<compile_context>
chip_gen: v7x
topology: tpu7x:2x2x1
jax: 0.10.0
libtpu: 0.0.40
codegen_flags: <defaults>
</compile_context>

<pallas_src>
import jax
import jax.numpy as jnp
from jax.experimental import pallas as pl
from jax.experimental.pallas import tpu as pltpu


# ---------------------------------------------------------------------------
# Fused Pallas kernel
# ---------------------------------------------------------------------------
def _fused_kernel(feats_ref, graph_ref,
                  wqg, bqg, wkv, bkv, wvv, bvv,
                  wqv, bqv, wkg, bkg, wvg, bvg,
                  wo, bo, o_ref):
    cv = feats_ref.shape[1]
    cg = graph_ref.shape[1]
    co = o_ref.shape[1]
    w_dim = feats_ref.shape[3]
    scale = 1.0 / (float(w_dim) ** 0.5)

    x_vis = feats_ref[0]    # [Cv, H, W]
    x_gra = graph_ref[0]    # [Cg, H, W]

    def project(x, cin, heads):
        # 1x1 conv == per-pixel linear: out[o] = sum_c w[c, o] * x[c] + b[o].
        # Weights are SMEM scalars -> splat-multiply input planes on the VPU.
        # `heads` is a list of (w_ref, b_ref); all heads share the loaded
        # input planes.  Returns one list of Co [H, W] planes per head.
        outs = [[] for _ in heads]
        for o in range(co):
            for j, (w_ref, b_ref) in enumerate(heads):
                acc = x[0] * w_ref[0, o]
                for c in range(1, cin):
                    acc = acc + x[c] * w_ref[c, o]
                outs[j].append(acc + b_ref[o])
        return outs

    q_g, k_g, v_g = project(x_gra, cg, [(wqg, bqg), (wkg, bkg), (wvg, bvg)])
    q_v, k_v, v_v = project(x_vis, cv, [(wqv, bqv), (wkv, bkv), (wvv, bvv)])

    # Fuse both branch attentions into one channel-batched attention:
    #   channels [0, Co)   : graph queries attending over visual K/V
    #   channels [Co, 2Co) : visual queries attending over graph K/V
    q_all = jnp.stack(q_g + q_v, axis=0)    # [2Co, H, W]
    k_all = jnp.stack(k_v + k_g, axis=0)    # [2Co, H, W]
    v_all = jnp.stack(v_v + v_g, axis=0)    # [2Co, H, W]

    s = jnp.einsum('chw,cvw->chv', q_all, k_all,
                   preferred_element_type=jnp.float32) * scale
    s = s - jnp.max(s, axis=-1, keepdims=True)
    p = jnp.exp(s)
    p = p / jnp.sum(p, axis=-1, keepdims=True)
    fused = jnp.einsum('chv,cvw->chw', p, v_all,
                       preferred_element_type=jnp.float32)   # [2Co, H, W]

    # Output 1x1 conv with the channel-concat folded in: `fused` already has
    # [fused_graph ; fused_visual] channel order, matching output_conv's
    # input-channel layout.
    out_planes = []
    for o in range(co):
        acc = fused[0] * wo[0, o]
        for c in range(1, 2 * co):
            acc = acc + fused[c] * wo[c, o]
        out_planes.append(acc + bo[o])
    o_ref[0] = jnp.stack(out_planes, axis=0).astype(o_ref.dtype)


_PARAM_ORDER = ("query_conv_graph", "key_conv_visual", "value_conv_visual",
                "query_conv_visual", "key_conv_graph", "value_conv_graph",
                "output_conv")


def conv_self_attention_fusion(params, feats, graph_feature):
    """feats: [B, Cv, H, W], graph_feature: [B, Cg, H, W] -> [B, Co, H, W]."""
    B, Cv, H, W = feats.shape
    Cg = graph_feature.shape[1]
    Co = params["output_conv"][0].shape[1]

    smem_args = []
    for name in _PARAM_ORDER:
        w_, b_ = params[name]
        smem_args += [w_, b_]
    smem_spec = pl.BlockSpec(memory_space=pltpu.MemorySpace.SMEM)

    return pl.pallas_call(
        _fused_kernel,
        out_shape=jax.ShapeDtypeStruct((B, Co, H, W), jnp.float32),
        grid=(B,),
        in_specs=[pl.BlockSpec((1, Cv, H, W), lambda b: (b, 0, 0, 0)),
                  pl.BlockSpec((1, Cg, H, W), lambda b: (b, 0, 0, 0))]
                 + [smem_spec] * len(smem_args),
        out_specs=pl.BlockSpec((1, Co, H, W), lambda b: (b, 0, 0, 0)),
        compiler_params=pltpu.CompilerParams(
            dimension_semantics=("parallel",)),
    )(feats, graph_feature, *smem_args)


# ---------------------------------------------------------------------------
# Parameters (Conv2d(k=1) weight [out, in, 1, 1] stored as [in, out])
# ---------------------------------------------------------------------------
def init_params(key, in_channels_visual, in_channels_graph, out_channels):
    def conv_params(k, cin, cout):
        k1, k2 = jax.random.split(k)
        bound = 1.0 / (cin ** 0.5)
        w = jax.random.uniform(k1, (cin, cout), jnp.float32, -bound, bound)
        b = jax.random.uniform(k2, (cout,), jnp.float32, -bound, bound)
        return w, b

    keys = jax.random.split(key, 7)
    return {
        "query_conv_graph": conv_params(keys[0], in_channels_graph, out_channels),
        "key_conv_visual": conv_params(keys[1], in_channels_visual, out_channels),
        "value_conv_visual": conv_params(keys[2], in_channels_visual, out_channels),
        "query_conv_visual": conv_params(keys[3], in_channels_visual, out_channels),
        "key_conv_graph": conv_params(keys[4], in_channels_graph, out_channels),
        "value_conv_graph": conv_params(keys[5], in_channels_graph, out_channels),
        "output_conv": conv_params(keys[6], out_channels * 2, out_channels),
    }


# ---------------------------------------------------------------------------
# Pure-JAX reference (correctness check)
# ---------------------------------------------------------------------------
def _ref_conv1x1(x, w, b):
    return jnp.einsum("bchw,cd->bdhw", x, w) + b[None, :, None, None]


def _ref_attn(q, k, v):
    s = jnp.einsum("bchw,bcvw->bchv", q, k) / (q.shape[-1] ** 0.5)
    p = jax.nn.softmax(s, axis=-1)
    return jnp.einsum("bchv,bcvw->bchw", p, v)


def _reference(params, feats, graph_feature):
    qg = _ref_conv1x1(graph_feature, *params["query_conv_graph"])
    kv = _ref_conv1x1(feats, *params["key_conv_visual"])
    vv = _ref_conv1x1(feats, *params["value_conv_visual"])
    fg = _ref_attn(qg, kv, vv)
    qv = _ref_conv1x1(feats, *params["query_conv_visual"])
    kg = _ref_conv1x1(graph_feature, *params["key_conv_graph"])
    vg = _ref_conv1x1(graph_feature, *params["value_conv_graph"])
    fv = _ref_attn(qv, kg, vg)
    return _ref_conv1x1(jnp.concatenate([fg, fv], axis=1), *params["output_conv"])


# ---------------------------------------------------------------------------
if __name__ == "__main__":
    B, Cv, Cg, Co, H, W = 2, 4, 4, 8, 16, 16

    key = jax.random.PRNGKey(0)
    k_feats, k_graph, k_params = jax.random.split(key, 3)
    feats = jax.random.normal(k_feats, (B, Cv, H, W), jnp.float32)
    graph_feature = jax.random.normal(k_graph, (B, Cg, H, W), jnp.float32)
    params = init_params(k_params, Cv, Cg, Co)

    out = conv_self_attention_fusion(params, feats, graph_feature)
    out = jax.block_until_ready(out)

    ref = jax.block_until_ready(_reference(params, feats, graph_feature))
    assert out.shape == (B, Co, H, W)
    assert jnp.allclose(out, ref, atol=1e-4, rtol=1e-4), "mismatch vs reference"

    print("KERNEL_OK")
</pallas_src>

<mosaic_0001>
module attributes {stable_mosaic.version = 11 : i64} {
  func.func @_fused_kernel(%arg0: i32, %arg1: memref<1x4x16x16xf32, #tpu.memory_space<vmem>>, %arg2: memref<1x4x16x16xf32, #tpu.memory_space<vmem>>, %arg3: memref<4x8xf32, #tpu.memory_space<smem>>, %arg4: memref<8xf32, #tpu.memory_space<smem>>, %arg5: memref<4x8xf32, #tpu.memory_space<smem>>, %arg6: memref<8xf32, #tpu.memory_space<smem>>, %arg7: memref<4x8xf32, #tpu.memory_space<smem>>, %arg8: memref<8xf32, #tpu.memory_space<smem>>, %arg9: memref<4x8xf32, #tpu.memory_space<smem>>, %arg10: memref<8xf32, #tpu.memory_space<smem>>, %arg11: memref<4x8xf32, #tpu.memory_space<smem>>, %arg12: memref<8xf32, #tpu.memory_space<smem>>, %arg13: memref<4x8xf32, #tpu.memory_space<smem>>, %arg14: memref<8xf32, #tpu.memory_space<smem>>, %arg15: memref<16x8xf32, #tpu.memory_space<smem>>, %arg16: memref<8xf32, #tpu.memory_space<smem>>, %arg17: memref<1x8x16x16xf32, #tpu.memory_space<vmem>>) attributes {dimension_semantics = [#tpu.dimension_semantics<parallel>], iteration_bounds = array<i64: 2>, scalar_prefetch = 0 : i64, scratch_operands = 0 : i64, tpu.core_type = #tpu.core_type<tc>, window_params = [{transform_indices = @transform_0, window_bounds = array<i64: 1, 4, 16, 16>}, {transform_indices = @transform_1, window_bounds = array<i64: 1, 4, 16, 16>}, {transform_indices = @transform_2, window_bounds = array<i64: 4, 8>}, {transform_indices = @transform_3, window_bounds = array<i64: 8>}, {transform_indices = @transform_4, window_bounds = array<i64: 4, 8>}, {transform_indices = @transform_5, window_bounds = array<i64: 8>}, {transform_indices = @transform_6, window_bounds = array<i64: 4, 8>}, {transform_indices = @transform_7, window_bounds = array<i64: 8>}, {transform_indices = @transform_8, window_bounds = array<i64: 4, 8>}, {transform_indices = @transform_9, window_bounds = array<i64: 8>}, {transform_indices = @transform_10, window_bounds = array<i64: 4, 8>}, {transform_indices = @transform_11, window_bounds = array<i64: 8>}, {transform_indices = @transform_12, window_bounds = array<i64: 4, 8>}, {transform_indices = @transform_13, window_bounds = array<i64: 8>}, {transform_indices = @transform_14, window_bounds = array<i64: 16, 8>}, {transform_indices = @transform_15, window_bounds = array<i64: 8>}, {transform_indices = @transform_16, window_bounds = array<i64: 1, 8, 16, 16>}]} {
    %c0 = arith.constant 0 : index
    %c0_0 = arith.constant 0 : index
    %c0_1 = arith.constant 0 : index
    %c0_2 = arith.constant 0 : index
    %0 = vector.load %arg1[%c0, %c0_0, %c0_1, %c0_2] : memref<1x4x16x16xf32, #tpu.memory_space<vmem>>, vector<1x4x16x16xf32>
    %1 = vector.shape_cast %0 : vector<1x4x16x16xf32> to vector<4x16x16xf32>
    %c0_3 = arith.constant 0 : index
    %c0_4 = arith.constant 0 : index
    %c0_5 = arith.constant 0 : index
    %c0_6 = arith.constant 0 : index
    %2 = vector.load %arg2[%c0_3, %c0_4, %c0_5, %c0_6] : memref<1x4x16x16xf32, #tpu.memory_space<vmem>>, vector<1x4x16x16xf32>
    %3 = vector.shape_cast %2 : vector<1x4x16x16xf32> to vector<4x16x16xf32>
    %4 = vector.extract_strided_slice %3 {offsets = [0, 0, 0], sizes = [1, 16, 16], strides = [1, 1, 1]} : vector<4x16x16xf32> to vector<1x16x16xf32>
    %5 = vector.shape_cast %4 : vector<1x16x16xf32> to vector<16x16xf32>
    %c0_7 = arith.constant 0 : index
    %c0_8 = arith.constant 0 : index
    %6 = memref.load %arg3[%c0_7, %c0_8] : memref<4x8xf32, #tpu.memory_space<smem>>
    %7 = vector.broadcast %6 : f32 to vector<16x16xf32>
    %8 = arith.mulf %5, %7 : vector<16x16xf32>
    %9 = vector.extract_strided_slice %3 {offsets = [1, 0, 0], sizes = [1, 16, 16], strides = [1, 1, 1]} : vector<4x16x16xf32> to vector<1x16x16xf32>
    %10 = vector.shape_cast %9 : vector<1x16x16xf32> to vector<16x16xf32>
    %c1 = arith.constant 1 : index
    %c0_9 = arith.constant 0 : index
    %11 = memref.load %arg3[%c1, %c0_9] : memref<4x8xf32, #tpu.memory_space<smem>>
    %12 = vector.broadcast %11 : f32 to vector<16x16xf32>
    %13 = arith.mulf %10, %12 : vector<16x16xf32>
    %14 = arith.addf %8, %13 : vector<16x16xf32>
    %15 = vector.extract_strided_slice %3 {offsets = [2, 0, 0], sizes = [1, 16, 16], strides = [1, 1, 1]} : vector<4x16x16xf32> to vector<1x16x16xf32>
    %16 = vector.shape_cast %15 : vector<1x16x16xf32> to vector<16x16xf32>
    %c2 = arith.constant 2 : index
    %c0_10 = arith.constant 0 : index
    %17 = memref.load %arg3[%c2, %c0_10] : memref<4x8xf32, #tpu.memory_space<smem>>
    %18 = vector.broadcast %17 : f32 to vector<16x16xf32>
    %19 = arith.mulf %16, %18 : vector<16x16xf32>
    %20 = arith.addf %14, %19 : vector<16x16xf32>
    %21 = vector.extract_strided_slice %3 {offsets = [3, 0, 0], sizes = [1, 16, 16], strides = [1, 1, 1]} : vector<4x16x16xf32> to vector<1x16x16xf32>
    %22 = vector.shape_cast %21 : vector<1x16x16xf32> to vector<16x16xf32>
    %c3 = arith.constant 3 : index
    %c0_11 = arith.constant 0 : index
    %23 = memref.load %arg3[%c3, %c0_11] : memref<4x8xf32, #tpu.memory_space<smem>>
    %24 = vector.broadcast %23 : f32 to vector<16x16xf32>
    %25 = arith.mulf %22, %24 : vector<16x16xf32>
    %26 = arith.addf %20, %25 : vector<16x16xf32>
    %c0_12 = arith.constant 0 : index
    %27 = memref.load %arg4[%c0_12] : memref<8xf32, #tpu.memory_space<smem>>
    %28 = vector.broadcast %27 : f32 to vector<16x16xf32>
    %29 = arith.addf %26, %28 : vector<16x16xf32>
    %30 = vector.extract_strided_slice %3 {offsets = [0, 0, 0], sizes = [1, 16, 16], strides = [1, 1, 1]} : vector<4x16x16xf32> to vector<1x16x16xf32>
    %31 = vector.shape_cast %30 : vector<1x16x16xf32> to vector<16x16xf32>
    %c0_13 = arith.constant 0 : index
    %c0_14 = arith.constant 0 : index
    %32 = memref.load %arg11[%c0_13, %c0_14] : memref<4x8xf32, #tpu.memory_space<smem>>
    %33 = vector.broadcast %32 : f32 to vector<16x16xf32>
    %34 = arith.mulf %31, %33 : vector<16x16xf32>
    %35 = vector.extract_strided_slice %3 {offsets = [1, 0, 0], sizes = [1, 16, 16], strides = [1, 1, 1]} : vector<4x16x16xf32> to vector<1x16x16xf32>
    %36 = vector.shape_cast %35 : vector<1x16x16xf32> to vector<16x16xf32>
    %c1_15 = arith.constant 1 : index
    %c0_16 = arith.constant 0 : index
    %37 = memref.load %arg11[%c1_15, %c0_16] : memref<4x8xf32, #tpu.memory_space<smem>>
    %38 = vector.broadcast %37 : f32 to vector<16x16xf32>
    %39 = arith.mulf %36, %38 : vector<16x16xf32>
    %40 = arith.addf %34, %39 : vector<16x16xf32>
    %41 = vector.extract_strided_slice %3 {offsets = [2, 0, 0], sizes = [1, 16, 16], strides = [1, 1, 1]} : vector<4x16x16xf32> to vector<1x16x16xf32>
    %42 = vector.shape_cast %41 : vector<1x16x16xf32> to vector<16x16xf32>
    %c2_17 = arith.constant 2 : index
    %c0_18 = arith.constant 0 : index
    %43 = memref.load %arg11[%c2_17, %c0_18] : memref<4x8xf32, #tpu.memory_space<smem>>
    %44 = vector.broadcast %43 : f32 to vector<16x16xf32>
    %45 = arith.mulf %42, %44 : vector<16x16xf32>
    %46 = arith.addf %40, %45 : vector<16x16xf32>
    %47 = vector.extract_strided_slice %3 {offsets = [3, 0, 0], sizes = [1, 16, 16], strides = [1, 1, 1]} : vector<4x16x16xf32> to vector<1x16x16xf32>
    %48 = vector.shape_cast %47 : vector<1x16x16xf32> to vector<16x16xf32>
    %c3_19 = arith.constant 3 : index
    %c0_20 = arith.constant 0 : index
    %49 = memref.load %arg11[%c3_19, %c0_20] : memref<4x8xf32, #tpu.memory_space<smem>>
    %50 = vector.broadcast %49 : f32 to vector<16x16xf32>
    %51 = arith.mulf %48, %50 : vector<16x16xf32>
    %52 = arith.addf %46, %51 : vector<16x16xf32>
    %c0_21 = arith.constant 0 : index
    %53 = memref.load %arg12[%c0_21] : memref<8xf32, #tpu.memory_space<smem>>
    %54 = vector.broadcast %53 : f32 to vector<16x16xf32>
    %55 = arith.addf %52, %54 : vector<16x16xf32>
    %56 = vector.extract_strided_slice %3 {offsets = [0, 0, 0], sizes = [1, 16, 16], strides = [1, 1, 1]} : vector<4x16x16xf32> to vector<1x16x16xf32>
    %57 = vector.shape_cast %56 : vector<1x16x16xf32> to vector<16x16xf32>
    %c0_22 = arith.constant 0 : index
    %c0_23 = arith.constant 0 : index
    %58 = memref.load %arg13[%c0_22, %c0_23] : memref<4x8xf32, #tpu.memory_space<smem>>
    %59 = vector.broadcast %58 : f32 to vector<16x16xf32>
    %60 = arith.mulf %57, %59 : vector<16x16xf32>
    %61 = vector.extract_strided_slice %3 {offsets = [1, 0, 0], sizes = [1, 16, 16], strides = [1, 1, 1]} : vector<4x16x16xf32> to vector<1x16x16xf32>
    %62 = vector.shape_cast %61 : vector<1x16x16xf32> to vector<16x16xf32>
    %c1_24 = arith.constant 1 : index
    %c0_25 = arith.constant 0 : index
    %63 = memref.load %arg13[%c1_24, %c0_25] : memref<4x8xf32, #tpu.memory_space<smem>>
    %64 = vector.broadcast %63 : f32 to vector<16x16xf32>
    %65 = arith.mulf %62, %64 : vector<16x16xf32>
    %66 = arith.addf %60, %65 : vector<16x16xf32>
    %67 = vector.extract_strided_slice %3 {offsets = [2, 0, 0], sizes = [1, 16, 16], strides = [1, 1, 1]} : vector<4x16x16xf32> to vector<1x16x16xf32>
    %68 = vector.shape_cast %67 : vector<1x16x16xf32> to vector<16x16xf32>
    %c2_26 = arith.constant 2 : index
    %c0_27 = arith.constant 0 : index
    %69 = memref.load %arg13[%c2_26, %c0_27] : memref<4x8xf32, #tpu.memory_space<smem>>
    %70 = vector.broadcast %69 : f32 to vector<16x16xf32>
    %71 = arith.mulf %68, %70 : vector<16x16xf32>
    %72 = arith.addf %66, %71 : vector<16x16xf32>
    %73 = vector.extract_strided_slice %3 {offsets = [3, 0, 0], sizes = [1, 16, 16], strides = [1, 1, 1]} : vector<4x16x16xf32> to vector<1x16x16xf32>
    %74 = vector.shape_cast %73 : vector<1x16x16xf32> to vector<16x16xf32>
    %c3_28 = arith.constant 3 : index
    %c0_29 = arith.constant 0 : index
    %75 = memref.load %arg13[%c3_28, %c0_29] : memref<4x8xf32, #tpu.memory_space<smem>>
    %76 = vector.broadcast %75 : f32 to vector<16x16xf32>
    %77 = arith.mulf %74, %76 : vector<16x16xf32>
    %78 = arith.addf %72, %77 : vector<16x16xf32>
    %c0_30 = arith.constant 0 : index
    %79 = memref.load %arg14[%c0_30] : memref<8xf32, #tpu.memory_space<smem>>
    %80 = vector.broadcast %79 : f32 to vector<16x16xf32>
    %81 = arith.addf %78, %80 : vector<16x16xf32>
    %82 = vector.extract_strided_slice %3 {offsets = [0, 0, 0], sizes = [1, 16, 16], strides = [1, 1, 1]} : vector<4x16x16xf32> to vector<1x16x16xf32>
    %83 = vector.shape_cast %82 : vector<1x16x16xf32> to vector<16x16xf32>
    %c0_31 = arith.constant 0 : index
    %c1_32 = arith.constant 1 : index
    %84 = memref.load %arg3[%c0_31, %c1_32] : memref<4x8xf32, #tpu.memory_space<smem>>
    %85 = vector.broadcast %84 : f32 to vector<16x16xf32>
    %86 = arith.mulf %83, %85 : vector<16x16xf32>
    %87 = vector.extract_strided_slice %3 {offsets = [1, 0, 0], sizes = [1, 16, 16], strides = [1, 1, 1]} : vector<4x16x16xf32> to vector<1x16x16xf32>
    %88 = vector.shape_cast %87 : vector<1x16x16xf32> to vector<16x16xf32>
    %c1_33 = arith.constant 1 : index
    %c1_34 = arith.constant 1 : index
    %89 = memref.load %arg3[%c1_33, %c1_34] : memref<4x8xf32, #tpu.memory_space<smem>>
    %90 = vector.broadcast %89 : f32 to vector<16x16xf32>
    %91 = arith.mulf %88, %90 : vector<16x16xf32>
    %92 = arith.addf %86, %91 : vector<16x16xf32>
    %93 = vector.extract_strided_slice %3 {offsets = [2, 0, 0], sizes = [1, 16, 16], strides = [1, 1, 1]} : vector<4x16x16xf32> to vector<1x16x16xf32>
    %94 = vector.shape_cast %93 : vector<1x16x16xf32> to vector<16x16xf32>
    %c2_35 = arith.constant 2 : index
    %c1_36 = arith.constant 1 : index
    %95 = memref.load %arg3[%c2_35, %c1_36] : memref<4x8xf32, #tpu.memory_space<smem>>
    %96 = vector.broadcast %95 : f32 to vector<16x16xf32>
    %97 = arith.mulf %94, %96 : vector<16x16xf32>
    %98 = arith.addf %92, %97 : vector<16x16xf32>
    %99 = vector.extract_strided_slice %3 {offsets = [3, 0, 0], sizes = [1, 16, 16], strides = [1, 1, 1]} : vector<4x16x16xf32> to vector<1x16x16xf32>
    %100 = vector.shape_cast %99 : vector<1x16x16xf32> to vector<16x16xf32>
    %c3_37 = arith.constant 3 : index
    %c1_38 = arith.constant 1 : index
    %101 = memref.load %arg3[%c3_37, %c1_38] : memref<4x8xf32, #tpu.memory_space<smem>>
    %102 = vector.broadcast %101 : f32 to vector<16x16xf32>
    %103 = arith.mulf %100, %102 : vector<16x16xf32>
    %104 = arith.addf %98, %103 : vector<16x16xf32>
    %c1_39 = arith.constant 1 : index
    %105 = memref.load %arg4[%c1_39] : memref<8xf32, #tpu.memory_space<smem>>
    %106 = vector.broadcast %105 : f32 to vector<16x16xf32>
    %107 = arith.addf %104, %106 : vector<16x16xf32>
    %108 = vector.extract_strided_slice %3 {offsets = [0, 0, 0], sizes = [1, 16, 16], strides = [1, 1, 1]} : vector<4x16x16xf32> to vector<1x16x16xf32>
    %109 = vector.shape_cast %108 : vector<1x16x16xf32> to vector<16x16xf32>
    %c0_40 = arith.constant 0 : index
    %c1_41 = arith.constant 1 : index
    %110 = memref.load %arg11[%c0_40, %c1_41] : memref<4x8xf32, #tpu.memory_space<smem>>
    %111 = vector.broadcast %110 : f32 to vector<16x16xf32>
    %112 = arith.mulf %109, %111 : vector<16x16xf32>
    %113 = vector.extract_strided_slice %3 {offsets = [1, 0, 0], sizes = [1, 16, 16], strides = [1, 1, 1]} : vector<4x16x16xf32> to vector<1x16x16xf32>
    %114 = vector.shape_cast %113 : vector<1x16x16xf32> to vector<16x16xf32>
    %c1_42 = arith.constant 1 : index
    %c1_43 = arith.constant 1 : index
    %115 = memref.load %arg11[%c1_42, %c1_43] : memref<4x8xf32, #tpu.memory_space<smem>>
    %116 = vector.broadcast %115 : f32 to vector<16x16xf32>
    %117 = arith.mulf %114, %116 : vector<16x16xf32>
    %118 = arith.addf %112, %117 : vector<16x16xf32>
    %119 = vector.extract_strided_slice %3 {offsets = [2, 0, 0], sizes = [1, 16, 16], strides = [1, 1, 1]} : vector<4x16x16xf32> to vector<1x16x16xf32>
    %120 = vector.shape_cast %119 : vector<1x16x16xf32> to vector<16x16xf32>
    %c2_44 = arith.constant 2 : index
    %c1_45 = arith.constant 1 : index
    %121 = memref.load %arg11[%c2_44, %c1_45] : memref<4x8xf32, #tpu.memory_space<smem>>
    %122 = vector.broadcast %121 : f32 to vector<16x16xf32>
    %123 = arith.mulf %120, %122 : vector<16x16xf32>
    %124 = arith.addf %118, %123 : vector<16x16xf32>
    %125 = vector.extract_strided_slice %3 {offsets = [3, 0, 0], sizes = [1, 16, 16], strides = [1, 1, 1]} : vector<4x16x16xf32> to vector<1x16x16xf32>
    %126 = vector.shape_cast %125 : vector<1x16x16xf32> to vector<16x16xf32>
    %c3_46 = arith.constant 3 : index
    %c1_47 = arith.constant 1 : index
    %127 = memref.load %arg11[%c3_46, %c1_47] : memref<4x8xf32, #tpu.memory_space<smem>>
    %128 = vector.broadcast %127 : f32 to vector<16x16xf32>
    %129 = arith.mulf %126, %128 : vector<16x16xf32>
    %130 = arith.addf %124, %129 : vector<16x16xf32>
    %c1_48 = arith.constant 1 : index
    %131 = memref.load %arg12[%c1_48] : memref<8xf32, #tpu.memory_space<smem>>
    %132 = vector.broadcast %131 : f32 to vector<16x16xf32>
    %133 = arith.addf %130, %132 : vector<16x16xf32>
    %134 = vector.extract_strided_slice %3 {offsets = [0, 0, 0], sizes = [1, 16, 16], strides = [1, 1, 1]} : vector<4x16x16xf32> to vector<1x16x16xf32>
    %135 = vector.shape_cast %134 : vector<1x16x16xf32> to vector<16x16xf32>
    %c0_49 = arith.constant 0 : index
    %c1_50 = arith.constant 1 : index
    %136 = memref.load %arg13[%c0_49, %c1_50] : memref<4x8xf32, #tpu.memory_space<smem>>
    %137 = vector.broadcast %136 : f32 to vector<16x16xf32>
    %138 = arith.mulf %135, %137 : vector<16x16xf32>
    %139 = vector.extract_strided_slice %3 {offsets = [1, 0, 0], sizes = [1, 16, 16], strides = [1, 1, 1]} : vector<4x16x16xf32> to vector<1x16x16xf32>
    %140 = vector.shape_cast %139 : vector<1x16x16xf32> to vector<16x16xf32>
    %c1_51 = arith.constant 1 : index
    %c1_52 = arith.constant 1 : index
    %141 = memref.load %arg13[%c1_51, %c1_52] : memref<4x8xf32, #tpu.memory_space<smem>>
    %142 = vector.broadcast %141 : f32 to vector<16x16xf32>
    %143 = arith.mulf %140, %142 : vector<16x16xf32>
    %144 = arith.addf %138, %143 : vector<16x16xf32>
    %145 = vector.extract_strided_slice %3 {offsets = [2, 0, 0], sizes = [1, 16, 16], strides = [1, 1, 1]} : vector<4x16x16xf32> to vector<1x16x16xf32>
    %146 = vector.shape_cast %145 : vector<1x16x16xf32> to vector<16x16xf32>
    %c2_53 = arith.constant 2 : index
    %c1_54 = arith.constant 1 : index
    %147 = memref.load %arg13[%c2_53, %c1_54] : memref<4x8xf32, #tpu.memory_space<smem>>
    %148 = vector.broadcast %147 : f32 to vector<16x16xf32>
    %149 = arith.mulf %146, %148 : vector<16x16xf32>
    %150 = arith.addf %144, %149 : vector<16x16xf32>
    %151 = vector.extract_strided_slice %3 {offsets = [3, 0, 0], sizes = [1, 16, 16], strides = [1, 1, 1]} : vector<4x16x16xf32> to vector<1x16x16xf32>
    %152 = vector.shape_cast %151 : vector<1x16x16xf32> to vector<16x16xf32>
    %c3_55 = arith.constant 3 : index
    %c1_56 = arith.constant 1 : index
    %153 = memref.load %arg13[%c3_55, %c1_56] : memref<4x8xf32, #tpu.memory_space<smem>>
    %154 = vector.broadcast %153 : f32 to vector<16x16xf32>
    %155 = arith.mulf %152, %154 : vector<16x16xf32>
    %156 = arith.addf %150, %155 : vector<16x16xf32>
    %c1_57 = arith.constant 1 : index
    %157 = memref.load %arg14[%c1_57] : memref<8xf32, #tpu.memory_space<smem>>
    %158 = vector.broadcast %157 : f32 to vector<16x16xf32>
    %159 = arith.addf %156, %158 : vector<16x16xf32>
    %160 = vector.extract_strided_slice %3 {offsets = [0, 0, 0], sizes = [1, 16, 16], strides = [1, 1, 1]} : vector<4x16x16xf32> to vector<1x16x16xf32>
    %161 = vector.shape_cast %160 : vector<1x16x16xf32> to vector<16x16xf32>
    %c0_58 = arith.constant 0 : index
    %c2_59 = arith.constant 2 : index
    %162 = memref.load %arg3[%c0_58, %c2_59] : memref<4x8xf32, #tpu.memory_space<smem>>
    %163 = vector.broadcast %162 : f32 to vector<16x16xf32>
    %164 = arith.mulf %161, %163 : vector<16x16xf32>
    %165 = vector.extract_strided_slice %3 {offsets = [1, 0, 0], sizes = [1, 16, 16], strides = [1, 1, 1]} : vector<4x16x16xf32> to vector<1x16x16xf32>
    %166 = vector.shape_cast %165 : vector<1x16x16xf32> to vector<16x16xf32>
    %c1_60 = arith.constant 1 : index
    %c2_61 = arith.constant 2 : index
    %167 = memref.load %arg3[%c1_60, %c2_61] : memref<4x8xf32, #tpu.memory_space<smem>>
    %168 = vector.broadcast %167 : f32 to vector<16x16xf32>
    %169 = arith.mulf %166, %168 : vector<16x16xf32>
    %170 = arith.addf %164, %169 : vector<16x16xf32>
    %171 = vector.extract_strided_slice %3 {offsets = [2, 0, 0], sizes = [1, 16, 16], strides = [1, 1, 1]} : vector<4x16x16xf32> to vector<1x16x16xf32>
    %172 = vector.shape_cast %171 : vector<1x16x16xf32> to vector<16x16xf32>
    %c2_62 = arith.constant 2 : index
    %c2_63 = arith.constant 2 : index
    %173 = memref.load %arg3[%c2_62, %c2_63] : memref<4x8xf32, #tpu.memory_space<smem>>
    %174 = vector.broadcast %173 : f32 to vector<16x16xf32>
    %175 = arith.mulf %172, %174 : vector<16x16xf32>
    %176 = arith.addf %170, %175 : vector<16x16xf32>
    %177 = vector.extract_strided_slice %3 {offsets = [3, 0, 0], sizes = [1, 16, 16], strides = [1, 1, 1]} : vector<4x16x16xf32> to vector<1x16x16xf32>
    %178 = vector.shape_cast %177 : vector<1x16x16xf32> to vector<16x16xf32>
    %c3_64 = arith.constant 3 : index
    %c2_65 = arith.constant 2 : index
    %179 = memref.load %arg3[%c3_64, %c2_65] : memref<4x8xf32, #tpu.memory_space<smem>>
    %180 = vector.broadcast %179 : f32 to vector<16x16xf32>
    %181 = arith.mulf %178, %180 : vector<16x16xf32>
    %182 = arith.addf %176, %181 : vector<16x16xf32>
    %c2_66 = arith.constant 2 : index
    %183 = memref.load %arg4[%c2_66] : memref<8xf32, #tpu.memory_space<smem>>
    %184 = vector.broadcast %183 : f32 to vector<16x16xf32>
    %185 = arith.addf %182, %184 : vector<16x16xf32>
    %186 = vector.extract_strided_slice %3 {offsets = [0, 0, 0], sizes = [1, 16, 16], strides = [1, 1, 1]} : vector<4x16x16xf32> to vector<1x16x16xf32>
    %187 = vector.shape_cast %186 : vector<1x16x16xf32> to vector<16x16xf32>
    %c0_67 = arith.constant 0 : index
    %c2_68 = arith.constant 2 : index
    %188 = memref.load %arg11[%c0_67, %c2_68] : memref<4x8xf32, #tpu.memory_space<smem>>
    %189 = vector.broadcast %188 : f32 to vector<16x16xf32>
    %190 = arith.mulf %187, %189 : vector<16x16xf32>
    %191 = vector.extract_strided_slice %3 {offsets = [1, 0, 0], sizes = [1, 16, 16], strides = [1, 1, 1]} : vector<4x16x16xf32> to vector<1x16x16xf32>
    %192 = vector.shape_cast %191 : vector<1x16x16xf32> to vector<16x16xf32>
    %c1_69 = arith.constant 1 : index
    %c2_70 = arith.constant 2 : index
    %193 = memref.load %arg11[%c1_69, %c2_70] : memref<4x8xf32, #tpu.memory_space<smem>>
    %194 = vector.broadcast %193 : f32 to vector<16x16xf32>
    %195 = arith.mulf %192, %194 : vector<16x16xf32>
    %196 = arith.addf %190, %195 : vector<16x16xf32>
    %197 = vector.extract_strided_slice %3 {offsets = [2, 0, 0], sizes = [1, 16, 16], strides = [1, 1, 1]} : vector<4x16x16xf32> to vector<1x16x16xf32>
    %198 = vector.shape_cast %197 : vector<1x16x16xf32> to vector<16x16xf32>
    %c2_71 = arith.constant 2 : index
    %c2_72 = arith.constant 2 : index
    %199 = memref.load %arg11[%c2_71, %c2_72] : memref<4x8xf32, #tpu.memory_space<smem>>
    %200 = vector.broadcast %199 : f32 to vector<16x16xf32>
    %201 = arith.mulf %198, %200 : vector<16x16xf32>
    %202 = arith.addf %196, %201 : vector<16x16xf32>
    %203 = vector.extract_strided_slice %3 {offsets = [3, 0, 0], sizes = [1, 16, 16], strides = [1, 1, 1]} : vector<4x16x16xf32> to vector<1x16x16xf32>
    %204 = vector.shape_cast %203 : vector<1x16x16xf32> to vector<16x16xf32>
    %c3_73 = arith.constant 3 : index
    %c2_74 = arith.constant 2 : index
    %205 = memref.load %arg11[%c3_73, %c2_74] : memref<4x8xf32, #tpu.memory_space<smem>>
    %206 = vector.broadcast %205 : f32 to vector<16x16xf32>
    %207 = arith.mulf %204, %206 : vector<16x16xf32>
    %208 = arith.addf %202, %207 : vector<16x16xf32>
    %c2_75 = arith.constant 2 : index
    %209 = memref.load %arg12[%c2_75] : memref<8xf32, #tpu.memory_space<smem>>
    %210 = vector.broadcast %209 : f32 to vector<16x16xf32>
    %211 = arith.addf %208, %210 : vector<16x16xf32>
    %212 = vector.extract_strided_slice %3 {offsets = [0, 0, 0], sizes = [1, 16, 16], strides = [1, 1, 1]} : vector<4x16x16xf32> to vector<1x16x16xf32>
    %213 = vector.shape_cast %212 : vector<1x16x16xf32> to vector<16x16xf32>
    %c0_76 = arith.constant 0 : index
    %c2_77 = arith.constant 2 : index
    %214 = memref.load %arg13[%c0_76, %c2_77] : memref<4x8xf32, #tpu.memory_space<smem>>
    %215 = vector.broadcast %214 : f32 to vector<16x16xf32>
    %216 = arith.mulf %213, %215 : vector<16x16xf32>
    %217 = vector.extract_strided_slice %3 {offsets = [1, 0, 0], sizes = [1, 16, 16], strides = [1, 1, 1]} : vector<4x16x16xf32> to vector<1x16x16xf32>
    %218 = vector.shape_cast %217 : vector<1x16x16xf32> to vector<16x16xf32>
    %c1_78 = arith.constant 1 : index
    %c2_79 = arith.constant 2 : index
    %219 = memref.load %arg13[%c1_78, %c2_79] : memref<4x8xf32, #tpu.memory_space<smem>>
    %220 = vector.broadcast %219 : f32 to vector<16x16xf32>
    %221 = arith.mulf %218, %220 : vector<16x16xf32>
    %222 = arith.addf %216, %221 : vector<16x16xf32>
    %223 = vector.extract_strided_slice %3 {offsets = [2, 0, 0], sizes = [1, 16, 16], strides = [1, 1, 1]} : vector<4x16x16xf32> to vector<1x16x16xf32>
    %224 = vector.shape_cast %223 : vector<1x16x16xf32> to vector<16x16xf32>
    %c2_80 = arith.constant 2 : index
    %c2_81 = arith.constant 2 : index
    %225 = memref.load %arg13[%c2_80, %c2_81] : memref<4x8xf32, #tpu.memory_space<smem>>
    %226 = vector.broadcast %225 : f32 to vector<16x16xf32>
    %227 = arith.mulf %224, %226 : vector<16x16xf32>
    %228 = arith.addf %222, %227 : vector<16x16xf32>
    %229 = vector.extract_strided_slice %3 {offsets = [3, 0, 0], sizes = [1, 16, 16], strides = [1, 1, 1]} : vector<4x16x16xf32> to vector<1x16x16xf32>
    %230 = vector.shape_cast %229 : vector<1x16x16xf32> to vector<16x16xf32>
    %c3_82 = arith.constant 3 : index
    %c2_83 = arith.constant 2 : index
    %231 = memref.load %arg13[%c3_82, %c2_83] : memref<4x8xf32, #tpu.memory_space<smem>>
    %232 = vector.broadcast %231 : f32 to vector<16x16xf32>
    %233 = arith.mulf %230, %232 : vector<16x16xf32>
    %234 = arith.addf %228, %233 : vector<16x16xf32>
    %c2_84 = arith.constant 2 : index
    %235 = memref.load %arg14[%c2_84] : memref<8xf32, #tpu.memory_space<smem>>
    %236 = vector.broadcast %235 : f32 to vector<16x16xf32>
    %237 = arith.addf %234, %236 : vector<16x16xf32>
    %238 = vector.extract_strided_slice %3 {offsets = [0, 0, 0], sizes = [1, 16, 16], strides = [1, 1, 1]} : vector<4x16x16xf32> to vector<1x16x16xf32>
    %239 = vector.shape_cast %238 : vector<1x16x16xf32> to vector<16x16xf32>
    %c0_85 = arith.constant 0 : index
    %c3_86 = arith.constant 3 : index
    %240 = memref.load %arg3[%c0_85, %c3_86] : memref<4x8xf32, #tpu.memory_space<smem>>
    %241 = vector.broadcast %240 : f32 to vector<16x16xf32>
    %242 = arith.mulf %239, %241 : vector<16x16xf32>
    %243 = vector.extract_strided_slice %3 {offsets = [1, 0, 0], sizes = [1, 16, 16], strides = [1, 1, 1]} : vector<4x16x16xf32> to vector<1x16x16xf32>
    %244 = vector.shape_cast %243 : vector<1x16x16xf32> to vector<16x16xf32>
    %c1_87 = arith.constant 1 : index
    %c3_88 = arith.constant 3 : index
    %245 = memref.load %arg3[%c1_87, %c3_88] : memref<4x8xf32, #tpu.memory_space<smem>>
    %246 = vector.broadcast %245 : f32 to vector<16x16xf32>
    %247 = arith.mulf %244, %246 : vector<16x16xf32>
    %248 = arith.addf %242, %247 : vector<16x16xf32>
    %249 = vector.extract_strided_slice %3 {offsets = [2, 0, 0], sizes = [1, 16, 16], strides = [1, 1, 1]} : vector<4x16x16xf32> to vector<1x16x16xf32>
    %250 = vector.shape_cast %249 : vector<1x16x16xf32> to vector<16x16xf32>
    %c2_89 = arith.constant 2 : index
    %c3_90 = arith.constant 3 : index
    %251 = memref.load %arg3[%c2_89, %c3_90] : memref<4x8xf32, #tpu.memory_space<smem>>
    %252 = vector.broadcast %251 : f32 to vector<16x16xf32>
    %253 = arith.mulf %250, %252 : vector<16x16xf32>
    %254 = arith.addf %248, %253 : vector<16x16xf32>
    %255 = vector.extract_strided_slice %3 {offsets = [3, 0, 0], sizes = [1, 16, 16], strides = [1, 1, 1]} : vector<4x16x16xf32> to vector<1x16x16xf32>
    %256 = vector.shape_cast %255 : vector<1x16x16xf32> to vector<16x16xf32>
    %c3_91 = arith.constant 3 : index
    %c3_92 = arith.constant 3 : index
    %257 = memref.load %arg3[%c3_91, %c3_92] : memref<4x8xf32, #tpu.memory_space<smem>>
    %258 = vector.broadcast %257 : f32 to vector<16x16xf32>
    %259 = arith.mulf %256, %258 : vector<16x16xf32>
    %260 = arith.addf %254, %259 : vector<16x16xf32>
    %c3_93 = arith.constant 3 : index
    %261 = memref.load %arg4[%c3_93] : memref<8xf32, #tpu.memory_space<smem>>
    %262 = vector.broadcast %261 : f32 to vector<16x16xf32>
    %263 = arith.addf %260, %262 : vector<16x16xf32>
    %264 = vector.extract_strided_slice %3 {offsets = [0, 0, 0], sizes = [1, 16, 16], strides = [1, 1, 1]} : vector<4x16x16xf32> to vector<1x16x16xf32>
    %265 = vector.shape_cast %264 : vector<1x16x16xf32> to vector<16x16xf32>
    %c0_94 = arith.constant 0 : index
    %c3_95 = arith.constant 3 : index
    %266 = memref.load %arg11[%c0_94, %c3_95] : memref<4x8xf32, #tpu.memory_space<smem>>
    %267 = vector.broadcast %266 : f32 to vector<16x16xf32>
    %268 = arith.mulf %265, %267 : vector<16x16xf32>
    %269 = vector.extract_strided_slice %3 {offsets = [1, 0, 0], sizes = [1, 16, 16], strides = [1, 1, 1]} : vector<4x16x16xf32> to vector<1x16x16xf32>
    %270 = vector.shape_cast %269 : vector<1x16x16xf32> to vector<16x16xf32>
    %c1_96 = arith.constant 1 : index
    %c3_97 = arith.constant 3 : index
    %271 = memref.load %arg11[%c1_96, %c3_97] : memref<4x8xf32, #tpu.memory_space<smem>>
    %272 = vector.broadcast %271 : f32 to vector<16x16xf32>
    %273 = arith.mulf %270, %272 : vector<16x16xf32>
    %274 = arith.addf %268, %273 : vector<16x16xf32>
    %275 = vector.extract_strided_slice %3 {offsets = [2, 0, 0], sizes = [1, 16, 16], strides = [1, 1, 1]} : vector<4x16x16xf32> to vector<1x16x16xf32>
    %276 = vector.shape_cast %275 : vector<1x16x16xf32> to vector<16x16xf32>
    %c2_98 = arith.constant 2 : index
    %c3_99 = arith.constant 3 : index
    %277 = memref.load %arg11[%c2_98, %c3_99] : memref<4x8xf32, #tpu.memory_space<smem>>
    %278 = vector.broadcast %277 : f32 to vector<16x16xf32>
    %279 = arith.mulf %276, %278 : vector<16x16xf32>
    %280 = arith.addf %274, %279 : vector<16x16xf32>
    %281 = vector.extract_strided_slice %3 {offsets = [3, 0, 0], sizes = [1, 16, 16], strides = [1, 1, 1]} : vector<4x16x16xf32> to vector<1x16x16xf32>
    %282 = vector.shape_cast %281 : vector<1x16x16xf32> to vector<16x16xf32>
    %c3_100 = arith.constant 3 : index
    %c3_101 = arith.constant 3 : index
    %283 = memref.load %arg11[%c3_100, %c3_101] : memref<4x8xf32, #tpu.memory_space<smem>>
    %284 = vector.broadcast %283 : f32 to vector<16x16xf32>
    %285 = arith.mulf %282, %284 : vector<16x16xf32>
    %286 = arith.addf %280, %285 : vector<16x16xf32>
    %c3_102 = arith.constant 3 : index
    %287 = memref.load %arg12[%c3_102] : memref<8xf32, #tpu.memory_space<smem>>
    %288 = vector.broadcast %287 : f32 to vector<16x16xf32>
    %289 = arith.addf %286, %288 : vector<16x16xf32>
    %290 = vector.extract_strided_slice %3 {offsets = [0, 0, 0], sizes = [1, 16, 16], strides = [1, 1, 1]} : vector<4x16x16xf32> to vector<1x16x16xf32>
    %291 = vector.shape_cast %290 : vector<1x16x16xf32> to vector<16x16xf32>
    %c0_103 = arith.constant 0 : index
    %c3_104 = arith.constant 3 : index
    %292 = memref.load %arg13[%c0_103, %c3_104] : memref<4x8xf32, #tpu.memory_space<smem>>
    %293 = vector.broadcast %292 : f32 to vector<16x16xf32>
    %294 = arith.mulf %291, %293 : vector<16x16xf32>
    %295 = vector.extract_strided_slice %3 {offsets = [1, 0, 0], sizes = [1, 16, 16], strides = [1, 1, 1]} : vector<4x16x16xf32> to vector<1x16x16xf32>
    %296 = vector.shape_cast %295 : vector<1x16x16xf32> to vector<16x16xf32>
    %c1_105 = arith.constant 1 : index
    %c3_106 = arith.constant 3 : index
    %297 = memref.load %arg13[%c1_105, %c3_106] : memref<4x8xf32, #tpu.memory_space<smem>>
    %298 = vector.broadcast %297 : f32 to vector<16x16xf32>
    %299 = arith.mulf %296, %298 : vector<16x16xf32>
    %300 = arith.addf %294, %299 : vector<16x16xf32>
    %301 = vector.extract_strided_slice %3 {offsets = [2, 0, 0], sizes = [1, 16, 16], strides = [1, 1, 1]} : vector<4x16x16xf32> to vector<1x16x16xf32>
    %302 = vector.shape_cast %301 : vector<1x16x16xf32> to vector<16x16xf32>
    %c2_107 = arith.constant 2 : index
    %c3_108 = arith.constant 3 : index
    %303 = memref.load %arg13[%c2_107, %c3_108] : memref<4x8xf32, #tpu.memory_space<smem>>
    %304 = vector.broadcast %303 : f32 to vector<16x16xf32>
    %305 = arith.mulf %302, %304 : vector<16x16xf32>
    %306 = arith.addf %300, %305 : vector<16x16xf32>
    %307 = vector.extract_strided_slice %3 {offsets = [3, 0, 0], sizes = [1, 16, 16], strides = [1, 1, 1]} : vector<4x16x16xf32> to vector<1x16x16xf32>
    %308 = vector.shape_cast %307 : vector<1x16x16xf32> to vector<16x16xf32>
    %c3_109 = arith.constant 3 : index
    %c3_110 = arith.constant 3 : index
    %309 = memref.load %arg13[%c3_109, %c3_110] : memref<4x8xf32, #tpu.memory_space<smem>>
    %310 = vector.broadcast %309 : f32 to vector<16x16xf32>
    %311 = arith.mulf %308, %310 : vector<16x16xf32>
    %312 = arith.addf %306, %311 : vector<16x16xf32>
    %c3_111 = arith.constant 3 : index
    %313 = memref.load %arg14[%c3_111] : memref<8xf32, #tpu.memory_space<smem>>
    %314 = vector.broadcast %313 : f32 to vector<16x16xf32>
    %315 = arith.addf %312, %314 : vector<16x16xf32>
    %316 = vector.extract_strided_slice %3 {offsets = [0, 0, 0], sizes = [1, 16, 16], strides = [1, 1, 1]} : vector<4x16x16xf32> to vector<1x16x16xf32>
    %317 = vector.shape_cast %316 : vector<1x16x16xf32> to vector<16x16xf32>
    %c0_112 = arith.constant 0 : index
    %c4 = arith.constant 4 : index
    %318 = memref.load %arg3[%c0_112, %c4] : memref<4x8xf32, #tpu.memory_space<smem>>
    %319 = vector.broadcast %318 : f32 to vector<16x16xf32>
    %320 = arith.mulf %317, %319 : vector<16x16xf32>
    %321 = vector.extract_strided_slice %3 {offsets = [1, 0, 0], sizes = [1, 16, 16], strides = [1, 1, 1]} : vector<4x16x16xf32> to vector<1x16x16xf32>
    %322 = vector.shape_cast %321 : vector<1x16x16xf32> to vector<16x16xf32>
    %c1_113 = arith.constant 1 : index
    %c4_114 = arith.constant 4 : index
    %323 = memref.load %arg3[%c1_113, %c4_114] : memref<4x8xf32, #tpu.memory_space<smem>>
    %324 = vector.broadcast %323 : f32 to vector<16x16xf32>
    %325 = arith.mulf %322, %324 : vector<16x16xf32>
    %326 = arith.addf %320, %325 : vector<16x16xf32>
    %327 = vector.extract_strided_slice %3 {offsets = [2, 0, 0], sizes = [1, 16, 16], strides = [1, 1, 1]} : vector<4x16x16xf32> to vector<1x16x16xf32>
    %328 = vector.shape_cast %327 : vector<1x16x16xf32> to vector<16x16xf32>
    %c2_115 = arith.constant 2 : index
    %c4_116 = arith.constant 4 : index
    %329 = memref.load %arg3[%c2_115, %c4_116] : memref<4x8xf32, #tpu.memory_space<smem>>
    %330 = vector.broadcast %329 : f32 to vector<16x16xf32>
    %331 = arith.mulf %328, %330 : vector<16x16xf32>
    %332 = arith.addf %326, %331 : vector<16x16xf32>
    %333 = vector.extract_strided_slice %3 {offsets = [3, 0, 0], sizes = [1, 16, 16], strides = [1, 1, 1]} : vector<4x16x16xf32> to vector<1x16x16xf32>
    %334 = vector.shape_cast %333 : vector<1x16x16xf32> to vector<16x16xf32>
    %c3_117 = arith.constant 3 : index
    %c4_118 = arith.constant 4 : index
    %335 = memref.load %arg3[%c3_117, %c4_118] : memref<4x8xf32, #tpu.memory_space<smem>>
    %336 = vector.broadcast %335 : f32 to vector<16x16xf32>
    %337 = arith.mulf %334, %336 : vector<16x16xf32>
    %338 = arith.addf %332, %337 : vector<16x16xf32>
    %c4_119 = arith.constant 4 : index
    %339 = memref.load %arg4[%c4_119] : memref<8xf32, #tpu.memory_space<smem>>
    %340 = vector.broadcast %339 : f32 to vector<16x16xf32>
    %341 = arith.addf %338, %340 : vector<16x16xf32>
    %342 = vector.extract_strided_slice %3 {offsets = [0, 0, 0], sizes = [1, 16, 16], strides = [1, 1, 1]} : vector<4x16x16xf32> to vector<1x16x16xf32>
    %343 = vector.shape_cast %342 : vector<1x16x16xf32> to vector<16x16xf32>
    %c0_120 = arith.constant 0 : index
    %c4_121 = arith.constant 4 : index
    %344 = memref.load %arg11[%c0_120, %c4_121] : memref<4x8xf32, #tpu.memory_space<smem>>
    %345 = vector.broadcast %344 : f32 to vector<16x16xf32>
    %346 = arith.mulf %343, %345 : vector<16x16xf32>
    %347 = vector.extract_strided_slice %3 {offsets = [1, 0, 0], sizes = [1, 16, 16], strides = [1, 1, 1]} : vector<4x16x16xf32> to vector<1x16x16xf32>
    %348 = vector.shape_cast %347 : vector<1x16x16xf32> to vector<16x16xf32>
    %c1_122 = arith.constant 1 : index
    %c4_123 = arith.constant 4 : index
    %349 = memref.load %arg11[%c1_122, %c4_123] : memref<4x8xf32, #tpu.memory_space<smem>>
    %350 = vector.broadcast %349 : f32 to vector<16x16xf32>
    %351 = arith.mulf %348, %350 : vector<16x16xf32>
    %352 = arith.addf %346, %351 : vector<16x16xf32>
    %353 = vector.extract_strided_slice %3 {offsets = [2, 0, 0], sizes = [1, 16, 16], strides = [1, 1, 1]} : vector<4x16x16xf32> to vector<1x16x16xf32>
    %354 = vector.shape_cast %353 : vector<1x16x16xf32> to vector<16x16xf32>
    %c2_124 = arith.constant 2 : index
    %c4_125 = arith.constant 4 : index
    %355 = memref.load %arg11[%c2_124, %c4_125] : memref<4x8xf32, #tpu.memory_space<smem>>
    %356 = vector.broadcast %355 : f32 to vector<16x16xf32>
    %357 = arith.mulf %354, %356 : vector<16x16xf32>
    %358 = arith.addf %352, %357 : vector<16x16xf32>
    %359 = vector.extract_strided_slice %3 {offsets = [3, 0, 0], sizes = [1, 16, 16], strides = [1, 1, 1]} : vector<4x16x16xf32> to vector<1x16x16xf32>
    %360 = vector.shape_cast %359 : vector<1x16x16xf32> to vector<16x16xf32>
    %c3_126 = arith.constant 3 : index
    %c4_127 = arith.constant 4 : index
    %361 = memref.load %arg11[%c3_126, %c4_127] : memref<4x8xf32, #tpu.memory_space<smem>>
    %362 = vector.broadcast %361 : f32 to vector<16x16xf32>
    %363 = arith.mulf %360, %362 : vector<16x16xf32>
    %364 = arith.addf %358, %363 : vector<16x16xf32>
    %c4_128 = arith.constant 4 : index
    %365 = memref.load %arg12[%c4_128] : memref<8xf32, #tpu.memory_space<smem>>
    %366 = vector.broadcast %365 : f32 to vector<16x16xf32>
    %367 = arith.addf %364, %366 : vector<16x16xf32>
    %368 = vector.extract_strided_slice %3 {offsets = [0, 0, 0], sizes = [1, 16, 16], strides = [1, 1, 1]} : vector<4x16x16xf32> to vector<1x16x16xf32>
    %369 = vector.shape_cast %368 : vector<1x16x16xf32> to vector<16x16xf32>
    %c0_129 = arith.constant 0 : index
    %c4_130 = arith.constant 4 : index
    %370 = memref.load %arg13[%c0_129, %c4_130] : memref<4x8xf32, #tpu.memory_space<smem>>
    %371 = vector.broadcast %370 : f32 to vector<16x16xf32>
    %372 = arith.mulf %369, %371 : vector<16x16xf32>
    %373 = vector.extract_strided_slice %3 {offsets = [1, 0, 0], sizes = [1, 16, 16], strides = [1, 1, 1]} : vector<4x16x16xf32> to vector<1x16x16xf32>
    %374 = vector.shape_cast %373 : vector<1x16x16xf32> to vector<16x16xf32>
    %c1_131 = arith.constant 1 : index
    %c4_132 = arith.constant 4 : index
    %375 = memref.load %arg13[%c1_131, %c4_132] : memref<4x8xf32, #tpu.memory_space<smem>>
    %376 = vector.broadcast %375 : f32 to vector<16x16xf32>
    %377 = arith.mulf %374, %376 : vector<16x16xf32>
    %378 = arith.addf %372, %377 : vector<16x16xf32>
    %379 = vector.extract_strided_slice %3 {offsets = [2, 0, 0], sizes = [1, 16, 16], strides = [1, 1, 1]} : vector<4x16x16xf32> to vector<1x16x16xf32>
    %380 = vector.shape_cast %379 : vector<1x16x16xf32> to vector<16x16xf32>
    %c2_133 = arith.constant 2 : index
    %c4_134 = arith.constant 4 : index
    %381 = memref.load %arg13[%c2_133, %c4_134] : memref<4x8xf32, #tpu.memory_space<smem>>
    %382 = vector.broadcast %381 : f32 to vector<16x16xf32>
    %383 = arith.mulf %380, %382 : vector<16x16xf32>
    %384 = arith.addf %378, %383 : vector<16x16xf32>
    %385 = vector.extract_strided_slice %3 {offsets = [3, 0, 0], sizes = [1, 16, 16], strides = [1, 1, 1]} : vector<4x16x16xf32> to vector<1x16x16xf32>
    %386 = vector.shape_cast %385 : vector<1x16x16xf32> to vector<16x16xf32>
    %c3_135 = arith.constant 3 : index
    %c4_136 = arith.constant 4 : index
    %387 = memref.load %arg13[%c3_135, %c4_136] : memref<4x8xf32, #tpu.memory_space<smem>>
    %388 = vector.broadcast %387 : f32 to vector<16x16xf32>
    %389 = arith.mulf %386, %388 : vector<16x16xf32>
    %390 = arith.addf %384, %389 : vector<16x16xf32>
    %c4_137 = arith.constant 4 : index
    %391 = memref.load %arg14[%c4_137] : memref<8xf32, #tpu.memory_space<smem>>
    %392 = vector.broadcast %391 : f32 to vector<16x16xf32>
    %393 = arith.addf %390, %392 : vector<16x16xf32>
    %394 = vector.extract_strided_slice %3 {offsets = [0, 0, 0], sizes = [1, 16, 16], strides = [1, 1, 1]} : vector<4x16x16xf32> to vector<1x16x16xf32>
    %395 = vector.shape_cast %394 : vector<1x16x16xf32> to vector<16x16xf32>
    %c0_138 = arith.constant 0 : index
    %c5 = arith.constant 5 : index
    %396 = memref.load %arg3[%c0_138, %c5] : memref<4x8xf32, #tpu.memory_space<smem>>
    %397 = vector.broadcast %396 : f32 to vector<16x16xf32>
    %398 = arith.mulf %395, %397 : vector<16x16xf32>
    %399 = vector.extract_strided_slice %3 {offsets = [1, 0, 0], sizes = [1, 16, 16], strides = [1, 1, 1]} : vector<4x16x16xf32> to vector<1x16x16xf32>
    %400 = vector.shape_cast %399 : vector<1x16x16xf32> to vector<16x16xf32>
    %c1_139 = arith.constant 1 : index
    %c5_140 = arith.constant 5 : index
    %401 = memref.load %arg3[%c1_139, %c5_140] : memref<4x8xf32, #tpu.memory_space<smem>>
    %402 = vector.broadcast %401 : f32 to vector<16x16xf32>
    %403 = arith.mulf %400, %402 : vector<16x16xf32>
    %404 = arith.addf %398, %403 : vector<16x16xf32>
    %405 = vector.extract_strided_slice %3 {offsets = [2, 0, 0], sizes = [1, 16, 16], strides = [1, 1, 1]} : vector<4x16x16xf32> to vector<1x16x16xf32>
    %406 = vector.shape_cast %405 : vector<1x16x16xf32> to vector<16x16xf32>
    %c2_141 = arith.constant 2 : index
    %c5_142 = arith.constant 5 : index
    %407 = memref.load %arg3[%c2_141, %c5_142] : memref<4x8xf32, #tpu.memory_space<smem>>
    %408 = vector.broadcast %407 : f32 to vector<16x16xf32>
    %409 = arith.mulf %406, %408 : vector<16x16xf32>
    %410 = arith.addf %404, %409 : vector<16x16xf32>
    %411 = vector.extract_strided_slice %3 {offsets = [3, 0, 0], sizes = [1, 16, 16], strides = [1, 1, 1]} : vector<4x16x16xf32> to vector<1x16x16xf32>
    %412 = vector.shape_cast %411 : vector<1x16x16xf32> to vector<16x16xf32>
    %c3_143 = arith.constant 3 : index
    %c5_144 = arith.constant 5 : index
    %413 = memref.load %arg3[%c3_143, %c5_144] : memref<4x8xf32, #tpu.memory_space<smem>>
    %414 = vector.broadcast %413 : f32 to vector<16x16xf32>
    %415 = arith.mulf %412, %414 : vector<16x16xf32>
    %416 = arith.addf %410, %415 : vector<16x16xf32>
    %c5_145 = arith.constant 5 : index
    %417 = memref.load %arg4[%c5_145] : memref<8xf32, #tpu.memory_space<smem>>
    %418 = vector.broadcast %417 : f32 to vector<16x16xf32>
    %419 = arith.addf %416, %418 : vector<16x16xf32>
    %420 = vector.extract_strided_slice %3 {offsets = [0, 0, 0], sizes = [1, 16, 16], strides = [1, 1, 1]} : vector<4x16x16xf32> to vector<1x16x16xf32>
    %421 = vector.shape_cast %420 : vector<1x16x16xf32> to vector<16x16xf32>
    %c0_146 = arith.constant 0 : index
    %c5_147 = arith.constant 5 : index
    %422 = memref.load %arg11[%c0_146, %c5_147] : memref<4x8xf32, #tpu.memory_space<smem>>
    %423 = vector.broadcast %422 : f32 to vector<16x16xf32>
    %424 = arith.mulf %421, %423 : vector<16x16xf32>
    %425 = vector.extract_strided_slice %3 {offsets = [1, 0, 0], sizes = [1, 16, 16], strides = [1, 1, 1]} : vector<4x16x16xf32> to vector<1x16x16xf32>
    %426 = vector.shape_cast %425 : vector<1x16x16xf32> to vector<16x16xf32>
    %c1_148 = arith.constant 1 : index
    %c5_149 = arith.constant 5 : index
    %427 = memref.load %arg11[%c1_148, %c5_149] : memref<4x8xf32, #tpu.memory_space<smem>>
    %428 = vector.broadcast %427 : f32 to vector<16x16xf32>
    %429 = arith.mulf %426, %428 : vector<16x16xf32>
    %430 = arith.addf %424, %429 : vector<16x16xf32>
    %431 = vector.extract_strided_slice %3 {offsets = [2, 0, 0], sizes = [1, 16, 16], strides = [1, 1, 1]} : vector<4x16x16xf32> to vector<1x16x16xf32>
    %432 = vector.shape_cast %431 : vector<1x16x16xf32> to vector<16x16xf32>
    %c2_150 = arith.constant 2 : index
    %c5_151 = arith.constant 5 : index
    %433 = memref.load %arg11[%c2_150, %c5_151] : memref<4x8xf32, #tpu.memory_space<smem>>
    %434 = vector.broadcast %433 : f32 to vector<16x16xf32>
    %435 = arith.mulf %432, %434 : vector<16x16xf32>
    %436 = arith.addf %430, %435 : vector<16x16xf32>
    %437 = vector.extract_strided_slice %3 {offsets = [3, 0, 0], sizes = [1, 16, 16], strides = [1, 1, 1]} : vector<4x16x16xf32> to vector<1x16x16xf32>
    %438 = vector.shape_cast %437 : vector<1x16x16xf32> to vector<16x16xf32>
    %c3_152 = arith.constant 3 : index
    %c5_153 = arith.constant 5 : index
    %439 = memref.load %arg11[%c3_152, %c5_153] : memref<4x8xf32, #tpu.memory_space<smem>>
    %440 = vector.broadcast %439 : f32 to vector<16x16xf32>
    %441 = arith.mulf %438, %440 : vector<16x16xf32>
    %442 = arith.addf %436, %441 : vector<16x16xf32>
    %c5_154 = arith.constant 5 : index
    %443 = memref.load %arg12[%c5_154] : memref<8xf32, #tpu.memory_space<smem>>
    %444 = vector.broadcast %443 : f32 to vector<16x16xf32>
    %445 = arith.addf %442, %444 : vector<16x16xf32>
    %446 = vector.extract_strided_slice %3 {offsets = [0, 0, 0], sizes = [1, 16, 16], strides = [1, 1, 1]} : vector<4x16x16xf32> to vector<1x16x16xf32>
    %447 = vector.shape_cast %446 : vector<1x16x16xf32> to vector<16x16xf32>
    %c0_155 = arith.constant 0 : index
    %c5_156 = arith.constant 5 : index
    %448 = memref.load %arg13[%c0_155, %c5_156] : memref<4x8xf32, #tpu.memory_space<smem>>
    %449 = vector.broadcast %448 : f32 to vector<16x16xf32>
    %450 = arith.mulf %447, %449 : vector<16x16xf32>
    %451 = vector.extract_strided_slice %3 {offsets = [1, 0, 0], sizes = [1, 16, 16], strides = [1, 1, 1]} : vector<4x16x16xf32> to vector<1x16x16xf32>
    %452 = vector.shape_cast %451 : vector<1x16x16xf32> to vector<16x16xf32>
    %c1_157 = arith.constant 1 : index
    %c5_158 = arith.constant 5 : index
    %453 = memref.load %arg13[%c1_157, %c5_158] : memref<4x8xf32, #tpu.memory_space<smem>>
    %454 = vector.broadcast %453 : f32 to vector<16x16xf32>
    %455 = arith.mulf %452, %454 : vector<16x16xf32>
    %456 = arith.addf %450, %455 : vector<16x16xf32>
    %457 = vector.extract_strided_slice %3 {offsets = [2, 0, 0], sizes = [1, 16, 16], strides = [1, 1, 1]} : vector<4x16x16xf32> to vector<1x16x16xf32>
    %458 = vector.shape_cast %457 : vector<1x16x16xf32> to vector<16x16xf32>
    %c2_159 = arith.constant 2 : index
    %c5_160 = arith.constant 5 : index
    %459 = memref.load %arg13[%c2_159, %c5_160] : memref<4x8xf32, #tpu.memory_space<smem>>
    %460 = vector.broadcast %459 : f32 to vector<16x16xf32>
    %461 = arith.mulf %458, %460 : vector<16x16xf32>
    %462 = arith.addf %456, %461 : vector<16x16xf32>
    %463 = vector.extract_strided_slice %3 {offsets = [3, 0, 0], sizes = [1, 16, 16], strides = [1, 1, 1]} : vector<4x16x16xf32> to vector<1x16x16xf32>
    %464 = vector.shape_cast %463 : vector<1x16x16xf32> to vector<16x16xf32>
    %c3_161 = arith.constant 3 : index
    %c5_162 = arith.constant 5 : index
    %465 = memref.load %arg13[%c3_161, %c5_162] : memref<4x8xf32, #tpu.memory_space<smem>>
    %466 = vector.broadcast %465 : f32 to vector<16x16xf32>
    %467 = arith.mulf %464, %466 : vector<16x16xf32>
    %468 = arith.addf %462, %467 : vector<16x16xf32>
    %c5_163 = arith.constant 5 : index
    %469 = memref.load %arg14[%c5_163] : memref<8xf32, #tpu.memory_space<smem>>
    %470 = vector.broadcast %469 : f32 to vector<16x16xf32>
    %471 = arith.addf %468, %470 : vector<16x16xf32>
    %472 = vector.extract_strided_slice %3 {offsets = [0, 0, 0], sizes = [1, 16, 16], strides = [1, 1, 1]} : vector<4x16x16xf32> to vector<1x16x16xf32>
    %473 = vector.shape_cast %472 : vector<1x16x16xf32> to vector<16x16xf32>
    %c0_164 = arith.constant 0 : index
    %c6 = arith.constant 6 : index
    %474 = memref.load %arg3[%c0_164, %c6] : memref<4x8xf32, #tpu.memory_space<smem>>
    %475 = vector.broadcast %474 : f32 to vector<16x16xf32>
    %476 = arith.mulf %473, %475 : vector<16x16xf32>
    %477 = vector.extract_strided_slice %3 {offsets = [1, 0, 0], sizes = [1, 16, 16], strides = [1, 1, 1]} : vector<4x16x16xf32> to vector<1x16x16xf32>
    %478 = vector.shape_cast %477 : vector<1x16x16xf32> to vector<16x16xf32>
    %c1_165 = arith.constant 1 : index
    %c6_166 = arith.constant 6 : index
    %479 = memref.load %arg3[%c1_165, %c6_166] : memref<4x8xf32, #tpu.memory_space<smem>>
    %480 = vector.broadcast %479 : f32 to vector<16x16xf32>
    %481 = arith.mulf %478, %480 : vector<16x16xf32>
    %482 = arith.addf %476, %481 : vector<16x16xf32>
    %483 = vector.extract_strided_slice %3 {offsets = [2, 0, 0], sizes = [1, 16, 16], strides = [1, 1, 1]} : vector<4x16x16xf32> to vector<1x16x16xf32>
    %484 = vector.shape_cast %483 : vector<1x16x16xf32> to vector<16x16xf32>
    %c2_167 = arith.constant 2 : index
    %c6_168 = arith.constant 6 : index
    %485 = memref.load %arg3[%c2_167, %c6_168] : memref<4x8xf32, #tpu.memory_space<smem>>
    %486 = vector.broadcast %485 : f32 to vector<16x16xf32>
    %487 = arith.mulf %484, %486 : vector<16x16xf32>
    %488 = arith.addf %482, %487 : vector<16x16xf32>
    %489 = vector.extract_strided_slice %3 {offsets = [3, 0, 0], sizes = [1, 16, 16], strides = [1, 1, 1]} : vector<4x16x16xf32> to vector<1x16x16xf32>
    %490 = vector.shape_cast %489 : vector<1x16x16xf32> to vector<16x16xf32>
    %c3_169 = arith.constant 3 : index
    %c6_170 = arith.constant 6 : index
    %491 = memref.load %arg3[%c3_169, %c6_170] : memref<4x8xf32, #tpu.memory_space<smem>>
    %492 = vector.broadcast %491 : f32 to vector<16x16xf32>
    %493 = arith.mulf %490, %492 : vector<16x16xf32>
    %494 = arith.addf %488, %493 : vector<16x16xf32>
    %c6_171 = arith.constant 6 : index
    %495 = memref.load %arg4[%c6_171] : memref<8xf32, #tpu.memory_space<smem>>
    %496 = vector.broadcast %495 : f32 to vector<16x16xf32>
    %497 = arith.addf %494, %496 : vector<16x16xf32>
    %498 = vector.extract_strided_slice %3 {offsets = [0, 0, 0], sizes = [1, 16, 16], strides = [1, 1, 1]} : vector<4x16x16xf32> to vector<1x16x16xf32>
    %499 = vector.shape_cast %498 : vector<1x16x16xf32> to vector<16x16xf32>
    %c0_172 = arith.constant 0 : index
    %c6_173 = arith.constant 6 : index
    %500 = memref.load %arg11[%c0_172, %c6_173] : memref<4x8xf32, #tpu.memory_space<smem>>
    %501 = vector.broadcast %500 : f32 to vector<16x16xf32>
    %502 = arith.mulf %499, %501 : vector<16x16xf32>
    %503 = vector.extract_strided_slice %3 {offsets = [1, 0, 0], sizes = [1, 16, 16], strides = [1, 1, 1]} : vector<4x16x16xf32> to vector<1x16x16xf32>
    %504 = vector.shape_cast %503 : vector<1x16x16xf32> to vector<16x16xf32>
    %c1_174 = arith.constant 1 : index
    %c6_175 = arith.constant 6 : index
    %505 = memref.load %arg11[%c1_174, %c6_175] : memref<4x8xf32, #tpu.memory_space<smem>>
    %506 = vector.broadcast %505 : f32 to vector<16x16xf32>
    %507 = arith.mulf %504, %506 : vector<16x16xf32>
    %508 = arith.addf %502, %507 : vector<16x16xf32>
    %509 = vector.extract_strided_slice %3 {offsets = [2, 0, 0], sizes = [1, 16, 16], strides = [1, 1, 1]} : vector<4x16x16xf32> to vector<1x16x16xf32>
    %510 = vector.shape_cast %509 : vector<1x16x16xf32> to vector<16x16xf32>
    %c2_176 = arith.constant 2 : index
    %c6_177 = arith.constant 6 : index
    %511 = memref.load %arg11[%c2_176, %c6_177] : memref<4x8xf32, #tpu.memory_space<smem>>
    %512 = vector.broadcast %511 : f32 to vector<16x16xf32>
    %513 = arith.mulf %510, %512 : vector<16x16xf32>
    %514 = arith.addf %508, %513 : vector<16x16xf32>
    %515 = vector.extract_strided_slice %3 {offsets = [3, 0, 0], sizes = [1, 16, 16], strides = [1, 1, 1]} : vector<4x16x16xf32> to vector<1x16x16xf32>
    %516 = vector.shape_cast %515 : vector<1x16x16xf32> to vector<16x16xf32>
    %c3_178 = arith.constant 3 : index
    %c6_179 = arith.constant 6 : index
    %517 = memref.load %arg11[%c3_178, %c6_179] : memref<4x8xf32, #tpu.memory_space<smem>>
    %518 = vector.broadcast %517 : f32 to vector<16x16xf32>
    %519 = arith.mulf %516, %518 : vector<16x16xf32>
    %520 = arith.addf %514, %519 : vector<16x16xf32>
    %c6_180 = arith.constant 6 : index
    %521 = memref.load %arg12[%c6_180] : memref<8xf32, #tpu.memory_space<smem>>
    %522 = vector.broadcast %521 : f32 to vector<16x16xf32>
    %523 = arith.addf %520, %522 : vector<16x16xf32>
    %524 = vector.extract_strided_slice %3 {offsets = [0, 0, 0], sizes = [1, 16, 16], strides = [1, 1, 1]} : vector<4x16x16xf32> to vector<1x16x16xf32>
    %525 = vector.shape_cast %524 : vector<1x16x16xf32> to vector<16x16xf32>
    %c0_181 = arith.constant 0 : index
    %c6_182 = arith.constant 6 : index
    %526 = memref.load %arg13[%c0_181, %c6_182] : memref<4x8xf32, #tpu.memory_space<smem>>
    %527 = vector.broadcast %526 : f32 to vector<16x16xf32>
    %528 = arith.mulf %525, %527 : vector<16x16xf32>
    %529 = vector.extract_strided_slice %3 {offsets = [1, 0, 0], sizes = [1, 16, 16], strides = [1, 1, 1]} : vector<4x16x16xf32> to vector<1x16x16xf32>
    %530 = vector.shape_cast %529 : vector<1x16x16xf32> to vector<16x16xf32>
    %c1_183 = arith.constant 1 : index
    %c6_184 = arith.constant 6 : index
    %531 = memref.load %arg13[%c1_183, %c6_184] : memref<4x8xf32, #tpu.memory_space<smem>>
    %532 = vector.broadcast %531 : f32 to vector<16x16xf32>
    %533 = arith.mulf %530, %532 : vector<16x16xf32>
    %534 = arith.addf %528, %533 : vector<16x16xf32>
    %535 = vector.extract_strided_slice %3 {offsets = [2, 0, 0], sizes = [1, 16, 16], strides = [1, 1, 1]} : vector<4x16x16xf32> to vector<1x16x16xf32>
    %536 = vector.shape_cast %535 : vector<1x16x16xf32> to vector<16x16xf32>
    %c2_185 = arith.constant 2 : index
    %c6_186 = arith.constant 6 : index
    %537 = memref.load %arg13[%c2_185, %c6_186] : memref<4x8xf32, #tpu.memory_space<smem>>
    %538 = vector.broadcast %537 : f32 to vector<16x16xf32>
    %539 = arith.mulf %536, %538 : vector<16x16xf32>
    %540 = arith.addf %534, %539 : vector<16x16xf32>
    %541 = vector.extract_strided_slice %3 {offsets = [3, 0, 0], sizes = [1, 16, 16], strides = [1, 1, 1]} : vector<4x16x16xf32> to vector<1x16x16xf32>
    %542 = vector.shape_cast %541 : vector<1x16x16xf32> to vector<16x16xf32>
    %c3_187 = arith.constant 3 : index
    %c6_188 = arith.constant 6 : index
    %543 = memref.load %arg13[%c3_187, %c6_188] : memref<4x8xf32, #tpu.memory_space<smem>>
    %544 = vector.broadcast %543 : f32 to vector<16x16xf32>
    %545 = arith.mulf %542, %544 : vector<16x16xf32>
    %546 = arith.addf %540, %545 : vector<16x16xf32>
    %c6_189 = arith.constant 6 : index
    %547 = memref.load %arg14[%c6_189] : memref<8xf32, #tpu.memory_space<smem>>
    %548 = vector.broadcast %547 : f32 to vector<16x16xf32>
    %549 = arith.addf %546, %548 : vector<16x16xf32>
    %550 = vector.extract_strided_slice %3 {offsets = [0, 0, 0], sizes = [1, 16, 16], strides = [1, 1, 1]} : vector<4x16x16xf32> to vector<1x16x16xf32>
    %551 = vector.shape_cast %550 : vector<1x16x16xf32> to vector<16x16xf32>
    %c0_190 = arith.constant 0 : index
    %c7 = arith.constant 7 : index
    %552 = memref.load %arg3[%c0_190, %c7] : memref<4x8xf32, #tpu.memory_space<smem>>
    %553 = vector.broadcast %552 : f32 to vector<16x16xf32>
    %554 = arith.mulf %551, %553 : vector<16x16xf32>
    %555 = vector.extract_strided_slice %3 {offsets = [1, 0, 0], sizes = [1, 16, 16], strides = [1, 1, 1]} : vector<4x16x16xf32> to vector<1x16x16xf32>
    %556 = vector.shape_cast %555 : vector<1x16x16xf32> to vector<16x16xf32>
    %c1_191 = arith.constant 1 : index
    %c7_192 = arith.constant 7 : index
    %557 = memref.load %arg3[%c1_191, %c7_192] : memref<4x8xf32, #tpu.memory_space<smem>>
    %558 = vector.broadcast %557 : f32 to vector<16x16xf32>
    %559 = arith.mulf %556, %558 : vector<16x16xf32>
    %560 = arith.addf %554, %559 : vector<16x16xf32>
    %561 = vector.extract_strided_slice %3 {offsets = [2, 0, 0], sizes = [1, 16, 16], strides = [1, 1, 1]} : vector<4x16x16xf32> to vector<1x16x16xf32>
    %562 = vector.shape_cast %561 : vector<1x16x16xf32> to vector<16x16xf32>
    %c2_193 = arith.constant 2 : index
    %c7_194 = arith.constant 7 : index
    %563 = memref.load %arg3[%c2_193, %c7_194] : memref<4x8xf32, #tpu.memory_space<smem>>
    %564 = vector.broadcast %563 : f32 to vector<16x16xf32>
    %565 = arith.mulf %562, %564 : vector<16x16xf32>
    %566 = arith.addf %560, %565 : vector<16x16xf32>
    %567 = vector.extract_strided_slice %3 {offsets = [3, 0, 0], sizes = [1, 16, 16], strides = [1, 1, 1]} : vector<4x16x16xf32> to vector<1x16x16xf32>
    %568 = vector.shape_cast %567 : vector<1x16x16xf32> to vector<16x16xf32>
    %c3_195 = arith.constant 3 : index
    %c7_196 = arith.constant 7 : index
    %569 = memref.load %arg3[%c3_195, %c7_196] : memref<4x8xf32, #tpu.memory_space<smem>>
    %570 = vector.broadcast %569 : f32 to vector<16x16xf32>
    %571 = arith.mulf %568, %570 : vector<16x16xf32>
    %572 = arith.addf %566, %571 : vector<16x16xf32>
    %c7_197 = arith.constant 7 : index
    %573 = memref.load %arg4[%c7_197] : memref<8xf32, #tpu.memory_space<smem>>
    %574 = vector.broadcast %573 : f32 to vector<16x16xf32>
    %575 = arith.addf %572, %574 : vector<16x16xf32>
    %576 = vector.extract_strided_slice %3 {offsets = [0, 0, 0], sizes = [1, 16, 16], strides = [1, 1, 1]} : vector<4x16x16xf32> to vector<1x16x16xf32>
    %577 = vector.shape_cast %576 : vector<1x16x16xf32> to vector<16x16xf32>
    %c0_198 = arith.constant 0 : index
    %c7_199 = arith.constant 7 : index
    %578 = memref.load %arg11[%c0_198, %c7_199] : memref<4x8xf32, #tpu.memory_space<smem>>
    %579 = vector.broadcast %578 : f32 to vector<16x16xf32>
    %580 = arith.mulf %577, %579 : vector<16x16xf32>
    %581 = vector.extract_strided_slice %3 {offsets = [1, 0, 0], sizes = [1, 16, 16], strides = [1, 1, 1]} : vector<4x16x16xf32> to vector<1x16x16xf32>
    %582 = vector.shape_cast %581 : vector<1x16x16xf32> to vector<16x16xf32>
    %c1_200 = arith.constant 1 : index
    %c7_201 = arith.constant 7 : index
    %583 = memref.load %arg11[%c1_200, %c7_201] : memref<4x8xf32, #tpu.memory_space<smem>>
    %584 = vector.broadcast %583 : f32 to vector<16x16xf32>
    %585 = arith.mulf %582, %584 : vector<16x16xf32>
    %586 = arith.addf %580, %585 : vector<16x16xf32>
    %587 = vector.extract_strided_slice %3 {offsets = [2, 0, 0], sizes = [1, 16, 16], strides = [1, 1, 1]} : vector<4x16x16xf32> to vector<1x16x16xf32>
    %588 = vector.shape_cast %587 : vector<1x16x16xf32> to vector<16x16xf32>
    %c2_202 = arith.constant 2 : index
    %c7_203 = arith.constant 7 : index
    %589 = memref.load %arg11[%c2_202, %c7_203] : memref<4x8xf32, #tpu.memory_space<smem>>
    %590 = vector.broadcast %589 : f32 to vector<16x16xf32>
    %591 = arith.mulf %588, %590 : vector<16x16xf32>
    %592 = arith.addf %586, %591 : vector<16x16xf32>
    %593 = vector.extract_strided_slice %3 {offsets = [3, 0, 0], sizes = [1, 16, 16], strides = [1, 1, 1]} : vector<4x16x16xf32> to vector<1x16x16xf32>
    %594 = vector.shape_cast %593 : vector<1x16x16xf32> to vector<16x16xf32>
    %c3_204 = arith.constant 3 : index
    %c7_205 = arith.constant 7 : index
    %595 = memref.load %arg11[%c3_204, %c7_205] : memref<4x8xf32, #tpu.memory_space<smem>>
    %596 = vector.broadcast %595 : f32 to vector<16x16xf32>
    %597 = arith.mulf %594, %596 : vector<16x16xf32>
    %598 = arith.addf %592, %597 : vector<16x16xf32>
    %c7_206 = arith.constant 7 : index
    %599 = memref.load %arg12[%c7_206] : memref<8xf32, #tpu.memory_space<smem>>
    %600 = vector.broadcast %599 : f32 to vector<16x16xf32>
    %601 = arith.addf %598, %600 : vector<16x16xf32>
    %602 = vector.extract_strided_slice %3 {offsets = [0, 0, 0], sizes = [1, 16, 16], strides = [1, 1, 1]} : vector<4x16x16xf32> to vector<1x16x16xf32>
    %603 = vector.shape_cast %602 : vector<1x16x16xf32> to vector<16x16xf32>
    %c0_207 = arith.constant 0 : index
    %c7_208 = arith.constant 7 : index
    %604 = memref.load %arg13[%c0_207, %c7_208] : memref<4x8xf32, #tpu.memory_space<smem>>
    %605 = vector.broadcast %604 : f32 to vector<16x16xf32>
    %606 = arith.mulf %603, %605 : vector<16x16xf32>
    %607 = vector.extract_strided_slice %3 {offsets = [1, 0, 0], sizes = [1, 16, 16], strides = [1, 1, 1]} : vector<4x16x16xf32> to vector<1x16x16xf32>
    %608 = vector.shape_cast %607 : vector<1x16x16xf32> to vector<16x16xf32>
    %c1_209 = arith.constant 1 : index
    %c7_210 = arith.constant 7 : index
    %609 = memref.load %arg13[%c1_209, %c7_210] : memref<4x8xf32, #tpu.memory_space<smem>>
    %610 = vector.broadcast %609 : f32 to vector<16x16xf32>
    %611 = arith.mulf %608, %610 : vector<16x16xf32>
    %612 = arith.addf %606, %611 : vector<16x16xf32>
    %613 = vector.extract_strided_slice %3 {offsets = [2, 0, 0], sizes = [1, 16, 16], strides = [1, 1, 1]} : vector<4x16x16xf32> to vector<1x16x16xf32>
    %614 = vector.shape_cast %613 : vector<1x16x16xf32> to vector<16x16xf32>
    %c2_211 = arith.constant 2 : index
    %c7_212 = arith.constant 7 : index
    %615 = memref.load %arg13[%c2_211, %c7_212] : memref<4x8xf32, #tpu.memory_space<smem>>
    %616 = vector.broadcast %615 : f32 to vector<16x16xf32>
    %617 = arith.mulf %614, %616 : vector<16x16xf32>
    %618 = arith.addf %612, %617 : vector<16x16xf32>
    %619 = vector.extract_strided_slice %3 {offsets = [3, 0, 0], sizes = [1, 16, 16], strides = [1, 1, 1]} : vector<4x16x16xf32> to vector<1x16x16xf32>
    %620 = vector.shape_cast %619 : vector<1x16x16xf32> to vector<16x16xf32>
    %c3_213 = arith.constant 3 : index
    %c7_214 = arith.constant 7 : index
    %621 = memref.load %arg13[%c3_213, %c7_214] : memref<4x8xf32, #tpu.memory_space<smem>>
    %622 = vector.broadcast %621 : f32 to vector<16x16xf32>
    %623 = arith.mulf %620, %622 : vector<16x16xf32>
    %624 = arith.addf %618, %623 : vector<16x16xf32>
    %c7_215 = arith.constant 7 : index
    %625 = memref.load %arg14[%c7_215] : memref<8xf32, #tpu.memory_space<smem>>
    %626 = vector.broadcast %625 : f32 to vector<16x16xf32>
    %627 = arith.addf %624, %626 : vector<16x16xf32>
    %628 = vector.extract_strided_slice %1 {offsets = [0, 0, 0], sizes = [1, 16, 16], strides = [1, 1, 1]} : vector<4x16x16xf32> to vector<1x16x16xf32>
    %629 = vector.shape_cast %628 : vector<1x16x16xf32> to vector<16x16xf32>
    %c0_216 = arith.constant 0 : index
    %c0_217 = arith.constant 0 : index
    %630 = memref.load %arg9[%c0_216, %c0_217] : memref<4x8xf32, #tpu.memory_space<smem>>
    %631 = vector.broadcast %630 : f32 to vector<16x16xf32>
    %632 = arith.mulf %629, %631 : vector<16x16xf32>
    %633 = vector.extract_strided_slice %1 {offsets = [1, 0, 0], sizes = [1, 16, 16], strides = [1, 1, 1]} : vector<4x16x16xf32> to vector<1x16x16xf32>
    %634 = vector.shape_cast %633 : vector<1x16x16xf32> to vector<16x16xf32>
    %c1_218 = arith.constant 1 : index
    %c0_219 = arith.constant 0 : index
    %635 = memref.load %arg9[%c1_218, %c0_219] : memref<4x8xf32, #tpu.memory_space<smem>>
    %636 = vector.broadcast %635 : f32 to vector<16x16xf32>
    %637 = arith.mulf %634, %636 : vector<16x16xf32>
    %638 = arith.addf %632, %637 : vector<16x16xf32>
    %639 = vector.extract_strided_slice %1 {offsets = [2, 0, 0], sizes = [1, 16, 16], strides = [1, 1, 1]} : vector<4x16x16xf32> to vector<1x16x16xf32>
    %640 = vector.shape_cast %639 : vector<1x16x16xf32> to vector<16x16xf32>
    %c2_220 = arith.constant 2 : index
    %c0_221 = arith.constant 0 : index
    %641 = memref.load %arg9[%c2_220, %c0_221] : memref<4x8xf32, #tpu.memory_space<smem>>
    %642 = vector.broadcast %641 : f32 to vector<16x16xf32>
    %643 = arith.mulf %640, %642 : vector<16x16xf32>
    %644 = arith.addf %638, %643 : vector<16x16xf32>
    %645 = vector.extract_strided_slice %1 {offsets = [3, 0, 0], sizes = [1, 16, 16], strides = [1, 1, 1]} : vector<4x16x16xf32> to vector<1x16x16xf32>
    %646 = vector.shape_cast %645 : vector<1x16x16xf32> to vector<16x16xf32>
    %c3_222 = arith.constant 3 : index
    %c0_223 = arith.constant 0 : index
    %647 = memref.load %arg9[%c3_222, %c0_223] : memref<4x8xf32, #tpu.memory_space<smem>>
    %648 = vector.broadcast %647 : f32 to vector<16x16xf32>
    %649 = arith.mulf %646, %648 : vector<16x16xf32>
    %650 = arith.addf %644, %649 : vector<16x16xf32>
    %c0_224 = arith.constant 0 : index
    %651 = memref.load %arg10[%c0_224] : memref<8xf32, #tpu.memory_space<smem>>
    %652 = vector.broadcast %651 : f32 to vector<16x16xf32>
    %653 = arith.addf %650, %652 : vector<16x16xf32>
    %654 = vector.extract_strided_slice %1 {offsets = [0, 0, 0], sizes = [1, 16, 16], strides = [1, 1, 1]} : vector<4x16x16xf32> to vector<1x16x16xf32>
    %655 = vector.shape_cast %654 : vector<1x16x16xf32> to vector<16x16xf32>
    %c0_225 = arith.constant 0 : index
    %c0_226 = arith.constant 0 : index
    %656 = memref.load %arg5[%c0_225, %c0_226] : memref<4x8xf32, #tpu.memory_space<smem>>
    %657 = vector.broadcast %656 : f32 to vector<16x16xf32>
    %658 = arith.mulf %655, %657 : vector<16x16xf32>
    %659 = vector.extract_strided_slice %1 {offsets = [1, 0, 0], sizes = [1, 16, 16], strides = [1, 1, 1]} : vector<4x16x16xf32> to vector<1x16x16xf32>
    %660 = vector.shape_cast %659 : vector<1x16x16xf32> to vector<16x16xf32>
    %c1_227 = arith.constant 1 : index
    %c0_228 = arith.constant 0 : index
    %661 = memref.load %arg5[%c1_227, %c0_228] : memref<4x8xf32, #tpu.memory_space<smem>>
    %662 = vector.broadcast %661 : f32 to vector<16x16xf32>
    %663 = arith.mulf %660, %662 : vector<16x16xf32>
    %664 = arith.addf %658, %663 : vector<16x16xf32>
    %665 = vector.extract_strided_slice %1 {offsets = [2, 0, 0], sizes = [1, 16, 16], strides = [1, 1, 1]} : vector<4x16x16xf32> to vector<1x16x16xf32>
    %666 = vector.shape_cast %665 : vector<1x16x16xf32> to vector<16x16xf32>
    %c2_229 = arith.constant 2 : index
    %c0_230 = arith.constant 0 : index
    %667 = memref.load %arg5[%c2_229, %c0_230] : memref<4x8xf32, #tpu.memory_space<smem>>
    %668 = vector.broadcast %667 : f32 to vector<16x16xf32>
    %669 = arith.mulf %666, %668 : vector<16x16xf32>
    %670 = arith.addf %664, %669 : vector<16x16xf32>
    %671 = vector.extract_strided_slice %1 {offsets = [3, 0, 0], sizes = [1, 16, 16], strides = [1, 1, 1]} : vector<4x16x16xf32> to vector<1x16x16xf32>
    %672 = vector.shape_cast %671 : vector<1x16x16xf32> to vector<16x16xf32>
    %c3_231 = arith.constant 3 : index
    %c0_232 = arith.constant 0 : index
    %673 = memref.load %arg5[%c3_231, %c0_232] : memref<4x8xf32, #tpu.memory_space<smem>>
    %674 = vector.broadcast %673 : f32 to vector<16x16xf32>
    %675 = arith.mulf %672, %674 : vector<16x16xf32>
    %676 = arith.addf %670, %675 : vector<16x16xf32>
    %c0_233 = arith.constant 0 : index
    %677 = memref.load %arg6[%c0_233] : memref<8xf32, #tpu.memory_space<smem>>
    %678 = vector.broadcast %677 : f32 to vector<16x16xf32>
    %679 = arith.addf %676, %678 : vector<16x16xf32>
    %680 = vector.extract_strided_slice %1 {offsets = [0, 0, 0], sizes = [1, 16, 16], strides = [1, 1, 1]} : vector<4x16x16xf32> to vector<1x16x16xf32>
    %681 = vector.shape_cast %680 : vector<1x16x16xf32> to vector<16x16xf32>
    %c0_234 = arith.constant 0 : index
    %c0_235 = arith.constant 0 : index
    %682 = memref.load %arg7[%c0_234, %c0_235] : memref<4x8xf32, #tpu.memory_space<smem>>
    %683 = vector.broadcast %682 : f32 to vector<16x16xf32>
    %684 = arith.mulf %681, %683 : vector<16x16xf32>
    %685 = vector.extract_strided_slice %1 {offsets = [1, 0, 0], sizes = [1, 16, 16], strides = [1, 1, 1]} : vector<4x16x16xf32> to vector<1x16x16xf32>
    %686 = vector.shape_cast %685 : vector<1x16x16xf32> to vector<16x16xf32>
    %c1_236 = arith.constant 1 : index
    %c0_237 = arith.constant 0 : index
    %687 = memref.load %arg7[%c1_236, %c0_237] : memref<4x8xf32, #tpu.memory_space<smem>>
    %688 = vector.broadcast %687 : f32 to vector<16x16xf32>
    %689 = arith.mulf %686, %688 : vector<16x16xf32>
    %690 = arith.addf %684, %689 : vector<16x16xf32>
    %691 = vector.extract_strided_slice %1 {offsets = [2, 0, 0], sizes = [1, 16, 16], strides = [1, 1, 1]} : vector<4x16x16xf32> to vector<1x16x16xf32>
    %692 = vector.shape_cast %691 : vector<1x16x16xf32> to vector<16x16xf32>
    %c2_238 = arith.constant 2 : index
    %c0_239 = arith.constant 0 : index
    %693 = memref.load %arg7[%c2_238, %c0_239] : memref<4x8xf32, #tpu.memory_space<smem>>
    %694 = vector.broadcast %693 : f32 to vector<16x16xf32>
    %695 = arith.mulf %692, %694 : vector<16x16xf32>
    %696 = arith.addf %690, %695 : vector<16x16xf32>
    %697 = vector.extract_strided_slice %1 {offsets = [3, 0, 0], sizes = [1, 16, 16], strides = [1, 1, 1]} : vector<4x16x16xf32> to vector<1x16x16xf32>
    %698 = vector.shape_cast %697 : vector<1x16x16xf32> to vector<16x16xf32>
    %c3_240 = arith.constant 3 : index
    %c0_241 = arith.constant 0 : index
    %699 = memref.load %arg7[%c3_240, %c0_241] : memref<4x8xf32, #tpu.memory_space<smem>>
    %700 = vector.broadcast %699 : f32 to vector<16x16xf32>
    %701 = arith.mulf %698, %700 : vector<16x16xf32>
    %702 = arith.addf %696, %701 : vector<16x16xf32>
    %c0_242 = arith.constant 0 : index
    %703 = memref.load %arg8[%c0_242] : memref<8xf32, #tpu.memory_space<smem>>
    %704 = vector.broadcast %703 : f32 to vector<16x16xf32>
    %705 = arith.addf %702, %704 : vector<16x16xf32>
    %706 = vector.extract_strided_slice %1 {offsets = [0, 0, 0], sizes = [1, 16, 16], strides = [1, 1, 1]} : vector<4x16x16xf32> to vector<1x16x16xf32>
    %707 = vector.shape_cast %706 : vector<1x16x16xf32> to vector<16x16xf32>
    %c0_243 = arith.constant 0 : index
    %c1_244 = arith.constant 1 : index
    %708 = memref.load %arg9[%c0_243, %c1_244] : memref<4x8xf32, #tpu.memory_space<smem>>
    %709 = vector.broadcast %708 : f32 to vector<16x16xf32>
    %710 = arith.mulf %707, %709 : vector<16x16xf32>
    %711 = vector.extract_strided_slice %1 {offsets = [1, 0, 0], sizes = [1, 16, 16], strides = [1, 1, 1]} : vector<4x16x16xf32> to vector<1x16x16xf32>
    %712 = vector.shape_cast %711 : vector<1x16x16xf32> to vector<16x16xf32>
    %c1_245 = arith.constant 1 : index
    %c1_246 = arith.constant 1 : index
    %713 = memref.load %arg9[%c1_245, %c1_246] : memref<4x8xf32, #tpu.memory_space<smem>>
    %714 = vector.broadcast %713 : f32 to vector<16x16xf32>
    %715 = arith.mulf %712, %714 : vector<16x16xf32>
    %716 = arith.addf %710, %715 : vector<16x16xf32>
    %717 = vector.extract_strided_slice %1 {offsets = [2, 0, 0], sizes = [1, 16, 16], strides = [1, 1, 1]} : vector<4x16x16xf32> to vector<1x16x16xf32>
    %718 = vector.shape_cast %717 : vector<1x16x16xf32> to vector<16x16xf32>
    %c2_247 = arith.constant 2 : index
    %c1_248 = arith.constant 1 : index
    %719 = memref.load %arg9[%c2_247, %c1_248] : memref<4x8xf32, #tpu.memory_space<smem>>
    %720 = vector.broadcast %719 : f32 to vector<16x16xf32>
    %721 = arith.mulf %718, %720 : vector<16x16xf32>
    %722 = arith.addf %716, %721 : vector<16x16xf32>
    %723 = vector.extract_strided_slice %1 {offsets = [3, 0, 0], sizes = [1, 16, 16], strides = [1, 1, 1]} : vector<4x16x16xf32> to vector<1x16x16xf32>
    %724 = vector.shape_cast %723 : vector<1x16x16xf32> to vector<16x16xf32>
    %c3_249 = arith.constant 3 : index
    %c1_250 = arith.constant 1 : index
    %725 = memref.load %arg9[%c3_249, %c1_250] : memref<4x8xf32, #tpu.memory_space<smem>>
    %726 = vector.broadcast %725 : f32 to vector<16x16xf32>
    %727 = arith.mulf %724, %726 : vector<16x16xf32>
    %728 = arith.addf %722, %727 : vector<16x16xf32>
    %c1_251 = arith.constant 1 : index
    %729 = memref.load %arg10[%c1_251] : memref<8xf32, #tpu.memory_space<smem>>
    %730 = vector.broadcast %729 : f32 to vector<16x16xf32>
    %731 = arith.addf %728, %730 : vector<16x16xf32>
    %732 = vector.extract_strided_slice %1 {offsets = [0, 0, 0], sizes = [1, 16, 16], strides = [1, 1, 1]} : vector<4x16x16xf32> to vector<1x16x16xf32>
    %733 = vector.shape_cast %732 : vector<1x16x16xf32> to vector<16x16xf32>
    %c0_252 = arith.constant 0 : index
    %c1_253 = arith.constant 1 : index
    %734 = memref.load %arg5[%c0_252, %c1_253] : memref<4x8xf32, #tpu.memory_space<smem>>
    %735 = vector.broadcast %734 : f32 to vector<16x16xf32>
    %736 = arith.mulf %733, %735 : vector<16x16xf32>
    %737 = vector.extract_strided_slice %1 {offsets = [1, 0, 0], sizes = [1, 16, 16], strides = [1, 1, 1]} : vector<4x16x16xf32> to vector<1x16x16xf32>
    %738 = vector.shape_cast %737 : vector<1x16x16xf32> to vector<16x16xf32>
    %c1_254 = arith.constant 1 : index
    %c1_255 = arith.constant 1 : index
    %739 = memref.load %arg5[%c1_254, %c1_255] : memref<4x8xf32, #tpu.memory_space<smem>>
    %740 = vector.broadcast %739 : f32 to vector<16x16xf32>
    %741 = arith.mulf %738, %740 : vector<16x16xf32>
    %742 = arith.addf %736, %741 : vector<16x16xf32>
    %743 = vector.extract_strided_slice %1 {offsets = [2, 0, 0], sizes = [1, 16, 16], strides = [1, 1, 1]} : vector<4x16x16xf32> to vector<1x16x16xf32>
    %744 = vector.shape_cast %743 : vector<1x16x16xf32> to vector<16x16xf32>
    %c2_256 = arith.constant 2 : index
    %c1_257 = arith.constant 1 : index
    %745 = memref.load %arg5[%c2_256, %c1_257] : memref<4x8xf32, #tpu.memory_space<smem>>
    %746 = vector.broadcast %745 : f32 to vector<16x16xf32>
    %747 = arith.mulf %744, %746 : vector<16x16xf32>
    %748 = arith.addf %742, %747 : vector<16x16xf32>
    %749 = vector.extract_strided_slice %1 {offsets = [3, 0, 0], sizes = [1, 16, 16], strides = [1, 1, 1]} : vector<4x16x16xf32> to vector<1x16x16xf32>
    %750 = vector.shape_cast %749 : vector<1x16x16xf32> to vector<16x16xf32>
    %c3_258 = arith.constant 3 : index
    %c1_259 = arith.constant 1 : index
    %751 = memref.load %arg5[%c3_258, %c1_259] : memref<4x8xf32, #tpu.memory_space<smem>>
    %752 = vector.broadcast %751 : f32 to vector<16x16xf32>
    %753 = arith.mulf %750, %752 : vector<16x16xf32>
    %754 = arith.addf %748, %753 : vector<16x16xf32>
    %c1_260 = arith.constant 1 : index
    %755 = memref.load %arg6[%c1_260] : memref<8xf32, #tpu.memory_space<smem>>
    %756 = vector.broadcast %755 : f32 to vector<16x16xf32>
    %757 = arith.addf %754, %756 : vector<16x16xf32>
    %758 = vector.extract_strided_slice %1 {offsets = [0, 0, 0], sizes = [1, 16, 16], strides = [1, 1, 1]} : vector<4x16x16xf32> to vector<1x16x16xf32>
    %759 = vector.shape_cast %758 : vector<1x16x16xf32> to vector<16x16xf32>
    %c0_261 = arith.constant 0 : index
    %c1_262 = arith.constant 1 : index
    %760 = memref.load %arg7[%c0_261, %c1_262] : memref<4x8xf32, #tpu.memory_space<smem>>
    %761 = vector.broadcast %760 : f32 to vector<16x16xf32>
    %762 = arith.mulf %759, %761 : vector<16x16xf32>
    %763 = vector.extract_strided_slice %1 {offsets = [1, 0, 0], sizes = [1, 16, 16], strides = [1, 1, 1]} : vector<4x16x16xf32> to vector<1x16x16xf32>
    %764 = vector.shape_cast %763 : vector<1x16x16xf32> to vector<16x16xf32>
    %c1_263 = arith.constant 1 : index
    %c1_264 = arith.constant 1 : index
    %765 = memref.load %arg7[%c1_263, %c1_264] : memref<4x8xf32, #tpu.memory_space<smem>>
    %766 = vector.broadcast %765 : f32 to vector<16x16xf32>
    %767 = arith.mulf %764, %766 : vector<16x16xf32>
    %768 = arith.addf %762, %767 : vector<16x16xf32>
    %769 = vector.extract_strided_slice %1 {offsets = [2, 0, 0], sizes = [1, 16, 16], strides = [1, 1, 1]} : vector<4x16x16xf32> to vector<1x16x16xf32>
    %770 = vector.shape_cast %769 : vector<1x16x16xf32> to vector<16x16xf32>
    %c2_265 = arith.constant 2 : index
    %c1_266 = arith.constant 1 : index
    %771 = memref.load %arg7[%c2_265, %c1_266] : memref<4x8xf32, #tpu.memory_space<smem>>
    %772 = vector.broadcast %771 : f32 to vector<16x16xf32>
    %773 = arith.mulf %770, %772 : vector<16x16xf32>
    %774 = arith.addf %768, %773 : vector<16x16xf32>
    %775 = vector.extract_strided_slice %1 {offsets = [3, 0, 0], sizes = [1, 16, 16], strides = [1, 1, 1]} : vector<4x16x16xf32> to vector<1x16x16xf32>
    %776 = vector.shape_cast %775 : vector<1x16x16xf32> to vector<16x16xf32>
    %c3_267 = arith.constant 3 : index
    %c1_268 = arith.constant 1 : index
    %777 = memref.load %arg7[%c3_267, %c1_268] : memref<4x8xf32, #tpu.memory_space<smem>>
    %778 = vector.broadcast %777 : f32 to vector<16x16xf32>
    %779 = arith.mulf %776, %778 : vector<16x16xf32>
    %780 = arith.addf %774, %779 : vector<16x16xf32>
    %c1_269 = arith.constant 1 : index
    %781 = memref.load %arg8[%c1_269] : memref<8xf32, #tpu.memory_space<smem>>
    %782 = vector.broadcast %781 : f32 to vector<16x16xf32>
    %783 = arith.addf %780, %782 : vector<16x16xf32>
    %784 = vector.extract_strided_slice %1 {offsets = [0, 0, 0], sizes = [1, 16, 16], strides = [1, 1, 1]} : vector<4x16x16xf32> to vector<1x16x16xf32>
    %785 = vector.shape_cast %784 : vector<1x16x16xf32> to vector<16x16xf32>
    %c0_270 = arith.constant 0 : index
    %c2_271 = arith.constant 2 : index
    %786 = memref.load %arg9[%c0_270, %c2_271] : memref<4x8xf32, #tpu.memory_space<smem>>
    %787 = vector.broadcast %786 : f32 to vector<16x16xf32>
    %788 = arith.mulf %785, %787 : vector<16x16xf32>
    %789 = vector.extract_strided_slice %1 {offsets = [1, 0, 0], sizes = [1, 16, 16], strides = [1, 1, 1]} : vector<4x16x16xf32> to vector<1x16x16xf32>
    %790 = vector.shape_cast %789 : vector<1x16x16xf32> to vector<16x16xf32>
    %c1_272 = arith.constant 1 : index
    %c2_273 = arith.constant 2 : index
    %791 = memref.load %arg9[%c1_272, %c2_273] : memref<4x8xf32, #tpu.memory_space<smem>>
    %792 = vector.broadcast %791 : f32 to vector<16x16xf32>
    %793 = arith.mulf %790, %792 : vector<16x16xf32>
    %794 = arith.addf %788, %793 : vector<16x16xf32>
    %795 = vector.extract_strided_slice %1 {offsets = [2, 0, 0], sizes = [1, 16, 16], strides = [1, 1, 1]} : vector<4x16x16xf32> to vector<1x16x16xf32>
    %796 = vector.shape_cast %795 : vector<1x16x16xf32> to vector<16x16xf32>
    %c2_274 = arith.constant 2 : index
    %c2_275 = arith.constant 2 : index
    %797 = memref.load %arg9[%c2_274, %c2_275] : memref<4x8xf32, #tpu.memory_space<smem>>
    %798 = vector.broadcast %797 : f32 to vector<16x16xf32>
    %799 = arith.mulf %796, %798 : vector<16x16xf32>
    %800 = arith.addf %794, %799 : vector<16x16xf32>
    %801 = vector.extract_strided_slice %1 {offsets = [3, 0, 0], sizes = [1, 16, 16], strides = [1, 1, 1]} : vector<4x16x16xf32> to vector<1x16x16xf32>
    %802 = vector.shape_cast %801 : vector<1x16x16xf32> to vector<16x16xf32>
    %c3_276 = arith.constant 3 : index
    %c2_277 = arith.constant 2 : index
    %803 = memref.load %arg9[%c3_276, %c2_277] : memref<4x8xf32, #tpu.memory_space<smem>>
    %804 = vector.broadcast %803 : f32 to vector<16x16xf32>
    %805 = arith.mulf %802, %804 : vector<16x16xf32>
    %806 = arith.addf %800, %805 : vector<16x16xf32>
    %c2_278 = arith.constant 2 : index
    %807 = memref.load %arg10[%c2_278] : memref<8xf32, #tpu.memory_space<smem>>
    %808 = vector.broadcast %807 : f32 to vector<16x16xf32>
    %809 = arith.addf %806, %808 : vector<16x16xf32>
    %810 = vector.extract_strided_slice %1 {offsets = [0, 0, 0], sizes = [1, 16, 16], strides = [1, 1, 1]} : vector<4x16x16xf32> to vector<1x16x16xf32>
    %811 = vector.shape_cast %810 : vector<1x16x16xf32> to vector<16x16xf32>
    %c0_279 = arith.constant 0 : index
    %c2_280 = arith.constant 2 : index
    %812 = memref.load %arg5[%c0_279, %c2_280] : memref<4x8xf32, #tpu.memory_space<smem>>
    %813 = vector.broadcast %812 : f32 to vector<16x16xf32>
    %814 = arith.mulf %811, %813 : vector<16x16xf32>
    %815 = vector.extract_strided_slice %1 {offsets = [1, 0, 0], sizes = [1, 16, 16], strides = [1, 1, 1]} : vector<4x16x16xf32> to vector<1x16x16xf32>
    %816 = vector.shape_cast %815 : vector<1x16x16xf32> to vector<16x16xf32>
    %c1_281 = arith.constant 1 : index
    %c2_282 = arith.constant 2 : index
    %817 = memref.load %arg5[%c1_281, %c2_282] : memref<4x8xf32, #tpu.memory_space<smem>>
    %818 = vector.broadcast %817 : f32 to vector<16x16xf32>
    %819 = arith.mulf %816, %818 : vector<16x16xf32>
    %820 = arith.addf %814, %819 : vector<16x16xf32>
    %821 = vector.extract_strided_slice %1 {offsets = [2, 0, 0], sizes = [1, 16, 16], strides = [1, 1, 1]} : vector<4x16x16xf32> to vector<1x16x16xf32>
    %822 = vector.shape_cast %821 : vector<1x16x16xf32> to vector<16x16xf32>
    %c2_283 = arith.constant 2 : index
    %c2_284 = arith.constant 2 : index
    %823 = memref.load %arg5[%c2_283, %c2_284] : memref<4x8xf32, #tpu.memory_space<smem>>
    %824 = vector.broadcast %823 : f32 to vector<16x16xf32>
    %825 = arith.mulf %822, %824 : vector<16x16xf32>
    %826 = arith.addf %820, %825 : vector<16x16xf32>
    %827 = vector.extract_strided_slice %1 {offsets = [3, 0, 0], sizes = [1, 16, 16], strides = [1, 1, 1]} : vector<4x16x16xf32> to vector<1x16x16xf32>
    %828 = vector.shape_cast %827 : vector<1x16x16xf32> to vector<16x16xf32>
    %c3_285 = arith.constant 3 : index
    %c2_286 = arith.constant 2 : index
    %829 = memref.load %arg5[%c3_285, %c2_286] : memref<4x8xf32, #tpu.memory_space<smem>>
    %830 = vector.broadcast %829 : f32 to vector<16x16xf32>
    %831 = arith.mulf %828, %830 : vector<16x16xf32>
    %832 = arith.addf %826, %831 : vector<16x16xf32>
    %c2_287 = arith.constant 2 : index
    %833 = memref.load %arg6[%c2_287] : memref<8xf32, #tpu.memory_space<smem>>
    %834 = vector.broadcast %833 : f32 to vector<16x16xf32>
    %835 = arith.addf %832, %834 : vector<16x16xf32>
    %836 = vector.extract_strided_slice %1 {offsets = [0, 0, 0], sizes = [1, 16, 16], strides = [1, 1, 1]} : vector<4x16x16xf32> to vector<1x16x16xf32>
    %837 = vector.shape_cast %836 : vector<1x16x16xf32> to vector<16x16xf32>
    %c0_288 = arith.constant 0 : index
    %c2_289 = arith.constant 2 : index
    %838 = memref.load %arg7[%c0_288, %c2_289] : memref<4x8xf32, #tpu.memory_space<smem>>
    %839 = vector.broadcast %838 : f32 to vector<16x16xf32>
    %840 = arith.mulf %837, %839 : vector<16x16xf32>
    %841 = vector.extract_strided_slice %1 {offsets = [1, 0, 0], sizes = [1, 16, 16], strides = [1, 1, 1]} : vector<4x16x16xf32> to vector<1x16x16xf32>
    %842 = vector.shape_cast %841 : vector<1x16x16xf32> to vector<16x16xf32>
    %c1_290 = arith.constant 1 : index
    %c2_291 = arith.constant 2 : index
    %843 = memref.load %arg7[%c1_290, %c2_291] : memref<4x8xf32, #tpu.memory_space<smem>>
    %844 = vector.broadcast %843 : f32 to vector<16x16xf32>
    %845 = arith.mulf %842, %844 : vector<16x16xf32>
    %846 = arith.addf %840, %845 : vector<16x16xf32>
    %847 = vector.extract_strided_slice %1 {offsets = [2, 0, 0], sizes = [1, 16, 16], strides = [1, 1, 1]} : vector<4x16x16xf32> to vector<1x16x16xf32>
    %848 = vector.shape_cast %847 : vector<1x16x16xf32> to vector<16x16xf32>
    %c2_292 = arith.constant 2 : index
    %c2_293 = arith.constant 2 : index
    %849 = memref.load %arg7[%c2_292, %c2_293] : memref<4x8xf32, #tpu.memory_space<smem>>
    %850 = vector.broadcast %849 : f32 to vector<16x16xf32>
    %851 = arith.mulf %848, %850 : vector<16x16xf32>
    %852 = arith.addf %846, %851 : vector<16x16xf32>
    %853 = vector.extract_strided_slice %1 {offsets = [3, 0, 0], sizes = [1, 16, 16], strides = [1, 1, 1]} : vector<4x16x16xf32> to vector<1x16x16xf32>
    %854 = vector.shape_cast %853 : vector<1x16x16xf32> to vector<16x16xf32>
    %c3_294 = arith.constant 3 : index
    %c2_295 = arith.constant 2 : index
    %855 = memref.load %arg7[%c3_294, %c2_295] : memref<4x8xf32, #tpu.memory_space<smem>>
    %856 = vector.broadcast %855 : f32 to vector<16x16xf32>
    %857 = arith.mulf %854, %856 : vector<16x16xf32>
    %858 = arith.addf %852, %857 : vector<16x16xf32>
    %c2_296 = arith.constant 2 : index
    %859 = memref.load %arg8[%c2_296] : memref<8xf32, #tpu.memory_space<smem>>
    %860 = vector.broadcast %859 : f32 to vector<16x16xf32>
    %861 = arith.addf %858, %860 : vector<16x16xf32>
    %862 = vector.extract_strided_slice %1 {offsets = [0, 0, 0], sizes = [1, 16, 16], strides = [1, 1, 1]} : vector<4x16x16xf32> to vector<1x16x16xf32>
    %863 = vector.shape_cast %862 : vector<1x16x16xf32> to vector<16x16xf32>
    %c0_297 = arith.constant 0 : index
    %c3_298 = arith.constant 3 : index
    %864 = memref.load %arg9[%c0_297, %c3_298] : memref<4x8xf32, #tpu.memory_space<smem>>
    %865 = vector.broadcast %864 : f32 to vector<16x16xf32>
    %866 = arith.mulf %863, %865 : vector<16x16xf32>
    %867 = vector.extract_strided_slice %1 {offsets = [1, 0, 0], sizes = [1, 16, 16], strides = [1, 1, 1]} : vector<4x16x16xf32> to vector<1x16x16xf32>
    %868 = vector.shape_cast %867 : vector<1x16x16xf32> to vector<16x16xf32>
    %c1_299 = arith.constant 1 : index
    %c3_300 = arith.constant 3 : index
    %869 = memref.load %arg9[%c1_299, %c3_300] : memref<4x8xf32, #tpu.memory_space<smem>>
    %870 = vector.broadcast %869 : f32 to vector<16x16xf32>
    %871 = arith.mulf %868, %870 : vector<16x16xf32>
    %872 = arith.addf %866, %871 : vector<16x16xf32>
    %873 = vector.extract_strided_slice %1 {offsets = [2, 0, 0], sizes = [1, 16, 16], strides = [1, 1, 1]} : vector<4x16x16xf32> to vector<1x16x16xf32>
    %874 = vector.shape_cast %873 : vector<1x16x16xf32> to vector<16x16xf32>
    %c2_301 = arith.constant 2 : index
    %c3_302 = arith.constant 3 : index
    %875 = memref.load %arg9[%c2_301, %c3_302] : memref<4x8xf32, #tpu.memory_space<smem>>
    %876 = vector.broadcast %875 : f32 to vector<16x16xf32>
    %877 = arith.mulf %874, %876 : vector<16x16xf32>
    %878 = arith.addf %872, %877 : vector<16x16xf32>
    %879 = vector.extract_strided_slice %1 {offsets = [3, 0, 0], sizes = [1, 16, 16], strides = [1, 1, 1]} : vector<4x16x16xf32> to vector<1x16x16xf32>
    %880 = vector.shape_cast %879 : vector<1x16x16xf32> to vector<16x16xf32>
    %c3_303 = arith.constant 3 : index
    %c3_304 = arith.constant 3 : index
    %881 = memref.load %arg9[%c3_303, %c3_304] : memref<4x8xf32, #tpu.memory_space<smem>>
    %882 = vector.broadcast %881 : f32 to vector<16x16xf32>
    %883 = arith.mulf %880, %882 : vector<16x16xf32>
    %884 = arith.addf %878, %883 : vector<16x16xf32>
    %c3_305 = arith.constant 3 : index
    %885 = memref.load %arg10[%c3_305] : memref<8xf32, #tpu.memory_space<smem>>
    %886 = vector.broadcast %885 : f32 to vector<16x16xf32>
    %887 = arith.addf %884, %886 : vector<16x16xf32>
    %888 = vector.extract_strided_slice %1 {offsets = [0, 0, 0], sizes = [1, 16, 16], strides = [1, 1, 1]} : vector<4x16x16xf32> to vector<1x16x16xf32>
    %889 = vector.shape_cast %888 : vector<1x16x16xf32> to vector<16x16xf32>
    %c0_306 = arith.constant 0 : index
    %c3_307 = arith.constant 3 : index
    %890 = memref.load %arg5[%c0_306, %c3_307] : memref<4x8xf32, #tpu.memory_space<smem>>
    %891 = vector.broadcast %890 : f32 to vector<16x16xf32>
    %892 = arith.mulf %889, %891 : vector<16x16xf32>
    %893 = vector.extract_strided_slice %1 {offsets = [1, 0, 0], sizes = [1, 16, 16], strides = [1, 1, 1]} : vector<4x16x16xf32> to vector<1x16x16xf32>
    %894 = vector.shape_cast %893 : vector<1x16x16xf32> to vector<16x16xf32>
    %c1_308 = arith.constant 1 : index
    %c3_309 = arith.constant 3 : index
    %895 = memref.load %arg5[%c1_308, %c3_309] : memref<4x8xf32, #tpu.memory_space<smem>>
    %896 = vector.broadcast %895 : f32 to vector<16x16xf32>
    %897 = arith.mulf %894, %896 : vector<16x16xf32>
    %898 = arith.addf %892, %897 : vector<16x16xf32>
    %899 = vector.extract_strided_slice %1 {offsets = [2, 0, 0], sizes = [1, 16, 16], strides = [1, 1, 1]} : vector<4x16x16xf32> to vector<1x16x16xf32>
    %900 = vector.shape_cast %899 : vector<1x16x16xf32> to vector<16x16xf32>
    %c2_310 = arith.constant 2 : index
    %c3_311 = arith.constant 3 : index
    %901 = memref.load %arg5[%c2_310, %c3_311] : memref<4x8xf32, #tpu.memory_space<smem>>
    %902 = vector.broadcast %901 : f32 to vector<16x16xf32>
    %903 = arith.mulf %900, %902 : vector<16x16xf32>
    %904 = arith.addf %898, %903 : vector<16x16xf32>
    %905 = vector.extract_strided_slice %1 {offsets = [3, 0, 0], sizes = [1, 16, 16], strides = [1, 1, 1]} : vector<4x16x16xf32> to vector<1x16x16xf32>
    %906 = vector.shape_cast %905 : vector<1x16x16xf32> to vector<16x16xf32>
    %c3_312 = arith.constant 3 : index
    %c3_313 = arith.constant 3 : index
    %907 = memref.load %arg5[%c3_312, %c3_313] : memref<4x8xf32, #tpu.memory_space<smem>>
    %908 = vector.broadcast %907 : f32 to vector<16x16xf32>
    %909 = arith.mulf %906, %908 : vector<16x16xf32>
    %910 = arith.addf %904, %909 : vector<16x16xf32>
    %c3_314 = arith.constant 3 : index
    %911 = memref.load %arg6[%c3_314] : memref<8xf32, #tpu.memory_space<smem>>
    %912 = vector.broadcast %911 : f32 to vector<16x16xf32>
    %913 = arith.addf %910, %912 : vector<16x16xf32>
    %914 = vector.extract_strided_slice %1 {offsets = [0, 0, 0], sizes = [1, 16, 16], strides = [1, 1, 1]} : vector<4x16x16xf32> to vector<1x16x16xf32>
    %915 = vector.shape_cast %914 : vector<1x16x16xf32> to vector<16x16xf32>
    %c0_315 = arith.constant 0 : index
    %c3_316 = arith.constant 3 : index
    %916 = memref.load %arg7[%c0_315, %c3_316] : memref<4x8xf32, #tpu.memory_space<smem>>
    %917 = vector.broadcast %916 : f32 to vector<16x16xf32>
    %918 = arith.mulf %915, %917 : vector<16x16xf32>
    %919 = vector.extract_strided_slice %1 {offsets = [1, 0, 0], sizes = [1, 16, 16], strides = [1, 1, 1]} : vector<4x16x16xf32> to vector<1x16x16xf32>
    %920 = vector.shape_cast %919 : vector<1x16x16xf32> to vector<16x16xf32>
    %c1_317 = arith.constant 1 : index
    %c3_318 = arith.constant 3 : index
    %921 = memref.load %arg7[%c1_317, %c3_318] : memref<4x8xf32, #tpu.memory_space<smem>>
    %922 = vector.broadcast %921 : f32 to vector<16x16xf32>
    %923 = arith.mulf %920, %922 : vector<16x16xf32>
    %924 = arith.addf %918, %923 : vector<16x16xf32>
    %925 = vector.extract_strided_slice %1 {offsets = [2, 0, 0], sizes = [1, 16, 16], strides = [1, 1, 1]} : vector<4x16x16xf32> to vector<1x16x16xf32>
    %926 = vector.shape_cast %925 : vector<1x16x16xf32> to vector<16x16xf32>
    %c2_319 = arith.constant 2 : index
    %c3_320 = arith.constant 3 : index
    %927 = memref.load %arg7[%c2_319, %c3_320] : memref<4x8xf32, #tpu.memory_space<smem>>
    %928 = vector.broadcast %927 : f32 to vector<16x16xf32>
    %929 = arith.mulf %926, %928 : vector<16x16xf32>
    %930 = arith.addf %924, %929 : vector<16x16xf32>
    %931 = vector.extract_strided_slice %1 {offsets = [3, 0, 0], sizes = [1, 16, 16], strides = [1, 1, 1]} : vector<4x16x16xf32> to vector<1x16x16xf32>
    %932 = vector.shape_cast %931 : vector<1x16x16xf32> to vector<16x16xf32>
    %c3_321 = arith.constant 3 : index
    %c3_322 = arith.constant 3 : index
    %933 = memref.load %arg7[%c3_321, %c3_322] : memref<4x8xf32, #tpu.memory_space<smem>>
    %934 = vector.broadcast %933 : f32 to vector<16x16xf32>
    %935 = arith.mulf %932, %934 : vector<16x16xf32>
    %936 = arith.addf %930, %935 : vector<16x16xf32>
    %c3_323 = arith.constant 3 : index
    %937 = memref.load %arg8[%c3_323] : memref<8xf32, #tpu.memory_space<smem>>
    %938 = vector.broadcast %937 : f32 to vector<16x16xf32>
    %939 = arith.addf %936, %938 : vector<16x16xf32>
    %940 = vector.extract_strided_slice %1 {offsets = [0, 0, 0], sizes = [1, 16, 16], strides = [1, 1, 1]} : vector<4x16x16xf32> to vector<1x16x16xf32>
    %941 = vector.shape_cast %940 : vector<1x16x16xf32> to vector<16x16xf32>
    %c0_324 = arith.constant 0 : index
    %c4_325 = arith.constant 4 : index
    %942 = memref.load %arg9[%c0_324, %c4_325] : memref<4x8xf32, #tpu.memory_space<smem>>
    %943 = vector.broadcast %942 : f32 to vector<16x16xf32>
    %944 = arith.mulf %941, %943 : vector<16x16xf32>
    %945 = vector.extract_strided_slice %1 {offsets = [1, 0, 0], sizes = [1, 16, 16], strides = [1, 1, 1]} : vector<4x16x16xf32> to vector<1x16x16xf32>
    %946 = vector.shape_cast %945 : vector<1x16x16xf32> to vector<16x16xf32>
    %c1_326 = arith.constant 1 : index
    %c4_327 = arith.constant 4 : index
    %947 = memref.load %arg9[%c1_326, %c4_327] : memref<4x8xf32, #tpu.memory_space<smem>>
    %948 = vector.broadcast %947 : f32 to vector<16x16xf32>
    %949 = arith.mulf %946, %948 : vector<16x16xf32>
    %950 = arith.addf %944, %949 : vector<16x16xf32>
    %951 = vector.extract_strided_slice %1 {offsets = [2, 0, 0], sizes = [1, 16, 16], strides = [1, 1, 1]} : vector<4x16x16xf32> to vector<1x16x16xf32>
    %952 = vector.shape_cast %951 : vector<1x16x16xf32> to vector<16x16xf32>
    %c2_328 = arith.constant 2 : index
    %c4_329 = arith.constant 4 : index
    %953 = memref.load %arg9[%c2_328, %c4_329] : memref<4x8xf32, #tpu.memory_space<smem>>
    %954 = vector.broadcast %953 : f32 to vector<16x16xf32>
    %955 = arith.mulf %952, %954 : vector<16x16xf32>
    %956 = arith.addf %950, %955 : vector<16x16xf32>
    %957 = vector.extract_strided_slice %1 {offsets = [3, 0, 0], sizes = [1, 16, 16], strides = [1, 1, 1]} : vector<4x16x16xf32> to vector<1x16x16xf32>
    %958 = vector.shape_cast %957 : vector<1x16x16xf32> to vector<16x16xf32>
    %c3_330 = arith.constant 3 : index
    %c4_331 = arith.constant 4 : index
    %959 = memref.load %arg9[%c3_330, %c4_331] : memref<4x8xf32, #tpu.memory_space<smem>>
    %960 = vector.broadcast %959 : f32 to vector<16x16xf32>
    %961 = arith.mulf %958, %960 : vector<16x16xf32>
    %962 = arith.addf %956, %961 : vector<16x16xf32>
    %c4_332 = arith.constant 4 : index
    %963 = memref.load %arg10[%c4_332] : memref<8xf32, #tpu.memory_space<smem>>
    %964 = vector.broadcast %963 : f32 to vector<16x16xf32>
    %965 = arith.addf %962, %964 : vector<16x16xf32>
    %966 = vector.extract_strided_slice %1 {offsets = [0, 0, 0], sizes = [1, 16, 16], strides = [1, 1, 1]} : vector<4x16x16xf32> to vector<1x16x16xf32>
    %967 = vector.shape_cast %966 : vector<1x16x16xf32> to vector<16x16xf32>
    %c0_333 = arith.constant 0 : index
    %c4_334 = arith.constant 4 : index
    %968 = memref.load %arg5[%c0_333, %c4_334] : memref<4x8xf32, #tpu.memory_space<smem>>
    %969 = vector.broadcast %968 : f32 to vector<16x16xf32>
    %970 = arith.mulf %967, %969 : vector<16x16xf32>
    %971 = vector.extract_strided_slice %1 {offsets = [1, 0, 0], sizes = [1, 16, 16], strides = [1, 1, 1]} : vector<4x16x16xf32> to vector<1x16x16xf32>
    %972 = vector.shape_cast %971 : vector<1x16x16xf32> to vector<16x16xf32>
    %c1_335 = arith.constant 1 : index
    %c4_336 = arith.constant 4 : index
    %973 = memref.load %arg5[%c1_335, %c4_336] : memref<4x8xf32, #tpu.memory_space<smem>>
    %974 = vector.broadcast %973 : f32 to vector<16x16xf32>
    %975 = arith.mulf %972, %974 : vector<16x16xf32>
    %976 = arith.addf %970, %975 : vector<16x16xf32>
    %977 = vector.extract_strided_slice %1 {offsets = [2, 0, 0], sizes = [1, 16, 16], strides = [1, 1, 1]} : vector<4x16x16xf32> to vector<1x16x16xf32>
    %978 = vector.shape_cast %977 : vector<1x16x16xf32> to vector<16x16xf32>
    %c2_337 = arith.constant 2 : index
    %c4_338 = arith.constant 4 : index
    %979 = memref.load %arg5[%c2_337, %c4_338] : memref<4x8xf32, #tpu.memory_space<smem>>
    %980 = vector.broadcast %979 : f32 to vector<16x16xf32>
    %981 = arith.mulf %978, %980 : vector<16x16xf32>
    %982 = arith.addf %976, %981 : vector<16x16xf32>
    %983 = vector.extract_strided_slice %1 {offsets = [3, 0, 0], sizes = [1, 16, 16], strides = [1, 1, 1]} : vector<4x16x16xf32> to vector<1x16x16xf32>
    %984 = vector.shape_cast %983 : vector<1x16x16xf32> to vector<16x16xf32>
    %c3_339 = arith.constant 3 : index
    %c4_340 = arith.constant 4 : index
    %985 = memref.load %arg5[%c3_339, %c4_340] : memref<4x8xf32, #tpu.memory_space<smem>>
    %986 = vector.broadcast %985 : f32 to vector<16x16xf32>
    %987 = arith.mulf %984, %986 : vector<16x16xf32>
    %988 = arith.addf %982, %987 : vector<16x16xf32>
    %c4_341 = arith.constant 4 : index
    %989 = memref.load %arg6[%c4_341] : memref<8xf32, #tpu.memory_space<smem>>
    %990 = vector.broadcast %989 : f32 to vector<16x16xf32>
    %991 = arith.addf %988, %990 : vector<16x16xf32>
    %992 = vector.extract_strided_slice %1 {offsets = [0, 0, 0], sizes = [1, 16, 16], strides = [1, 1, 1]} : vector<4x16x16xf32> to vector<1x16x16xf32>
    %993 = vector.shape_cast %992 : vector<1x16x16xf32> to vector<16x16xf32>
    %c0_342 = arith.constant 0 : index
    %c4_343 = arith.constant 4 : index
    %994 = memref.load %arg7[%c0_342, %c4_343] : memref<4x8xf32, #tpu.memory_space<smem>>
    %995 = vector.broadcast %994 : f32 to vector<16x16xf32>
    %996 = arith.mulf %993, %995 : vector<16x16xf32>
    %997 = vector.extract_strided_slice %1 {offsets = [1, 0, 0], sizes = [1, 16, 16], strides = [1, 1, 1]} : vector<4x16x16xf32> to vector<1x16x16xf32>
    %998 = vector.shape_cast %997 : vector<1x16x16xf32> to vector<16x16xf32>
    %c1_344 = arith.constant 1 : index
    %c4_345 = arith.constant 4 : index
    %999 = memref.load %arg7[%c1_344, %c4_345] : memref<4x8xf32, #tpu.memory_space<smem>>
    %1000 = vector.broadcast %999 : f32 to vector<16x16xf32>
    %1001 = arith.mulf %998, %1000 : vector<16x16xf32>
    %1002 = arith.addf %996, %1001 : vector<16x16xf32>
    %1003 = vector.extract_strided_slice %1 {offsets = [2, 0, 0], sizes = [1, 16, 16], strides = [1, 1, 1]} : vector<4x16x16xf32> to vector<1x16x16xf32>
    %1004 = vector.shape_cast %1003 : vector<1x16x16xf32> to vector<16x16xf32>
    %c2_346 = arith.constant 2 : index
    %c4_347 = arith.constant 4 : index
    %1005 = memref.load %arg7[%c2_346, %c4_347] : memref<4x8xf32, #tpu.memory_space<smem>>
    %1006 = vector.broadcast %1005 : f32 to vector<16x16xf32>
    %1007 = arith.mulf %1004, %1006 : vector<16x16xf32>
    %1008 = arith.addf %1002, %1007 : vector<16x16xf32>
    %1009 = vector.extract_strided_slice %1 {offsets = [3, 0, 0], sizes = [1, 16, 16], strides = [1, 1, 1]} : vector<4x16x16xf32> to vector<1x16x16xf32>
    %1010 = vector.shape_cast %1009 : vector<1x16x16xf32> to vector<16x16xf32>
    %c3_348 = arith.constant 3 : index
    %c4_349 = arith.constant 4 : index
    %1011 = memref.load %arg7[%c3_348, %c4_349] : memref<4x8xf32, #tpu.memory_space<smem>>
    %1012 = vector.broadcast %1011 : f32 to vector<16x16xf32>
    %1013 = arith.mulf %1010, %1012 : vector<16x16xf32>
    %1014 = arith.addf %1008, %1013 : vector<16x16xf32>
    %c4_350 = arith.constant 4 : index
    %1015 = memref.load %arg8[%c4_350] : memref<8xf32, #tpu.memory_space<smem>>
    %1016 = vector.broadcast %1015 : f32 to vector<16x16xf32>
    %1017 = arith.addf %1014, %1016 : vector<16x16xf32>
    %1018 = vector.extract_strided_slice %1 {offsets = [0, 0, 0], sizes = [1, 16, 16], strides = [1, 1, 1]} : vector<4x16x16xf32> to vector<1x16x16xf32>
    %1019 = vector.shape_cast %1018 : vector<1x16x16xf32> to vector<16x16xf32>
    %c0_351 = arith.constant 0 : index
    %c5_352 = arith.constant 5 : index
    %1020 = memref.load %arg9[%c0_351, %c5_352] : memref<4x8xf32, #tpu.memory_space<smem>>
    %1021 = vector.broadcast %1020 : f32 to vector<16x16xf32>
    %1022 = arith.mulf %1019, %1021 : vector<16x16xf32>
    %1023 = vector.extract_strided_slice %1 {offsets = [1, 0, 0], sizes = [1, 16, 16], strides = [1, 1, 1]} : vector<4x16x16xf32> to vector<1x16x16xf32>
    %1024 = vector.shape_cast %1023 : vector<1x16x16xf32> to vector<16x16xf32>
    %c1_353 = arith.constant 1 : index
    %c5_354 = arith.constant 5 : index
    %1025 = memref.load %arg9[%c1_353, %c5_354] : memref<4x8xf32, #tpu.memory_space<smem>>
    %1026 = vector.broadcast %1025 : f32 to vector<16x16xf32>
    %1027 = arith.mulf %1024, %1026 : vector<16x16xf32>
    %1028 = arith.addf %1022, %1027 : vector<16x16xf32>
    %1029 = vector.extract_strided_slice %1 {offsets = [2, 0, 0], sizes = [1, 16, 16], strides = [1, 1, 1]} : vector<4x16x16xf32> to vector<1x16x16xf32>
    %1030 = vector.shape_cast %1029 : vector<1x16x16xf32> to vector<16x16xf32>
    %c2_355 = arith.constant 2 : index
    %c5_356 = arith.constant 5 : index
    %1031 = memref.load %arg9[%c2_355, %c5_356] : memref<4x8xf32, #tpu.memory_space<smem>>
    %1032 = vector.broadcast %1031 : f32 to vector<16x16xf32>
    %1033 = arith.mulf %1030, %1032 : vector<16x16xf32>
    %1034 = arith.addf %1028, %1033 : vector<16x16xf32>
    %1035 = vector.extract_strided_slice %1 {offsets = [3, 0, 0], sizes = [1, 16, 16], strides = [1, 1, 1]} : vector<4x16x16xf32> to vector<1x16x16xf32>
    %1036 = vector.shape_cast %1035 : vector<1x16x16xf32> to vector<16x16xf32>
    %c3_357 = arith.constant 3 : index
    %c5_358 = arith.constant 5 : index
    %1037 = memref.load %arg9[%c3_357, %c5_358] : memref<4x8xf32, #tpu.memory_space<smem>>
    %1038 = vector.broadcast %1037 : f32 to vector<16x16xf32>
    %1039 = arith.mulf %1036, %1038 : vector<16x16xf32>
    %1040 = arith.addf %1034, %1039 : vector<16x16xf32>
    %c5_359 = arith.constant 5 : index
    %1041 = memref.load %arg10[%c5_359] : memref<8xf32, #tpu.memory_space<smem>>
    %1042 = vector.broadcast %1041 : f32 to vector<16x16xf32>
    %1043 = arith.addf %1040, %1042 : vector<16x16xf32>
    %1044 = vector.extract_strided_slice %1 {offsets = [0, 0, 0], sizes = [1, 16, 16], strides = [1, 1, 1]} : vector<4x16x16xf32> to vector<1x16x16xf32>
    %1045 = vector.shape_cast %1044 : vector<1x16x16xf32> to vector<16x16xf32>
    %c0_360 = arith.constant 0 : index
    %c5_361 = arith.constant 5 : index
    %1046 = memref.load %arg5[%c0_360, %c5_361] : memref<4x8xf32, #tpu.memory_space<smem>>
    %1047 = vector.broadcast %1046 : f32 to vector<16x16xf32>
    %1048 = arith.mulf %1045, %1047 : vector<16x16xf32>
    %1049 = vector.extract_strided_slice %1 {offsets = [1, 0, 0], sizes = [1, 16, 16], strides = [1, 1, 1]} : vector<4x16x16xf32> to vector<1x16x16xf32>
    %1050 = vector.shape_cast %1049 : vector<1x16x16xf32> to vector<16x16xf32>
    %c1_362 = arith.constant 1 : index
    %c5_363 = arith.constant 5 : index
    %1051 = memref.load %arg5[%c1_362, %c5_363] : memref<4x8xf32, #tpu.memory_space<smem>>
    %1052 = vector.broadcast %1051 : f32 to vector<16x16xf32>
    %1053 = arith.mulf %1050, %1052 : vector<16x16xf32>
    %1054 = arith.addf %1048, %1053 : vector<16x16xf32>
    %1055 = vector.extract_strided_slice %1 {offsets = [2, 0, 0], sizes = [1, 16, 16], strides = [1, 1, 1]} : vector<4x16x16xf32> to vector<1x16x16xf32>
    %1056 = vector.shape_cast %1055 : vector<1x16x16xf32> to vector<16x16xf32>
    %c2_364 = arith.constant 2 : index
    %c5_365 = arith.constant 5 : index
    %1057 = memref.load %arg5[%c2_364, %c5_365] : memref<4x8xf32, #tpu.memory_space<smem>>
    %1058 = vector.broadcast %1057 : f32 to vector<16x16xf32>
    %1059 = arith.mulf %1056, %1058 : vector<16x16xf32>
    %1060 = arith.addf %1054, %1059 : vector<16x16xf32>
    %1061 = vector.extract_strided_slice %1 {offsets = [3, 0, 0], sizes = [1, 16, 16], strides = [1, 1, 1]} : vector<4x16x16xf32> to vector<1x16x16xf32>
    %1062 = vector.shape_cast %1061 : vector<1x16x16xf32> to vector<16x16xf32>
    %c3_366 = arith.constant 3 : index
    %c5_367 = arith.constant 5 : index
    %1063 = memref.load %arg5[%c3_366, %c5_367] : memref<4x8xf32, #tpu.memory_space<smem>>
    %1064 = vector.broadcast %1063 : f32 to vector<16x16xf32>
    %1065 = arith.mulf %1062, %1064 : vector<16x16xf32>
    %1066 = arith.addf %1060, %1065 : vector<16x16xf32>
    %c5_368 = arith.constant 5 : index
    %1067 = memref.load %arg6[%c5_368] : memref<8xf32, #tpu.memory_space<smem>>
    %1068 = vector.broadcast %1067 : f32 to vector<16x16xf32>
    %1069 = arith.addf %1066, %1068 : vector<16x16xf32>
    %1070 = vector.extract_strided_slice %1 {offsets = [0, 0, 0], sizes = [1, 16, 16], strides = [1, 1, 1]} : vector<4x16x16xf32> to vector<1x16x16xf32>
    %1071 = vector.shape_cast %1070 : vector<1x16x16xf32> to vector<16x16xf32>
    %c0_369 = arith.constant 0 : index
    %c5_370 = arith.constant 5 : index
    %1072 = memref.load %arg7[%c0_369, %c5_370] : memref<4x8xf32, #tpu.memory_space<smem>>
    %1073 = vector.broadcast %1072 : f32 to vector<16x16xf32>
    %1074 = arith.mulf %1071, %1073 : vector<16x16xf32>
    %1075 = vector.extract_strided_slice %1 {offsets = [1, 0, 0], sizes = [1, 16, 16], strides = [1, 1, 1]} : vector<4x16x16xf32> to vector<1x16x16xf32>
    %1076 = vector.shape_cast %1075 : vector<1x16x16xf32> to vector<16x16xf32>
    %c1_371 = arith.constant 1 : index
    %c5_372 = arith.constant 5 : index
    %1077 = memref.load %arg7[%c1_371, %c5_372] : memref<4x8xf32, #tpu.memory_space<smem>>
    %1078 = vector.broadcast %1077 : f32 to vector<16x16xf32>
    %1079 = arith.mulf %1076, %1078 : vector<16x16xf32>
    %1080 = arith.addf %1074, %1079 : vector<16x16xf32>
    %1081 = vector.extract_strided_slice %1 {offsets = [2, 0, 0], sizes = [1, 16, 16], strides = [1, 1, 1]} : vector<4x16x16xf32> to vector<1x16x16xf32>
    %1082 = vector.shape_cast %1081 : vector<1x16x16xf32> to vector<16x16xf32>
    %c2_373 = arith.constant 2 : index
    %c5_374 = arith.constant 5 : index
    %1083 = memref.load %arg7[%c2_373, %c5_374] : memref<4x8xf32, #tpu.memory_space<smem>>
    %1084 = vector.broadcast %1083 : f32 to vector<16x16xf32>
    %1085 = arith.mulf %1082, %1084 : vector<16x16xf32>
    %1086 = arith.addf %1080, %1085 : vector<16x16xf32>
    %1087 = vector.extract_strided_slice %1 {offsets = [3, 0, 0], sizes = [1, 16, 16], strides = [1, 1, 1]} : vector<4x16x16xf32> to vector<1x16x16xf32>
    %1088 = vector.shape_cast %1087 : vector<1x16x16xf32> to vector<16x16xf32>
    %c3_375 = arith.constant 3 : index
    %c5_376 = arith.constant 5 : index
    %1089 = memref.load %arg7[%c3_375, %c5_376] : memref<4x8xf32, #tpu.memory_space<smem>>
    %1090 = vector.broadcast %1089 : f32 to vector<16x16xf32>
    %1091 = arith.mulf %1088, %1090 : vector<16x16xf32>
    %1092 = arith.addf %1086, %1091 : vector<16x16xf32>
    %c5_377 = arith.constant 5 : index
    %1093 = memref.load %arg8[%c5_377] : memref<8xf32, #tpu.memory_space<smem>>
    %1094 = vector.broadcast %1093 : f32 to vector<16x16xf32>
    %1095 = arith.addf %1092, %1094 : vector<16x16xf32>
    %1096 = vector.extract_strided_slice %1 {offsets = [0, 0, 0], sizes = [1, 16, 16], strides = [1, 1, 1]} : vector<4x16x16xf32> to vector<1x16x16xf32>
    %1097 = vector.shape_cast %1096 : vector<1x16x16xf32> to vector<16x16xf32>
    %c0_378 = arith.constant 0 : index
    %c6_379 = arith.constant 6 : index
    %1098 = memref.load %arg9[%c0_378, %c6_379] : memref<4x8xf32, #tpu.memory_space<smem>>
    %1099 = vector.broadcast %1098 : f32 to vector<16x16xf32>
    %1100 = arith.mulf %1097, %1099 : vector<16x16xf32>
    %1101 = vector.extract_strided_slice %1 {offsets = [1, 0, 0], sizes = [1, 16, 16], strides = [1, 1, 1]} : vector<4x16x16xf32> to vector<1x16x16xf32>
    %1102 = vector.shape_cast %1101 : vector<1x16x16xf32> to vector<16x16xf32>
    %c1_380 = arith.constant 1 : index
    %c6_381 = arith.constant 6 : index
    %1103 = memref.load %arg9[%c1_380, %c6_381] : memref<4x8xf32, #tpu.memory_space<smem>>
    %1104 = vector.broadcast %1103 : f32 to vector<16x16xf32>
    %1105 = arith.mulf %1102, %1104 : vector<16x16xf32>
    %1106 = arith.addf %1100, %1105 : vector<16x16xf32>
    %1107 = vector.extract_strided_slice %1 {offsets = [2, 0, 0], sizes = [1, 16, 16], strides = [1, 1, 1]} : vector<4x16x16xf32> to vector<1x16x16xf32>
    %1108 = vector.shape_cast %1107 : vector<1x16x16xf32> to vector<16x16xf32>
    %c2_382 = arith.constant 2 : index
    %c6_383 = arith.constant 6 : index
    %1109 = memref.load %arg9[%c2_382, %c6_383] : memref<4x8xf32, #tpu.memory_space<smem>>
    %1110 = vector.broadcast %1109 : f32 to vector<16x16xf32>
    %1111 = arith.mulf %1108, %1110 : vector<16x16xf32>
    %1112 = arith.addf %1106, %1111 : vector<16x16xf32>
    %1113 = vector.extract_strided_slice %1 {offsets = [3, 0, 0], sizes = [1, 16, 16], strides = [1, 1, 1]} : vector<4x16x16xf32> to vector<1x16x16xf32>
    %1114 = vector.shape_cast %1113 : vector<1x16x16xf32> to vector<16x16xf32>
    %c3_384 = arith.constant 3 : index
    %c6_385 = arith.constant 6 : index
    %1115 = memref.load %arg9[%c3_384, %c6_385] : memref<4x8xf32, #tpu.memory_space<smem>>
    %1116 = vector.broadcast %1115 : f32 to vector<16x16xf32>
    %1117 = arith.mulf %1114, %1116 : vector<16x16xf32>
    %1118 = arith.addf %1112, %1117 : vector<16x16xf32>
    %c6_386 = arith.constant 6 : index
    %1119 = memref.load %arg10[%c6_386] : memref<8xf32, #tpu.memory_space<smem>>
    %1120 = vector.broadcast %1119 : f32 to vector<16x16xf32>
    %1121 = arith.addf %1118, %1120 : vector<16x16xf32>
    %1122 = vector.extract_strided_slice %1 {offsets = [0, 0, 0], sizes = [1, 16, 16], strides = [1, 1, 1]} : vector<4x16x16xf32> to vector<1x16x16xf32>
    %1123 = vector.shape_cast %1122 : vector<1x16x16xf32> to vector<16x16xf32>
    %c0_387 = arith.constant 0 : index
    %c6_388 = arith.constant 6 : index
    %1124 = memref.load %arg5[%c0_387, %c6_388] : memref<4x8xf32, #tpu.memory_space<smem>>
    %1125 = vector.broadcast %1124 : f32 to vector<16x16xf32>
    %1126 = arith.mulf %1123, %1125 : vector<16x16xf32>
    %1127 = vector.extract_strided_slice %1 {offsets = [1, 0, 0], sizes = [1, 16, 16], strides = [1, 1, 1]} : vector<4x16x16xf32> to vector<1x16x16xf32>
    %1128 = vector.shape_cast %1127 : vector<1x16x16xf32> to vector<16x16xf32>
    %c1_389 = arith.constant 1 : index
    %c6_390 = arith.constant 6 : index
    %1129 = memref.load %arg5[%c1_389, %c6_390] : memref<4x8xf32, #tpu.memory_space<smem>>
    %1130 = vector.broadcast %1129 : f32 to vector<16x16xf32>
    %1131 = arith.mulf %1128, %1130 : vector<16x16xf32>
    %1132 = arith.addf %1126, %1131 : vector<16x16xf32>
    %1133 = vector.extract_strided_slice %1 {offsets = [2, 0, 0], sizes = [1, 16, 16], strides = [1, 1, 1]} : vector<4x16x16xf32> to vector<1x16x16xf32>
    %1134 = vector.shape_cast %1133 : vector<1x16x16xf32> to vector<16x16xf32>
    %c2_391 = arith.constant 2 : index
    %c6_392 = arith.constant 6 : index
    %1135 = memref.load %arg5[%c2_391, %c6_392] : memref<4x8xf32, #tpu.memory_space<smem>>
    %1136 = vector.broadcast %1135 : f32 to vector<16x16xf32>
    %1137 = arith.mulf %1134, %1136 : vector<16x16xf32>
    %1138 = arith.addf %1132, %1137 : vector<16x16xf32>
    %1139 = vector.extract_strided_slice %1 {offsets = [3, 0, 0], sizes = [1, 16, 16], strides = [1, 1, 1]} : vector<4x16x16xf32> to vector<1x16x16xf32>
    %1140 = vector.shape_cast %1139 : vector<1x16x16xf32> to vector<16x16xf32>
    %c3_393 = arith.constant 3 : index
    %c6_394 = arith.constant 6 : index
    %1141 = memref.load %arg5[%c3_393, %c6_394] : memref<4x8xf32, #tpu.memory_space<smem>>
    %1142 = vector.broadcast %1141 : f32 to vector<16x16xf32>
    %1143 = arith.mulf %1140, %1142 : vector<16x16xf32>
    %1144 = arith.addf %1138, %1143 : vector<16x16xf32>
    %c6_395 = arith.constant 6 : index
    %1145 = memref.load %arg6[%c6_395] : memref<8xf32, #tpu.memory_space<smem>>
    %1146 = vector.broadcast %1145 : f32 to vector<16x16xf32>
    %1147 = arith.addf %1144, %1146 : vector<16x16xf32>
    %1148 = vector.extract_strided_slice %1 {offsets = [0, 0, 0], sizes = [1, 16, 16], strides = [1, 1, 1]} : vector<4x16x16xf32> to vector<1x16x16xf32>
    %1149 = vector.shape_cast %1148 : vector<1x16x16xf32> to vector<16x16xf32>
    %c0_396 = arith.constant 0 : index
    %c6_397 = arith.constant 6 : index
    %1150 = memref.load %arg7[%c0_396, %c6_397] : memref<4x8xf32, #tpu.memory_space<smem>>
    %1151 = vector.broadcast %1150 : f32 to vector<16x16xf32>
    %1152 = arith.mulf %1149, %1151 : vector<16x16xf32>
    %1153 = vector.extract_strided_slice %1 {offsets = [1, 0, 0], sizes = [1, 16, 16], strides = [1, 1, 1]} : vector<4x16x16xf32> to vector<1x16x16xf32>
    %1154 = vector.shape_cast %1153 : vector<1x16x16xf32> to vector<16x16xf32>
    %c1_398 = arith.constant 1 : index
    %c6_399 = arith.constant 6 : index
    %1155 = memref.load %arg7[%c1_398, %c6_399] : memref<4x8xf32, #tpu.memory_space<smem>>
    %1156 = vector.broadcast %1155 : f32 to vector<16x16xf32>
    %1157 = arith.mulf %1154, %1156 : vector<16x16xf32>
    %1158 = arith.addf %1152, %1157 : vector<16x16xf32>
    %1159 = vector.extract_strided_slice %1 {offsets = [2, 0, 0], sizes = [1, 16, 16], strides = [1, 1, 1]} : vector<4x16x16xf32> to vector<1x16x16xf32>
    %1160 = vector.shape_cast %1159 : vector<1x16x16xf32> to vector<16x16xf32>
    %c2_400 = arith.constant 2 : index
    %c6_401 = arith.constant 6 : index
    %1161 = memref.load %arg7[%c2_400, %c6_401] : memref<4x8xf32, #tpu.memory_space<smem>>
    %1162 = vector.broadcast %1161 : f32 to vector<16x16xf32>
    %1163 = arith.mulf %1160, %1162 : vector<16x16xf32>
    %1164 = arith.addf %1158, %1163 : vector<16x16xf32>
    %1165 = vector.extract_strided_slice %1 {offsets = [3, 0, 0], sizes = [1, 16, 16], strides = [1, 1, 1]} : vector<4x16x16xf32> to vector<1x16x16xf32>
    %1166 = vector.shape_cast %1165 : vector<1x16x16xf32> to vector<16x16xf32>
    %c3_402 = arith.constant 3 : index
    %c6_403 = arith.constant 6 : index
    %1167 = memref.load %arg7[%c3_402, %c6_403] : memref<4x8xf32, #tpu.memory_space<smem>>
    %1168 = vector.broadcast %1167 : f32 to vector<16x16xf32>
    %1169 = arith.mulf %1166, %1168 : vector<16x16xf32>
    %1170 = arith.addf %1164, %1169 : vector<16x16xf32>
    %c6_404 = arith.constant 6 : index
    %1171 = memref.load %arg8[%c6_404] : memref<8xf32, #tpu.memory_space<smem>>
    %1172 = vector.broadcast %1171 : f32 to vector<16x16xf32>
    %1173 = arith.addf %1170, %1172 : vector<16x16xf32>
    %1174 = vector.extract_strided_slice %1 {offsets = [0, 0, 0], sizes = [1, 16, 16], strides = [1, 1, 1]} : vector<4x16x16xf32> to vector<1x16x16xf32>
    %1175 = vector.shape_cast %1174 : vector<1x16x16xf32> to vector<16x16xf32>
    %c0_405 = arith.constant 0 : index
    %c7_406 = arith.constant 7 : index
    %1176 = memref.load %arg9[%c0_405, %c7_406] : memref<4x8xf32, #tpu.memory_space<smem>>
    %1177 = vector.broadcast %1176 : f32 to vector<16x16xf32>
    %1178 = arith.mulf %1175, %1177 : vector<16x16xf32>
    %1179 = vector.extract_strided_slice %1 {offsets = [1, 0, 0], sizes = [1, 16, 16], strides = [1, 1, 1]} : vector<4x16x16xf32> to vector<1x16x16xf32>
    %1180 = vector.shape_cast %1179 : vector<1x16x16xf32> to vector<16x16xf32>
    %c1_407 = arith.constant 1 : index
    %c7_408 = arith.constant 7 : index
    %1181 = memref.load %arg9[%c1_407, %c7_408] : memref<4x8xf32, #tpu.memory_space<smem>>
    %1182 = vector.broadcast %1181 : f32 to vector<16x16xf32>
    %1183 = arith.mulf %1180, %1182 : vector<16x16xf32>
    %1184 = arith.addf %1178, %1183 : vector<16x16xf32>
    %1185 = vector.extract_strided_slice %1 {offsets = [2, 0, 0], sizes = [1, 16, 16], strides = [1, 1, 1]} : vector<4x16x16xf32> to vector<1x16x16xf32>
    %1186 = vector.shape_cast %1185 : vector<1x16x16xf32> to vector<16x16xf32>
    %c2_409 = arith.constant 2 : index
    %c7_410 = arith.constant 7 : index
    %1187 = memref.load %arg9[%c2_409, %c7_410] : memref<4x8xf32, #tpu.memory_space<smem>>
    %1188 = vector.broadcast %1187 : f32 to vector<16x16xf32>
    %1189 = arith.mulf %1186, %1188 : vector<16x16xf32>
    %1190 = arith.addf %1184, %1189 : vector<16x16xf32>
    %1191 = vector.extract_strided_slice %1 {offsets = [3, 0, 0], sizes = [1, 16, 16], strides = [1, 1, 1]} : vector<4x16x16xf32> to vector<1x16x16xf32>
    %1192 = vector.shape_cast %1191 : vector<1x16x16xf32> to vector<16x16xf32>
    %c3_411 = arith.constant 3 : index
    %c7_412 = arith.constant 7 : index
    %1193 = memref.load %arg9[%c3_411, %c7_412] : memref<4x8xf32, #tpu.memory_space<smem>>
    %1194 = vector.broadcast %1193 : f32 to vector<16x16xf32>
    %1195 = arith.mulf %1192, %1194 : vector<16x16xf32>
    %1196 = arith.addf %1190, %1195 : vector<16x16xf32>
    %c7_413 = arith.constant 7 : index
    %1197 = memref.load %arg10[%c7_413] : memref<8xf32, #tpu.memory_space<smem>>
    %1198 = vector.broadcast %1197 : f32 to vector<16x16xf32>
    %1199 = arith.addf %1196, %1198 : vector<16x16xf32>
    %1200 = vector.extract_strided_slice %1 {offsets = [0, 0, 0], sizes = [1, 16, 16], strides = [1, 1, 1]} : vector<4x16x16xf32> to vector<1x16x16xf32>
    %1201 = vector.shape_cast %1200 : vector<1x16x16xf32> to vector<16x16xf32>
    %c0_414 = arith.constant 0 : index
    %c7_415 = arith.constant 7 : index
    %1202 = memref.load %arg5[%c0_414, %c7_415] : memref<4x8xf32, #tpu.memory_space<smem>>
    %1203 = vector.broadcast %1202 : f32 to vector<16x16xf32>
    %1204 = arith.mulf %1201, %1203 : vector<16x16xf32>
    %1205 = vector.extract_strided_slice %1 {offsets = [1, 0, 0], sizes = [1, 16, 16], strides = [1, 1, 1]} : vector<4x16x16xf32> to vector<1x16x16xf32>
    %1206 = vector.shape_cast %1205 : vector<1x16x16xf32> to vector<16x16xf32>
    %c1_416 = arith.constant 1 : index
    %c7_417 = arith.constant 7 : index
    %1207 = memref.load %arg5[%c1_416, %c7_417] : memref<4x8xf32, #tpu.memory_space<smem>>
    %1208 = vector.broadcast %1207 : f32 to vector<16x16xf32>
    %1209 = arith.mulf %1206, %1208 : vector<16x16xf32>
    %1210 = arith.addf %1204, %1209 : vector<16x16xf32>
    %1211 = vector.extract_strided_slice %1 {offsets = [2, 0, 0], sizes = [1, 16, 16], strides = [1, 1, 1]} : vector<4x16x16xf32> to vector<1x16x16xf32>
    %1212 = vector.shape_cast %1211 : vector<1x16x16xf32> to vector<16x16xf32>
    %c2_418 = arith.constant 2 : index
    %c7_419 = arith.constant 7 : index
    %1213 = memref.load %arg5[%c2_418, %c7_419] : memref<4x8xf32, #tpu.memory_space<smem>>
    %1214 = vector.broadcast %1213 : f32 to vector<16x16xf32>
    %1215 = arith.mulf %1212, %1214 : vector<16x16xf32>
    %1216 = arith.addf %1210, %1215 : vector<16x16xf32>
    %1217 = vector.extract_strided_slice %1 {offsets = [3, 0, 0], sizes = [1, 16, 16], strides = [1, 1, 1]} : vector<4x16x16xf32> to vector<1x16x16xf32>
    %1218 = vector.shape_cast %1217 : vector<1x16x16xf32> to vector<16x16xf32>
    %c3_420 = arith.constant 3 : index
    %c7_421 = arith.constant 7 : index
    %1219 = memref.load %arg5[%c3_420, %c7_421] : memref<4x8xf32, #tpu.memory_space<smem>>
    %1220 = vector.broadcast %1219 : f32 to vector<16x16xf32>
    %1221 = arith.mulf %1218, %1220 : vector<16x16xf32>
    %1222 = arith.addf %1216, %1221 : vector<16x16xf32>
    %c7_422 = arith.constant 7 : index
    %1223 = memref.load %arg6[%c7_422] : memref<8xf32, #tpu.memory_space<smem>>
    %1224 = vector.broadcast %1223 : f32 to vector<16x16xf32>
    %1225 = arith.addf %1222, %1224 : vector<16x16xf32>
    %1226 = vector.extract_strided_slice %1 {offsets = [0, 0, 0], sizes = [1, 16, 16], strides = [1, 1, 1]} : vector<4x16x16xf32> to vector<1x16x16xf32>
    %1227 = vector.shape_cast %1226 : vector<1x16x16xf32> to vector<16x16xf32>
    %c0_423 = arith.constant 0 : index
    %c7_424 = arith.constant 7 : index
    %1228 = memref.load %arg7[%c0_423, %c7_424] : memref<4x8xf32, #tpu.memory_space<smem>>
    %1229 = vector.broadcast %1228 : f32 to vector<16x16xf32>
    %1230 = arith.mulf %1227, %1229 : vector<16x16xf32>
    %1231 = vector.extract_strided_slice %1 {offsets = [1, 0, 0], sizes = [1, 16, 16], strides = [1, 1, 1]} : vector<4x16x16xf32> to vector<1x16x16xf32>
    %1232 = vector.shape_cast %1231 : vector<1x16x16xf32> to vector<16x16xf32>
    %c1_425 = arith.constant 1 : index
    %c7_426 = arith.constant 7 : index
    %1233 = memref.load %arg7[%c1_425, %c7_426] : memref<4x8xf32, #tpu.memory_space<smem>>
    %1234 = vector.broadcast %1233 : f32 to vector<16x16xf32>
    %1235 = arith.mulf %1232, %1234 : vector<16x16xf32>
    %1236 = arith.addf %1230, %1235 : vector<16x16xf32>
    %1237 = vector.extract_strided_slice %1 {offsets = [2, 0, 0], sizes = [1, 16, 16], strides = [1, 1, 1]} : vector<4x16x16xf32> to vector<1x16x16xf32>
    %1238 = vector.shape_cast %1237 : vector<1x16x16xf32> to vector<16x16xf32>
    %c2_427 = arith.constant 2 : index
    %c7_428 = arith.constant 7 : index
    %1239 = memref.load %arg7[%c2_427, %c7_428] : memref<4x8xf32, #tpu.memory_space<smem>>
    %1240 = vector.broadcast %1239 : f32 to vector<16x16xf32>
    %1241 = arith.mulf %1238, %1240 : vector<16x16xf32>
    %1242 = arith.addf %1236, %1241 : vector<16x16xf32>
    %1243 = vector.extract_strided_slice %1 {offsets = [3, 0, 0], sizes = [1, 16, 16], strides = [1, 1, 1]} : vector<4x16x16xf32> to vector<1x16x16xf32>
    %1244 = vector.shape_cast %1243 : vector<1x16x16xf32> to vector<16x16xf32>
    %c3_429 = arith.constant 3 : index
    %c7_430 = arith.constant 7 : index
    %1245 = memref.load %arg7[%c3_429, %c7_430] : memref<4x8xf32, #tpu.memory_space<smem>>
    %1246 = vector.broadcast %1245 : f32 to vector<16x16xf32>
    %1247 = arith.mulf %1244, %1246 : vector<16x16xf32>
    %1248 = arith.addf %1242, %1247 : vector<16x16xf32>
    %c7_431 = arith.constant 7 : index
    %1249 = memref.load %arg8[%c7_431] : memref<8xf32, #tpu.memory_space<smem>>
    %1250 = vector.broadcast %1249 : f32 to vector<16x16xf32>
    %1251 = arith.addf %1248, %1250 : vector<16x16xf32>
    %1252 = vector.shape_cast %29 : vector<16x16xf32> to vector<1x16x16xf32>
    %1253 = vector.shape_cast %107 : vector<16x16xf32> to vector<1x16x16xf32>
    %1254 = vector.shape_cast %185 : vector<16x16xf32> to vector<1x16x16xf32>
    %1255 = vector.shape_cast %263 : vector<16x16xf32> to vector<1x16x16xf32>
    %1256 = vector.shape_cast %341 : vector<16x16xf32> to vector<1x16x16xf32>
    %1257 = vector.shape_cast %419 : vector<16x16xf32> to vector<1x16x16xf32>
    %1258 = vector.shape_cast %497 : vector<16x16xf32> to vector<1x16x16xf32>
    %1259 = vector.shape_cast %575 : vector<16x16xf32> to vector<1x16x16xf32>
    %1260 = vector.shape_cast %653 : vector<16x16xf32> to vector<1x16x16xf32>
    %1261 = vector.shape_cast %731 : vector<16x16xf32> to vector<1x16x16xf32>
    %1262 = vector.shape_cast %809 : vector<16x16xf32> to vector<1x16x16xf32>
    %1263 = vector.shape_cast %887 : vector<16x16xf32> to vector<1x16x16xf32>
    %1264 = vector.shape_cast %965 : vector<16x16xf32> to vector<1x16x16xf32>
    %1265 = vector.shape_cast %1043 : vector<16x16xf32> to vector<1x16x16xf32>
    %1266 = vector.shape_cast %1121 : vector<16x16xf32> to vector<1x16x16xf32>
    %1267 = vector.shape_cast %1199 : vector<16x16xf32> to vector<1x16x16xf32>
    %1268 = tpu.concatenate %1252, %1253, %1254, %1255, %1256, %1257, %1258, %1259, %1260, %1261, %1262, %1263, %1264, %1265, %1266, %1267 in 0 : vector<1x16x16xf32>, vector<1x16x16xf32>, vector<1x16x16xf32>, vector<1x16x16xf32>, vector<1x16x16xf32>, vector<1x16x16xf32>, vector<1x16x16xf32>, vector<1x16x16xf32>, vector<1x16x16xf32>, vector<1x16x16xf32>, vector<1x16x16xf32>, vector<1x16x16xf32>, vector<1x16x16xf32>, vector<1x16x16xf32>, vector<1x16x16xf32>, vector<1x16x16xf32> -> vector<16x16x16xf32>
    %1269 = vector.shape_cast %679 : vector<16x16xf32> to vector<1x16x16xf32>
    %1270 = vector.shape_cast %757 : vector<16x16xf32> to vector<1x16x16xf32>
    %1271 = vector.shape_cast %835 : vector<16x16xf32> to vector<1x16x16xf32>
    %1272 = vector.shape_cast %913 : vector<16x16xf32> to vector<1x16x16xf32>
    %1273 = vector.shape_cast %991 : vector<16x16xf32> to vector<1x16x16xf32>
    %1274 = vector.shape_cast %1069 : vector<16x16xf32> to vector<1x16x16xf32>
    %1275 = vector.shape_cast %1147 : vector<16x16xf32> to vector<1x16x16xf32>
    %1276 = vector.shape_cast %1225 : vector<16x16xf32> to vector<1x16x16xf32>
    %1277 = vector.shape_cast %55 : vector<16x16xf32> to vector<1x16x16xf32>
    %1278 = vector.shape_cast %133 : vector<16x16xf32> to vector<1x16x16xf32>
    %1279 = vector.shape_cast %211 : vector<16x16xf32> to vector<1x16x16xf32>
    %1280 = vector.shape_cast %289 : vector<16x16xf32> to vector<1x16x16xf32>
    %1281 = vector.shape_cast %367 : vector<16x16xf32> to vector<1x16x16xf32>
    %1282 = vector.shape_cast %445 : vector<16x16xf32> to vector<1x16x16xf32>
    %1283 = vector.shape_cast %523 : vector<16x16xf32> to vector<1x16x16xf32>
    %1284 = vector.shape_cast %601 : vector<16x16xf32> to vector<1x16x16xf32>
    %1285 = tpu.concatenate %1269, %1270, %1271, %1272, %1273, %1274, %1275, %1276, %1277, %1278, %1279, %1280, %1281, %1282, %1283, %1284 in 0 : vector<1x16x16xf32>, vector<1x16x16xf32>, vector<1x16x16xf32>, vector<1x16x16xf32>, vector<1x16x16xf32>, vector<1x16x16xf32>, vector<1x16x16xf32>, vector<1x16x16xf32>, vector<1x16x16xf32>, vector<1x16x16xf32>, vector<1x16x16xf32>, vector<1x16x16xf32>, vector<1x16x16xf32>, vector<1x16x16xf32>, vector<1x16x16xf32>, vector<1x16x16xf32> -> vector<16x16x16xf32>
    %1286 = vector.shape_cast %705 : vector<16x16xf32> to vector<1x16x16xf32>
    %1287 = vector.shape_cast %783 : vector<16x16xf32> to vector<1x16x16xf32>
    %1288 = vector.shape_cast %861 : vector<16x16xf32> to vector<1x16x16xf32>
    %1289 = vector.shape_cast %939 : vector<16x16xf32> to vector<1x16x16xf32>
    %1290 = vector.shape_cast %1017 : vector<16x16xf32> to vector<1x16x16xf32>
    %1291 = vector.shape_cast %1095 : vector<16x16xf32> to vector<1x16x16xf32>
    %1292 = vector.shape_cast %1173 : vector<16x16xf32> to vector<1x16x16xf32>
    %1293 = vector.shape_cast %1251 : vector<16x16xf32> to vector<1x16x16xf32>
    %1294 = vector.shape_cast %81 : vector<16x16xf32> to vector<1x16x16xf32>
    %1295 = vector.shape_cast %159 : vector<16x16xf32> to vector<1x16x16xf32>
    %1296 = vector.shape_cast %237 : vector<16x16xf32> to vector<1x16x16xf32>
    %1297 = vector.shape_cast %315 : vector<16x16xf32> to vector<1x16x16xf32>
    %1298 = vector.shape_cast %393 : vector<16x16xf32> to vector<1x16x16xf32>
    %1299 = vector.shape_cast %471 : vector<16x16xf32> to vector<1x16x16xf32>
    %1300 = vector.shape_cast %549 : vector<16x16xf32> to vector<1x16x16xf32>
    %1301 = vector.shape_cast %627 : vector<16x16xf32> to vector<1x16x16xf32>
    %1302 = tpu.concatenate %1286, %1287, %1288, %1289, %1290, %1291, %1292, %1293, %1294, %1295, %1296, %1297, %1298, %1299, %1300, %1301 in 0 : vector<1x16x16xf32>, vector<1x16x16xf32>, vector<1x16x16xf32>, vector<1x16x16xf32>, vector<1x16x16xf32>, vector<1x16x16xf32>, vector<1x16x16xf32>, vector<1x16x16xf32>, vector<1x16x16xf32>, vector<1x16x16xf32>, vector<1x16x16xf32>, vector<1x16x16xf32>, vector<1x16x16xf32>, vector<1x16x16xf32>, vector<1x16x16xf32>, vector<1x16x16xf32> -> vector<16x16x16xf32>
    "tpu.trace_start"() <{level = 10 : i32, message = "chw,cvw->chv"}> : () -> ()
    %cst = arith.constant dense<0.000000e+00> : vector<16x16x16xf32>
    %1303 = tpu.matmul %1268, %1285, %cst {dimension_numbers = #tpu.dot_dimension_numbers<[2], [2], [1], [1], [0, 0, 0, 1, 1, 1], [0], [0]>} : vector<16x16x16xf32>, vector<16x16x16xf32>, vector<16x16x16xf32> -> vector<16x16x16xf32>
    "tpu.trace_stop"() : () -> ()
    %cst_432 = arith.constant 2.500000e-01 : f32
    %1304 = vector.broadcast %cst_432 : f32 to vector<16x16x16xf32>
    %1305 = arith.mulf %1303, %1304 : vector<16x16x16xf32>
    %cst_433 = arith.constant dense<0xFF800000> : vector<16x16xf32>
    %1306 = vector.multi_reduction <maximumf>, %1305, %cst_433 [2] : vector<16x16x16xf32> to vector<16x16xf32>
    %1307 = vector.shape_cast %1306 : vector<16x16xf32> to vector<16x16x1xf32>
    %1308 = vector.broadcast %1307 : vector<16x16x1xf32> to vector<16x16x16xf32>
    %1309 = arith.subf %1305, %1308 : vector<16x16x16xf32>
    %1310 = math.exp %1309 : vector<16x16x16xf32>
    %cst_434 = arith.constant dense<0.000000e+00> : vector<16x16xf32>
    %1311 = vector.multi_reduction <add>, %1310, %cst_434 [2] : vector<16x16x16xf32> to vector<16x16xf32>
    %1312 = vector.shape_cast %1311 : vector<16x16xf32> to vector<16x16x1xf32>
    %1313 = vector.broadcast %1312 : vector<16x16x1xf32> to vector<16x16x16xf32>
    %1314 = arith.divf %1310, %1313 : vector<16x16x16xf32>
    "tpu.trace_start"() <{level = 10 : i32, message = "chv,cvw->chw"}> : () -> ()
    %cst_435 = arith.constant dense<0.000000e+00> : vector<16x16x16xf32>
    %1315 = tpu.matmul %1314, %1302, %cst_435 {dimension_numbers = #tpu.dot_dimension_numbers<[2], [1], [1], [2], [0, 0, 0, 1, 1, 2], [0], [0]>} : vector<16x16x16xf32>, vector<16x16x16xf32>, vector<16x16x16xf32> -> vector<16x16x16xf32>
    "tpu.trace_stop"() : () -> ()
    %1316 = vector.extract_strided_slice %1315 {offsets = [0, 0, 0], sizes = [1, 16, 16], strides = [1, 1, 1]} : vector<16x16x16xf32> to vector<1x16x16xf32>
    %1317 = vector.shape_cast %1316 : vector<1x16x16xf32> to vector<16x16xf32>
    %c0_436 = arith.constant 0 : index
    %c0_437 = arith.constant 0 : index
    %1318 = memref.load %arg15[%c0_436, %c0_437] : memref<16x8xf32, #tpu.memory_space<smem>>
    %1319 = vector.broadcast %1318 : f32 to vector<16x16xf32>
    %1320 = arith.mulf %1317, %1319 : vector<16x16xf32>
    %1321 = vector.extract_strided_slice %1315 {offsets = [1, 0, 0], sizes = [1, 16, 16], strides = [1, 1, 1]} : vector<16x16x16xf32> to vector<1x16x16xf32>
    %1322 = vector.shape_cast %1321 : vector<1x16x16xf32> to vector<16x16xf32>
    %c1_438 = arith.constant 1 : index
    %c0_439 = arith.constant 0 : index
    %1323 = memref.load %arg15[%c1_438, %c0_439] : memref<16x8xf32, #tpu.memory_space<smem>>
    %1324 = vector.broadcast %1323 : f32 to vector<16x16xf32>
    %1325 = arith.mulf %1322, %1324 : vector<16x16xf32>
    %1326 = arith.addf %1320, %1325 : vector<16x16xf32>
    %1327 = vector.extract_strided_slice %1315 {offsets = [2, 0, 0], sizes = [1, 16, 16], strides = [1, 1, 1]} : vector<16x16x16xf32> to vector<1x16x16xf32>
    %1328 = vector.shape_cast %1327 : vector<1x16x16xf32> to vector<16x16xf32>
    %c2_440 = arith.constant 2 : index
    %c0_441 = arith.constant 0 : index
    %1329 = memref.load %arg15[%c2_440, %c0_441] : memref<16x8xf32, #tpu.memory_space<smem>>
    %1330 = vector.broadcast %1329 : f32 to vector<16x16xf32>
    %1331 = arith.mulf %1328, %1330 : vector<16x16xf32>
    %1332 = arith.addf %1326, %1331 : vector<16x16xf32>
    %1333 = vector.extract_strided_slice %1315 {offsets = [3, 0, 0], sizes = [1, 16, 16], strides = [1, 1, 1]} : vector<16x16x16xf32> to vector<1x16x16xf32>
    %1334 = vector.shape_cast %1333 : vector<1x16x16xf32> to vector<16x16xf32>
    %c3_442 = arith.constant 3 : index
    %c0_443 = arith.constant 0 : index
    %1335 = memref.load %arg15[%c3_442, %c0_443] : memref<16x8xf32, #tpu.memory_space<smem>>
    %1336 = vector.broadcast %1335 : f32 to vector<16x16xf32>
    %1337 = arith.mulf %1334, %1336 : vector<16x16xf32>
    %1338 = arith.addf %1332, %1337 : vector<16x16xf32>
    %1339 = vector.extract_strided_slice %1315 {offsets = [4, 0, 0], sizes = [1, 16, 16], strides = [1, 1, 1]} : vector<16x16x16xf32> to vector<1x16x16xf32>
    %1340 = vector.shape_cast %1339 : vector<1x16x16xf32> to vector<16x16xf32>
    %c4_444 = arith.constant 4 : index
    %c0_445 = arith.constant 0 : index
    %1341 = memref.load %arg15[%c4_444, %c0_445] : memref<16x8xf32, #tpu.memory_space<smem>>
    %1342 = vector.broadcast %1341 : f32 to vector<16x16xf32>
    %1343 = arith.mulf %1340, %1342 : vector<16x16xf32>
    %1344 = arith.addf %1338, %1343 : vector<16x16xf32>
    %1345 = vector.extract_strided_slice %1315 {offsets = [5, 0, 0], sizes = [1, 16, 16], strides = [1, 1, 1]} : vector<16x16x16xf32> to vector<1x16x16xf32>
    %1346 = vector.shape_cast %1345 : vector<1x16x16xf32> to vector<16x16xf32>
    %c5_446 = arith.constant 5 : index
    %c0_447 = arith.constant 0 : index
    %1347 = memref.load %arg15[%c5_446, %c0_447] : memref<16x8xf32, #tpu.memory_space<smem>>
    %1348 = vector.broadcast %1347 : f32 to vector<16x16xf32>
    %1349 = arith.mulf %1346, %1348 : vector<16x16xf32>
    %1350 = arith.addf %1344, %1349 : vector<16x16xf32>
    %1351 = vector.extract_strided_slice %1315 {offsets = [6, 0, 0], sizes = [1, 16, 16], strides = [1, 1, 1]} : vector<16x16x16xf32> to vector<1x16x16xf32>
    %1352 = vector.shape_cast %1351 : vector<1x16x16xf32> to vector<16x16xf32>
    %c6_448 = arith.constant 6 : index
    %c0_449 = arith.constant 0 : index
    %1353 = memref.load %arg15[%c6_448, %c0_449] : memref<16x8xf32, #tpu.memory_space<smem>>
    %1354 = vector.broadcast %1353 : f32 to vector<16x16xf32>
    %1355 = arith.mulf %1352, %1354 : vector<16x16xf32>
    %1356 = arith.addf %1350, %1355 : vector<16x16xf32>
    %1357 = vector.extract_strided_slice %1315 {offsets = [7, 0, 0], sizes = [1, 16, 16], strides = [1, 1, 1]} : vector<16x16x16xf32> to vector<1x16x16xf32>
    %1358 = vector.shape_cast %1357 : vector<1x16x16xf32> to vector<16x16xf32>
    %c7_450 = arith.constant 7 : index
    %c0_451 = arith.constant 0 : index
    %1359 = memref.load %arg15[%c7_450, %c0_451] : memref<16x8xf32, #tpu.memory_space<smem>>
    %1360 = vector.broadcast %1359 : f32 to vector<16x16xf32>
    %1361 = arith.mulf %1358, %1360 : vector<16x16xf32>
    %1362 = arith.addf %1356, %1361 : vector<16x16xf32>
    %1363 = vector.extract_strided_slice %1315 {offsets = [8, 0, 0], sizes = [1, 16, 16], strides = [1, 1, 1]} : vector<16x16x16xf32> to vector<1x16x16xf32>
    %1364 = vector.shape_cast %1363 : vector<1x16x16xf32> to vector<16x16xf32>
    %c8 = arith.constant 8 : index
    %c0_452 = arith.constant 0 : index
    %1365 = memref.load %arg15[%c8, %c0_452] : memref<16x8xf32, #tpu.memory_space<smem>>
    %1366 = vector.broadcast %1365 : f32 to vector<16x16xf32>
    %1367 = arith.mulf %1364, %1366 : vector<16x16xf32>
    %1368 = arith.addf %1362, %1367 : vector<16x16xf32>
    %1369 = vector.extract_strided_slice %1315 {offsets = [9, 0, 0], sizes = [1, 16, 16], strides = [1, 1, 1]} : vector<16x16x16xf32> to vector<1x16x16xf32>
    %1370 = vector.shape_cast %1369 : vector<1x16x16xf32> to vector<16x16xf32>
    %c9 = arith.constant 9 : index
    %c0_453 = arith.constant 0 : index
    %1371 = memref.load %arg15[%c9, %c0_453] : memref<16x8xf32, #tpu.memory_space<smem>>
    %1372 = vector.broadcast %1371 : f32 to vector<16x16xf32>
    %1373 = arith.mulf %1370, %1372 : vector<16x16xf32>
    %1374 = arith.addf %1368, %1373 : vector<16x16xf32>
    %1375 = vector.extract_strided_slice %1315 {offsets = [10, 0, 0], sizes = [1, 16, 16], strides = [1, 1, 1]} : vector<16x16x16xf32> to vector<1x16x16xf32>
    %1376 = vector.shape_cast %1375 : vector<1x16x16xf32> to vector<16x16xf32>
    %c10 = arith.constant 10 : index
    %c0_454 = arith.constant 0 : index
    %1377 = memref.load %arg15[%c10, %c0_454] : memref<16x8xf32, #tpu.memory_space<smem>>
    %1378 = vector.broadcast %1377 : f32 to vector<16x16xf32>
    %1379 = arith.mulf %1376, %1378 : vector<16x16xf32>
    %1380 = arith.addf %1374, %1379 : vector<16x16xf32>
    %1381 = vector.extract_strided_slice %1315 {offsets = [11, 0, 0], sizes = [1, 16, 16], strides = [1, 1, 1]} : vector<16x16x16xf32> to vector<1x16x16xf32>
    %1382 = vector.shape_cast %1381 : vector<1x16x16xf32> to vector<16x16xf32>
    %c11 = arith.constant 11 : index
    %c0_455 = arith.constant 0 : index
    %1383 = memref.load %arg15[%c11, %c0_455] : memref<16x8xf32, #tpu.memory_space<smem>>
    %1384 = vector.broadcast %1383 : f32 to vector<16x16xf32>
    %1385 = arith.mulf %1382, %1384 : vector<16x16xf32>
    %1386 = arith.addf %1380, %1385 : vector<16x16xf32>
    %1387 = vector.extract_strided_slice %1315 {offsets = [12, 0, 0], sizes = [1, 16, 16], strides = [1, 1, 1]} : vector<16x16x16xf32> to vector<1x16x16xf32>
    %1388 = vector.shape_cast %1387 : vector<1x16x16xf32> to vector<16x16xf32>
    %c12 = arith.constant 12 : index
    %c0_456 = arith.constant 0 : index
    %1389 = memref.load %arg15[%c12, %c0_456] : memref<16x8xf32, #tpu.memory_space<smem>>
    %1390 = vector.broadcast %1389 : f32 to vector<16x16xf32>
    %1391 = arith.mulf %1388, %1390 : vector<16x16xf32>
    %1392 = arith.addf %1386, %1391 : vector<16x16xf32>
    %1393 = vector.extract_strided_slice %1315 {offsets = [13, 0, 0], sizes = [1, 16, 16], strides = [1, 1, 1]} : vector<16x16x16xf32> to vector<1x16x16xf32>
    %1394 = vector.shape_cast %1393 : vector<1x16x16xf32> to vector<16x16xf32>
    %c13 = arith.constant 13 : index
    %c0_457 = arith.constant 0 : index
    %1395 = memref.load %arg15[%c13, %c0_457] : memref<16x8xf32, #tpu.memory_space<smem>>
    %1396 = vector.broadcast %1395 : f32 to vector<16x16xf32>
    %1397 = arith.mulf %1394, %1396 : vector<16x16xf32>
    %1398 = arith.addf %1392, %1397 : vector<16x16xf32>
    %1399 = vector.extract_strided_slice %1315 {offsets = [14, 0, 0], sizes = [1, 16, 16], strides = [1, 1, 1]} : vector<16x16x16xf32> to vector<1x16x16xf32>
    %1400 = vector.shape_cast %1399 : vector<1x16x16xf32> to vector<16x16xf32>
    %c14 = arith.constant 14 : index
    %c0_458 = arith.constant 0 : index
    %1401 = memref.load %arg15[%c14, %c0_458] : memref<16x8xf32, #tpu.memory_space<smem>>
    %1402 = vector.broadcast %1401 : f32 to vector<16x16xf32>
    %1403 = arith.mulf %1400, %1402 : vector<16x16xf32>
    %1404 = arith.addf %1398, %1403 : vector<16x16xf32>
    %1405 = vector.extract_strided_slice %1315 {offsets = [15, 0, 0], sizes = [1, 16, 16], strides = [1, 1, 1]} : vector<16x16x16xf32> to vector<1x16x16xf32>
    %1406 = vector.shape_cast %1405 : vector<1x16x16xf32> to vector<16x16xf32>
    %c15 = arith.constant 15 : index
    %c0_459 = arith.constant 0 : index
    %1407 = memref.load %arg15[%c15, %c0_459] : memref<16x8xf32, #tpu.memory_space<smem>>
    %1408 = vector.broadcast %1407 : f32 to vector<16x16xf32>
    %1409 = arith.mulf %1406, %1408 : vector<16x16xf32>
    %1410 = arith.addf %1404, %1409 : vector<16x16xf32>
    %c0_460 = arith.constant 0 : index
    %1411 = memref.load %arg16[%c0_460] : memref<8xf32, #tpu.memory_space<smem>>
    %1412 = vector.broadcast %1411 : f32 to vector<16x16xf32>
    %1413 = arith.addf %1410, %1412 : vector<16x16xf32>
    %1414 = vector.extract_strided_slice %1315 {offsets = [0, 0, 0], sizes = [1, 16, 16], strides = [1, 1, 1]} : vector<16x16x16xf32> to vector<1x16x16xf32>
    %1415 = vector.shape_cast %1414 : vector<1x16x16xf32> to vector<16x16xf32>
    %c0_461 = arith.constant 0 : index
    %c1_462 = arith.constant 1 : index
    %1416 = memref.load %arg15[%c0_461, %c1_462] : memref<16x8xf32, #tpu.memory_space<smem>>
    %1417 = vector.broadcast %1416 : f32 to vector<16x16xf32>
    %1418 = arith.mulf %1415, %1417 : vector<16x16xf32>
    %1419 = vector.extract_strided_slice %1315 {offsets = [1, 0, 0], sizes = [1, 16, 16], strides = [1, 1, 1]} : vector<16x16x16xf32> to vector<1x16x16xf32>
    %1420 = vector.shape_cast %1419 : vector<1x16x16xf32> to vector<16x16xf32>
    %c1_463 = arith.constant 1 : index
    %c1_464 = arith.constant 1 : index
    %1421 = memref.load %arg15[%c1_463, %c1_464] : memref<16x8xf32, #tpu.memory_space<smem>>
    %1422 = vector.broadcast %1421 : f32 to vector<16x16xf32>
    %1423 = arith.mulf %1420, %1422 : vector<16x16xf32>
    %1424 = arith.addf %1418, %1423 : vector<16x16xf32>
    %1425 = vector.extract_strided_slice %1315 {offsets = [2, 0, 0], sizes = [1, 16, 16], strides = [1, 1, 1]} : vector<16x16x16xf32> to vector<1x16x16xf32>
    %1426 = vector.shape_cast %1425 : vector<1x16x16xf32> to vector<16x16xf32>
    %c2_465 = arith.constant 2 : index
    %c1_466 = arith.constant 1 : index
    %1427 = memref.load %arg15[%c2_465, %c1_466] : memref<16x8xf32, #tpu.memory_space<smem>>
    %1428 = vector.broadcast %1427 : f32 to vector<16x16xf32>
    %1429 = arith.mulf %1426, %1428 : vector<16x16xf32>
    %1430 = arith.addf %1424, %1429 : vector<16x16xf32>
    %1431 = vector.extract_strided_slice %1315 {offsets = [3, 0, 0], sizes = [1, 16, 16], strides = [1, 1, 1]} : vector<16x16x16xf32> to vector<1x16x16xf32>
    %1432 = vector.shape_cast %1431 : vector<1x16x16xf32> to vector<16x16xf32>
    %c3_467 = arith.constant 3 : index
    %c1_468 = arith.constant 1 : index
    %1433 = memref.load %arg15[%c3_467, %c1_468] : memref<16x8xf32, #tpu.memory_space<smem>>
    %1434 = vector.broadcast %1433 : f32 to vector<16x16xf32>
    %1435 = arith.mulf %1432, %1434 : vector<16x16xf32>
    %1436 = arith.addf %1430, %1435 : vector<16x16xf32>
    %1437 = vector.extract_strided_slice %1315 {offsets = [4, 0, 0], sizes = [1, 16, 16], strides = [1, 1, 1]} : vector<16x16x16xf32> to vector<1x16x16xf32>
    %1438 = vector.shape_cast %1437 : vector<1x16x16xf32> to vector<16x16xf32>
    %c4_469 = arith.constant 4 : index
    %c1_470 = arith.constant 1 : index
    %1439 = memref.load %arg15[%c4_469, %c1_470] : memref<16x8xf32, #tpu.memory_space<smem>>
    %1440 = vector.broadcast %1439 : f32 to vector<16x16xf32>
    %1441 = arith.mulf %1438, %1440 : vector<16x16xf32>
    %1442 = arith.addf %1436, %1441 : vector<16x16xf32>
    %1443 = vector.extract_strided_slice %1315 {offsets = [5, 0, 0], sizes = [1, 16, 16], strides = [1, 1, 1]} : vector<16x16x16xf32> to vector<1x16x16xf32>
    %1444 = vector.shape_cast %1443 : vector<1x16x16xf32> to vector<16x16xf32>
    %c5_471 = arith.constant 5 : index
    %c1_472 = arith.constant 1 : index
    %1445 = memref.load %arg15[%c5_471, %c1_472] : memref<16x8xf32, #tpu.memory_space<smem>>
    %1446 = vector.broadcast %1445 : f32 to vector<16x16xf32>
    %1447 = arith.mulf %1444, %1446 : vector<16x16xf32>
    %1448 = arith.addf %1442, %1447 : vector<16x16xf32>
    %1449 = vector.extract_strided_slice %1315 {offsets = [6, 0, 0], sizes = [1, 16, 16], strides = [1, 1, 1]} : vector<16x16x16xf32> to vector<1x16x16xf32>
    %1450 = vector.shape_cast %1449 : vector<1x16x16xf32> to vector<16x16xf32>
    %c6_473 = arith.constant 6 : index
    %c1_474 = arith.constant 1 : index
    %1451 = memref.load %arg15[%c6_473, %c1_474] : memref<16x8xf32, #tpu.memory_space<smem>>
    %1452 = vector.broadcast %1451 : f32 to vector<16x16xf32>
    %1453 = arith.mulf %1450, %1452 : vector<16x16xf32>
    %1454 = arith.addf %1448, %1453 : vector<16x16xf32>
    %1455 = vector.extract_strided_slice %1315 {offsets = [7, 0, 0], sizes = [1, 16, 16], strides = [1, 1, 1]} : vector<16x16x16xf32> to vector<1x16x16xf32>
    %1456 = vector.shape_cast %1455 : vector<1x16x16xf32> to vector<16x16xf32>
    %c7_475 = arith.constant 7 : index
    %c1_476 = arith.constant 1 : index
    %1457 = memref.load %arg15[%c7_475, %c1_476] : memref<16x8xf32, #tpu.memory_space<smem>>
    %1458 = vector.broadcast %1457 : f32 to vector<16x16xf32>
    %1459 = arith.mulf %1456, %1458 : vector<16x16xf32>
    %1460 = arith.addf %1454, %1459 : vector<16x16xf32>
    %1461 = vector.extract_strided_slice %1315 {offsets = [8, 0, 0], sizes = [1, 16, 16], strides = [1, 1, 1]} : vector<16x16x16xf32> to vector<1x16x16xf32>
    %1462 = vector.shape_cast %1461 : vector<1x16x16xf32> to vector<16x16xf32>
    %c8_477 = arith.constant 8 : index
    %c1_478 = arith.constant 1 : index
    %1463 = memref.load %arg15[%c8_477, %c1_478] : memref<16x8xf32, #tpu.memory_space<smem>>
    %1464 = vector.broadcast %1463 : f32 to vector<16x16xf32>
    %1465 = arith.mulf %1462, %1464 : vector<16x16xf32>
    %1466 = arith.addf %1460, %1465 : vector<16x16xf32>
    %1467 = vector.extract_strided_slice %1315 {offsets = [9, 0, 0], sizes = [1, 16, 16], strides = [1, 1, 1]} : vector<16x16x16xf32> to vector<1x16x16xf32>
    %1468 = vector.shape_cast %1467 : vector<1x16x16xf32> to vector<16x16xf32>
    %c9_479 = arith.constant 9 : index
    %c1_480 = arith.constant 1 : index
    %1469 = memref.load %arg15[%c9_479, %c1_480] : memref<16x8xf32, #tpu.memory_space<smem>>
    %1470 = vector.broadcast %1469 : f32 to vector<16x16xf32>
    %1471 = arith.mulf %1468, %1470 : vector<16x16xf32>
    %1472 = arith.addf %1466, %1471 : vector<16x16xf32>
    %1473 = vector.extract_strided_slice %1315 {offsets = [10, 0, 0], sizes = [1, 16, 16], strides = [1, 1, 1]} : vector<16x16x16xf32> to vector<1x16x16xf32>
    %1474 = vector.shape_cast %1473 : vector<1x16x16xf32> to vector<16x16xf32>
    %c10_481 = arith.constant 10 : index
    %c1_482 = arith.constant 1 : index
    %1475 = memref.load %arg15[%c10_481, %c1_482] : memref<16x8xf32, #tpu.memory_space<smem>>
    %1476 = vector.broadcast %1475 : f32 to vector<16x16xf32>
    %1477 = arith.mulf %1474, %1476 : vector<16x16xf32>
    %1478 = arith.addf %1472, %1477 : vector<16x16xf32>
    %1479 = vector.extract_strided_slice %1315 {offsets = [11, 0, 0], sizes = [1, 16, 16], strides = [1, 1, 1]} : vector<16x16x16xf32> to vector<1x16x16xf32>
    %1480 = vector.shape_cast %1479 : vector<1x16x16xf32> to vector<16x16xf32>
    %c11_483 = arith.constant 11 : index
    %c1_484 = arith.constant 1 : index
    %1481 = memref.load %arg15[%c11_483, %c1_484] : memref<16x8xf32, #tpu.memory_space<smem>>
    %1482 = vector.broadcast %1481 : f32 to vector<16x16xf32>
    %1483 = arith.mulf %1480, %1482 : vector<16x16xf32>
    %1484 = arith.addf %1478, %1483 : vector<16x16xf32>
    %1485 = vector.extract_strided_slice %1315 {offsets = [12, 0, 0], sizes = [1, 16, 16], strides = [1, 1, 1]} : vector<16x16x16xf32> to vector<1x16x16xf32>
    %1486 = vector.shape_cast %1485 : vector<1x16x16xf32> to vector<16x16xf32>
    %c12_485 = arith.constant 12 : index
    %c1_486 = arith.constant 1 : index
    %1487 = memref.load %arg15[%c12_485, %c1_486] : memref<16x8xf32, #tpu.memory_space<smem>>
    %1488 = vector.broadcast %1487 : f32 to vector<16x16xf32>
    %1489 = arith.mulf %1486, %1488 : vector<16x16xf32>
    %1490 = arith.addf %1484, %1489 : vector<16x16xf32>
    %1491 = vector.extract_strided_slice %1315 {offsets = [13, 0, 0], sizes = [1, 16, 16], strides = [1, 1, 1]} : vector<16x16x16xf32> to vector<1x16x16xf32>
    %1492 = vector.shape_cast %1491 : vector<1x16x16xf32> to vector<16x16xf32>
    %c13_487 = arith.constant 13 : index
    %c1_488 = arith.constant 1 : index
    %1493 = memref.load %arg15[%c13_487, %c1_488] : memref<16x8xf32, #tpu.memory_space<smem>>
    %1494 = vector.broadcast %1493 : f32 to vector<16x16xf32>
    %1495 = arith.mulf %1492, %1494 : vector<16x16xf32>
    %1496 = arith.addf %1490, %1495 : vector<16x16xf32>
    %1497 = vector.extract_strided_slice %1315 {offsets = [14, 0, 0], sizes = [1, 16, 16], strides = [1, 1, 1]} : vector<16x16x16xf32> to vector<1x16x16xf32>
    %1498 = vector.shape_cast %1497 : vector<1x16x16xf32> to vector<16x16xf32>
    %c14_489 = arith.constant 14 : index
    %c1_490 = arith.constant 1 : index
    %1499 = memref.load %arg15[%c14_489, %c1_490] : memref<16x8xf32, #tpu.memory_space<smem>>
    %1500 = vector.broadcast %1499 : f32 to vector<16x16xf32>
    %1501 = arith.mulf %1498, %1500 : vector<16x16xf32>
    %1502 = arith.addf %1496, %1501 : vector<16x16xf32>
    %1503 = vector.extract_strided_slice %1315 {offsets = [15, 0, 0], sizes = [1, 16, 16], strides = [1, 1, 1]} : vector<16x16x16xf32> to vector<1x16x16xf32>
    %1504 = vector.shape_cast %1503 : vector<1x16x16xf32> to vector<16x16xf32>
    %c15_491 = arith.constant 15 : index
    %c1_492 = arith.constant 1 : index
    %1505 = memref.load %arg15[%c15_491, %c1_492] : memref<16x8xf32, #tpu.memory_space<smem>>
    %1506 = vector.broadcast %1505 : f32 to vector<16x16xf32>
    %1507 = arith.mulf %1504, %1506 : vector<16x16xf32>
    %1508 = arith.addf %1502, %1507 : vector<16x16xf32>
    %c1_493 = arith.constant 1 : index
    %1509 = memref.load %arg16[%c1_493] : memref<8xf32, #tpu.memory_space<smem>>
    %1510 = vector.broadcast %1509 : f32 to vector<16x16xf32>
    %1511 = arith.addf %1508, %1510 : vector<16x16xf32>
    %1512 = vector.extract_strided_slice %1315 {offsets = [0, 0, 0], sizes = [1, 16, 16], strides = [1, 1, 1]} : vector<16x16x16xf32> to vector<1x16x16xf32>
    %1513 = vector.shape_cast %1512 : vector<1x16x16xf32> to vector<16x16xf32>
    %c0_494 = arith.constant 0 : index
    %c2_495 = arith.constant 2 : index
    %1514 = memref.load %arg15[%c0_494, %c2_495] : memref<16x8xf32, #tpu.memory_space<smem>>
    %1515 = vector.broadcast %1514 : f32 to vector<16x16xf32>
    %1516 = arith.mulf %1513, %1515 : vector<16x16xf32>
    %1517 = vector.extract_strided_slice %1315 {offsets = [1, 0, 0], sizes = [1, 16, 16], strides = [1, 1, 1]} : vector<16x16x16xf32> to vector<1x16x16xf32>
    %1518 = vector.shape_cast %1517 : vector<1x16x16xf32> to vector<16x16xf32>
    %c1_496 = arith.constant 1 : index
    %c2_497 = arith.constant 2 : index
    %1519 = memref.load %arg15[%c1_496, %c2_497] : memref<16x8xf32, #tpu.memory_space<smem>>
    %1520 = vector.broadcast %1519 : f32 to vector<16x16xf32>
    %1521 = arith.mulf %1518, %1520 : vector<16x16xf32>
    %1522 = arith.addf %1516, %1521 : vector<16x16xf32>
    %1523 = vector.extract_strided_slice %1315 {offsets = [2, 0, 0], sizes = [1, 16, 16], strides = [1, 1, 1]} : vector<16x16x16xf32> to vector<1x16x16xf32>
    %1524 = vector.shape_cast %1523 : vector<1x16x16xf32> to vector<16x16xf32>
    %c2_498 = arith.constant 2 : index
    %c2_499 = arith.constant 2 : index
    %1525 = memref.load %arg15[%c2_498, %c2_499] : memref<16x8xf32, #tpu.memory_space<smem>>
    %1526 = vector.broadcast %1525 : f32 to vector<16x16xf32>
    %1527 = arith.mulf %1524, %1526 : vector<16x16xf32>
    %1528 = arith.addf %1522, %1527 : vector<16x16xf32>
    %1529 = vector.extract_strided_slice %1315 {offsets = [3, 0, 0], sizes = [1, 16, 16], strides = [1, 1, 1]} : vector<16x16x16xf32> to vector<1x16x16xf32>
    %1530 = vector.shape_cast %1529 : vector<1x16x16xf32> to vector<16x16xf32>
    %c3_500 = arith.constant 3 : index
    %c2_501 = arith.constant 2 : index
    %1531 = memref.load %arg15[%c3_500, %c2_501] : memref<16x8xf32, #tpu.memory_space<smem>>
    %1532 = vector.broadcast %1531 : f32 to vector<16x16xf32>
    %1533 = arith.mulf %1530, %1532 : vector<16x16xf32>
    %1534 = arith.addf %1528, %1533 : vector<16x16xf32>
    %1535 = vector.extract_strided_slice %1315 {offsets = [4, 0, 0], sizes = [1, 16, 16], strides = [1, 1, 1]} : vector<16x16x16xf32> to vector<1x16x16xf32>
    %1536 = vector.shape_cast %1535 : vector<1x16x16xf32> to vector<16x16xf32>
    %c4_502 = arith.constant 4 : index
    %c2_503 = arith.constant 2 : index
    %1537 = memref.load %arg15[%c4_502, %c2_503] : memref<16x8xf32, #tpu.memory_space<smem>>
    %1538 = vector.broadcast %1537 : f32 to vector<16x16xf32>
    %1539 = arith.mulf %1536, %1538 : vector<16x16xf32>
    %1540 = arith.addf %1534, %1539 : vector<16x16xf32>
    %1541 = vector.extract_strided_slice %1315 {offsets = [5, 0, 0], sizes = [1, 16, 16], strides = [1, 1, 1]} : vector<16x16x16xf32> to vector<1x16x16xf32>
    %1542 = vector.shape_cast %1541 : vector<1x16x16xf32> to vector<16x16xf32>
    %c5_504 = arith.constant 5 : index
    %c2_505 = arith.constant 2 : index
    %1543 = memref.load %arg15[%c5_504, %c2_505] : memref<16x8xf32, #tpu.memory_space<smem>>
    %1544 = vector.broadcast %1543 : f32 to vector<16x16xf32>
    %1545 = arith.mulf %1542, %1544 : vector<16x16xf32>
    %1546 = arith.addf %1540, %1545 : vector<16x16xf32>
    %1547 = vector.extract_strided_slice %1315 {offsets = [6, 0, 0], sizes = [1, 16, 16], strides = [1, 1, 1]} : vector<16x16x16xf32> to vector<1x16x16xf32>
    %1548 = vector.shape_cast %1547 : vector<1x16x16xf32> to vector<16x16xf32>
    %c6_506 = arith.constant 6 : index
    %c2_507 = arith.constant 2 : index
    %1549 = memref.load %arg15[%c6_506, %c2_507] : memref<16x8xf32, #tpu.memory_space<smem>>
    %1550 = vector.broadcast %1549 : f32 to vector<16x16xf32>
    %1551 = arith.mulf %1548, %1550 : vector<16x16xf32>
    %1552 = arith.addf %1546, %1551 : vector<16x16xf32>
    %1553 = vector.extract_strided_slice %1315 {offsets = [7, 0, 0], sizes = [1, 16, 16], strides = [1, 1, 1]} : vector<16x16x16xf32> to vector<1x16x16xf32>
    %1554 = vector.shape_cast %1553 : vector<1x16x16xf32> to vector<16x16xf32>
    %c7_508 = arith.constant 7 : index
    %c2_509 = arith.constant 2 : index
    %1555 = memref.load %arg15[%c7_508, %c2_509] : memref<16x8xf32, #tpu.memory_space<smem>>
    %1556 = vector.broadcast %1555 : f32 to vector<16x16xf32>
    %1557 = arith.mulf %1554, %1556 : vector<16x16xf32>
    %1558 = arith.addf %1552, %1557 : vector<16x16xf32>
    %1559 = vector.extract_strided_slice %1315 {offsets = [8, 0, 0], sizes = [1, 16, 16], strides = [1, 1, 1]} : vector<16x16x16xf32> to vector<1x16x16xf32>
    %1560 = vector.shape_cast %1559 : vector<1x16x16xf32> to vector<16x16xf32>
    %c8_510 = arith.constant 8 : index
    %c2_511 = arith.constant 2 : index
    %1561 = memref.load %arg15[%c8_510, %c2_511] : memref<16x8xf32, #tpu.memory_space<smem>>
    %1562 = vector.broadcast %1561 : f32 to vector<16x16xf32>
    %1563 = arith.mulf %1560, %1562 : vector<16x16xf32>
    %1564 = arith.addf %1558, %1563 : vector<16x16xf32>
    %1565 = vector.extract_strided_slice %1315 {offsets = [9, 0, 0], sizes = [1, 16, 16], strides = [1, 1, 1]} : vector<16x16x16xf32> to vector<1x16x16xf32>
    %1566 = vector.shape_cast %1565 : vector<1x16x16xf32> to vector<16x16xf32>
    %c9_512 = arith.constant 9 : index
    %c2_513 = arith.constant 2 : index
    %1567 = memref.load %arg15[%c9_512, %c2_513] : memref<16x8xf32, #tpu.memory_space<smem>>
    %1568 = vector.broadcast %1567 : f32 to vector<16x16xf32>
    %1569 = arith.mulf %1566, %1568 : vector<16x16xf32>
    %1570 = arith.addf %1564, %1569 : vector<16x16xf32>
    %1571 = vector.extract_strided_slice %1315 {offsets = [10, 0, 0], sizes = [1, 16, 16], strides = [1, 1, 1]} : vector<16x16x16xf32> to vector<1x16x16xf32>
    %1572 = vector.shape_cast %1571 : vector<1x16x16xf32> to vector<16x16xf32>
    %c10_514 = arith.constant 10 : index
    %c2_515 = arith.constant 2 : index
    %1573 = memref.load %arg15[%c10_514, %c2_515] : memref<16x8xf32, #tpu.memory_space<smem>>
    %1574 = vector.broadcast %1573 : f32 to vector<16x16xf32>
    %1575 = arith.mulf %1572, %1574 : vector<16x16xf32>
    %1576 = arith.addf %1570, %1575 : vector<16x16xf32>
    %1577 = vector.extract_strided_slice %1315 {offsets = [11, 0, 0], sizes = [1, 16, 16], strides = [1, 1, 1]} : vector<16x16x16xf32> to vector<1x16x16xf32>
    %1578 = vector.shape_cast %1577 : vector<1x16x16xf32> to vector<16x16xf32>
    %c11_516 = arith.constant 11 : index
    %c2_517 = arith.constant 2 : index
    %1579 = memref.load %arg15[%c11_516, %c2_517] : memref<16x8xf32, #tpu.memory_space<smem>>
    %1580 = vector.broadcast %1579 : f32 to vector<16x16xf32>
    %1581 = arith.mulf %1578, %1580 : vector<16x16xf32>
    %1582 = arith.addf %1576, %1581 : vector<16x16xf32>
    %1583 = vector.extract_strided_slice %1315 {offsets = [12, 0, 0], sizes = [1, 16, 16], strides = [1, 1, 1]} : vector<16x16x16xf32> to vector<1x16x16xf32>
    %1584 = vector.shape_cast %1583 : vector<1x16x16xf32> to vector<16x16xf32>
    %c12_518 = arith.constant 12 : index
    %c2_519 = arith.constant 2 : index
    %1585 = memref.load %arg15[%c12_518, %c2_519] : memref<16x8xf32, #tpu.memory_space<smem>>
    %1586 = vector.broadcast %1585 : f32 to vector<16x16xf32>
    %1587 = arith.mulf %1584, %1586 : vector<16x16xf32>
    %1588 = arith.addf %1582, %1587 : vector<16x16xf32>
    %1589 = vector.extract_strided_slice %1315 {offsets = [13, 0, 0], sizes = [1, 16, 16], strides = [1, 1, 1]} : vector<16x16x16xf32> to vector<1x16x16xf32>
    %1590 = vector.shape_cast %1589 : vector<1x16x16xf32> to vector<16x16xf32>
    %c13_520 = arith.constant 13 : index
    %c2_521 = arith.constant 2 : index
    %1591 = memref.load %arg15[%c13_520, %c2_521] : memref<16x8xf32, #tpu.memory_space<smem>>
    %1592 = vector.broadcast %1591 : f32 to vector<16x16xf32>
    %1593 = arith.mulf %1590, %1592 : vector<16x16xf32>
    %1594 = arith.addf %1588, %1593 : vector<16x16xf32>
    %1595 = vector.extract_strided_slice %1315 {offsets = [14, 0, 0], sizes = [1, 16, 16], strides = [1, 1, 1]} : vector<16x16x16xf32> to vector<1x16x16xf32>
    %1596 = vector.shape_cast %1595 : vector<1x16x16xf32> to vector<16x16xf32>
    %c14_522 = arith.constant 14 : index
    %c2_523 = arith.constant 2 : index
    %1597 = memref.load %arg15[%c14_522, %c2_523] : memref<16x8xf32, #tpu.memory_space<smem>>
    %1598 = vector.broadcast %1597 : f32 to vector<16x16xf32>
    %1599 = arith.mulf %1596, %1598 : vector<16x16xf32>
    %1600 = arith.addf %1594, %1599 : vector<16x16xf32>
    %1601 = vector.extract_strided_slice %1315 {offsets = [15, 0, 0], sizes = [1, 16, 16], strides = [1, 1, 1]} : vector<16x16x16xf32> to vector<1x16x16xf32>
    %1602 = vector.shape_cast %1601 : vector<1x16x16xf32> to vector<16x16xf32>
    %c15_524 = arith.constant 15 : index
    %c2_525 = arith.constant 2 : index
    %1603 = memref.load %arg15[%c15_524, %c2_525] : memref<16x8xf32, #tpu.memory_space<smem>>
    %1604 = vector.broadcast %1603 : f32 to vector<16x16xf32>
    %1605 = arith.mulf %1602, %1604 : vector<16x16xf32>
    %1606 = arith.addf %1600, %1605 : vector<16x16xf32>
    %c2_526 = arith.constant 2 : index
    %1607 = memref.load %arg16[%c2_526] : memref<8xf32, #tpu.memory_space<smem>>
    %1608 = vector.broadcast %1607 : f32 to vector<16x16xf32>
    %1609 = arith.addf %1606, %1608 : vector<16x16xf32>
    %1610 = vector.extract_strided_slice %1315 {offsets = [0, 0, 0], sizes = [1, 16, 16], strides = [1, 1, 1]} : vector<16x16x16xf32> to vector<1x16x16xf32>
    %1611 = vector.shape_cast %1610 : vector<1x16x16xf32> to vector<16x16xf32>
    %c0_527 = arith.constant 0 : index
    %c3_528 = arith.constant 3 : index
    %1612 = memref.load %arg15[%c0_527, %c3_528] : memref<16x8xf32, #tpu.memory_space<smem>>
    %1613 = vector.broadcast %1612 : f32 to vector<16x16xf32>
    %1614 = arith.mulf %1611, %1613 : vector<16x16xf32>
    %1615 = vector.extract_strided_slice %1315 {offsets = [1, 0, 0], sizes = [1, 16, 16], strides = [1, 1, 1]} : vector<16x16x16xf32> to vector<1x16x16xf32>
    %1616 = vector.shape_cast %1615 : vector<1x16x16xf32> to vector<16x16xf32>
    %c1_529 = arith.constant 1 : index
    %c3_530 = arith.constant 3 : index
    %1617 = memref.load %arg15[%c1_529, %c3_530] : memref<16x8xf32, #tpu.memory_space<smem>>
    %1618 = vector.broadcast %1617 : f32 to vector<16x16xf32>
    %1619 = arith.mulf %1616, %1618 : vector<16x16xf32>
    %1620 = arith.addf %1614, %1619 : vector<16x16xf32>
    %1621 = vector.extract_strided_slice %1315 {offsets = [2, 0, 0], sizes = [1, 16, 16], strides = [1, 1, 1]} : vector<16x16x16xf32> to vector<1x16x16xf32>
    %1622 = vector.shape_cast %1621 : vector<1x16x16xf32> to vector<16x16xf32>
    %c2_531 = arith.constant 2 : index
    %c3_532 = arith.constant 3 : index
    %1623 = memref.load %arg15[%c2_531, %c3_532] : memref<16x8xf32, #tpu.memory_space<smem>>
    %1624 = vector.broadcast %1623 : f32 to vector<16x16xf32>
    %1625 = arith.mulf %1622, %1624 : vector<16x16xf32>
    %1626 = arith.addf %1620, %1625 : vector<16x16xf32>
    %1627 = vector.extract_strided_slice %1315 {offsets = [3, 0, 0], sizes = [1, 16, 16], strides = [1, 1, 1]} : vector<16x16x16xf32> to vector<1x16x16xf32>
    %1628 = vector.shape_cast %1627 : vector<1x16x16xf32> to vector<16x16xf32>
    %c3_533 = arith.constant 3 : index
    %c3_534 = arith.constant 3 : index
    %1629 = memref.load %arg15[%c3_533, %c3_534] : memref<16x8xf32, #tpu.memory_space<smem>>
    %1630 = vector.broadcast %1629 : f32 to vector<16x16xf32>
    %1631 = arith.mulf %1628, %1630 : vector<16x16xf32>
    %1632 = arith.addf %1626, %1631 : vector<16x16xf32>
    %1633 = vector.extract_strided_slice %1315 {offsets = [4, 0, 0], sizes = [1, 16, 16], strides = [1, 1, 1]} : vector<16x16x16xf32> to vector<1x16x16xf32>
    %1634 = vector.shape_cast %1633 : vector<1x16x16xf32> to vector<16x16xf32>
    %c4_535 = arith.constant 4 : index
    %c3_536 = arith.constant 3 : index
    %1635 = memref.load %arg15[%c4_535, %c3_536] : memref<16x8xf32, #tpu.memory_space<smem>>
    %1636 = vector.broadcast %1635 : f32 to vector<16x16xf32>
    %1637 = arith.mulf %1634, %1636 : vector<16x16xf32>
    %1638 = arith.addf %1632, %1637 : vector<16x16xf32>
    %1639 = vector.extract_strided_slice %1315 {offsets = [5, 0, 0], sizes = [1, 16, 16], strides = [1, 1, 1]} : vector<16x16x16xf32> to vector<1x16x16xf32>
    %1640 = vector.shape_cast %1639 : vector<1x16x16xf32> to vector<16x16xf32>
    %c5_537 = arith.constant 5 : index
    %c3_538 = arith.constant 3 : index
    %1641 = memref.load %arg15[%c5_537, %c3_538] : memref<16x8xf32, #tpu.memory_space<smem>>
    %1642 = vector.broadcast %1641 : f32 to vector<16x16xf32>
    %1643 = arith.mulf %1640, %1642 : vector<16x16xf32>
    %1644 = arith.addf %1638, %1643 : vector<16x16xf32>
    %1645 = vector.extract_strided_slice %1315 {offsets = [6, 0, 0], sizes = [1, 16, 16], strides = [1, 1, 1]} : vector<16x16x16xf32> to vector<1x16x16xf32>
    %1646 = vector.shape_cast %1645 : vector<1x16x16xf32> to vector<16x16xf32>
    %c6_539 = arith.constant 6 : index
    %c3_540 = arith.constant 3 : index
    %1647 = memref.load %arg15[%c6_539, %c3_540] : memref<16x8xf32, #tpu.memory_space<smem>>
    %1648 = vector.broadcast %1647 : f32 to vector<16x16xf32>
    %1649 = arith.mulf %1646, %1648 : vector<16x16xf32>
    %1650 = arith.addf %1644, %1649 : vector<16x16xf32>
    %1651 = vector.extract_strided_slice %1315 {offsets = [7, 0, 0], sizes = [1, 16, 16], strides = [1, 1, 1]} : vector<16x16x16xf32> to vector<1x16x16xf32>
    %1652 = vector.shape_cast %1651 : vector<1x16x16xf32> to vector<16x16xf32>
    %c7_541 = arith.constant 7 : index
    %c3_542 = arith.constant 3 : index
    %1653 = memref.load %arg15[%c7_541, %c3_542] : memref<16x8xf32, #tpu.memory_space<smem>>
    %1654 = vector.broadcast %1653 : f32 to vector<16x16xf32>
    %1655 = arith.mulf %1652, %1654 : vector<16x16xf32>
    %1656 = arith.addf %1650, %1655 : vector<16x16xf32>
    %1657 = vector.extract_strided_slice %1315 {offsets = [8, 0, 0], sizes = [1, 16, 16], strides = [1, 1, 1]} : vector<16x16x16xf32> to vector<1x16x16xf32>
    %1658 = vector.shape_cast %1657 : vector<1x16x16xf32> to vector<16x16xf32>
    %c8_543 = arith.constant 8 : index
    %c3_544 = arith.constant 3 : index
    %1659 = memref.load %arg15[%c8_543, %c3_544] : memref<16x8xf32, #tpu.memory_space<smem>>
    %1660 = vector.broadcast %1659 : f32 to vector<16x16xf32>
    %1661 = arith.mulf %1658, %1660 : vector<16x16xf32>
    %1662 = arith.addf %1656, %1661 : vector<16x16xf32>
    %1663 = vector.extract_strided_slice %1315 {offsets = [9, 0, 0], sizes = [1, 16, 16], strides = [1, 1, 1]} : vector<16x16x16xf32> to vector<1x16x16xf32>
    %1664 = vector.shape_cast %1663 : vector<1x16x16xf32> to vector<16x16xf32>
    %c9_545 = arith.constant 9 : index
    %c3_546 = arith.constant 3 : index
    %1665 = memref.load %arg15[%c9_545, %c3_546] : memref<16x8xf32, #tpu.memory_space<smem>>
    %1666 = vector.broadcast %1665 : f32 to vector<16x16xf32>
    %1667 = arith.mulf %1664, %1666 : vector<16x16xf32>
    %1668 = arith.addf %1662, %1667 : vector<16x16xf32>
    %1669 = vector.extract_strided_slice %1315 {offsets = [10, 0, 0], sizes = [1, 16, 16], strides = [1, 1, 1]} : vector<16x16x16xf32> to vector<1x16x16xf32>
    %1670 = vector.shape_cast %1669 : vector<1x16x16xf32> to vector<16x16xf32>
    %c10_547 = arith.constant 10 : index
    %c3_548 = arith.constant 3 : index
    %1671 = memref.load %arg15[%c10_547, %c3_548] : memref<16x8xf32, #tpu.memory_space<smem>>
    %1672 = vector.broadcast %1671 : f32 to vector<16x16xf32>
    %1673 = arith.mulf %1670, %1672 : vector<16x16xf32>
    %1674 = arith.addf %1668, %1673 : vector<16x16xf32>
    %1675 = vector.extract_strided_slice %1315 {offsets = [11, 0, 0], sizes = [1, 16, 16], strides = [1, 1, 1]} : vector<16x16x16xf32> to vector<1x16x16xf32>
    %1676 = vector.shape_cast %1675 : vector<1x16x16xf32> to vector<16x16xf32>
    %c11_549 = arith.constant 11 : index
    %c3_550 = arith.constant 3 : index
    %1677 = memref.load %arg15[%c11_549, %c3_550] : memref<16x8xf32, #tpu.memory_space<smem>>
    %1678 = vector.broadcast %1677 : f32 to vector<16x16xf32>
    %1679 = arith.mulf %1676, %1678 : vector<16x16xf32>
    %1680 = arith.addf %1674, %1679 : vector<16x16xf32>
    %1681 = vector.extract_strided_slice %1315 {offsets = [12, 0, 0], sizes = [1, 16, 16], strides = [1, 1, 1]} : vector<16x16x16xf32> to vector<1x16x16xf32>
    %1682 = vector.shape_cast %1681 : vector<1x16x16xf32> to vector<16x16xf32>
    %c12_551 = arith.constant 12 : index
    %c3_552 = arith.constant 3 : index
    %1683 = memref.load %arg15[%c12_551, %c3_552] : memref<16x8xf32, #tpu.memory_space<smem>>
    %1684 = vector.broadcast %1683 : f32 to vector<16x16xf32>
    %1685 = arith.mulf %1682, %1684 : vector<16x16xf32>
    %1686 = arith.addf %1680, %1685 : vector<16x16xf32>
    %1687 = vector.extract_strided_slice %1315 {offsets = [13, 0, 0], sizes = [1, 16, 16], strides = [1, 1, 1]} : vector<16x16x16xf32> to vector<1x16x16xf32>
    %1688 = vector.shape_cast %1687 : vector<1x16x16xf32> to vector<16x16xf32>
    %c13_553 = arith.constant 13 : index
    %c3_554 = arith.constant 3 : index
    %1689 = memref.load %arg15[%c13_553, %c3_554] : memref<16x8xf32, #tpu.memory_space<smem>>
    %1690 = vector.broadcast %1689 : f32 to vector<16x16xf32>
    %1691 = arith.mulf %1688, %1690 : vector<16x16xf32>
    %1692 = arith.addf %1686, %1691 : vector<16x16xf32>
    %1693 = vector.extract_strided_slice %1315 {offsets = [14, 0, 0], sizes = [1, 16, 16], strides = [1, 1, 1]} : vector<16x16x16xf32> to vector<1x16x16xf32>
    %1694 = vector.shape_cast %1693 : vector<1x16x16xf32> to vector<16x16xf32>
    %c14_555 = arith.constant 14 : index
    %c3_556 = arith.constant 3 : index
    %1695 = memref.load %arg15[%c14_555, %c3_556] : memref<16x8xf32, #tpu.memory_space<smem>>
    %1696 = vector.broadcast %1695 : f32 to vector<16x16xf32>
    %1697 = arith.mulf %1694, %1696 : vector<16x16xf32>
    %1698 = arith.addf %1692, %1697 : vector<16x16xf32>
    %1699 = vector.extract_strided_slice %1315 {offsets = [15, 0, 0], sizes = [1, 16, 16], strides = [1, 1, 1]} : vector<16x16x16xf32> to vector<1x16x16xf32>
    %1700 = vector.shape_cast %1699 : vector<1x16x16xf32> to vector<16x16xf32>
    %c15_557 = arith.constant 15 : index
    %c3_558 = arith.constant 3 : index
    %1701 = memref.load %arg15[%c15_557, %c3_558] : memref<16x8xf32, #tpu.memory_space<smem>>
    %1702 = vector.broadcast %1701 : f32 to vector<16x16xf32>
    %1703 = arith.mulf %1700, %1702 : vector<16x16xf32>
    %1704 = arith.addf %1698, %1703 : vector<16x16xf32>
    %c3_559 = arith.constant 3 : index
    %1705 = memref.load %arg16[%c3_559] : memref<8xf32, #tpu.memory_space<smem>>
    %1706 = vector.broadcast %1705 : f32 to vector<16x16xf32>
    %1707 = arith.addf %1704, %1706 : vector<16x16xf32>
    %1708 = vector.extract_strided_slice %1315 {offsets = [0, 0, 0], sizes = [1, 16, 16], strides = [1, 1, 1]} : vector<16x16x16xf32> to vector<1x16x16xf32>
    %1709 = vector.shape_cast %1708 : vector<1x16x16xf32> to vector<16x16xf32>
    %c0_560 = arith.constant 0 : index
    %c4_561 = arith.constant 4 : index
    %1710 = memref.load %arg15[%c0_560, %c4_561] : memref<16x8xf32, #tpu.memory_space<smem>>
    %1711 = vector.broadcast %1710 : f32 to vector<16x16xf32>
    %1712 = arith.mulf %1709, %1711 : vector<16x16xf32>
    %1713 = vector.extract_strided_slice %1315 {offsets = [1, 0, 0], sizes = [1, 16, 16], strides = [1, 1, 1]} : vector<16x16x16xf32> to vector<1x16x16xf32>
    %1714 = vector.shape_cast %1713 : vector<1x16x16xf32> to vector<16x16xf32>
    %c1_562 = arith.constant 1 : index
    %c4_563 = arith.constant 4 : index
    %1715 = memref.load %arg15[%c1_562, %c4_563] : memref<16x8xf32, #tpu.memory_space<smem>>
    %1716 = vector.broadcast %1715 : f32 to vector<16x16xf32>
    %1717 = arith.mulf %1714, %1716 : vector<16x16xf32>
    %1718 = arith.addf %1712, %1717 : vector<16x16xf32>
    %1719 = vector.extract_strided_slice %1315 {offsets = [2, 0, 0], sizes = [1, 16, 16], strides = [1, 1, 1]} : vector<16x16x16xf32> to vector<1x16x16xf32>
    %1720 = vector.shape_cast %1719 : vector<1x16x16xf32> to vector<16x16xf32>
    %c2_564 = arith.constant 2 : index
    %c4_565 = arith.constant 4 : index
    %1721 = memref.load %arg15[%c2_564, %c4_565] : memref<16x8xf32, #tpu.memory_space<smem>>
    %1722 = vector.broadcast %1721 : f32 to vector<16x16xf32>
    %1723 = arith.mulf %1720, %1722 : vector<16x16xf32>
    %1724 = arith.addf %1718, %1723 : vector<16x16xf32>
    %1725 = vector.extract_strided_slice %1315 {offsets = [3, 0, 0], sizes = [1, 16, 16], strides = [1, 1, 1]} : vector<16x16x16xf32> to vector<1x16x16xf32>
    %1726 = vector.shape_cast %1725 : vector<1x16x16xf32> to vector<16x16xf32>
    %c3_566 = arith.constant 3 : index
    %c4_567 = arith.constant 4 : index
    %1727 = memref.load %arg15[%c3_566, %c4_567] : memref<16x8xf32, #tpu.memory_space<smem>>
    %1728 = vector.broadcast %1727 : f32 to vector<16x16xf32>
    %1729 = arith.mulf %1726, %1728 : vector<16x16xf32>
    %1730 = arith.addf %1724, %1729 : vector<16x16xf32>
    %1731 = vector.extract_strided_slice %1315 {offsets = [4, 0, 0], sizes = [1, 16, 16], strides = [1, 1, 1]} : vector<16x16x16xf32> to vector<1x16x16xf32>
    %1732 = vector.shape_cast %1731 : vector<1x16x16xf32> to vector<16x16xf32>
    %c4_568 = arith.constant 4 : index
    %c4_569 = arith.constant 4 : index
    %1733 = memref.load %arg15[%c4_568, %c4_569] : memref<16x8xf32, #tpu.memory_space<smem>>
    %1734 = vector.broadcast %1733 : f32 to vector<16x16xf32>
    %1735 = arith.mulf %1732, %1734 : vector<16x16xf32>
    %1736 = arith.addf %1730, %1735 : vector<16x16xf32>
    %1737 = vector.extract_strided_slice %1315 {offsets = [5, 0, 0], sizes = [1, 16, 16], strides = [1, 1, 1]} : vector<16x16x16xf32> to vector<1x16x16xf32>
    %1738 = vector.shape_cast %1737 : vector<1x16x16xf32> to vector<16x16xf32>
    %c5_570 = arith.constant 5 : index
    %c4_571 = arith.constant 4 : index
    %1739 = memref.load %arg15[%c5_570, %c4_571] : memref<16x8xf32, #tpu.memory_space<smem>>
    %1740 = vector.broadcast %1739 : f32 to vector<16x16xf32>
    %1741 = arith.mulf %1738, %1740 : vector<16x16xf32>
    %1742 = arith.addf %1736, %1741 : vector<16x16xf32>
    %1743 = vector.extract_strided_slice %1315 {offsets = [6, 0, 0], sizes = [1, 16, 16], strides = [1, 1, 1]} : vector<16x16x16xf32> to vector<1x16x16xf32>
    %1744 = vector.shape_cast %1743 : vector<1x16x16xf32> to vector<16x16xf32>
    %c6_572 = arith.constant 6 : index
    %c4_573 = arith.constant 4 : index
    %1745 = memref.load %arg15[%c6_572, %c4_573] : memref<16x8xf32, #tpu.memory_space<smem>>
    %1746 = vector.broadcast %1745 : f32 to vector<16x16xf32>
    %1747 = arith.mulf %1744, %1746 : vector<16x16xf32>
    %1748 = arith.addf %1742, %1747 : vector<16x16xf32>
    %1749 = vector.extract_strided_slice %1315 {offsets = [7, 0, 0], sizes = [1, 16, 16], strides = [1, 1, 1]} : vector<16x16x16xf32> to vector<1x16x16xf32>
    %1750 = vector.shape_cast %1749 : vector<1x16x16xf32> to vector<16x16xf32>
    %c7_574 = arith.constant 7 : index
    %c4_575 = arith.constant 4 : index
    %1751 = memref.load %arg15[%c7_574, %c4_575] : memref<16x8xf32, #tpu.memory_space<smem>>
    %1752 = vector.broadcast %1751 : f32 to vector<16x16xf32>
    %1753 = arith.mulf %1750, %1752 : vector<16x16xf32>
    %1754 = arith.addf %1748, %1753 : vector<16x16xf32>
    %1755 = vector.extract_strided_slice %1315 {offsets = [8, 0, 0], sizes = [1, 16, 16], strides = [1, 1, 1]} : vector<16x16x16xf32> to vector<1x16x16xf32>
    %1756 = vector.shape_cast %1755 : vector<1x16x16xf32> to vector<16x16xf32>
    %c8_576 = arith.constant 8 : index
    %c4_577 = arith.constant 4 : index
    %1757 = memref.load %arg15[%c8_576, %c4_577] : memref<16x8xf32, #tpu.memory_space<smem>>
    %1758 = vector.broadcast %1757 : f32 to vector<16x16xf32>
    %1759 = arith.mulf %1756, %1758 : vector<16x16xf32>
    %1760 = arith.addf %1754, %1759 : vector<16x16xf32>
    %1761 = vector.extract_strided_slice %1315 {offsets = [9, 0, 0], sizes = [1, 16, 16], strides = [1, 1, 1]} : vector<16x16x16xf32> to vector<1x16x16xf32>
    %1762 = vector.shape_cast %1761 : vector<1x16x16xf32> to vector<16x16xf32>
    %c9_578 = arith.constant 9 : index
    %c4_579 = arith.constant 4 : index
    %1763 = memref.load %arg15[%c9_578, %c4_579] : memref<16x8xf32, #tpu.memory_space<smem>>
    %1764 = vector.broadcast %1763 : f32 to vector<16x16xf32>
    %1765 = arith.mulf %1762, %1764 : vector<16x16xf32>
    %1766 = arith.addf %1760, %1765 : vector<16x16xf32>
    %1767 = vector.extract_strided_slice %1315 {offsets = [10, 0, 0], sizes = [1, 16, 16], strides = [1, 1, 1]} : vector<16x16x16xf32> to vector<1x16x16xf32>
    %1768 = vector.shape_cast %1767 : vector<1x16x16xf32> to vector<16x16xf32>
    %c10_580 = arith.constant 10 : index
    %c4_581 = arith.constant 4 : index
    %1769 = memref.load %arg15[%c10_580, %c4_581] : memref<16x8xf32, #tpu.memory_space<smem>>
    %1770 = vector.broadcast %1769 : f32 to vector<16x16xf32>
    %1771 = arith.mulf %1768, %1770 : vector<16x16xf32>
    %1772 = arith.addf %1766, %1771 : vector<16x16xf32>
    %1773 = vector.extract_strided_slice %1315 {offsets = [11, 0, 0], sizes = [1, 16, 16], strides = [1, 1, 1]} : vector<16x16x16xf32> to vector<1x16x16xf32>
    %1774 = vector.shape_cast %1773 : vector<1x16x16xf32> to vector<16x16xf32>
    %c11_582 = arith.constant 11 : index
    %c4_583 = arith.constant 4 : index
    %1775 = memref.load %arg15[%c11_582, %c4_583] : memref<16x8xf32, #tpu.memory_space<smem>>
    %1776 = vector.broadcast %1775 : f32 to vector<16x16xf32>
    %1777 = arith.mulf %1774, %1776 : vector<16x16xf32>
    %1778 = arith.addf %1772, %1777 : vector<16x16xf32>
    %1779 = vector.extract_strided_slice %1315 {offsets = [12, 0, 0], sizes = [1, 16, 16], strides = [1, 1, 1]} : vector<16x16x16xf32> to vector<1x16x16xf32>
    %1780 = vector.shape_cast %1779 : vector<1x16x16xf32> to vector<16x16xf32>
    %c12_584 = arith.constant 12 : index
    %c4_585 = arith.constant 4 : index
    %1781 = memref.load %arg15[%c12_584, %c4_585] : memref<16x8xf32, #tpu.memory_space<smem>>
    %1782 = vector.broadcast %1781 : f32 to vector<16x16xf32>
    %1783 = arith.mulf %1780, %1782 : vector<16x16xf32>
    %1784 = arith.addf %1778, %1783 : vector<16x16xf32>
    %1785 = vector.extract_strided_slice %1315 {offsets = [13, 0, 0], sizes = [1, 16, 16], strides = [1, 1, 1]} : vector<16x16x16xf32> to vector<1x16x16xf32>
    %1786 = vector.shape_cast %1785 : vector<1x16x16xf32> to vector<16x16xf32>
    %c13_586 = arith.constant 13 : index
    %c4_587 = arith.constant 4 : index
    %1787 = memref.load %arg15[%c13_586, %c4_587] : memref<16x8xf32, #tpu.memory_space<smem>>
    %1788 = vector.broadcast %1787 : f32 to vector<16x16xf32>
    %1789 = arith.mulf %1786, %1788 : vector<16x16xf32>
    %1790 = arith.addf %1784, %1789 : vector<16x16xf32>
    %1791 = vector.extract_strided_slice %1315 {offsets = [14, 0, 0], sizes = [1, 16, 16], strides = [1, 1, 1]} : vector<16x16x16xf32> to vector<1x16x16xf32>
    %1792 = vector.shape_cast %1791 : vector<1x16x16xf32> to vector<16x16xf32>
    %c14_588 = arith.constant 14 : index
    %c4_589 = arith.constant 4 : index
    %1793 = memref.load %arg15[%c14_588, %c4_589] : memref<16x8xf32, #tpu.memory_space<smem>>
    %1794 = vector.broadcast %1793 : f32 to vector<16x16xf32>
    %1795 = arith.mulf %1792, %1794 : vector<16x16xf32>
    %1796 = arith.addf %1790, %1795 : vector<16x16xf32>
    %1797 = vector.extract_strided_slice %1315 {offsets = [15, 0, 0], sizes = [1, 16, 16], strides = [1, 1, 1]} : vector<16x16x16xf32> to vector<1x16x16xf32>
    %1798 = vector.shape_cast %1797 : vector<1x16x16xf32> to vector<16x16xf32>
    %c15_590 = arith.constant 15 : index
    %c4_591 = arith.constant 4 : index
    %1799 = memref.load %arg15[%c15_590, %c4_591] : memref<16x8xf32, #tpu.memory_space<smem>>
    %1800 = vector.broadcast %1799 : f32 to vector<16x16xf32>
    %1801 = arith.mulf %1798, %1800 : vector<16x16xf32>
    %1802 = arith.addf %1796, %1801 : vector<16x16xf32>
    %c4_592 = arith.constant 4 : index
    %1803 = memref.load %arg16[%c4_592] : memref<8xf32, #tpu.memory_space<smem>>
    %1804 = vector.broadcast %1803 : f32 to vector<16x16xf32>
    %1805 = arith.addf %1802, %1804 : vector<16x16xf32>
    %1806 = vector.extract_strided_slice %1315 {offsets = [0, 0, 0], sizes = [1, 16, 16], strides = [1, 1, 1]} : vector<16x16x16xf32> to vector<1x16x16xf32>
    %1807 = vector.shape_cast %1806 : vector<1x16x16xf32> to vector<16x16xf32>
    %c0_593 = arith.constant 0 : index
    %c5_594 = arith.constant 5 : index
    %1808 = memref.load %arg15[%c0_593, %c5_594] : memref<16x8xf32, #tpu.memory_space<smem>>
    %1809 = vector.broadcast %1808 : f32 to vector<16x16xf32>
    %1810 = arith.mulf %1807, %1809 : vector<16x16xf32>
    %1811 = vector.extract_strided_slice %1315 {offsets = [1, 0, 0], sizes = [1, 16, 16], strides = [1, 1, 1]} : vector<16x16x16xf32> to vector<1x16x16xf32>
    %1812 = vector.shape_cast %1811 : vector<1x16x16xf32> to vector<16x16xf32>
    %c1_595 = arith.constant 1 : index
    %c5_596 = arith.constant 5 : index
    %1813 = memref.load %arg15[%c1_595, %c5_596] : memref<16x8xf32, #tpu.memory_space<smem>>
    %1814 = vector.broadcast %1813 : f32 to vector<16x16xf32>
    %1815 = arith.mulf %1812, %1814 : vector<16x16xf32>
    %1816 = arith.addf %1810, %1815 : vector<16x16xf32>
    %1817 = vector.extract_strided_slice %1315 {offsets = [2, 0, 0], sizes = [1, 16, 16], strides = [1, 1, 1]} : vector<16x16x16xf32> to vector<1x16x16xf32>
    %1818 = vector.shape_cast %1817 : vector<1x16x16xf32> to vector<16x16xf32>
    %c2_597 = arith.constant 2 : index
    %c5_598 = arith.constant 5 : index
    %1819 = memref.load %arg15[%c2_597, %c5_598] : memref<16x8xf32, #tpu.memory_space<smem>>
    %1820 = vector.broadcast %1819 : f32 to vector<16x16xf32>
    %1821 = arith.mulf %1818, %1820 : vector<16x16xf32>
    %1822 = arith.addf %1816, %1821 : vector<16x16xf32>
    %1823 = vector.extract_strided_slice %1315 {offsets = [3, 0, 0], sizes = [1, 16, 16], strides = [1, 1, 1]} : vector<16x16x16xf32> to vector<1x16x16xf32>
    %1824 = vector.shape_cast %1823 : vector<1x16x16xf32> to vector<16x16xf32>
    %c3_599 = arith.constant 3 : index
    %c5_600 = arith.constant 5 : index
    %1825 = memref.load %arg15[%c3_599, %c5_600] : memref<16x8xf32, #tpu.memory_space<smem>>
    %1826 = vector.broadcast %1825 : f32 to vector<16x16xf32>
    %1827 = arith.mulf %1824, %1826 : vector<16x16xf32>
    %1828 = arith.addf %1822, %1827 : vector<16x16xf32>
    %1829 = vector.extract_strided_slice %1315 {offsets = [4, 0, 0], sizes = [1, 16, 16], strides = [1, 1, 1]} : vector<16x16x16xf32> to vector<1x16x16xf32>
    %1830 = vector.shape_cast %1829 : vector<1x16x16xf32> to vector<16x16xf32>
    %c4_601 = arith.constant 4 : index
    %c5_602 = arith.constant 5 : index
    %1831 = memref.load %arg15[%c4_601, %c5_602] : memref<16x8xf32, #tpu.memory_space<smem>>
    %1832 = vector.broadcast %1831 : f32 to vector<16x16xf32>
    %1833 = arith.mulf %1830, %1832 : vector<16x16xf32>
    %1834 = arith.addf %1828, %1833 : vector<16x16xf32>
    %1835 = vector.extract_strided_slice %1315 {offsets = [5, 0, 0], sizes = [1, 16, 16], strides = [1, 1, 1]} : vector<16x16x16xf32> to vector<1x16x16xf32>
    %1836 = vector.shape_cast %1835 : vector<1x16x16xf32> to vector<16x16xf32>
    %c5_603 = arith.constant 5 : index
    %c5_604 = arith.constant 5 : index
    %1837 = memref.load %arg15[%c5_603, %c5_604] : memref<16x8xf32, #tpu.memory_space<smem>>
    %1838 = vector.broadcast %1837 : f32 to vector<16x16xf32>
    %1839 = arith.mulf %1836, %1838 : vector<16x16xf32>
    %1840 = arith.addf %1834, %1839 : vector<16x16xf32>
    %1841 = vector.extract_strided_slice %1315 {offsets = [6, 0, 0], sizes = [1, 16, 16], strides = [1, 1, 1]} : vector<16x16x16xf32> to vector<1x16x16xf32>
    %1842 = vector.shape_cast %1841 : vector<1x16x16xf32> to vector<16x16xf32>
    %c6_605 = arith.constant 6 : index
    %c5_606 = arith.constant 5 : index
    %1843 = memref.load %arg15[%c6_605, %c5_606] : memref<16x8xf32, #tpu.memory_space<smem>>
    %1844 = vector.broadcast %1843 : f32 to vector<16x16xf32>
    %1845 = arith.mulf %1842, %1844 : vector<16x16xf32>
    %1846 = arith.addf %1840, %1845 : vector<16x16xf32>
    %1847 = vector.extract_strided_slice %1315 {offsets = [7, 0, 0], sizes = [1, 16, 16], strides = [1, 1, 1]} : vector<16x16x16xf32> to vector<1x16x16xf32>
    %1848 = vector.shape_cast %1847 : vector<1x16x16xf32> to vector<16x16xf32>
    %c7_607 = arith.constant 7 : index
    %c5_608 = arith.constant 5 : index
    %1849 = memref.load %arg15[%c7_607, %c5_608] : memref<16x8xf32, #tpu.memory_space<smem>>
    %1850 = vector.broadcast %1849 : f32 to vector<16x16xf32>
    %1851 = arith.mulf %1848, %1850 : vector<16x16xf32>
    %1852 = arith.addf %1846, %1851 : vector<16x16xf32>
    %1853 = vector.extract_strided_slice %1315 {offsets = [8, 0, 0], sizes = [1, 16, 16], strides = [1, 1, 1]} : vector<16x16x16xf32> to vector<1x16x16xf32>
    %1854 = vector.shape_cast %1853 : vector<1x16x16xf32> to vector<16x16xf32>
    %c8_609 = arith.constant 8 : index
    %c5_610 = arith.constant 5 : index
    %1855 = memref.load %arg15[%c8_609, %c5_610] : memref<16x8xf32, #tpu.memory_space<smem>>
    %1856 = vector.broadcast %1855 : f32 to vector<16x16xf32>
    %1857 = arith.mulf %1854, %1856 : vector<16x16xf32>
    %1858 = arith.addf %1852, %1857 : vector<16x16xf32>
    %1859 = vector.extract_strided_slice %1315 {offsets = [9, 0, 0], sizes = [1, 16, 16], strides = [1, 1, 1]} : vector<16x16x16xf32> to vector<1x16x16xf32>
    %1860 = vector.shape_cast %1859 : vector<1x16x16xf32> to vector<16x16xf32>
    %c9_611 = arith.constant 9 : index
    %c5_612 = arith.constant 5 : index
    %1861 = memref.load %arg15[%c9_611, %c5_612] : memref<16x8xf32, #tpu.memory_space<smem>>
    %1862 = vector.broadcast %1861 : f32 to vector<16x16xf32>
    %1863 = arith.mulf %1860, %1862 : vector<16x16xf32>
    %1864 = arith.addf %1858, %1863 : vector<16x16xf32>
    %1865 = vector.extract_strided_slice %1315 {offsets = [10, 0, 0], sizes = [1, 16, 16], strides = [1, 1, 1]} : vector<16x16x16xf32> to vector<1x16x16xf32>
    %1866 = vector.shape_cast %1865 : vector<1x16x16xf32> to vector<16x16xf32>
    %c10_613 = arith.constant 10 : index
    %c5_614 = arith.constant 5 : index
    %1867 = memref.load %arg15[%c10_613, %c5_614] : memref<16x8xf32, #tpu.memory_space<smem>>
    %1868 = vector.broadcast %1867 : f32 to vector<16x16xf32>
    %1869 = arith.mulf %1866, %1868 : vector<16x16xf32>
    %1870 = arith.addf %1864, %1869 : vector<16x16xf32>
    %1871 = vector.extract_strided_slice %1315 {offsets = [11, 0, 0], sizes = [1, 16, 16], strides = [1, 1, 1]} : vector<16x16x16xf32> to vector<1x16x16xf32>
    %1872 = vector.shape_cast %1871 : vector<1x16x16xf32> to vector<16x16xf32>
    %c11_615 = arith.constant 11 : index
    %c5_616 = arith.constant 5 : index
    %1873 = memref.load %arg15[%c11_615, %c5_616] : memref<16x8xf32, #tpu.memory_space<smem>>
    %1874 = vector.broadcast %1873 : f32 to vector<16x16xf32>
    %1875 = arith.mulf %1872, %1874 : vector<16x16xf32>
    %1876 = arith.addf %1870, %1875 : vector<16x16xf32>
    %1877 = vector.extract_strided_slice %1315 {offsets = [12, 0, 0], sizes = [1, 16, 16], strides = [1, 1, 1]} : vector<16x16x16xf32> to vector<1x16x16xf32>
    %1878 = vector.shape_cast %1877 : vector<1x16x16xf32> to vector<16x16xf32>
    %c12_617 = arith.constant 12 : index
    %c5_618 = arith.constant 5 : index
    %1879 = memref.load %arg15[%c12_617, %c5_618] : memref<16x8xf32, #tpu.memory_space<smem>>
    %1880 = vector.broadcast %1879 : f32 to vector<16x16xf32>
    %1881 = arith.mulf %1878, %1880 : vector<16x16xf32>
    %1882 = arith.addf %1876, %1881 : vector<16x16xf32>
    %1883 = vector.extract_strided_slice %1315 {offsets = [13, 0, 0], sizes = [1, 16, 16], strides = [1, 1, 1]} : vector<16x16x16xf32> to vector<1x16x16xf32>
    %1884 = vector.shape_cast %1883 : vector<1x16x16xf32> to vector<16x16xf32>
    %c13_619 = arith.constant 13 : index
    %c5_620 = arith.constant 5 : index
    %1885 = memref.load %arg15[%c13_619, %c5_620] : memref<16x8xf32, #tpu.memory_space<smem>>
    %1886 = vector.broadcast %1885 : f32 to vector<16x16xf32>
    %1887 = arith.mulf %1884, %1886 : vector<16x16xf32>
    %1888 = arith.addf %1882, %1887 : vector<16x16xf32>
    %1889 = vector.extract_strided_slice %1315 {offsets = [14, 0, 0], sizes = [1, 16, 16], strides = [1, 1, 1]} : vector<16x16x16xf32> to vector<1x16x16xf32>
    %1890 = vector.shape_cast %1889 : vector<1x16x16xf32> to vector<16x16xf32>
    %c14_621 = arith.constant 14 : index
    %c5_622 = arith.constant 5 : index
    %1891 = memref.load %arg15[%c14_621, %c5_622] : memref<16x8xf32, #tpu.memory_space<smem>>
    %1892 = vector.broadcast %1891 : f32 to vector<16x16xf32>
    %1893 = arith.mulf %1890, %1892 : vector<16x16xf32>
    %1894 = arith.addf %1888, %1893 : vector<16x16xf32>
    %1895 = vector.extract_strided_slice %1315 {offsets = [15, 0, 0], sizes = [1, 16, 16], strides = [1, 1, 1]} : vector<16x16x16xf32> to vector<1x16x16xf32>
    %1896 = vector.shape_cast %1895 : vector<1x16x16xf32> to vector<16x16xf32>
    %c15_623 = arith.constant 15 : index
    %c5_624 = arith.constant 5 : index
    %1897 = memref.load %arg15[%c15_623, %c5_624] : memref<16x8xf32, #tpu.memory_space<smem>>
    %1898 = vector.broadcast %1897 : f32 to vector<16x16xf32>
    %1899 = arith.mulf %1896, %1898 : vector<16x16xf32>
    %1900 = arith.addf %1894, %1899 : vector<16x16xf32>
    %c5_625 = arith.constant 5 : index
    %1901 = memref.load %arg16[%c5_625] : memref<8xf32, #tpu.memory_space<smem>>
    %1902 = vector.broadcast %1901 : f32 to vector<16x16xf32>
    %1903 = arith.addf %1900, %1902 : vector<16x16xf32>
    %1904 = vector.extract_strided_slice %1315 {offsets = [0, 0, 0], sizes = [1, 16, 16], strides = [1, 1, 1]} : vector<16x16x16xf32> to vector<1x16x16xf32>
    %1905 = vector.shape_cast %1904 : vector<1x16x16xf32> to vector<16x16xf32>
    %c0_626 = arith.constant 0 : index
    %c6_627 = arith.constant 6 : index
    %1906 = memref.load %arg15[%c0_626, %c6_627] : memref<16x8xf32, #tpu.memory_space<smem>>
    %1907 = vector.broadcast %1906 : f32 to vector<16x16xf32>
    %1908 = arith.mulf %1905, %1907 : vector<16x16xf32>
    %1909 = vector.extract_strided_slice %1315 {offsets = [1, 0, 0], sizes = [1, 16, 16], strides = [1, 1, 1]} : vector<16x16x16xf32> to vector<1x16x16xf32>
    %1910 = vector.shape_cast %1909 : vector<1x16x16xf32> to vector<16x16xf32>
    %c1_628 = arith.constant 1 : index
    %c6_629 = arith.constant 6 : index
    %1911 = memref.load %arg15[%c1_628, %c6_629] : memref<16x8xf32, #tpu.memory_space<smem>>
    %1912 = vector.broadcast %1911 : f32 to vector<16x16xf32>
    %1913 = arith.mulf %1910, %1912 : vector<16x16xf32>
    %1914 = arith.addf %1908, %1913 : vector<16x16xf32>
    %1915 = vector.extract_strided_slice %1315 {offsets = [2, 0, 0], sizes = [1, 16, 16], strides = [1, 1, 1]} : vector<16x16x16xf32> to vector<1x16x16xf32>
    %1916 = vector.shape_cast %1915 : vector<1x16x16xf32> to vector<16x16xf32>
    %c2_630 = arith.constant 2 : index
    %c6_631 = arith.constant 6 : index
    %1917 = memref.load %arg15[%c2_630, %c6_631] : memref<16x8xf32, #tpu.memory_space<smem>>
    %1918 = vector.broadcast %1917 : f32 to vector<16x16xf32>
    %1919 = arith.mulf %1916, %1918 : vector<16x16xf32>
    %1920 = arith.addf %1914, %1919 : vector<16x16xf32>
    %1921 = vector.extract_strided_slice %1315 {offsets = [3, 0, 0], sizes = [1, 16, 16], strides = [1, 1, 1]} : vector<16x16x16xf32> to vector<1x16x16xf32>
    %1922 = vector.shape_cast %1921 : vector<1x16x16xf32> to vector<16x16xf32>
    %c3_632 = arith.constant 3 : index
    %c6_633 = arith.constant 6 : index
    %1923 = memref.load %arg15[%c3_632, %c6_633] : memref<16x8xf32, #tpu.memory_space<smem>>
    %1924 = vector.broadcast %1923 : f32 to vector<16x16xf32>
    %1925 = arith.mulf %1922, %1924 : vector<16x16xf32>
    %1926 = arith.addf %1920, %1925 : vector<16x16xf32>
    %1927 = vector.extract_strided_slice %1315 {offsets = [4, 0, 0], sizes = [1, 16, 16], strides = [1, 1, 1]} : vector<16x16x16xf32> to vector<1x16x16xf32>
    %1928 = vector.shape_cast %1927 : vector<1x16x16xf32> to vector<16x16xf32>
    %c4_634 = arith.constant 4 : index
    %c6_635 = arith.constant 6 : index
    %1929 = memref.load %arg15[%c4_634, %c6_635] : memref<16x8xf32, #tpu.memory_space<smem>>
    %1930 = vector.broadcast %1929 : f32 to vector<16x16xf32>
    %1931 = arith.mulf %1928, %1930 : vector<16x16xf32>
    %1932 = arith.addf %1926, %1931 : vector<16x16xf32>
    %1933 = vector.extract_strided_slice %1315 {offsets = [5, 0, 0], sizes = [1, 16, 16], strides = [1, 1, 1]} : vector<16x16x16xf32> to vector<1x16x16xf32>
    %1934 = vector.shape_cast %1933 : vector<1x16x16xf32> to vector<16x16xf32>
    %c5_636 = arith.constant 5 : index
    %c6_637 = arith.constant 6 : index
    %1935 = memref.load %arg15[%c5_636, %c6_637] : memref<16x8xf32, #tpu.memory_space<smem>>
    %1936 = vector.broadcast %1935 : f32 to vector<16x16xf32>
    %1937 = arith.mulf %1934, %1936 : vector<16x16xf32>
    %1938 = arith.addf %1932, %1937 : vector<16x16xf32>
    %1939 = vector.extract_strided_slice %1315 {offsets = [6, 0, 0], sizes = [1, 16, 16], strides = [1, 1, 1]} : vector<16x16x16xf32> to vector<1x16x16xf32>
    %1940 = vector.shape_cast %1939 : vector<1x16x16xf32> to vector<16x16xf32>
    %c6_638 = arith.constant 6 : index
    %c6_639 = arith.constant 6 : index
    %1941 = memref.load %arg15[%c6_638, %c6_639] : memref<16x8xf32, #tpu.memory_space<smem>>
    %1942 = vector.broadcast %1941 : f32 to vector<16x16xf32>
    %1943 = arith.mulf %1940, %1942 : vector<16x16xf32>
    %1944 = arith.addf %1938, %1943 : vector<16x16xf32>
    %1945 = vector.extract_strided_slice %1315 {offsets = [7, 0, 0], sizes = [1, 16, 16], strides = [1, 1, 1]} : vector<16x16x16xf32> to vector<1x16x16xf32>
    %1946 = vector.shape_cast %1945 : vector<1x16x16xf32> to vector<16x16xf32>
    %c7_640 = arith.constant 7 : index
    %c6_641 = arith.constant 6 : index
    %1947 = memref.load %arg15[%c7_640, %c6_641] : memref<16x8xf32, #tpu.memory_space<smem>>
    %1948 = vector.broadcast %1947 : f32 to vector<16x16xf32>
    %1949 = arith.mulf %1946, %1948 : vector<16x16xf32>
    %1950 = arith.addf %1944, %1949 : vector<16x16xf32>
    %1951 = vector.extract_strided_slice %1315 {offsets = [8, 0, 0], sizes = [1, 16, 16], strides = [1, 1, 1]} : vector<16x16x16xf32> to vector<1x16x16xf32>
    %1952 = vector.shape_cast %1951 : vector<1x16x16xf32> to vector<16x16xf32>
    %c8_642 = arith.constant 8 : index
    %c6_643 = arith.constant 6 : index
    %1953 = memref.load %arg15[%c8_642, %c6_643] : memref<16x8xf32, #tpu.memory_space<smem>>
    %1954 = vector.broadcast %1953 : f32 to vector<16x16xf32>
    %1955 = arith.mulf %1952, %1954 : vector<16x16xf32>
    %1956 = arith.addf %1950, %1955 : vector<16x16xf32>
    %1957 = vector.extract_strided_slice %1315 {offsets = [9, 0, 0], sizes = [1, 16, 16], strides = [1, 1, 1]} : vector<16x16x16xf32> to vector<1x16x16xf32>
    %1958 = vector.shape_cast %1957 : vector<1x16x16xf32> to vector<16x16xf32>
    %c9_644 = arith.constant 9 : index
    %c6_645 = arith.constant 6 : index
    %1959 = memref.load %arg15[%c9_644, %c6_645] : memref<16x8xf32, #tpu.memory_space<smem>>
    %1960 = vector.broadcast %1959 : f32 to vector<16x16xf32>
    %1961 = arith.mulf %1958, %1960 : vector<16x16xf32>
    %1962 = arith.addf %1956, %1961 : vector<16x16xf32>
    %1963 = vector.extract_strided_slice %1315 {offsets = [10, 0, 0], sizes = [1, 16, 16], strides = [1, 1, 1]} : vector<16x16x16xf32> to vector<1x16x16xf32>
    %1964 = vector.shape_cast %1963 : vector<1x16x16xf32> to vector<16x16xf32>
    %c10_646 = arith.constant 10 : index
    %c6_647 = arith.constant 6 : index
    %1965 = memref.load %arg15[%c10_646, %c6_647] : memref<16x8xf32, #tpu.memory_space<smem>>
    %1966 = vector.broadcast %1965 : f32 to vector<16x16xf32>
    %1967 = arith.mulf %1964, %1966 : vector<16x16xf32>
    %1968 = arith.addf %1962, %1967 : vector<16x16xf32>
    %1969 = vector.extract_strided_slice %1315 {offsets = [11, 0, 0], sizes = [1, 16, 16], strides = [1, 1, 1]} : vector<16x16x16xf32> to vector<1x16x16xf32>
    %1970 = vector.shape_cast %1969 : vector<1x16x16xf32> to vector<16x16xf32>
    %c11_648 = arith.constant 11 : index
    %c6_649 = arith.constant 6 : index
    %1971 = memref.load %arg15[%c11_648, %c6_649] : memref<16x8xf32, #tpu.memory_space<smem>>
    %1972 = vector.broadcast %1971 : f32 to vector<16x16xf32>
    %1973 = arith.mulf %1970, %1972 : vector<16x16xf32>
    %1974 = arith.addf %1968, %1973 : vector<16x16xf32>
    %1975 = vector.extract_strided_slice %1315 {offsets = [12, 0, 0], sizes = [1, 16, 16], strides = [1, 1, 1]} : vector<16x16x16xf32> to vector<1x16x16xf32>
    %1976 = vector.shape_cast %1975 : vector<1x16x16xf32> to vector<16x16xf32>
    %c12_650 = arith.constant 12 : index
    %c6_651 = arith.constant 6 : index
    %1977 = memref.load %arg15[%c12_650, %c6_651] : memref<16x8xf32, #tpu.memory_space<smem>>
    %1978 = vector.broadcast %1977 : f32 to vector<16x16xf32>
    %1979 = arith.mulf %1976, %1978 : vector<16x16xf32>
    %1980 = arith.addf %1974, %1979 : vector<16x16xf32>
    %1981 = vector.extract_strided_slice %1315 {offsets = [13, 0, 0], sizes = [1, 16, 16], strides = [1, 1, 1]} : vector<16x16x16xf32> to vector<1x16x16xf32>
    %1982 = vector.shape_cast %1981 : vector<1x16x16xf32> to vector<16x16xf32>
    %c13_652 = arith.constant 13 : index
    %c6_653 = arith.constant 6 : index
    %1983 = memref.load %arg15[%c13_652, %c6_653] : memref<16x8xf32, #tpu.memory_space<smem>>
    %1984 = vector.broadcast %1983 : f32 to vector<16x16xf32>
    %1985 = arith.mulf %1982, %1984 : vector<16x16xf32>
    %1986 = arith.addf %1980, %1985 : vector<16x16xf32>
    %1987 = vector.extract_strided_slice %1315 {offsets = [14, 0, 0], sizes = [1, 16, 16], strides = [1, 1, 1]} : vector<16x16x16xf32> to vector<1x16x16xf32>
    %1988 = vector.shape_cast %1987 : vector<1x16x16xf32> to vector<16x16xf32>
    %c14_654 = arith.constant 14 : index
    %c6_655 = arith.constant 6 : index
    %1989 = memref.load %arg15[%c14_654, %c6_655] : memref<16x8xf32, #tpu.memory_space<smem>>
    %1990 = vector.broadcast %1989 : f32 to vector<16x16xf32>
    %1991 = arith.mulf %1988, %1990 : vector<16x16xf32>
    %1992 = arith.addf %1986, %1991 : vector<16x16xf32>
    %1993 = vector.extract_strided_slice %1315 {offsets = [15, 0, 0], sizes = [1, 16, 16], strides = [1, 1, 1]} : vector<16x16x16xf32> to vector<1x16x16xf32>
    %1994 = vector.shape_cast %1993 : vector<1x16x16xf32> to vector<16x16xf32>
    %c15_656 = arith.constant 15 : index
    %c6_657 = arith.constant 6 : index
    %1995 = memref.load %arg15[%c15_656, %c6_657] : memref<16x8xf32, #tpu.memory_space<smem>>
    %1996 = vector.broadcast %1995 : f32 to vector<16x16xf32>
    %1997 = arith.mulf %1994, %1996 : vector<16x16xf32>
    %1998 = arith.addf %1992, %1997 : vector<16x16xf32>
    %c6_658 = arith.constant 6 : index
    %1999 = memref.load %arg16[%c6_658] : memref<8xf32, #tpu.memory_space<smem>>
    %2000 = vector.broadcast %1999 : f32 to vector<16x16xf32>
    %2001 = arith.addf %1998, %2000 : vector<16x16xf32>
    %2002 = vector.extract_strided_slice %1315 {offsets = [0, 0, 0], sizes = [1, 16, 16], strides = [1, 1, 1]} : vector<16x16x16xf32> to vector<1x16x16xf32>
    %2003 = vector.shape_cast %2002 : vector<1x16x16xf32> to vector<16x16xf32>
    %c0_659 = arith.constant 0 : index
    %c7_660 = arith.constant 7 : index
    %2004 = memref.load %arg15[%c0_659, %c7_660] : memref<16x8xf32, #tpu.memory_space<smem>>
    %2005 = vector.broadcast %2004 : f32 to vector<16x16xf32>
    %2006 = arith.mulf %2003, %2005 : vector<16x16xf32>
    %2007 = vector.extract_strided_slice %1315 {offsets = [1, 0, 0], sizes = [1, 16, 16], strides = [1, 1, 1]} : vector<16x16x16xf32> to vector<1x16x16xf32>
    %2008 = vector.shape_cast %2007 : vector<1x16x16xf32> to vector<16x16xf32>
    %c1_661 = arith.constant 1 : index
    %c7_662 = arith.constant 7 : index
    %2009 = memref.load %arg15[%c1_661, %c7_662] : memref<16x8xf32, #tpu.memory_space<smem>>
    %2010 = vector.broadcast %2009 : f32 to vector<16x16xf32>
    %2011 = arith.mulf %2008, %2010 : vector<16x16xf32>
    %2012 = arith.addf %2006, %2011 : vector<16x16xf32>
    %2013 = vector.extract_strided_slice %1315 {offsets = [2, 0, 0], sizes = [1, 16, 16], strides = [1, 1, 1]} : vector<16x16x16xf32> to vector<1x16x16xf32>
    %2014 = vector.shape_cast %2013 : vector<1x16x16xf32> to vector<16x16xf32>
    %c2_663 = arith.constant 2 : index
    %c7_664 = arith.constant 7 : index
    %2015 = memref.load %arg15[%c2_663, %c7_664] : memref<16x8xf32, #tpu.memory_space<smem>>
    %2016 = vector.broadcast %2015 : f32 to vector<16x16xf32>
    %2017 = arith.mulf %2014, %2016 : vector<16x16xf32>
    %2018 = arith.addf %2012, %2017 : vector<16x16xf32>
    %2019 = vector.extract_strided_slice %1315 {offsets = [3, 0, 0], sizes = [1, 16, 16], strides = [1, 1, 1]} : vector<16x16x16xf32> to vector<1x16x16xf32>
    %2020 = vector.shape_cast %2019 : vector<1x16x16xf32> to vector<16x16xf32>
    %c3_665 = arith.constant 3 : index
    %c7_666 = arith.constant 7 : index
    %2021 = memref.load %arg15[%c3_665, %c7_666] : memref<16x8xf32, #tpu.memory_space<smem>>
    %2022 = vector.broadcast %2021 : f32 to vector<16x16xf32>
    %2023 = arith.mulf %2020, %2022 : vector<16x16xf32>
    %2024 = arith.addf %2018, %2023 : vector<16x16xf32>
    %2025 = vector.extract_strided_slice %1315 {offsets = [4, 0, 0], sizes = [1, 16, 16], strides = [1, 1, 1]} : vector<16x16x16xf32> to vector<1x16x16xf32>
    %2026 = vector.shape_cast %2025 : vector<1x16x16xf32> to vector<16x16xf32>
    %c4_667 = arith.constant 4 : index
    %c7_668 = arith.constant 7 : index
    %2027 = memref.load %arg15[%c4_667, %c7_668] : memref<16x8xf32, #tpu.memory_space<smem>>
    %2028 = vector.broadcast %2027 : f32 to vector<16x16xf32>
    %2029 = arith.mulf %2026, %2028 : vector<16x16xf32>
    %2030 = arith.addf %2024, %2029 : vector<16x16xf32>
    %2031 = vector.extract_strided_slice %1315 {offsets = [5, 0, 0], sizes = [1, 16, 16], strides = [1, 1, 1]} : vector<16x16x16xf32> to vector<1x16x16xf32>
    %2032 = vector.shape_cast %2031 : vector<1x16x16xf32> to vector<16x16xf32>
    %c5_669 = arith.constant 5 : index
    %c7_670 = arith.constant 7 : index
    %2033 = memref.load %arg15[%c5_669, %c7_670] : memref<16x8xf32, #tpu.memory_space<smem>>
    %2034 = vector.broadcast %2033 : f32 to vector<16x16xf32>
    %2035 = arith.mulf %2032, %2034 : vector<16x16xf32>
    %2036 = arith.addf %2030, %2035 : vector<16x16xf32>
    %2037 = vector.extract_strided_slice %1315 {offsets = [6, 0, 0], sizes = [1, 16, 16], strides = [1, 1, 1]} : vector<16x16x16xf32> to vector<1x16x16xf32>
    %2038 = vector.shape_cast %2037 : vector<1x16x16xf32> to vector<16x16xf32>
    %c6_671 = arith.constant 6 : index
    %c7_672 = arith.constant 7 : index
    %2039 = memref.load %arg15[%c6_671, %c7_672] : memref<16x8xf32, #tpu.memory_space<smem>>
    %2040 = vector.broadcast %2039 : f32 to vector<16x16xf32>
    %2041 = arith.mulf %2038, %2040 : vector<16x16xf32>
    %2042 = arith.addf %2036, %2041 : vector<16x16xf32>
    %2043 = vector.extract_strided_slice %1315 {offsets = [7, 0, 0], sizes = [1, 16, 16], strides = [1, 1, 1]} : vector<16x16x16xf32> to vector<1x16x16xf32>
    %2044 = vector.shape_cast %2043 : vector<1x16x16xf32> to vector<16x16xf32>
    %c7_673 = arith.constant 7 : index
    %c7_674 = arith.constant 7 : index
    %2045 = memref.load %arg15[%c7_673, %c7_674] : memref<16x8xf32, #tpu.memory_space<smem>>
    %2046 = vector.broadcast %2045 : f32 to vector<16x16xf32>
    %2047 = arith.mulf %2044, %2046 : vector<16x16xf32>
    %2048 = arith.addf %2042, %2047 : vector<16x16xf32>
    %2049 = vector.extract_strided_slice %1315 {offsets = [8, 0, 0], sizes = [1, 16, 16], strides = [1, 1, 1]} : vector<16x16x16xf32> to vector<1x16x16xf32>
    %2050 = vector.shape_cast %2049 : vector<1x16x16xf32> to vector<16x16xf32>
    %c8_675 = arith.constant 8 : index
    %c7_676 = arith.constant 7 : index
    %2051 = memref.load %arg15[%c8_675, %c7_676] : memref<16x8xf32, #tpu.memory_space<smem>>
    %2052 = vector.broadcast %2051 : f32 to vector<16x16xf32>
    %2053 = arith.mulf %2050, %2052 : vector<16x16xf32>
    %2054 = arith.addf %2048, %2053 : vector<16x16xf32>
    %2055 = vector.extract_strided_slice %1315 {offsets = [9, 0, 0], sizes = [1, 16, 16], strides = [1, 1, 1]} : vector<16x16x16xf32> to vector<1x16x16xf32>
    %2056 = vector.shape_cast %2055 : vector<1x16x16xf32> to vector<16x16xf32>
    %c9_677 = arith.constant 9 : index
    %c7_678 = arith.constant 7 : index
    %2057 = memref.load %arg15[%c9_677, %c7_678] : memref<16x8xf32, #tpu.memory_space<smem>>
    %2058 = vector.broadcast %2057 : f32 to vector<16x16xf32>
    %2059 = arith.mulf %2056, %2058 : vector<16x16xf32>
    %2060 = arith.addf %2054, %2059 : vector<16x16xf32>
    %2061 = vector.extract_strided_slice %1315 {offsets = [10, 0, 0], sizes = [1, 16, 16], strides = [1, 1, 1]} : vector<16x16x16xf32> to vector<1x16x16xf32>
    %2062 = vector.shape_cast %2061 : vector<1x16x16xf32> to vector<16x16xf32>
    %c10_679 = arith.constant 10 : index
    %c7_680 = arith.constant 7 : index
    %2063 = memref.load %arg15[%c10_679, %c7_680] : memref<16x8xf32, #tpu.memory_space<smem>>
    %2064 = vector.broadcast %2063 : f32 to vector<16x16xf32>
    %2065 = arith.mulf %2062, %2064 : vector<16x16xf32>
    %2066 = arith.addf %2060, %2065 : vector<16x16xf32>
    %2067 = vector.extract_strided_slice %1315 {offsets = [11, 0, 0], sizes = [1, 16, 16], strides = [1, 1, 1]} : vector<16x16x16xf32> to vector<1x16x16xf32>
    %2068 = vector.shape_cast %2067 : vector<1x16x16xf32> to vector<16x16xf32>
    %c11_681 = arith.constant 11 : index
    %c7_682 = arith.constant 7 : index
    %2069 = memref.load %arg15[%c11_681, %c7_682] : memref<16x8xf32, #tpu.memory_space<smem>>
    %2070 = vector.broadcast %2069 : f32 to vector<16x16xf32>
    %2071 = arith.mulf %2068, %2070 : vector<16x16xf32>
    %2072 = arith.addf %2066, %2071 : vector<16x16xf32>
    %2073 = vector.extract_strided_slice %1315 {offsets = [12, 0, 0], sizes = [1, 16, 16], strides = [1, 1, 1]} : vector<16x16x16xf32> to vector<1x16x16xf32>
    %2074 = vector.shape_cast %2073 : vector<1x16x16xf32> to vector<16x16xf32>
    %c12_683 = arith.constant 12 : index
    %c7_684 = arith.constant 7 : index
    %2075 = memref.load %arg15[%c12_683, %c7_684] : memref<16x8xf32, #tpu.memory_space<smem>>
    %2076 = vector.broadcast %2075 : f32 to vector<16x16xf32>
    %2077 = arith.mulf %2074, %2076 : vector<16x16xf32>
    %2078 = arith.addf %2072, %2077 : vector<16x16xf32>
    %2079 = vector.extract_strided_slice %1315 {offsets = [13, 0, 0], sizes = [1, 16, 16], strides = [1, 1, 1]} : vector<16x16x16xf32> to vector<1x16x16xf32>
    %2080 = vector.shape_cast %2079 : vector<1x16x16xf32> to vector<16x16xf32>
    %c13_685 = arith.constant 13 : index
    %c7_686 = arith.constant 7 : index
    %2081 = memref.load %arg15[%c13_685, %c7_686] : memref<16x8xf32, #tpu.memory_space<smem>>
    %2082 = vector.broadcast %2081 : f32 to vector<16x16xf32>
    %2083 = arith.mulf %2080, %2082 : vector<16x16xf32>
    %2084 = arith.addf %2078, %2083 : vector<16x16xf32>
    %2085 = vector.extract_strided_slice %1315 {offsets = [14, 0, 0], sizes = [1, 16, 16], strides = [1, 1, 1]} : vector<16x16x16xf32> to vector<1x16x16xf32>
    %2086 = vector.shape_cast %2085 : vector<1x16x16xf32> to vector<16x16xf32>
    %c14_687 = arith.constant 14 : index
    %c7_688 = arith.constant 7 : index
    %2087 = memref.load %arg15[%c14_687, %c7_688] : memref<16x8xf32, #tpu.memory_space<smem>>
    %2088 = vector.broadcast %2087 : f32 to vector<16x16xf32>
    %2089 = arith.mulf %2086, %2088 : vector<16x16xf32>
    %2090 = arith.addf %2084, %2089 : vector<16x16xf32>
    %2091 = vector.extract_strided_slice %1315 {offsets = [15, 0, 0], sizes = [1, 16, 16], strides = [1, 1, 1]} : vector<16x16x16xf32> to vector<1x16x16xf32>
    %2092 = vector.shape_cast %2091 : vector<1x16x16xf32> to vector<16x16xf32>
    %c15_689 = arith.constant 15 : index
    %c7_690 = arith.constant 7 : index
    %2093 = memref.load %arg15[%c15_689, %c7_690] : memref<16x8xf32, #tpu.memory_space<smem>>
    %2094 = vector.broadcast %2093 : f32 to vector<16x16xf32>
    %2095 = arith.mulf %2092, %2094 : vector<16x16xf32>
    %2096 = arith.addf %2090, %2095 : vector<16x16xf32>
    %c7_691 = arith.constant 7 : index
    %2097 = memref.load %arg16[%c7_691] : memref<8xf32, #tpu.memory_space<smem>>
    %2098 = vector.broadcast %2097 : f32 to vector<16x16xf32>
    %2099 = arith.addf %2096, %2098 : vector<16x16xf32>
    %2100 = vector.shape_cast %1413 : vector<16x16xf32> to vector<1x16x16xf32>
    %2101 = vector.shape_cast %1511 : vector<16x16xf32> to vector<1x16x16xf32>
    %2102 = vector.shape_cast %1609 : vector<16x16xf32> to vector<1x16x16xf32>
    %2103 = vector.shape_cast %1707 : vector<16x16xf32> to vector<1x16x16xf32>
    %2104 = vector.shape_cast %1805 : vector<16x16xf32> to vector<1x16x16xf32>
    %2105 = vector.shape_cast %1903 : vector<16x16xf32> to vector<1x16x16xf32>
    %2106 = vector.shape_cast %2001 : vector<16x16xf32> to vector<1x16x16xf32>
    %2107 = vector.shape_cast %2099 : vector<16x16xf32> to vector<1x16x16xf32>
    %2108 = tpu.concatenate %2100, %2101, %2102, %2103, %2104, %2105, %2106, %2107 in 0 : vector<1x16x16xf32>, vector<1x16x16xf32>, vector<1x16x16xf32>, vector<1x16x16xf32>, vector<1x16x16xf32>, vector<1x16x16xf32>, vector<1x16x16xf32>, vector<1x16x16xf32> -> vector<8x16x16xf32>
    %c0_692 = arith.constant 0 : index
    %c0_693 = arith.constant 0 : index
    %c0_694 = arith.constant 0 : index
    %c0_695 = arith.constant 0 : index
    %2109 = vector.load %arg17[%c0_692, %c0_693, %c0_694, %c0_695] : memref<1x8x16x16xf32, #tpu.memory_space<vmem>>, vector<1x8x16x16xf32>
    %2110 = vector.shape_cast %2109 : vector<1x8x16x16xf32> to vector<8x16x16xf32>
    %2111 = vector.shape_cast %2108 : vector<8x16x16xf32> to vector<1x8x16x16xf32>
    tpu.vector_store %arg17[%c0_692, %c0_693, %c0_694, %c0_695], %2111 {strides = array<i32>} : memref<1x8x16x16xf32, #tpu.memory_space<vmem>>, vector<1x8x16x16xf32>,
    return
  }
  func.func @transform_0(%arg0: i32) -> (i32, i32, i32, i32) {
    %c0_i32 = arith.constant 0 : i32
    %c0_i32_0 = arith.constant 0 : i32
    %c0_i32_1 = arith.constant 0 : i32
    %c0_i32_2 = arith.constant 0 : i32
    return %arg0, %c0_i32, %c0_i32_0, %c0_i32_1 : i32, i32, i32, i32
  }
  func.func @transform_1(%arg0: i32) -> (i32, i32, i32, i32) {
    %c0_i32 = arith.constant 0 : i32
    %c0_i32_0 = arith.constant 0 : i32
    %c0_i32_1 = arith.constant 0 : i32
    %c0_i32_2 = arith.constant 0 : i32
    return %arg0, %c0_i32, %c0_i32_0, %c0_i32_1 : i32, i32, i32, i32
  }
  func.func @transform_2(%arg0: i32) -> (i32, i32) {
    %c0_i32 = arith.constant 0 : i32
    %c0_i32_0 = arith.constant 0 : i32
    %c0_i32_1 = arith.constant 0 : i32
    return %c0_i32, %c0_i32_0 : i32, i32
  }
  func.func @transform_3(%arg0: i32) -> i32 {
    %c0_i32 = arith.constant 0 : i32
    %c0_i32_0 = arith.constant 0 : i32
    return %c0_i32 : i32
  }
  func.func @transform_4(%arg0: i32) -> (i32, i32) {
    %c0_i32 = arith.constant 0 : i32
    %c0_i32_0 = arith.constant 0 : i32
    %c0_i32_1 = arith.constant 0 : i32
    return %c0_i32, %c0_i32_0 : i32, i32
  }
  func.func @transform_5(%arg0: i32) -> i32 {
    %c0_i32 = arith.constant 0 : i32
    %c0_i32_0 = arith.constant 0 : i32
    return %c0_i32 : i32
  }
  func.func @transform_6(%arg0: i32) -> (i32, i32) {
    %c0_i32 = arith.constant 0 : i32
    %c0_i32_0 = arith.constant 0 : i32
    %c0_i32_1 = arith.constant 0 : i32
    return %c0_i32, %c0_i32_0 : i32, i32
  }
  func.func @transform_7(%arg0: i32) -> i32 {
    %c0_i32 = arith.constant 0 : i32
    %c0_i32_0 = arith.constant 0 : i32
    return %c0_i32 : i32
  }
  func.func @transform_8(%arg0: i32) -> (i32, i32) {
    %c0_i32 = arith.constant 0 : i32
    %c0_i32_0 = arith.constant 0 : i32
    %c0_i32_1 = arith.constant 0 : i32
    return %c0_i32, %c0_i32_0 : i32, i32
  }
  func.func @transform_9(%arg0: i32) -> i32 {
    %c0_i32 = arith.constant 0 : i32
    %c0_i32_0 = arith.constant 0 : i32
    return %c0_i32 : i32
  }
  func.func @transform_10(%arg0: i32) -> (i32, i32) {
    %c0_i32 = arith.constant 0 : i32
    %c0_i32_0 = arith.constant 0 : i32
    %c0_i32_1 = arith.constant 0 : i32
    return %c0_i32, %c0_i32_0 : i32, i32
  }
  func.func @transform_11(%arg0: i32) -> i32 {
    %c0_i32 = arith.constant 0 : i32
    %c0_i32_0 = arith.constant 0 : i32
    return %c0_i32 : i32
  }
  func.func @transform_12(%arg0: i32) -> (i32, i32) {
    %c0_i32 = arith.constant 0 : i32
    %c0_i32_0 = arith.constant 0 : i32
    %c0_i32_1 = arith.constant 0 : i32
    return %c0_i32, %c0_i32_0 : i32, i32
  }
  func.func @transform_13(%arg0: i32) -> i32 {
    %c0_i32 = arith.constant 0 : i32
    %c0_i32_0 = arith.constant 0 : i32
    return %c0_i32 : i32
  }
  func.func @transform_14(%arg0: i32) -> (i32, i32) {
    %c0_i32 = arith.constant 0 : i32
    %c0_i32_0 = arith.constant 0 : i32
    %c0_i32_1 = arith.constant 0 : i32
    return %c0_i32, %c0_i32_0 : i32, i32
  }
  func.func @transform_15(%arg0: i32) -> i32 {
    %c0_i32 = arith.constant 0 : i32
    %c0_i32_0 = arith.constant 0 : i32
    return %c0_i32 : i32
  }
  func.func @transform_16(%arg0: i32) -> (i32, i32, i32, i32) {
    %c0_i32 = arith.constant 0 : i32
    %c0_i32_0 = arith.constant 0 : i32
    %c0_i32_1 = arith.constant 0 : i32
    %c0_i32_2 = arith.constant 0 : i32
    return %arg0, %c0_i32, %c0_i32_0, %c0_i32_1 : i32, i32, i32, i32
  }
}

</mosaic_0001>

<llo_original>
// kernel: tpu_custom_call.1
$region0: #{tpu_custom_call.1}
  #allocation0 [shape = 'u32[]', space=smem, size = 0x4, offset = 0x4, fixed_abs, tag = 'smem constant byte address 0x4 - core index']
  #allocation1 [shape = 'u32[144,128]{1,0:T(1,128)}', space=vmem, size = 0x12000, scoped, tag = 'internal scratch']
  %s0 = inlined_call_operand.hbm [shape: f32[2,4,16,16], index: 0, kind: input, shape index: {}]
  %s1 = inlined_call_operand.hbm [shape: f32[2,4,16,16], index: 1, kind: input, shape index: {}]
  %s2 = inlined_call_operand.vmem [shape: f32[4,8], index: 2, kind: input, shape index: {}]
  %s3 = inlined_call_operand.vmem [shape: f32[8], index: 3, kind: input, shape index: {}]
  %s4 = inlined_call_operand.vmem [shape: f32[4,8], index: 4, kind: input, shape index: {}]
  %s5 = inlined_call_operand.vmem [shape: f32[8], index: 5, kind: input, shape index: {}]
  %s6 = inlined_call_operand.vmem [shape: f32[4,8], index: 6, kind: input, shape index: {}]
  %s7 = inlined_call_operand.vmem [shape: f32[8], index: 7, kind: input, shape index: {}]
  %s8 = inlined_call_operand.vmem [shape: f32[4,8], index: 8, kind: input, shape index: {}]
  %s9 = inlined_call_operand.vmem [shape: f32[8], index: 9, kind: input, shape index: {}]
  %s10 = inlined_call_operand.vmem [shape: f32[4,8], index: 10, kind: input, shape index: {}]
  %s11 = inlined_call_operand.vmem [shape: f32[8], index: 11, kind: input, shape index: {}]
  %s12 = inlined_call_operand.vmem [shape: f32[4,8], index: 12, kind: input, shape index: {}]
  %s13 = inlined_call_operand.vmem [shape: f32[8], index: 13, kind: input, shape index: {}]
  %s14 = inlined_call_operand.vmem [shape: f32[16,8], index: 14, kind: input, shape index: {}]
  %s15 = inlined_call_operand.vmem [shape: f32[8], index: 15, kind: input, shape index: {}]
  %s16 = inlined_call_operand.hbm [shape: f32[2,8,16,16], index: 16, kind: output, shape index: {}]
  %s17 = sld [smem:[#allocation0]]
  $region161: #{tpu_custom_call.1} parent=0
    _
  %s19 = ssub.s32 1, %s17
  %s20 = scalar_select 0, %s19, %s17
  $region1: #{tpu_custom_call.1} parent=0
    #allocation2 [shape = 'u8[65536]{0}', space=vmem, size = 0x10000, scoped, tag = 'input window, operand 0']
    #allocation3 [shape = 's32[2]{0}', space=sflag, size = 0x8, scoped, tag = 'scoped memory for tpu_custom_call.1']
    #allocation4 [shape = 's32[2]{0}', space=sflag, size = 0x8, scoped, tag = 'scoped memory for tpu_custom_call.1']
    #allocation5 [shape = 's32[2]{0}', space=sflag, size = 0x8, scoped, tag = 'scoped memory for tpu_custom_call.1']
    #allocation6 [shape = 'u8[65536]{0}', space=vmem, size = 0x10000, scoped, tag = 'input window, operand 1']
    #allocation7 [shape = 's32[2]{0}', space=sflag, size = 0x8, scoped, tag = 'scoped memory for tpu_custom_call.1']
    #allocation8 [shape = 'u8[2048]{0}', space=smem, size = 0x800, scoped, tag = 'input window, operand 2, single buffered']
    #allocation9 [shape = 'u8[512]{0}', space=smem, size = 0x200, scoped, tag = 'input window, operand 3, single buffered']
    #allocation10 [shape = 's32[1]{0}', space=sflag, size = 0x4, scoped, tag = 'scoped memory for tpu_custom_call.1']
    #allocation11 [shape = 'u8[2048]{0}', space=smem, size = 0x800, scoped, tag = 'input window, operand 4, single buffered']
    #allocation12 [shape = 'u8[512]{0}', space=smem, size = 0x200, scoped, tag = 'input window, operand 5, single buffered']
    #allocation13 [shape = 's32[1]{0}', space=sflag, size = 0x4, scoped, tag = 'scoped memory for tpu_custom_call.1']
    #allocation14 [shape = 'u8[2048]{0}', space=smem, size = 0x800, scoped, tag = 'input window, operand 6, single buffered']
    #allocation15 [shape = 'u8[512]{0}', space=smem, size = 0x200, scoped, tag = 'input window, operand 7, single buffered']
    #allocation16 [shape = 's32[1]{0}', space=sflag, size = 0x4, scoped, tag = 'scoped memory for tpu_custom_call.1']
    #allocation17 [shape = 'u8[2048]{0}', space=smem, size = 0x800, scoped, tag = 'input window, operand 8, single buffered']
    #allocation18 [shape = 'u8[512]{0}', space=smem, size = 0x200, scoped, tag = 'input window, operand 9, single buffered']
    #allocation19 [shape = 's32[1]{0}', space=sflag, size = 0x4, scoped, tag = 'scoped memory for tpu_custom_call.1']
    #allocation20 [shape = 'u8[2048]{0}', space=smem, size = 0x800, scoped, tag = 'input window, operand 10, single buffered']
    #allocation21 [shape = 'u8[512]{0}', space=smem, size = 0x200, scoped, tag = 'input window, operand 11, single buffered']
    #allocation22 [shape = 's32[1]{0}', space=sflag, size = 0x4, scoped, tag = 'scoped memory for tpu_custom_call.1']
    #allocation23 [shape = 'u8[2048]{0}', space=smem, size = 0x800, scoped, tag = 'input window, operand 12, single buffered']
    #allocation24 [shape = 'u8[512]{0}', space=smem, size = 0x200, scoped, tag = 'input window, operand 13, single buffered']
    #allocation25 [shape = 's32[1]{0}', space=sflag, size = 0x4, scoped, tag = 'scoped memory for tpu_custom_call.1']
    #allocation26 [shape = 'u8[8192]{0}', space=smem, size = 0x2000, scoped, tag = 'input window, operand 14, single buffered']
    #allocation27 [shape = 'u8[512]{0}', space=smem, size = 0x200, scoped, tag = 'input window, operand 15, single buffered']
    #allocation28 [shape = 's32[1]{0}', space=sflag, size = 0x4, scoped, tag = 'scoped memory for tpu_custom_call.1']
    #allocation29 [shape = 'u8[131072]{0}', space=vmem, size = 0x20000, scoped, tag = 'output window, operand 0']
    %21 = vsyncpa [#allocation3], 0
    %s22 = scalar_lea.sflag [#allocation3], 1
    %23 = vsyncpa %s22, 0
    %24 = vsyncpa [#allocation7], 0
    %s25 = scalar_lea.sflag [#allocation7], 1
    %26 = vsyncpa %s25, 0
    %27 = vsyncpa [#allocation5], 0
    %28 = vsyncpa [#allocation10], 0
    %29 = vsyncpa [#allocation13], 0
    %30 = vsyncpa [#allocation16], 0
    %31 = vsyncpa [#allocation19], 0
    %32 = vsyncpa [#allocation22], 0
    %33 = vsyncpa [#allocation25], 0
    %34 = vsyncpa [#allocation28], 0
    %35 = vsyncpa [#allocation4], 0
    %s36 = scalar_lea.sflag [#allocation4], 1
    %37 = vsyncpa %s36, 0
    loop: start=0, step=1, limit=4
    $region2: #{tpu_custom_call.1} parent=1 // loop_pre_header
      _
    $region3: #{tpu_custom_call.1} parent=1 // loop_header
      %s39 = sphi 0, %s43
      %p40 = scmp.ge.s32.totalorder %s39, 4
      %s49 = sphi 0, %s51
      %s52 = sphi 0, %s49
      %s53 = sphi 0, %s52
      %s69 = sphi 0, %s53
      %s75 = sphi 0, %s77
      %s78 = sphi 0, %s75
      %s79 = sphi 0, %s78
      %s95 = sphi 0, %s79
      %s99 = sphi 0, %s99
      %s101 = sphi 0, %s99
      %s102 = sphi 0, %s101
      %s116 = sphi 0, %s102
      %s120 = sphi 0, %s120
      %s122 = sphi 0, %s120
      %s123 = sphi 0, %s122
      %s137 = sphi 0, %s123
      %s141 = sphi 0, %s141
      %s143 = sphi 0, %s141
      %s144 = sphi 0, %s143
      %s158 = sphi 0, %s144
      %s162 = sphi 0, %s162
      %s164 = sphi 0, %s162
      %s165 = sphi 0, %s164
      %s179 = sphi 0, %s165
      %s183 = sphi 0, %s183
      %s185 = sphi 0, %s183
      %s186 = sphi 0, %s185
      %s200 = sphi 0, %s186
      %s204 = sphi 0, %s204
      %s206 = sphi 0, %s204
      %s207 = sphi 0, %s206
      %s221 = sphi 0, %s207
      %s225 = sphi 0, %s225
      %s227 = sphi 0, %s225
      %s228 = sphi 0, %s227
      %s242 = sphi 0, %s228
      %s246 = sphi 0, %s246
      %s248 = sphi 0, %s246
      %s249 = sphi 0, %s248
      %s263 = sphi 0, %s249
      %s267 = sphi 0, %s267
      %s269 = sphi 0, %s267
      %s270 = sphi 0, %s269
      %s284 = sphi 0, %s270
      %s288 = sphi 0, %s288
      %s290 = sphi 0, %s288
      %s291 = sphi 0, %s290
      %s305 = sphi 0, %s291
      %s309 = sphi 0, %s309
      %s311 = sphi 0, %s309
      %s312 = sphi 0, %s311
      %s326 = sphi 0, %s312
      %s330 = sphi 0, %s330
      %s332 = sphi 0, %s330
      %s333 = sphi 0, %s332
      %s347 = sphi 0, %s333
      %s351 = sphi 0, %s351
      %s353 = sphi 0, %s351
      %s354 = sphi 0, %s353
      %s368 = sphi 0, %s354
      %s372 = sphi 0, %s372
      %s374 = sphi 0, %s372
      %s375 = sphi 0, %s374
      %s389 = sphi 0, %s375
      %s395 = sphi 0, %s397
      %s398 = sphi 0, %s395
      %s399 = sphi 0, %s398
      %s415 = sphi 0, %s399
    $region4: #{tpu_custom_call.1} parent=1 // loop_header_branch
      %42 = sbr.rel (%p40) target = $region8
    $region5: #{tpu_custom_call.1} parent=1 // loop_body
      %s44 = ssub.s32 %s39, 1
      %s45 = ssub.s32 %s39, 2
      %s46 = sadd.s32 %s39, 1
      %s47 = ssub.s32 %s39, %s46
      %p48 = scmp.eq.s32.totalorder %s47, 0
      %s50 = sadd.s32 %s49, 1
      %s51 = scalar_select %p48, %s49, %s50
      %p54 = pneg %p48
      %p55 = scmp.eq.s32.totalorder %s39, 1
      %p56 = por %p54, %p55
      %p57 = scmp.ne.s32.totalorder %s49, %s52
      %p58 = scmp.eq.s32.totalorder %s39, 0
      %p59 = por %p57, %p58
      %p60 = scmp.ne.s32.totalorder %s49, %s52
      %p61 = scmp.eq.s32.totalorder %s44, 1
      %p62 = por %p60, %p61
      %p63 = scmp.ne.s32.totalorder %s52, %s53
      %p64 = scmp.eq.s32.totalorder %s44, 0
      %p65 = por %p63, %p64
      %p66 = scmp.ne.s32.totalorder %s52, %s53
      %p67 = scmp.eq.s32.totalorder %s45, 1
      %p68 = por %p66, %p67
      %p70 = scmp.ne.s32.totalorder %s53, %s69
      %p71 = scmp.eq.s32.totalorder %s45, 0
      %p72 = por %p70, %p71
      %s73 = ssub.s32 %s39, %s46
      %p74 = scmp.eq.s32.totalorder %s73, 0
      %s76 = sadd.s32 %s75, 1
      %s77 = scalar_select %p74, %s75, %s76
      %p80 = pneg %p74
      %p81 = scmp.eq.s32.totalorder %s39, 1
      %p82 = por %p80, %p81
      %p83 = scmp.ne.s32.totalorder %s75, %s78
      %p84 = scmp.eq.s32.totalorder %s39, 0
      %p85 = por %p83, %p84
      %p86 = scmp.ne.s32.totalorder %s75, %s78
      %p87 = scmp.eq.s32.totalorder %s44, 1
      %p88 = por %p86, %p87
      %p89 = scmp.ne.s32.totalorder %s78, %s79
      %p90 = scmp.eq.s32.totalorder %s44, 0
      %p91 = por %p89, %p90
      %p92 = scmp.ne.s32.totalorder %s78, %s79
      %p93 = scmp.eq.s32.totalorder %s45, 1
      %p94 = por %p92, %p93
      %p96 = scmp.ne.s32.totalorder %s79, %s95
      %p97 = scmp.eq.s32.totalorder %s45, 0
      %p98 = por %p96, %p97
      %s100 = sadd.s32 %s99, 1
      %p103 = scmp.eq.s32.totalorder %s39, 1
      %p104 = scmp.ne.s32.totalorder %s99, %s101
      %p105 = scmp.eq.s32.totalorder %s39, 0
      %p106 = por %p104, %p105
      %p107 = scmp.ne.s32.totalorder %s99, %s101
      %p108 = scmp.eq.s32.totalorder %s44, 1
      %p109 = por %p107, %p108
      %p110 = scmp.ne.s32.totalorder %s101, %s102
      %p111 = scmp.eq.s32.totalorder %s44, 0
      %p112 = por %p110, %p111
      %p113 = scmp.ne.s32.totalorder %s101, %s102
      %p114 = scmp.eq.s32.totalorder %s45, 1
      %p115 = por %p113, %p114
      %p117 = scmp.ne.s32.totalorder %s102, %s116
      %p118 = scmp.eq.s32.totalorder %s45, 0
      %p119 = por %p117, %p118
      %s121 = sadd.s32 %s120, 1
      %p124 = scmp.eq.s32.totalorder %s39, 1
      %p125 = scmp.ne.s32.totalorder %s120, %s122
      %p126 = scmp.eq.s32.totalorder %s39, 0
      %p127 = por %p125, %p126
      %p128 = scmp.ne.s32.totalorder %s120, %s122
      %p129 = scmp.eq.s32.totalorder %s44, 1
      %p130 = por %p128, %p129
      %p131 = scmp.ne.s32.totalorder %s122, %s123
      %p132 = scmp.eq.s32.totalorder %s44, 0
      %p133 = por %p131, %p132
      %p134 = scmp.ne.s32.totalorder %s122, %s123
      %p135 = scmp.eq.s32.totalorder %s45, 1
      %p136 = por %p134, %p135
      %p138 = scmp.ne.s32.totalorder %s123, %s137
      %p139 = scmp.eq.s32.totalorder %s45, 0
      %p140 = por %p138, %p139
      %s142 = sadd.s32 %s141, 1
      %p145 = scmp.eq.s32.totalorder %s39, 1
      %p146 = scmp.ne.s32.totalorder %s141, %s143
      %p147 = scmp.eq.s32.totalorder %s39, 0
      %p148 = por %p146, %p147
      %p149 = scmp.ne.s32.totalorder %s141, %s143
      %p150 = scmp.eq.s32.totalorder %s44, 1
      %p151 = por %p149, %p150
      %p152 = scmp.ne.s32.totalorder %s143, %s144
      %p153 = scmp.eq.s32.totalorder %s44, 0
      %p154 = por %p152, %p153
      %p155 = scmp.ne.s32.totalorder %s143, %s144
      %p156 = scmp.eq.s32.totalorder %s45, 1
      %p157 = por %p155, %p156
      %p159 = scmp.ne.s32.totalorder %s144, %s158
      %p160 = scmp.eq.s32.totalorder %s45, 0
      %p161 = por %p159, %p160
      %s163 = sadd.s32 %s162, 1
      %p166 = scmp.eq.s32.totalorder %s39, 1
      %p167 = scmp.ne.s32.totalorder %s162, %s164
      %p168 = scmp.eq.s32.totalorder %s39, 0
      %p169 = por %p167, %p168
      %p170 = scmp.ne.s32.totalorder %s162, %s164
      %p171 = scmp.eq.s32.totalorder %s44, 1
      %p172 = por %p170, %p171
      %p173 = scmp.ne.s32.totalorder %s164, %s165
      %p174 = scmp.eq.s32.totalorder %s44, 0
      %p175 = por %p173, %p174
      %p176 = scmp.ne.s32.totalorder %s164, %s165
      %p177 = scmp.eq.s32.totalorder %s45, 1
      %p178 = por %p176, %p177
      %p180 = scmp.ne.s32.totalorder %s165, %s179
      %p181 = scmp.eq.s32.totalorder %s45, 0
      %p182 = por %p180, %p181
      %s184 = sadd.s32 %s183, 1
      %p187 = scmp.eq.s32.totalorder %s39, 1
      %p188 = scmp.ne.s32.totalorder %s183, %s185
      %p189 = scmp.eq.s32.totalorder %s39, 0
      %p190 = por %p188, %p189
      %p191 = scmp.ne.s32.totalorder %s183, %s185
      %p192 = scmp.eq.s32.totalorder %s44, 1
      %p193 = por %p191, %p192
      %p194 = scmp.ne.s32.totalorder %s185, %s186
      %p195 = scmp.eq.s32.totalorder %s44, 0
      %p196 = por %p194, %p195
      %p197 = scmp.ne.s32.totalorder %s185, %s186
      %p198 = scmp.eq.s32.totalorder %s45, 1
      %p199 = por %p197, %p198
      %p201 = scmp.ne.s32.totalorder %s186, %s200
      %p202 = scmp.eq.s32.totalorder %s45, 0
      %p203 = por %p201, %p202
      %s205 = sadd.s32 %s204, 1
      %p208 = scmp.eq.s32.totalorder %s39, 1
      %p209 = scmp.ne.s32.totalorder %s204, %s206
      %p210 = scmp.eq.s32.totalorder %s39, 0
      %p211 = por %p209, %p210
      %p212 = scmp.ne.s32.totalorder %s204, %s206
      %p213 = scmp.eq.s32.totalorder %s44, 1
      %p214 = por %p212, %p213
      %p215 = scmp.ne.s32.totalorder %s206, %s207
      %p216 = scmp.eq.s32.totalorder %s44, 0
      %p217 = por %p215, %p216
      %p218 = scmp.ne.s32.totalorder %s206, %s207
      %p219 = scmp.eq.s32.totalorder %s45, 1
      %p220 = por %p218, %p219
      %p222 = scmp.ne.s32.totalorder %s207, %s221
      %p223 = scmp.eq.s32.totalorder %s45, 0
      %p224 = por %p222, %p223
      %s226 = sadd.s32 %s225, 1
      %p229 = scmp.eq.s32.totalorder %s39, 1
      %p230 = scmp.ne.s32.totalorder %s225, %s227
      %p231 = scmp.eq.s32.totalorder %s39, 0
      %p232 = por %p230, %p231
      %p233 = scmp.ne.s32.totalorder %s225, %s227
      %p234 = scmp.eq.s32.totalorder %s44, 1
      %p235 = por %p233, %p234
      %p236 = scmp.ne.s32.totalorder %s227, %s228
      %p237 = scmp.eq.s32.totalorder %s44, 0
      %p238 = por %p236, %p237
      %p239 = scmp.ne.s32.totalorder %s227, %s228
      %p240 = scmp.eq.s32.totalorder %s45, 1
      %p241 = por %p239, %p240
      %p243 = scmp.ne.s32.totalorder %s228, %s242
      %p244 = scmp.eq.s32.totalorder %s45, 0
      %p245 = por %p243, %p244
      %s247 = sadd.s32 %s246, 1
      %p250 = scmp.eq.s32.totalorder %s39, 1
      %p251 = scmp.ne.s32.totalorder %s246, %s248
      %p252 = scmp.eq.s32.totalorder %s39, 0
      %p253 = por %p251, %p252
      %p254 = scmp.ne.s32.totalorder %s246, %s248
      %p255 = scmp.eq.s32.totalorder %s44, 1
      %p256 = por %p254, %p255
      %p257 = scmp.ne.s32.totalorder %s248, %s249
      %p258 = scmp.eq.s32.totalorder %s44, 0
      %p259 = por %p257, %p258
      %p260 = scmp.ne.s32.totalorder %s248, %s249
      %p261 = scmp.eq.s32.totalorder %s45, 1
      %p262 = por %p260, %p261
      %p264 = scmp.ne.s32.totalorder %s249, %s263
      %p265 = scmp.eq.s32.totalorder %s45, 0
      %p266 = por %p264, %p265
      %s268 = sadd.s32 %s267, 1
      %p271 = scmp.eq.s32.totalorder %s39, 1
      %p272 = scmp.ne.s32.totalorder %s267, %s269
      %p273 = scmp.eq.s32.totalorder %s39, 0
      %p274 = por %p272, %p273
      %p275 = scmp.ne.s32.totalorder %s267, %s269
      %p276 = scmp.eq.s32.totalorder %s44, 1
      %p277 = por %p275, %p276
      %p278 = scmp.ne.s32.totalorder %s269, %s270
      %p279 = scmp.eq.s32.totalorder %s44, 0
      %p280 = por %p278, %p279
      %p281 = scmp.ne.s32.totalorder %s269, %s270
      %p282 = scmp.eq.s32.totalorder %s45, 1
      %p283 = por %p281, %p282
      %p285 = scmp.ne.s32.totalorder %s270, %s284
      %p286 = scmp.eq.s32.totalorder %s45, 0
      %p287 = por %p285, %p286
      %s289 = sadd.s32 %s288, 1
      %p292 = scmp.eq.s32.totalorder %s39, 1
      %p293 = scmp.ne.s32.totalorder %s288, %s290
      %p294 = scmp.eq.s32.totalorder %s39, 0
      %p295 = por %p293, %p294
      %p296 = scmp.ne.s32.totalorder %s288, %s290
      %p297 = scmp.eq.s32.totalorder %s44, 1
      %p298 = por %p296, %p297
      %p299 = scmp.ne.s32.totalorder %s290, %s291
      %p300 = scmp.eq.s32.totalorder %s44, 0
      %p301 = por %p299, %p300
      %p302 = scmp.ne.s32.totalorder %s290, %s291
      %p303 = scmp.eq.s32.totalorder %s45, 1
      %p304 = por %p302, %p303
      %p306 = scmp.ne.s32.totalorder %s291, %s305
      %p307 = scmp.eq.s32.totalorder %s45, 0
      %p308 = por %p306, %p307
      %s310 = sadd.s32 %s309, 1
      %p313 = scmp.eq.s32.totalorder %s39, 1
      %p314 = scmp.ne.s32.totalorder %s309, %s311
      %p315 = scmp.eq.s32.totalorder %s39, 0
      %p316 = por %p314, %p315
      %p317 = scmp.ne.s32.totalorder %s309, %s311
      %p318 = scmp.eq.s32.totalorder %s44, 1
      %p319 = por %p317, %p318
      %p320 = scmp.ne.s32.totalorder %s311, %s312
      %p321 = scmp.eq.s32.totalorder %s44, 0
      %p322 = por %p320, %p321
      %p323 = scmp.ne.s32.totalorder %s311, %s312
      %p324 = scmp.eq.s32.totalorder %s45, 1
      %p325 = por %p323, %p324
      %p327 = scmp.ne.s32.totalorder %s312, %s326
      %p328 = scmp.eq.s32.totalorder %s45, 0
      %p329 = por %p327, %p328
      %s331 = sadd.s32 %s330, 1
      %p334 = scmp.eq.s32.totalorder %s39, 1
      %p335 = scmp.ne.s32.totalorder %s330, %s332
      %p336 = scmp.eq.s32.totalorder %s39, 0
      %p337 = por %p335, %p336
      %p338 = scmp.ne.s32.totalorder %s330, %s332
      %p339 = scmp.eq.s32.totalorder %s44, 1
      %p340 = por %p338, %p339
      %p341 = scmp.ne.s32.totalorder %s332, %s333
      %p342 = scmp.eq.s32.totalorder %s44, 0
      %p343 = por %p341, %p342
      %p344 = scmp.ne.s32.totalorder %s332, %s333
      %p345 = scmp.eq.s32.totalorder %s45, 1
      %p346 = por %p344, %p345
      %p348 = scmp.ne.s32.totalorder %s333, %s347
      %p349 = scmp.eq.s32.totalorder %s45, 0
      %p350 = por %p348, %p349
      %s352 = sadd.s32 %s351, 1
      %p355 = scmp.eq.s32.totalorder %s39, 1
      %p356 = scmp.ne.s32.totalorder %s351, %s353
      %p357 = scmp.eq.s32.totalorder %s39, 0
      %p358 = por %p356, %p357
      %p359 = scmp.ne.s32.totalorder %s351, %s353
      %p360 = scmp.eq.s32.totalorder %s44, 1
      %p361 = por %p359, %p360
      %p362 = scmp.ne.s32.totalorder %s353, %s354
      %p363 = scmp.eq.s32.totalorder %s44, 0
      %p364 = por %p362, %p363
      %p365 = scmp.ne.s32.totalorder %s353, %s354
      %p366 = scmp.eq.s32.totalorder %s45, 1
      %p367 = por %p365, %p366
      %p369 = scmp.ne.s32.totalorder %s354, %s368
      %p370 = scmp.eq.s32.totalorder %s45, 0
      %p371 = por %p369, %p370
      %s373 = sadd.s32 %s372, 1
      %p376 = scmp.eq.s32.totalorder %s39, 1
      %p377 = scmp.ne.s32.totalorder %s372, %s374
      %p378 = scmp.eq.s32.totalorder %s39, 0
      %p379 = por %p377, %p378
      %p380 = scmp.ne.s32.totalorder %s372, %s374
      %p381 = scmp.eq.s32.totalorder %s44, 1
      %p382 = por %p380, %p381
      %p383 = scmp.ne.s32.totalorder %s374, %s375
      %p384 = scmp.eq.s32.totalorder %s44, 0
      %p385 = por %p383, %p384
      %p386 = scmp.ne.s32.totalorder %s374, %s375
      %p387 = scmp.eq.s32.totalorder %s45, 1
      %p388 = por %p386, %p387
      %p390 = scmp.ne.s32.totalorder %s375, %s389
      %p391 = scmp.eq.s32.totalorder %s45, 0
      %p392 = por %p390, %p391
      %s393 = ssub.s32 %s39, %s46
      %p394 = scmp.eq.s32.totalorder %s393, 0
      %s396 = sadd.s32 %s395, 1
      %s397 = scalar_select %p394, %s395, %s396
      %p400 = pneg %p394
      %p401 = scmp.eq.s32.totalorder %s39, 1
      %p402 = por %p400, %p401
      %p403 = scmp.ne.s32.totalorder %s395, %s398
      %p404 = scmp.eq.s32.totalorder %s39, 0
      %p405 = por %p403, %p404
      %p406 = scmp.ne.s32.totalorder %s395, %s398
      %p407 = scmp.eq.s32.totalorder %s44, 1
      %p408 = por %p406, %p407
      %p409 = scmp.ne.s32.totalorder %s398, %s399
      %p410 = scmp.eq.s32.totalorder %s44, 0
      %p411 = por %p409, %p410
      %p412 = scmp.ne.s32.totalorder %s398, %s399
      %p413 = scmp.eq.s32.totalorder %s45, 1
      %p414 = por %p412, %p413
      %p416 = scmp.ne.s32.totalorder %s399, %s415
      %p417 = scmp.eq.s32.totalorder %s45, 0
      %p418 = por %p416, %p417
      %p419 = scmp.le.s32.totalorder 1, %s39
      %p420 = scmp.lt.s32.totalorder %s39, 3
      %p421 = pnand %p419, %p420
      %p422 = pneg %p421
      // Predicated region
      $region9: #{tpu_custom_call.1} parent=5 // pred_check
        _
      $region10: #{tpu_custom_call.1} parent=5 // pred_check_branch
        %424 = sbr.rel (%p421) target = $region12
      $region11: #{tpu_custom_call.1} parent=5 // pred_region
        %s425 = ssub.s32 %s39, 1
        // Predicated region
        $region13: #{tpu_custom_call.1} parent=11 // pred_check
          %p426 = pneg %p112
        $region14: #{tpu_custom_call.1} parent=11 // pred_check_branch
          %428 = sbr.rel (%p426) target = $region16
        $region15: #{tpu_custom_call.1} parent=11 // pred_region
          %s430 = ssub.s32 64, 64
          %431 = vsyncadd [#allocation5], %s430
          %s433 = sshll.u32 %s2, 4
          %s434 = int_to_ptr.vmem [resolvable:$true] %s433
          %436 = dma.vmem_to_smem %s434, 64, [#allocation8], [#allocation5]
        $region16: #{tpu_custom_call.1} parent=11 // pred_fallthru
          _
        // Predicated region
        $region17: #{tpu_custom_call.1} parent=11 // pred_check
          %p437 = pneg %p133
        $region18: #{tpu_custom_call.1} parent=11 // pred_check_branch
          %439 = sbr.rel (%p437) target = $region20
        $region19: #{tpu_custom_call.1} parent=11 // pred_region
          %s441 = ssub.s32 16, 16
          %442 = vsyncadd [#allocation10], %s441
          %s444 = sshll.u32 %s3, 4
          %s445 = int_to_ptr.vmem [resolvable:$true] %s444
          %447 = dma.vmem_to_smem %s445, 16, [#allocation9], [#allocation10]
        $region20: #{tpu_custom_call.1} parent=11 // pred_fallthru
          _
        // Predicated region
        $region21: #{tpu_custom_call.1} parent=11 // pred_check
          %p448 = pneg %p154
        $region22: #{tpu_custom_call.1} parent=11 // pred_check_branch
          %450 = sbr.rel (%p448) target = $region24
        $region23: #{tpu_custom_call.1} parent=11 // pred_region
          %s452 = ssub.s32 64, 64
          %453 = vsyncadd [#allocation10], %s452
          %s455 = sshll.u32 %s4, 4
          %s456 = int_to_ptr.vmem [resolvable:$true] %s455
          %458 = dma.vmem_to_smem %s456, 64, [#allocation11], [#allocation10]
        $region24: #{tpu_custom_call.1} parent=11 // pred_fallthru
          _
        // Predicated region
        $region25: #{tpu_custom_call.1} parent=11 // pred_check
          %p459 = pneg %p175
        $region26: #{tpu_custom_call.1} parent=11 // pred_check_branch
          %461 = sbr.rel (%p459) target = $region28
        $region27: #{tpu_custom_call.1} parent=11 // pred_region
          %s463 = ssub.s32 16, 16
          %464 = vsyncadd [#allocation13], %s463
          %s466 = sshll.u32 %s5, 4
          %s467 = int_to_ptr.vmem [resolvable:$true] %s466
          %469 = dma.vmem_to_smem %s467, 16, [#allocation12], [#allocation13]
        $region28: #{tpu_custom_call.1} parent=11 // pred_fallthru
          _
        // Predicated region
        $region29: #{tpu_custom_call.1} parent=11 // pred_check
          %p470 = pneg %p196
        $region30: #{tpu_custom_call.1} parent=11 // pred_check_branch
          %472 = sbr.rel (%p470) target = $region32
        $region31: #{tpu_custom_call.1} parent=11 // pred_region
          %s474 = ssub.s32 64, 64
          %475 = vsyncadd [#allocation13], %s474
          %s477 = sshll.u32 %s6, 4
          %s478 = int_to_ptr.vmem [resolvable:$true] %s477
          %480 = dma.vmem_to_smem %s478, 64, [#allocation14], [#allocation13]
        $region32: #{tpu_custom_call.1} parent=11 // pred_fallthru
          _
        // Predicated region
        $region33: #{tpu_custom_call.1} parent=11 // pred_check
          %p481 = pneg %p217
        $region34: #{tpu_custom_call.1} parent=11 // pred_check_branch
          %483 = sbr.rel (%p481) target = $region36
        $region35: #{tpu_custom_call.1} parent=11 // pred_region
          %s485 = ssub.s32 16, 16
          %486 = vsyncadd [#allocation16], %s485
          %s488 = sshll.u32 %s7, 4
          %s489 = int_to_ptr.vmem [resolvable:$true] %s488
          %491 = dma.vmem_to_smem %s489, 16, [#allocation15], [#allocation16]
        $region36: #{tpu_custom_call.1} parent=11 // pred_fallthru
          _
        // Predicated region
        $region37: #{tpu_custom_call.1} parent=11 // pred_check
          %p492 = pneg %p238
        $region38: #{tpu_custom_call.1} parent=11 // pred_check_branch
          %494 = sbr.rel (%p492) target = $region40
        $region39: #{tpu_custom_call.1} parent=11 // pred_region
          %s496 = ssub.s32 64, 64
          %497 = vsyncadd [#allocation16], %s496
          %s499 = sshll.u32 %s8, 4
          %s500 = int_to_ptr.vmem [resolvable:$true] %s499
          %502 = dma.vmem_to_smem %s500, 64, [#allocation17], [#allocation16]
        $region40: #{tpu_custom_call.1} parent=11 // pred_fallthru
          _
        // Predicated region
        $region41: #{tpu_custom_call.1} parent=11 // pred_check
          %p503 = pneg %p259
        $region42: #{tpu_custom_call.1} parent=11 // pred_check_branch
          %505 = sbr.rel (%p503) target = $region44
        $region43: #{tpu_custom_call.1} parent=11 // pred_region
          %s507 = ssub.s32 16, 16
          %508 = vsyncadd [#allocation19], %s507
          %s510 = sshll.u32 %s9, 4
          %s511 = int_to_ptr.vmem [resolvable:$true] %s510
          %513 = dma.vmem_to_smem %s511, 16, [#allocation18], [#allocation19]
        $region44: #{tpu_custom_call.1} parent=11 // pred_fallthru
          _
        // Predicated region
        $region45: #{tpu_custom_call.1} parent=11 // pred_check
          %p514 = pneg %p280
        $region46: #{tpu_custom_call.1} parent=11 // pred_check_branch
          %516 = sbr.rel (%p514) target = $region48
        $region47: #{tpu_custom_call.1} parent=11 // pred_region
          %s518 = ssub.s32 64, 64
          %519 = vsyncadd [#allocation19], %s518
          %s521 = sshll.u32 %s10, 4
          %s522 = int_to_ptr.vmem [resolvable:$true] %s521
          %524 = dma.vmem_to_smem %s522, 64, [#allocation20], [#allocation19]
        $region48: #{tpu_custom_call.1} parent=11 // pred_fallthru
          _
        // Predicated region
        $region49: #{tpu_custom_call.1} parent=11 // pred_check
          %p525 = pneg %p301
        $region50: #{tpu_custom_call.1} parent=11 // pred_check_branch
          %527 = sbr.rel (%p525) target = $region52
        $region51: #{tpu_custom_call.1} parent=11 // pred_region
          %s529 = ssub.s32 16, 16
          %530 = vsyncadd [#allocation22], %s529
          %s532 = sshll.u32 %s11, 4
          %s533 = int_to_ptr.vmem [resolvable:$true] %s532
          %535 = dma.vmem_to_smem %s533, 16, [#allocation21], [#allocation22]
        $region52: #{tpu_custom_call.1} parent=11 // pred_fallthru
          _
        // Predicated region
        $region53: #{tpu_custom_call.1} parent=11 // pred_check
          %p536 = pneg %p322
        $region54: #{tpu_custom_call.1} parent=11 // pred_check_branch
          %538 = sbr.rel (%p536) target = $region56
        $region55: #{tpu_custom_call.1} parent=11 // pred_region
          %s540 = ssub.s32 64, 64
          %541 = vsyncadd [#allocation22], %s540
          %s543 = sshll.u32 %s12, 4
          %s544 = int_to_ptr.vmem [resolvable:$true] %s543
          %546 = dma.vmem_to_smem %s544, 64, [#allocation23], [#allocation22]
        $region56: #{tpu_custom_call.1} parent=11 // pred_fallthru
          _
        // Predicated region
        $region57: #{tpu_custom_call.1} parent=11 // pred_check
          %p547 = pneg %p343
        $region58: #{tpu_custom_call.1} parent=11 // pred_check_branch
          %549 = sbr.rel (%p547) target = $region60
        $region59: #{tpu_custom_call.1} parent=11 // pred_region
          %s551 = ssub.s32 16, 16
          %552 = vsyncadd [#allocation25], %s551
          %s554 = sshll.u32 %s13, 4
          %s555 = int_to_ptr.vmem [resolvable:$true] %s554
          %557 = dma.vmem_to_smem %s555, 16, [#allocation24], [#allocation25]
        $region60: #{tpu_custom_call.1} parent=11 // pred_fallthru
          _
        // Predicated region
        $region61: #{tpu_custom_call.1} parent=11 // pred_check
          %p558 = pneg %p364
        $region62: #{tpu_custom_call.1} parent=11 // pred_check_branch
          %560 = sbr.rel (%p558) target = $region64
        $region63: #{tpu_custom_call.1} parent=11 // pred_region
          %s562 = ssub.s32 256, 256
          %563 = vsyncadd [#allocation25], %s562
          %s564 = sshll.u32 %s14, 4
          %s565 = int_to_ptr.vmem [resolvable:$true] %s564
          %570 = dma.vmem_to_smem %s565, 256, [#allocation26], [#allocation25], 128, 128, 8
        $region64: #{tpu_custom_call.1} parent=11 // pred_fallthru
          _
        // Predicated region
        $region65: #{tpu_custom_call.1} parent=11 // pred_check
          %p571 = pneg %p385
        $region66: #{tpu_custom_call.1} parent=11 // pred_check_branch
          %573 = sbr.rel (%p571) target = $region68
        $region67: #{tpu_custom_call.1} parent=11 // pred_region
          %s575 = ssub.s32 16, 16
          %576 = vsyncadd [#allocation28], %s575
          %s578 = sshll.u32 %s15, 4
          %s579 = int_to_ptr.vmem [resolvable:$true] %s578
          %581 = dma.vmem_to_smem %s579, 16, [#allocation27], [#allocation28]
        $region68: #{tpu_custom_call.1} parent=11 // pred_fallthru
          _
      $region12: #{tpu_custom_call.1} parent=5 // pred_fallthru
        _
      %p582 = scmp.lt.s32.totalorder %s39, 2
      // Predicated region
      $region69: #{tpu_custom_call.1} parent=5 // pred_check
        %p583 = pneg %p582
      $region70: #{tpu_custom_call.1} parent=5 // pred_check_branch
        %585 = sbr.rel (%p583) target = $region72
      $region71: #{tpu_custom_call.1} parent=5 // pred_region
        // Predicated region
        $region73: #{tpu_custom_call.1} parent=71 // pred_check
          %p586 = pneg %p59
        $region74: #{tpu_custom_call.1} parent=71 // pred_check_branch
          %588 = sbr.rel (%p586) target = $region76
        $region75: #{tpu_custom_call.1} parent=71 // pred_region
          %s589 = sand.u32 %s49, 1
          %s590 = scalar_lea.sflag [#allocation3], %s589
          %s591 = sand.u32 %s49, 1
          %s592 = smul.addr %s591, 64
          %s593 = scalar_lea.vmem [#allocation2], %s592
          %s595 = ssub.s32 1024, 1024
          %596 = vsyncadd %s590, %s595
          %s597 = smul.addr %s39, 8
          %s598 = smul.addr %s597, 128
          %s599 = scalar_lea.hbm %s0, %s598
          %s600 = sshll.u32 %s593, 4
          %s601 = int_to_ptr.vmem [resolvable:$true] %s600
          %606 = dma.hbm_to_vmem [thread:$0]  %s599, 1024, %s601, %s590, 128, 128, 8
        $region76: #{tpu_custom_call.1} parent=71 // pred_fallthru
          _
        // Predicated region
        $region77: #{tpu_custom_call.1} parent=71 // pred_check
          %p607 = pneg %p85
        $region78: #{tpu_custom_call.1} parent=71 // pred_check_branch
          %609 = sbr.rel (%p607) target = $region80
        $region79: #{tpu_custom_call.1} parent=71 // pred_region
          %s610 = sand.u32 %s75, 1
          %s611 = scalar_lea.sflag [#allocation7], %s610
          %s612 = sand.u32 %s75, 1
          %s613 = smul.addr %s612, 64
          %s614 = scalar_lea.vmem [#allocation6], %s613
          %s616 = ssub.s32 1024, 1024
          %617 = vsyncadd %s611, %s616
          %s618 = smul.addr %s39, 8
          %s619 = smul.addr %s618, 128
          %s620 = scalar_lea.hbm %s1, %s619
          %s621 = sshll.u32 %s614, 4
          %s622 = int_to_ptr.vmem [resolvable:$true] %s621
          %627 = dma.hbm_to_vmem [thread:$0]  %s620, 1024, %s622, %s611, 128, 128, 8
        $region80: #{tpu_custom_call.1} parent=71 // pred_fallthru
          _
      $region72: #{tpu_custom_call.1} parent=5 // pred_fallthru
        _
      %p628 = scmp.le.s32.totalorder 1, %s39
      %p629 = scmp.lt.s32.totalorder %s39, 3
      %p630 = pnand %p628, %p629
      %p631 = pneg %p630
      // Predicated region
      $region81: #{tpu_custom_call.1} parent=5 // pred_check
        _
      $region82: #{tpu_custom_call.1} parent=5 // pred_check_branch
        %633 = sbr.rel (%p630) target = $region84
      $region83: #{tpu_custom_call.1} parent=5 // pred_region
        %s634 = ssub.s32 %s39, 1
        %s635 = sand.u32 %s52, 1
        %s636 = scalar_lea.sflag [#allocation3], %s635
        %s637 = sand.u32 %s52, 1
        %s638 = smul.addr %s637, 64
        %s639 = scalar_lea.vmem [#allocation2], %s638
        // Predicated region
        $region85: #{tpu_custom_call.1} parent=83 // pred_check
          %p640 = pneg %p65
        $region86: #{tpu_custom_call.1} parent=83 // pred_check_branch
          %642 = sbr.rel (%p640) target = $region88
        $region87: #{tpu_custom_call.1} parent=83 // pred_region
          %643 = dma.done %s636, 1024
        $region88: #{tpu_custom_call.1} parent=83 // pred_fallthru
          _
        %s644 = sand.u32 %s78, 1
        %s645 = scalar_lea.sflag [#allocation7], %s644
        %s646 = sand.u32 %s78, 1
        %s647 = smul.addr %s646, 64
        %s648 = scalar_lea.vmem [#allocation6], %s647
        // Predicated region
        $region89: #{tpu_custom_call.1} parent=83 // pred_check
          %p649 = pneg %p91
        $region90: #{tpu_custom_call.1} parent=83 // pred_check_branch
          %651 = sbr.rel (%p649) target = $region92
        $region91: #{tpu_custom_call.1} parent=83 // pred_region
          %652 = dma.done %s645, 1024
        $region92: #{tpu_custom_call.1} parent=83 // pred_fallthru
          _
        // Predicated region
        $region93: #{tpu_custom_call.1} parent=83 // pred_check
          %p653 = pneg %p112
        $region94: #{tpu_custom_call.1} parent=83 // pred_check_branch
          %655 = sbr.rel (%p653) target = $region96
        $region95: #{tpu_custom_call.1} parent=83 // pred_region
          %656 = dma.done [#allocation5], 64
        $region96: #{tpu_custom_call.1} parent=83 // pred_fallthru
          _
        // Predicated region
        $region97: #{tpu_custom_call.1} parent=83 // pred_check
          %p657 = pneg %p133
        $region98: #{tpu_custom_call.1} parent=83 // pred_check_branch
          %659 = sbr.rel (%p657) target = $region100
        $region99: #{tpu_custom_call.1} parent=83 // pred_region
          %660 = dma.done [#allocation10], 16
        $region100: #{tpu_custom_call.1} parent=83 // pred_fallthru
          _
        // Predicated region
        $region101: #{tpu_custom_call.1} parent=83 // pred_check
          %p661 = pneg %p154
        $region102: #{tpu_custom_call.1} parent=83 // pred_check_branch
          %663 = sbr.rel (%p661) target = $region104
        $region103: #{tpu_custom_call.1} parent=83 // pred_region
          %664 = dma.done [#allocation10], 64
        $region104: #{tpu_custom_call.1} parent=83 // pred_fallthru
          _
        // Predicated region
        $region105: #{tpu_custom_call.1} parent=83 // pred_check
          %p665 = pneg %p175
        $region106: #{tpu_custom_call.1} parent=83 // pred_check_branch
          %667 = sbr.rel (%p665) target = $region108
        $region107: #{tpu_custom_call.1} parent=83 // pred_region
          %668 = dma.done [#allocation13], 16
        $region108: #{tpu_custom_call.1} parent=83 // pred_fallthru
          _
        // Predicated region
        $region109: #{tpu_custom_call.1} parent=83 // pred_check
          %p669 = pneg %p196
        $region110: #{tpu_custom_call.1} parent=83 // pred_check_branch
          %671 = sbr.rel (%p669) target = $region112
        $region111: #{tpu_custom_call.1} parent=83 // pred_region
          %672 = dma.done [#allocation13], 64
        $region112: #{tpu_custom_call.1} parent=83 // pred_fallthru
          _
        // Predicated region
        $region113: #{tpu_custom_call.1} parent=83 // pred_check
          %p673 = pneg %p217
        $region114: #{tpu_custom_call.1} parent=83 // pred_check_branch
          %675 = sbr.rel (%p673) target = $region116
        $region115: #{tpu_custom_call.1} parent=83 // pred_region
          %676 = dma.done [#allocation16], 16
        $region116: #{tpu_custom_call.1} parent=83 // pred_fallthru
          _
        // Predicated region
        $region117: #{tpu_custom_call.1} parent=83 // pred_check
          %p677 = pneg %p238
        $region118: #{tpu_custom_call.1} parent=83 // pred_check_branch
          %679 = sbr.rel (%p677) target = $region120
        $region119: #{tpu_custom_call.1} parent=83 // pred_region
          %680 = dma.done [#allocation16], 64
        $region120: #{tpu_custom_call.1} parent=83 // pred_fallthru
          _
        // Predicated region
        $region121: #{tpu_custom_call.1} parent=83 // pred_check
          %p681 = pneg %p259
        $region122: #{tpu_custom_call.1} parent=83 // pred_check_branch
          %683 = sbr.rel (%p681) target = $region124
        $region123: #{tpu_custom_call.1} parent=83 // pred_region
          %684 = dma.done [#allocation19], 16
        $region124: #{tpu_custom_call.1} parent=83 // pred_fallthru
          _
        // Predicated region
        $region125: #{tpu_custom_call.1} parent=83 // pred_check
          %p685 = pneg %p280
        $region126: #{tpu_custom_call.1} parent=83 // pred_check_branch
          %687 = sbr.rel (%p685) target = $region128
        $region127: #{tpu_custom_call.1} parent=83 // pred_region
          %688 = dma.done [#allocation19], 64
        $region128: #{tpu_custom_call.1} parent=83 // pred_fallthru
          _
        // Predicated region
        $region129: #{tpu_custom_call.1} parent=83 // pred_check
          %p689 = pneg %p301
        $region130: #{tpu_custom_call.1} parent=83 // pred_check_branch
          %691 = sbr.rel (%p689) target = $region132
        $region131: #{tpu_custom_call.1} parent=83 // pred_region
          %692 = dma.done [#allocation22], 16
        $region132: #{tpu_custom_call.1} parent=83 // pred_fallthru
          _
        // Predicated region
        $region133: #{tpu_custom_call.1} parent=83 // pred_check
          %p693 = pneg %p322
        $region134: #{tpu_custom_call.1} parent=83 // pred_check_branch
          %695 = sbr.rel (%p693) target = $region136
        $region135: #{tpu_custom_call.1} parent=83 // pred_region
          %696 = dma.done [#allocation22], 64
        $region136: #{tpu_custom_call.1} parent=83 // pred_fallthru
          _
        // Predicated region
        $region137: #{tpu_custom_call.1} parent=83 // pred_check
          %p697 = pneg %p343
        $region138: #{tpu_custom_call.1} parent=83 // pred_check_branch
          %699 = sbr.rel (%p697) target = $region140
        $region139: #{tpu_custom_call.1} parent=83 // pred_region
          %700 = dma.done [#allocation25], 16
        $region140: #{tpu_custom_call.1} parent=83 // pred_fallthru
          _
        // Predicated region
        $region141: #{tpu_custom_call.1} parent=83 // pred_check
          %p701 = pneg %p364
        $region142: #{tpu_custom_call.1} parent=83 // pred_check_branch
          %703 = sbr.rel (%p701) target = $region144
        $region143: #{tpu_custom_call.1} parent=83 // pred_region
          %704 = dma.done [#allocation25], 256
        $region144: #{tpu_custom_call.1} parent=83 // pred_fallthru
          _
        // Predicated region
        $region145: #{tpu_custom_call.1} parent=83 // pred_check
          %p705 = pneg %p385
        $region146: #{tpu_custom_call.1} parent=83 // pred_check_branch
          %707 = sbr.rel (%p705) target = $region148
        $region147: #{tpu_custom_call.1} parent=83 // pred_region
          %708 = dma.done [#allocation28], 16
        $region148: #{tpu_custom_call.1} parent=83 // pred_fallthru
          _
        %709 = sfence
        %s710 = sand.u32 %s52, 1
        %s711 = scalar_lea.sflag [#allocation3], %s710
        %s712 = sand.u32 %s52, 1
        %s713 = smul.addr %s712, 64
        %s714 = scalar_lea.vmem [#allocation2], %s713
        %p715 = pneg %p65
        %p716 = pneg %p62
        %s717 = sand.u32 %s78, 1
        %s718 = scalar_lea.sflag [#allocation7], %s717
        %s719 = sand.u32 %s78, 1
        %s720 = smul.addr %s719, 64
        %s721 = scalar_lea.vmem [#allocation6], %s720
        %p722 = pneg %p91
        %p723 = pneg %p88
        %p724 = pneg %p112
        %p725 = pneg %p109
        %p726 = pneg %p133
        %p727 = pneg %p130
        %p728 = pneg %p154
        %p729 = pneg %p151
        %p730 = pneg %p175
        %p731 = pneg %p172
        %p732 = pneg %p196
        %p733 = pneg %p193
        %p734 = pneg %p217
        %p735 = pneg %p214
        %p736 = pneg %p238
        %p737 = pneg %p235
        %p738 = pneg %p259
        %p739 = pneg %p256
        %p740 = pneg %p280
        %p741 = pneg %p277
        %p742 = pneg %p301
        %p743 = pneg %p298
        %p744 = pneg %p322
        %p745 = pneg %p319
        %p746 = pneg %p343
        %p747 = pneg %p340
        %p748 = pneg %p364
        %p749 = pneg %p361
        %p750 = pneg %p385
        %p751 = pneg %p382
        %p752 = pneg %p411
        %p753 = pneg %p408
        %s754 = sand.u32 %s398, 1
        %s755 = scalar_lea.sflag [#allocation4], %s754
        %s756 = sand.u32 %s398, 1
        %s757 = smul.addr %s756, 128
        %s758 = scalar_lea.vmem [#allocation29], %s757
        %v759 = vld [vmem:[%s639] sm:$0xff]
        %v760 = vld [vmem:[%s639 + $0x8] sm:$0xff]
        %v761 = vld [vmem:[%s639 + $0x10] sm:$0xff]
        %v762 = vld [vmem:[%s639 + $0x18] sm:$0xff]
        %v763 = vld [vmem:[%s639 + $0x20] sm:$0xff]
        %v764 = vld [vmem:[%s639 + $0x28] sm:$0xff]
        %v765 = vld [vmem:[%s639 + $0x30] sm:$0xff]
        %v766 = vld [vmem:[%s639 + $0x38] sm:$0xff]
        %v767 = vld [vmem:[%s648] sm:$0xff]
        %v768 = vld [vmem:[%s648 + $0x8] sm:$0xff]
        %v769 = vld [vmem:[%s648 + $0x10] sm:$0xff]
        %v770 = vld [vmem:[%s648 + $0x18] sm:$0xff]
        %v771 = vld [vmem:[%s648 + $0x20] sm:$0xff]
        %v772 = vld [vmem:[%s648 + $0x28] sm:$0xff]
        %v773 = vld [vmem:[%s648 + $0x30] sm:$0xff]
        %v774 = vld [vmem:[%s648 + $0x38] sm:$0xff]
        %s775 = sld [smem:[#allocation8]]
        %v776 = vstv %s775
        %v777 = vmul.f32 %v767, %v776
        %v778 = vmul.f32 %v768, %v776
        %s779 = sld [smem:[#allocation8 + $0x80]]
        %v780 = vstv %s779
        %v781 = vmul.f32 %v769, %v780
        %v782 = vmul.f32 %v770, %v780
        %v783 = vadd.f32 %v777, %v781
        %v784 = vadd.f32 %v778, %v782
        %s785 = sld [smem:[#allocation8 + $0x100]]
        %v786 = vstv %s785
        %v787 = vmul.f32 %v771, %v786
        %v788 = vmul.f32 %v772, %v786
        %v789 = vadd.f32 %v783, %v787
        %v790 = vadd.f32 %v784, %v788
        %s791 = sld [smem:[#allocation8 + $0x180]]
        %v792 = vstv %s791
        %v793 = vmul.f32 %v773, %v792
        %v794 = vmul.f32 %v774, %v792
        %v795 = vadd.f32 %v789, %v793
        %v796 = vadd.f32 %v790, %v794
        %s797 = sld [smem:[#allocation9]]
        %v798 = vstv %s797
        %v799 = vadd.f32 %v795, %v798
        %v800 = vadd.f32 %v796, %v798
        %s801 = sld [smem:[#allocation20]]
        %v802 = vstv %s801
        %v803 = vmul.f32 %v767, %v802
        %v804 = vmul.f32 %v768, %v802
        %s805 = sld [smem:[#allocation20 + $0x80]]
        %v806 = vstv %s805
        %v807 = vmul.f32 %v769, %v806
        %v808 = vmul.f32 %v770, %v806
        %v809 = vadd.f32 %v803, %v807
        %v810 = vadd.f32 %v804, %v808
        %s811 = sld [smem:[#allocation20 + $0x100]]
        %v812 = vstv %s811
        %v813 = vmul.f32 %v771, %v812
        %v814 = vmul.f32 %v772, %v812
        %v815 = vadd.f32 %v809, %v813
        %v816 = vadd.f32 %v810, %v814
        %s817 = sld [smem:[#allocation20 + $0x180]]
        %v818 = vstv %s817
        %v819 = vmul.f32 %v773, %v818
        %v820 = vmul.f32 %v774, %v818
        %v821 = vadd.f32 %v815, %v819
        %v822 = vadd.f32 %v816, %v820
        %s823 = sld [smem:[#allocation21]]
        %v824 = vstv %s823
        %v825 = vadd.f32 %v821, %v824
        %v826 = vadd.f32 %v822, %v824
        %s827 = sld [smem:[#allocation23]]
        %v828 = vstv %s827
        %v829 = vmul.f32 %v767, %v828
        %v830 = vmul.f32 %v768, %v828
        %s831 = sld [smem:[#allocation23 + $0x80]]
        %v832 = vstv %s831
        %v833 = vmul.f32 %v769, %v832
        %v834 = vmul.f32 %v770, %v832
        %v835 = vadd.f32 %v829, %v833
        %v836 = vadd.f32 %v830, %v834
        %s837 = sld [smem:[#allocation23 + $0x100]]
        %v838 = vstv %s837
        %v839 = vmul.f32 %v771, %v838
        %v840 = vmul.f32 %v772, %v838
        %v841 = vadd.f32 %v835, %v839
        %v842 = vadd.f32 %v836, %v840
        %s843 = sld [smem:[#allocation23 + $0x180]]
        %v844 = vstv %s843
        %v845 = vmul.f32 %v773, %v844
        %v846 = vmul.f32 %v774, %v844
        %v847 = vadd.f32 %v841, %v845
        %v848 = vadd.f32 %v842, %v846
        %s849 = sld [smem:[#allocation24]]
        %v850 = vstv %s849
        %v851 = vadd.f32 %v847, %v850
        %v852 = vadd.f32 %v848, %v850
        %s853 = sld [smem:[#allocation8 + $0x1]]
        %v854 = vstv %s853
        %v855 = vmul.f32 %v767, %v854
        %v856 = vmul.f32 %v768, %v854
        %s857 = sld [smem:[#allocation8 + $0x81]]
        %v858 = vstv %s857
        %v859 = vmul.f32 %v769, %v858
        %v860 = vmul.f32 %v770, %v858
        %v861 = vadd.f32 %v855, %v859
        %v862 = vadd.f32 %v856, %v860
        %s863 = sld [smem:[#allocation8 + $0x101]]
        %v864 = vstv %s863
        %v865 = vmul.f32 %v771, %v864
        %v866 = vmul.f32 %v772, %v864
        %v867 = vadd.f32 %v861, %v865
        %v868 = vadd.f32 %v862, %v866
        %s869 = sld [smem:[#allocation8 + $0x181]]
        %v870 = vstv %s869
        %v871 = vmul.f32 %v773, %v870
        %v872 = vmul.f32 %v774, %v870
        %v873 = vadd.f32 %v867, %v871
        %v874 = vadd.f32 %v868, %v872
        %s875 = sld [smem:[#allocation9 + $0x1]]
        %v876 = vstv %s875
        %v877 = vadd.f32 %v873, %v876
        %v878 = vadd.f32 %v874, %v876
        %s879 = sld [smem:[#allocation20 + $0x1]]
        %v880 = vstv %s879
        %v881 = vmul.f32 %v767, %v880
        %v882 = vmul.f32 %v768, %v880
        %s883 = sld [smem:[#allocation20 + $0x81]]
        %v884 = vstv %s883
        %v885 = vmul.f32 %v769, %v884
        %v886 = vmul.f32 %v770, %v884
        %v887 = vadd.f32 %v881, %v885
        %v888 = vadd.f32 %v882, %v886
        %s889 = sld [smem:[#allocation20 + $0x101]]
        %v890 = vstv %s889
        %v891 = vmul.f32 %v771, %v890
        %v892 = vmul.f32 %v772, %v890
        %v893 = vadd.f32 %v887, %v891
        %v894 = vadd.f32 %v888, %v892
        %s895 = sld [smem:[#allocation20 + $0x181]]
        %v896 = vstv %s895
        %v897 = vmul.f32 %v773, %v896
        %v898 = vmul.f32 %v774, %v896
        %v899 = vadd.f32 %v893, %v897
        %v900 = vadd.f32 %v894, %v898
        %s901 = sld [smem:[#allocation21 + $0x1]]
        %v902 = vstv %s901
        %v903 = vadd.f32 %v899, %v902
        %v904 = vadd.f32 %v900, %v902
        %s905 = sld [smem:[#allocation23 + $0x1]]
        %v906 = vstv %s905
        %v907 = vmul.f32 %v767, %v906
        %v908 = vmul.f32 %v768, %v906
        %s909 = sld [smem:[#allocation23 + $0x81]]
        %v910 = vstv %s909
        %v911 = vmul.f32 %v769, %v910
        %v912 = vmul.f32 %v770, %v910
        %v913 = vadd.f32 %v907, %v911
        %v914 = vadd.f32 %v908, %v912
        %s915 = sld [smem:[#allocation23 + $0x101]]
        %v916 = vstv %s915
        %v917 = vmul.f32 %v771, %v916
        %v918 = vmul.f32 %v772, %v916
        %v919 = vadd.f32 %v913, %v917
        %v920 = vadd.f32 %v914, %v918
        %s921 = sld [smem:[#allocation23 + $0x181]]
        %v922 = vstv %s921
        %v923 = vmul.f32 %v773, %v922
        %v924 = vmul.f32 %v774, %v922
        %v925 = vadd.f32 %v919, %v923
        %v926 = vadd.f32 %v920, %v924
        %s927 = sld [smem:[#allocation24 + $0x1]]
        %v928 = vstv %s927
        %v929 = vadd.f32 %v925, %v928
        %v930 = vadd.f32 %v926, %v928
        %s931 = sld [smem:[#allocation8 + $0x2]]
        %v932 = vstv %s931
        %v933 = vmul.f32 %v767, %v932
        %v934 = vmul.f32 %v768, %v932
        %s935 = sld [smem:[#allocation8 + $0x82]]
        %v936 = vstv %s935
        %v937 = vmul.f32 %v769, %v936
        %v938 = vmul.f32 %v770, %v936
        %v939 = vadd.f32 %v933, %v937
        %v940 = vadd.f32 %v934, %v938
        %s941 = sld [smem:[#allocation8 + $0x102]]
        %v942 = vstv %s941
        %v943 = vmul.f32 %v771, %v942
        %v944 = vmul.f32 %v772, %v942
        %v945 = vadd.f32 %v939, %v943
        %v946 = vadd.f32 %v940, %v944
        %s947 = sld [smem:[#allocation8 + $0x182]]
        %v948 = vstv %s947
        %v949 = vmul.f32 %v773, %v948
        %v950 = vmul.f32 %v774, %v948
        %v951 = vadd.f32 %v945, %v949
        %v952 = vadd.f32 %v946, %v950
        %s953 = sld [smem:[#allocation9 + $0x2]]
        %v954 = vstv %s953
        %v955 = vadd.f32 %v951, %v954
        %v956 = vadd.f32 %v952, %v954
        %s957 = sld [smem:[#allocation20 + $0x2]]
        %v958 = vstv %s957
        %v959 = vmul.f32 %v767, %v958
        %v960 = vmul.f32 %v768, %v958
        %s961 = sld [smem:[#allocation20 + $0x82]]
        %v962 = vstv %s961
        %v963 = vmul.f32 %v769, %v962
        %v964 = vmul.f32 %v770, %v962
        %v965 = vadd.f32 %v959, %v963
        %v966 = vadd.f32 %v960, %v964
        %s967 = sld [smem:[#allocation20 + $0x102]]
        %v968 = vstv %s967
        %v969 = vmul.f32 %v771, %v968
        %v970 = vmul.f32 %v772, %v968
        %v971 = vadd.f32 %v965, %v969
        %v972 = vadd.f32 %v966, %v970
        %s973 = sld [smem:[#allocation20 + $0x182]]
        %v974 = vstv %s973
        %v975 = vmul.f32 %v773, %v974
        %v976 = vmul.f32 %v774, %v974
        %v977 = vadd.f32 %v971, %v975
        %v978 = vadd.f32 %v972, %v976
        %s979 = sld [smem:[#allocation21 + $0x2]]
        %v980 = vstv %s979
        %v981 = vadd.f32 %v977, %v980
        %v982 = vadd.f32 %v978, %v980
        %s983 = sld [smem:[#allocation23 + $0x2]]
        %v984 = vstv %s983
        %v985 = vmul.f32 %v767, %v984
        %v986 = vmul.f32 %v768, %v984
        %s987 = sld [smem:[#allocation23 + $0x82]]
        %v988 = vstv %s987
        %v989 = vmul.f32 %v769, %v988
        %v990 = vmul.f32 %v770, %v988
        %v991 = vadd.f32 %v985, %v989
        %v992 = vadd.f32 %v986, %v990
        %s993 = sld [smem:[#allocation23 + $0x102]]
        %v994 = vstv %s993
        %v995 = vmul.f32 %v771, %v994
        %v996 = vmul.f32 %v772, %v994
        %v997 = vadd.f32 %v991, %v995
        %v998 = vadd.f32 %v992, %v996
        %s999 = sld [smem:[#allocation23 + $0x182]]
        %v1000 = vstv %s999
        %v1001 = vmul.f32 %v773, %v1000
        %v1002 = vmul.f32 %v774, %v1000
        %v1003 = vadd.f32 %v997, %v1001
        %v1004 = vadd.f32 %v998, %v1002
        %s1005 = sld [smem:[#allocation24 + $0x2]]
        %v1006 = vstv %s1005
        %v1007 = vadd.f32 %v1003, %v1006
        %v1008 = vadd.f32 %v1004, %v1006
        %s1009 = sld [smem:[#allocation8 + $0x3]]
        %v1010 = vstv %s1009
        %v1011 = vmul.f32 %v767, %v1010
        %v1012 = vmul.f32 %v768, %v1010
        %s1013 = sld [smem:[#allocation8 + $0x83]]
        %v1014 = vstv %s1013
        %v1015 = vmul.f32 %v769, %v1014
        %v1016 = vmul.f32 %v770, %v1014
        %v1017 = vadd.f32 %v1011, %v1015
        %v1018 = vadd.f32 %v1012, %v1016
        %s1019 = sld [smem:[#allocation8 + $0x103]]
        %v1020 = vstv %s1019
        %v1021 = vmul.f32 %v771, %v1020
        %v1022 = vmul.f32 %v772, %v1020
        %v1023 = vadd.f32 %v1017, %v1021
        %v1024 = vadd.f32 %v1018, %v1022
        %s1025 = sld [smem:[#allocation8 + $0x183]]
        %v1026 = vstv %s1025
        %v1027 = vmul.f32 %v773, %v1026
        %v1028 = vmul.f32 %v774, %v1026
        %v1029 = vadd.f32 %v1023, %v1027
        %v1030 = vadd.f32 %v1024, %v1028
        %s1031 = sld [smem:[#allocation9 + $0x3]]
        %v1032 = vstv %s1031
        %v1033 = vadd.f32 %v1029, %v1032
        %v1034 = vadd.f32 %v1030, %v1032
        %s1035 = sld [smem:[#allocation20 + $0x3]]
        %v1036 = vstv %s1035
        %v1037 = vmul.f32 %v767, %v1036
        %v1038 = vmul.f32 %v768, %v1036
        %s1039 = sld [smem:[#allocation20 + $0x83]]
        %v1040 = vstv %s1039
        %v1041 = vmul.f32 %v769, %v1040
        %v1042 = vmul.f32 %v770, %v1040
        %v1043 = vadd.f32 %v1037, %v1041
        %v1044 = vadd.f32 %v1038, %v1042
        %s1045 = sld [smem:[#allocation20 + $0x103]]
        %v1046 = vstv %s1045
        %v1047 = vmul.f32 %v771, %v1046
        %v1048 = vmul.f32 %v772, %v1046
        %v1049 = vadd.f32 %v1043, %v1047
        %v1050 = vadd.f32 %v1044, %v1048
        %s1051 = sld [smem:[#allocation20 + $0x183]]
        %v1052 = vstv %s1051
        %v1053 = vmul.f32 %v773, %v1052
        %v1054 = vmul.f32 %v774, %v1052
        %v1055 = vadd.f32 %v1049, %v1053
        %v1056 = vadd.f32 %v1050, %v1054
        %s1057 = sld [smem:[#allocation21 + $0x3]]
        %v1058 = vstv %s1057
        %v1059 = vadd.f32 %v1055, %v1058
        %v1060 = vadd.f32 %v1056, %v1058
        %s1061 = sld [smem:[#allocation23 + $0x3]]
        %v1062 = vstv %s1061
        %v1063 = vmul.f32 %v767, %v1062
        %v1064 = vmul.f32 %v768, %v1062
        %s1065 = sld [smem:[#allocation23 + $0x83]]
        %v1066 = vstv %s1065
        %v1067 = vmul.f32 %v769, %v1066
        %v1068 = vmul.f32 %v770, %v1066
        %v1069 = vadd.f32 %v1063, %v1067
        %v1070 = vadd.f32 %v1064, %v1068
        %s1071 = sld [smem:[#allocation23 + $0x103]]
        %v1072 = vstv %s1071
        %v1073 = vmul.f32 %v771, %v1072
        %v1074 = vmul.f32 %v772, %v1072
        %v1075 = vadd.f32 %v1069, %v1073
        %v1076 = vadd.f32 %v1070, %v1074
        %s1077 = sld [smem:[#allocation23 + $0x183]]
        %v1078 = vstv %s1077
        %v1079 = vmul.f32 %v773, %v1078
        %v1080 = vmul.f32 %v774, %v1078
        %v1081 = vadd.f32 %v1075, %v1079
        %v1082 = vadd.f32 %v1076, %v1080
        %s1083 = sld [smem:[#allocation24 + $0x3]]
        %v1084 = vstv %s1083
        %v1085 = vadd.f32 %v1081, %v1084
        %v1086 = vadd.f32 %v1082, %v1084
        %s1087 = sld [smem:[#allocation8 + $0x4]]
        %v1088 = vstv %s1087
        %v1089 = vmul.f32 %v767, %v1088
        %v1090 = vmul.f32 %v768, %v1088
        %s1091 = sld [smem:[#allocation8 + $0x84]]
        %v1092 = vstv %s1091
        %v1093 = vmul.f32 %v769, %v1092
        %v1094 = vmul.f32 %v770, %v1092
        %v1095 = vadd.f32 %v1089, %v1093
        %v1096 = vadd.f32 %v1090, %v1094
        %s1097 = sld [smem:[#allocation8 + $0x104]]
        %v1098 = vstv %s1097
        %v1099 = vmul.f32 %v771, %v1098
        %v1100 = vmul.f32 %v772, %v1098
        %v1101 = vadd.f32 %v1095, %v1099
        %v1102 = vadd.f32 %v1096, %v1100
        %s1103 = sld [smem:[#allocation8 + $0x184]]
        %v1104 = vstv %s1103
        %v1105 = vmul.f32 %v773, %v1104
        %v1106 = vmul.f32 %v774, %v1104
        %v1107 = vadd.f32 %v1101, %v1105
        %v1108 = vadd.f32 %v1102, %v1106
        %s1109 = sld [smem:[#allocation9 + $0x4]]
        %v1110 = vstv %s1109
        %v1111 = vadd.f32 %v1107, %v1110
        %v1112 = vadd.f32 %v1108, %v1110
        %s1113 = sld [smem:[#allocation20 + $0x4]]
        %v1114 = vstv %s1113
        %v1115 = vmul.f32 %v767, %v1114
        %v1116 = vmul.f32 %v768, %v1114
        %s1117 = sld [smem:[#allocation20 + $0x84]]
        %v1118 = vstv %s1117
        %v1119 = vmul.f32 %v769, %v1118
        %v1120 = vmul.f32 %v770, %v1118
        %v1121 = vadd.f32 %v1115, %v1119
        %v1122 = vadd.f32 %v1116, %v1120
        %s1123 = sld [smem:[#allocation20 + $0x104]]
        %v1124 = vstv %s1123
        %v1125 = vmul.f32 %v771, %v1124
        %v1126 = vmul.f32 %v772, %v1124
        %v1127 = vadd.f32 %v1121, %v1125
        %v1128 = vadd.f32 %v1122, %v1126
        %s1129 = sld [smem:[#allocation20 + $0x184]]
        %v1130 = vstv %s1129
        %v1131 = vmul.f32 %v773, %v1130
        %v1132 = vmul.f32 %v774, %v1130
        %v1133 = vadd.f32 %v1127, %v1131
        %v1134 = vadd.f32 %v1128, %v1132
        %s1135 = sld [smem:[#allocation21 + $0x4]]
        %v1136 = vstv %s1135
        %v1137 = vadd.f32 %v1133, %v1136
        %v1138 = vadd.f32 %v1134, %v1136
        %s1139 = sld [smem:[#allocation23 + $0x4]]
        %v1140 = vstv %s1139
        %v1141 = vmul.f32 %v767, %v1140
        %v1142 = vmul.f32 %v768, %v1140
        %s1143 = sld [smem:[#allocation23 + $0x84]]
        %v1144 = vstv %s1143
        %v1145 = vmul.f32 %v769, %v1144
        %v1146 = vmul.f32 %v770, %v1144
        %v1147 = vadd.f32 %v1141, %v1145
        %v1148 = vadd.f32 %v1142, %v1146
        %s1149 = sld [smem:[#allocation23 + $0x104]]
        %v1150 = vstv %s1149
        %v1151 = vmul.f32 %v771, %v1150
        %v1152 = vmul.f32 %v772, %v1150
        %v1153 = vadd.f32 %v1147, %v1151
        %v1154 = vadd.f32 %v1148, %v1152
        %s1155 = sld [smem:[#allocation23 + $0x184]]
        %v1156 = vstv %s1155
        %v1157 = vmul.f32 %v773, %v1156
        %v1158 = vmul.f32 %v774, %v1156
        %v1159 = vadd.f32 %v1153, %v1157
        %v1160 = vadd.f32 %v1154, %v1158
        %s1161 = sld [smem:[#allocation24 + $0x4]]
        %v1162 = vstv %s1161
        %v1163 = vadd.f32 %v1159, %v1162
        %v1164 = vadd.f32 %v1160, %v1162
        %s1165 = sld [smem:[#allocation8 + $0x5]]
        %v1166 = vstv %s1165
        %v1167 = vmul.f32 %v767, %v1166
        %v1168 = vmul.f32 %v768, %v1166
        %s1169 = sld [smem:[#allocation8 + $0x85]]
        %v1170 = vstv %s1169
        %v1171 = vmul.f32 %v769, %v1170
        %v1172 = vmul.f32 %v770, %v1170
        %v1173 = vadd.f32 %v1167, %v1171
        %v1174 = vadd.f32 %v1168, %v1172
        %s1175 = sld [smem:[#allocation8 + $0x105]]
        %v1176 = vstv %s1175
        %v1177 = vmul.f32 %v771, %v1176
        %v1178 = vmul.f32 %v772, %v1176
        %v1179 = vadd.f32 %v1173, %v1177
        %v1180 = vadd.f32 %v1174, %v1178
        %s1181 = sld [smem:[#allocation8 + $0x185]]
        %v1182 = vstv %s1181
        %v1183 = vmul.f32 %v773, %v1182
        %v1184 = vmul.f32 %v774, %v1182
        %v1185 = vadd.f32 %v1179, %v1183
        %v1186 = vadd.f32 %v1180, %v1184
        %s1187 = sld [smem:[#allocation9 + $0x5]]
        %v1188 = vstv %s1187
        %v1189 = vadd.f32 %v1185, %v1188
        %v1190 = vadd.f32 %v1186, %v1188
        %s1191 = sld [smem:[#allocation20 + $0x5]]
        %v1192 = vstv %s1191
        %v1193 = vmul.f32 %v767, %v1192
        %v1194 = vmul.f32 %v768, %v1192
        %s1195 = sld [smem:[#allocation20 + $0x85]]
        %v1196 = vstv %s1195
        %v1197 = vmul.f32 %v769, %v1196
        %v1198 = vmul.f32 %v770, %v1196
        %v1199 = vadd.f32 %v1193, %v1197
        %v1200 = vadd.f32 %v1194, %v1198
        %s1201 = sld [smem:[#allocation20 + $0x105]]
        %v1202 = vstv %s1201
        %v1203 = vmul.f32 %v771, %v1202
        %v1204 = vmul.f32 %v772, %v1202
        %v1205 = vadd.f32 %v1199, %v1203
        %v1206 = vadd.f32 %v1200, %v1204
        %s1207 = sld [smem:[#allocation20 + $0x185]]
        %v1208 = vstv %s1207
        %v1209 = vmul.f32 %v773, %v1208
        %v1210 = vmul.f32 %v774, %v1208
        %v1211 = vadd.f32 %v1205, %v1209
        %v1212 = vadd.f32 %v1206, %v1210
        %s1213 = sld [smem:[#allocation21 + $0x5]]
        %v1214 = vstv %s1213
        %v1215 = vadd.f32 %v1211, %v1214
        %v1216 = vadd.f32 %v1212, %v1214
        %s1217 = sld [smem:[#allocation23 + $0x5]]
        %v1218 = vstv %s1217
        %v1219 = vmul.f32 %v767, %v1218
        %v1220 = vmul.f32 %v768, %v1218
        %s1221 = sld [smem:[#allocation23 + $0x85]]
        %v1222 = vstv %s1221
        %v1223 = vmul.f32 %v769, %v1222
        %v1224 = vmul.f32 %v770, %v1222
        %v1225 = vadd.f32 %v1219, %v1223
        %v1226 = vadd.f32 %v1220, %v1224
        %s1227 = sld [smem:[#allocation23 + $0x105]]
        %v1228 = vstv %s1227
        %v1229 = vmul.f32 %v771, %v1228
        %v1230 = vmul.f32 %v772, %v1228
        %v1231 = vadd.f32 %v1225, %v1229
        %v1232 = vadd.f32 %v1226, %v1230
        %s1233 = sld [smem:[#allocation23 + $0x185]]
        %v1234 = vstv %s1233
        %v1235 = vmul.f32 %v773, %v1234
        %v1236 = vmul.f32 %v774, %v1234
        %v1237 = vadd.f32 %v1231, %v1235
        %v1238 = vadd.f32 %v1232, %v1236
        %s1239 = sld [smem:[#allocation24 + $0x5]]
        %v1240 = vstv %s1239
        %v1241 = vadd.f32 %v1237, %v1240
        %v1242 = vadd.f32 %v1238, %v1240
        %s1243 = sld [smem:[#allocation8 + $0x6]]
        %v1244 = vstv %s1243
        %v1245 = vmul.f32 %v767, %v1244
        %v1246 = vmul.f32 %v768, %v1244
        %s1247 = sld [smem:[#allocation8 + $0x86]]
        %v1248 = vstv %s1247
        %v1249 = vmul.f32 %v769, %v1248
        %v1250 = vmul.f32 %v770, %v1248
        %v1251 = vadd.f32 %v1245, %v1249
        %v1252 = vadd.f32 %v1246, %v1250
        %s1253 = sld [smem:[#allocation8 + $0x106]]
        %v1254 = vstv %s1253
        %v1255 = vmul.f32 %v771, %v1254
        %v1256 = vmul.f32 %v772, %v1254
        %v1257 = vadd.f32 %v1251, %v1255
        %v1258 = vadd.f32 %v1252, %v1256
        %s1259 = sld [smem:[#allocation8 + $0x186]]
        %v1260 = vstv %s1259
        %v1261 = vmul.f32 %v773, %v1260
        %v1262 = vmul.f32 %v774, %v1260
        %v1263 = vadd.f32 %v1257, %v1261
        %v1264 = vadd.f32 %v1258, %v1262
        %s1265 = sld [smem:[#allocation9 + $0x6]]
        %v1266 = vstv %s1265
        %v1267 = vadd.f32 %v1263, %v1266
        %v1268 = vadd.f32 %v1264, %v1266
        %s1269 = sld [smem:[#allocation20 + $0x6]]
        %v1270 = vstv %s1269
        %v1271 = vmul.f32 %v767, %v1270
        %v1272 = vmul.f32 %v768, %v1270
        %s1273 = sld [smem:[#allocation20 + $0x86]]
        %v1274 = vstv %s1273
        %v1275 = vmul.f32 %v769, %v1274
        %v1276 = vmul.f32 %v770, %v1274
        %v1277 = vadd.f32 %v1271, %v1275
        %v1278 = vadd.f32 %v1272, %v1276
        %s1279 = sld [smem:[#allocation20 + $0x106]]
        %v1280 = vstv %s1279
        %v1281 = vmul.f32 %v771, %v1280
        %v1282 = vmul.f32 %v772, %v1280
        %v1283 = vadd.f32 %v1277, %v1281
        %v1284 = vadd.f32 %v1278, %v1282
        %s1285 = sld [smem:[#allocation20 + $0x186]]
        %v1286 = vstv %s1285
        %v1287 = vmul.f32 %v773, %v1286
        %v1288 = vmul.f32 %v774, %v1286
        %v1289 = vadd.f32 %v1283, %v1287
        %v1290 = vadd.f32 %v1284, %v1288
        %s1291 = sld [smem:[#allocation21 + $0x6]]
        %v1292 = vstv %s1291
        %v1293 = vadd.f32 %v1289, %v1292
        %v1294 = vadd.f32 %v1290, %v1292
        %s1295 = sld [smem:[#allocation23 + $0x6]]
        %v1296 = vstv %s1295
        %v1297 = vmul.f32 %v767, %v1296
        %v1298 = vmul.f32 %v768, %v1296
        %s1299 = sld [smem:[#allocation23 + $0x86]]
        %v1300 = vstv %s1299
        %v1301 = vmul.f32 %v769, %v1300
        %v1302 = vmul.f32 %v770, %v1300
        %v1303 = vadd.f32 %v1297, %v1301
        %v1304 = vadd.f32 %v1298, %v1302
        %s1305 = sld [smem:[#allocation23 + $0x106]]
        %v1306 = vstv %s1305
        %v1307 = vmul.f32 %v771, %v1306
        %v1308 = vmul.f32 %v772, %v1306
        %v1309 = vadd.f32 %v1303, %v1307
        %v1310 = vadd.f32 %v1304, %v1308
        %s1311 = sld [smem:[#allocation23 + $0x186]]
        %v1312 = vstv %s1311
        %v1313 = vmul.f32 %v773, %v1312
        %v1314 = vmul.f32 %v774, %v1312
        %v1315 = vadd.f32 %v1309, %v1313
        %v1316 = vadd.f32 %v1310, %v1314
        %s1317 = sld [smem:[#allocation24 + $0x6]]
        %v1318 = vstv %s1317
        %v1319 = vadd.f32 %v1315, %v1318
        %v1320 = vadd.f32 %v1316, %v1318
        %s1321 = sld [smem:[#allocation8 + $0x7]]
        %v1322 = vstv %s1321
        %v1323 = vmul.f32 %v767, %v1322
        %v1324 = vmul.f32 %v768, %v1322
        %s1325 = sld [smem:[#allocation8 + $0x87]]
        %v1326 = vstv %s1325
        %v1327 = vmul.f32 %v769, %v1326
        %v1328 = vmul.f32 %v770, %v1326
        %v1329 = vadd.f32 %v1323, %v1327
        %v1330 = vadd.f32 %v1324, %v1328
        %s1331 = sld [smem:[#allocation8 + $0x107]]
        %v1332 = vstv %s1331
        %v1333 = vmul.f32 %v771, %v1332
        %v1334 = vmul.f32 %v772, %v1332
        %v1335 = vadd.f32 %v1329, %v1333
        %v1336 = vadd.f32 %v1330, %v1334
        %s1337 = sld [smem:[#allocation8 + $0x187]]
        %v1338 = vstv %s1337
        %v1339 = vmul.f32 %v773, %v1338
        %v1340 = vmul.f32 %v774, %v1338
        %v1341 = vadd.f32 %v1335, %v1339
        %v1342 = vadd.f32 %v1336, %v1340
        %s1343 = sld [smem:[#allocation9 + $0x7]]
        %v1344 = vstv %s1343
        %v1345 = vadd.f32 %v1341, %v1344
        %v1346 = vadd.f32 %v1342, %v1344
        %s1347 = sld [smem:[#allocation20 + $0x7]]
        %v1348 = vstv %s1347
        %v1349 = vmul.f32 %v767, %v1348
        %v1350 = vmul.f32 %v768, %v1348
        %s1351 = sld [smem:[#allocation20 + $0x87]]
        %v1352 = vstv %s1351
        %v1353 = vmul.f32 %v769, %v1352
        %v1354 = vmul.f32 %v770, %v1352
        %v1355 = vadd.f32 %v1349, %v1353
        %v1356 = vadd.f32 %v1350, %v1354
        %s1357 = sld [smem:[#allocation20 + $0x107]]
        %v1358 = vstv %s1357
        %v1359 = vmul.f32 %v771, %v1358
        %v1360 = vmul.f32 %v772, %v1358
        %v1361 = vadd.f32 %v1355, %v1359
        %v1362 = vadd.f32 %v1356, %v1360
        %s1363 = sld [smem:[#allocation20 + $0x187]]
        %v1364 = vstv %s1363
        %v1365 = vmul.f32 %v773, %v1364
        %v1366 = vmul.f32 %v774, %v1364
        %v1367 = vadd.f32 %v1361, %v1365
        %v1368 = vadd.f32 %v1362, %v1366
        %s1369 = sld [smem:[#allocation21 + $0x7]]
        %v1370 = vstv %s1369
        %v1371 = vadd.f32 %v1367, %v1370
        %v1372 = vadd.f32 %v1368, %v1370
        %s1373 = sld [smem:[#allocation23 + $0x7]]
        %v1374 = vstv %s1373
        %v1375 = vmul.f32 %v767, %v1374
        %v1376 = vmul.f32 %v768, %v1374
        %s1377 = sld [smem:[#allocation23 + $0x87]]
        %v1378 = vstv %s1377
        %v1379 = vmul.f32 %v769, %v1378
        %v1380 = vmul.f32 %v770, %v1378
        %v1381 = vadd.f32 %v1375, %v1379
        %v1382 = vadd.f32 %v1376, %v1380
        %s1383 = sld [smem:[#allocation23 + $0x107]]
        %v1384 = vstv %s1383
        %v1385 = vmul.f32 %v771, %v1384
        %v1386 = vmul.f32 %v772, %v1384
        %v1387 = vadd.f32 %v1381, %v1385
        %v1388 = vadd.f32 %v1382, %v1386
        %s1389 = sld [smem:[#allocation23 + $0x187]]
        %v1390 = vstv %s1389
        %v1391 = vmul.f32 %v773, %v1390
        %v1392 = vmul.f32 %v774, %v1390
        %v1393 = vadd.f32 %v1387, %v1391
        %v1394 = vadd.f32 %v1388, %v1392
        %s1395 = sld [smem:[#allocation24 + $0x7]]
        %v1396 = vstv %s1395
        %v1397 = vadd.f32 %v1393, %v1396
        %v1398 = vadd.f32 %v1394, %v1396
        %s1399 = sld [smem:[#allocation17]]
        %v1400 = vstv %s1399
        %v1401 = vmul.f32 %v759, %v1400
        %v1402 = vmul.f32 %v760, %v1400
        %s1403 = sld [smem:[#allocation17 + $0x80]]
        %v1404 = vstv %s1403
        %v1405 = vmul.f32 %v761, %v1404
        %v1406 = vmul.f32 %v762, %v1404
        %v1407 = vadd.f32 %v1401, %v1405
        %v1408 = vadd.f32 %v1402, %v1406
        %s1409 = sld [smem:[#allocation17 + $0x100]]
        %v1410 = vstv %s1409
        %v1411 = vmul.f32 %v763, %v1410
        %v1412 = vmul.f32 %v764, %v1410
        %v1413 = vadd.f32 %v1407, %v1411
        %v1414 = vadd.f32 %v1408, %v1412
        %s1415 = sld [smem:[#allocation17 + $0x180]]
        %v1416 = vstv %s1415
        %v1417 = vmul.f32 %v765, %v1416
        %v1418 = vmul.f32 %v766, %v1416
        %v1419 = vadd.f32 %v1413, %v1417
        %v1420 = vadd.f32 %v1414, %v1418
        %s1421 = sld [smem:[#allocation18]]
        %v1422 = vstv %s1421
        %v1423 = vadd.f32 %v1419, %v1422
        %v1424 = vadd.f32 %v1420, %v1422
        %s1425 = sld [smem:[#allocation11]]
        %v1426 = vstv %s1425
        %v1427 = vmul.f32 %v759, %v1426
        %v1428 = vmul.f32 %v760, %v1426
        %s1429 = sld [smem:[#allocation11 + $0x80]]
        %v1430 = vstv %s1429
        %v1431 = vmul.f32 %v761, %v1430
        %v1432 = vmul.f32 %v762, %v1430
        %v1433 = vadd.f32 %v1427, %v1431
        %v1434 = vadd.f32 %v1428, %v1432
        %s1435 = sld [smem:[#allocation11 + $0x100]]
        %v1436 = vstv %s1435
        %v1437 = vmul.f32 %v763, %v1436
        %v1438 = vmul.f32 %v764, %v1436
        %v1439 = vadd.f32 %v1433, %v1437
        %v1440 = vadd.f32 %v1434, %v1438
        %s1441 = sld [smem:[#allocation11 + $0x180]]
        %v1442 = vstv %s1441
        %v1443 = vmul.f32 %v765, %v1442
        %v1444 = vmul.f32 %v766, %v1442
        %v1445 = vadd.f32 %v1439, %v1443
        %v1446 = vadd.f32 %v1440, %v1444
        %s1447 = sld [smem:[#allocation12]]
        %v1448 = vstv %s1447
        %v1449 = vadd.f32 %v1445, %v1448
        %v1450 = vadd.f32 %v1446, %v1448
        %s1451 = sld [smem:[#allocation14]]
        %v1452 = vstv %s1451
        %v1453 = vmul.f32 %v759, %v1452
        %v1454 = vmul.f32 %v760, %v1452
        %s1455 = sld [smem:[#allocation14 + $0x80]]
        %v1456 = vstv %s1455
        %v1457 = vmul.f32 %v761, %v1456
        %v1458 = vmul.f32 %v762, %v1456
        %v1459 = vadd.f32 %v1453, %v1457
        %v1460 = vadd.f32 %v1454, %v1458
        %s1461 = sld [smem:[#allocation14 + $0x100]]
        %v1462 = vstv %s1461
        %v1463 = vmul.f32 %v763, %v1462
        %v1464 = vmul.f32 %v764, %v1462
        %v1465 = vadd.f32 %v1459, %v1463
        %v1466 = vadd.f32 %v1460, %v1464
        %s1467 = sld [smem:[#allocation14 + $0x180]]
        %v1468 = vstv %s1467
        %v1469 = vmul.f32 %v765, %v1468
        %v1470 = vmul.f32 %v766, %v1468
        %v1471 = vadd.f32 %v1465, %v1469
        %v1472 = vadd.f32 %v1466, %v1470
        %s1473 = sld [smem:[#allocation15]]
        %v1474 = vstv %s1473
        %v1475 = vadd.f32 %v1471, %v1474
        %v1476 = vadd.f32 %v1472, %v1474
        %s1477 = sld [smem:[#allocation17 + $0x1]]
        %v1478 = vstv %s1477
        %v1479 = vmul.f32 %v759, %v1478
        %v1480 = vmul.f32 %v760, %v1478
        %s1481 = sld [smem:[#allocation17 + $0x81]]
        %v1482 = vstv %s1481
        %v1483 = vmul.f32 %v761, %v1482
        %v1484 = vmul.f32 %v762, %v1482
        %v1485 = vadd.f32 %v1479, %v1483
        %v1486 = vadd.f32 %v1480, %v1484
        %s1487 = sld [smem:[#allocation17 + $0x101]]
        %v1488 = vstv %s1487
        %v1489 = vmul.f32 %v763, %v1488
        %v1490 = vmul.f32 %v764, %v1488
        %v1491 = vadd.f32 %v1485, %v1489
        %v1492 = vadd.f32 %v1486, %v1490
        %s1493 = sld [smem:[#allocation17 + $0x181]]
        %v1494 = vstv %s1493
        %v1495 = vmul.f32 %v765, %v1494
        %v1496 = vmul.f32 %v766, %v1494
        %v1497 = vadd.f32 %v1491, %v1495
        %v1498 = vadd.f32 %v1492, %v1496
        %s1499 = sld [smem:[#allocation18 + $0x1]]
        %v1500 = vstv %s1499
        %v1501 = vadd.f32 %v1497, %v1500
        %v1502 = vadd.f32 %v1498, %v1500
        %s1503 = sld [smem:[#allocation11 + $0x1]]
        %v1504 = vstv %s1503
        %v1505 = vmul.f32 %v759, %v1504
        %v1506 = vmul.f32 %v760, %v1504
        %s1507 = sld [smem:[#allocation11 + $0x81]]
        %v1508 = vstv %s1507
        %v1509 = vmul.f32 %v761, %v1508
        %v1510 = vmul.f32 %v762, %v1508
        %v1511 = vadd.f32 %v1505, %v1509
        %v1512 = vadd.f32 %v1506, %v1510
        %s1513 = sld [smem:[#allocation11 + $0x101]]
        %v1514 = vstv %s1513
        %v1515 = vmul.f32 %v763, %v1514
        %v1516 = vmul.f32 %v764, %v1514
        %v1517 = vadd.f32 %v1511, %v1515
        %v1518 = vadd.f32 %v1512, %v1516
        %s1519 = sld [smem:[#allocation11 + $0x181]]
        %v1520 = vstv %s1519
        %v1521 = vmul.f32 %v765, %v1520
        %v1522 = vmul.f32 %v766, %v1520
        %v1523 = vadd.f32 %v1517, %v1521
        %v1524 = vadd.f32 %v1518, %v1522
        %s1525 = sld [smem:[#allocation12 + $0x1]]
        %v1526 = vstv %s1525
        %v1527 = vadd.f32 %v1523, %v1526
        %v1528 = vadd.f32 %v1524, %v1526
        %s1529 = sld [smem:[#allocation14 + $0x1]]
        %v1530 = vstv %s1529
        %v1531 = vmul.f32 %v759, %v1530
        %v1532 = vmul.f32 %v760, %v1530
        %s1533 = sld [smem:[#allocation14 + $0x81]]
        %v1534 = vstv %s1533
        %v1535 = vmul.f32 %v761, %v1534
        %v1536 = vmul.f32 %v762, %v1534
        %v1537 = vadd.f32 %v1531, %v1535
        %v1538 = vadd.f32 %v1532, %v1536
        %s1539 = sld [smem:[#allocation14 + $0x101]]
        %v1540 = vstv %s1539
        %v1541 = vmul.f32 %v763, %v1540
        %v1542 = vmul.f32 %v764, %v1540
        %v1543 = vadd.f32 %v1537, %v1541
        %v1544 = vadd.f32 %v1538, %v1542
        %s1545 = sld [smem:[#allocation14 + $0x181]]
        %v1546 = vstv %s1545
        %v1547 = vmul.f32 %v765, %v1546
        %v1548 = vmul.f32 %v766, %v1546
        %v1549 = vadd.f32 %v1543, %v1547
        %v1550 = vadd.f32 %v1544, %v1548
        %s1551 = sld [smem:[#allocation15 + $0x1]]
        %v1552 = vstv %s1551
        %v1553 = vadd.f32 %v1549, %v1552
        %v1554 = vadd.f32 %v1550, %v1552
        %s1555 = sld [smem:[#allocation17 + $0x2]]
        %v1556 = vstv %s1555
        %v1557 = vmul.f32 %v759, %v1556
        %v1558 = vmul.f32 %v760, %v1556
        %s1559 = sld [smem:[#allocation17 + $0x82]]
        %v1560 = vstv %s1559
        %v1561 = vmul.f32 %v761, %v1560
        %v1562 = vmul.f32 %v762, %v1560
        %v1563 = vadd.f32 %v1557, %v1561
        %v1564 = vadd.f32 %v1558, %v1562
        %s1565 = sld [smem:[#allocation17 + $0x102]]
        %v1566 = vstv %s1565
        %v1567 = vmul.f32 %v763, %v1566
        %v1568 = vmul.f32 %v764, %v1566
        %v1569 = vadd.f32 %v1563, %v1567
        %v1570 = vadd.f32 %v1564, %v1568
        %s1571 = sld [smem:[#allocation17 + $0x182]]
        %v1572 = vstv %s1571
        %v1573 = vmul.f32 %v765, %v1572
        %v1574 = vmul.f32 %v766, %v1572
        %v1575 = vadd.f32 %v1569, %v1573
        %v1576 = vadd.f32 %v1570, %v1574
        %s1577 = sld [smem:[#allocation18 + $0x2]]
        %v1578 = vstv %s1577
        %v1579 = vadd.f32 %v1575, %v1578
        %v1580 = vadd.f32 %v1576, %v1578
        %s1581 = sld [smem:[#allocation11 + $0x2]]
        %v1582 = vstv %s1581
        %v1583 = vmul.f32 %v759, %v1582
        %v1584 = vmul.f32 %v760, %v1582
        %s1585 = sld [smem:[#allocation11 + $0x82]]
        %v1586 = vstv %s1585
        %v1587 = vmul.f32 %v761, %v1586
        %v1588 = vmul.f32 %v762, %v1586
        %v1589 = vadd.f32 %v1583, %v1587
        %v1590 = vadd.f32 %v1584, %v1588
        %s1591 = sld [smem:[#allocation11 + $0x102]]
        %v1592 = vstv %s1591
        %v1593 = vmul.f32 %v763, %v1592
        %v1594 = vmul.f32 %v764, %v1592
        %v1595 = vadd.f32 %v1589, %v1593
        %v1596 = vadd.f32 %v1590, %v1594
        %s1597 = sld [smem:[#allocation11 + $0x182]]
        %v1598 = vstv %s1597
        %v1599 = vmul.f32 %v765, %v1598
        %v1600 = vmul.f32 %v766, %v1598
        %v1601 = vadd.f32 %v1595, %v1599
        %v1602 = vadd.f32 %v1596, %v1600
        %s1603 = sld [smem:[#allocation12 + $0x2]]
        %v1604 = vstv %s1603
        %v1605 = vadd.f32 %v1601, %v1604
        %v1606 = vadd.f32 %v1602, %v1604
        %s1607 = sld [smem:[#allocation14 + $0x2]]
        %v1608 = vstv %s1607
        %v1609 = vmul.f32 %v759, %v1608
        %v1610 = vmul.f32 %v760, %v1608
        %s1611 = sld [smem:[#allocation14 + $0x82]]
        %v1612 = vstv %s1611
        %v1613 = vmul.f32 %v761, %v1612
        %v1614 = vmul.f32 %v762, %v1612
        %v1615 = vadd.f32 %v1609, %v1613
        %v1616 = vadd.f32 %v1610, %v1614
        %s1617 = sld [smem:[#allocation14 + $0x102]]
        %v1618 = vstv %s1617
        %v1619 = vmul.f32 %v763, %v1618
        %v1620 = vmul.f32 %v764, %v1618
        %v1621 = vadd.f32 %v1615, %v1619
        %v1622 = vadd.f32 %v1616, %v1620
        %s1623 = sld [smem:[#allocation14 + $0x182]]
        %v1624 = vstv %s1623
        %v1625 = vmul.f32 %v765, %v1624
        %v1626 = vmul.f32 %v766, %v1624
        %v1627 = vadd.f32 %v1621, %v1625
        %v1628 = vadd.f32 %v1622, %v1626
        %s1629 = sld [smem:[#allocation15 + $0x2]]
        %v1630 = vstv %s1629
        %v1631 = vadd.f32 %v1627, %v1630
        %v1632 = vadd.f32 %v1628, %v1630
        %s1633 = sld [smem:[#allocation17 + $0x3]]
        %v1634 = vstv %s1633
        %v1635 = vmul.f32 %v759, %v1634
        %v1636 = vmul.f32 %v760, %v1634
        %s1637 = sld [smem:[#allocation17 + $0x83]]
        %v1638 = vstv %s1637
        %v1639 = vmul.f32 %v761, %v1638
        %v1640 = vmul.f32 %v762, %v1638
        %v1641 = vadd.f32 %v1635, %v1639
        %v1642 = vadd.f32 %v1636, %v1640
        %s1643 = sld [smem:[#allocation17 + $0x103]]
        %v1644 = vstv %s1643
        %v1645 = vmul.f32 %v763, %v1644
        %v1646 = vmul.f32 %v764, %v1644
        %v1647 = vadd.f32 %v1641, %v1645
        %v1648 = vadd.f32 %v1642, %v1646
        %s1649 = sld [smem:[#allocation17 + $0x183]]
        %v1650 = vstv %s1649
        %v1651 = vmul.f32 %v765, %v1650
        %v1652 = vmul.f32 %v766, %v1650
        %v1653 = vadd.f32 %v1647, %v1651
        %v1654 = vadd.f32 %v1648, %v1652
        %s1655 = sld [smem:[#allocation18 + $0x3]]
        %v1656 = vstv %s1655
        %v1657 = vadd.f32 %v1653, %v1656
        %v1658 = vadd.f32 %v1654, %v1656
        %s1659 = sld [smem:[#allocation11 + $0x3]]
        %v1660 = vstv %s1659
        %v1661 = vmul.f32 %v759, %v1660
        %v1662 = vmul.f32 %v760, %v1660
        %s1663 = sld [smem:[#allocation11 + $0x83]]
        %v1664 = vstv %s1663
        %v1665 = vmul.f32 %v761, %v1664
        %v1666 = vmul.f32 %v762, %v1664
        %v1667 = vadd.f32 %v1661, %v1665
        %v1668 = vadd.f32 %v1662, %v1666
        %s1669 = sld [smem:[#allocation11 + $0x103]]
        %v1670 = vstv %s1669
        %v1671 = vmul.f32 %v763, %v1670
        %v1672 = vmul.f32 %v764, %v1670
        %v1673 = vadd.f32 %v1667, %v1671
        %v1674 = vadd.f32 %v1668, %v1672
        %s1675 = sld [smem:[#allocation11 + $0x183]]
        %v1676 = vstv %s1675
        %v1677 = vmul.f32 %v765, %v1676
        %v1678 = vmul.f32 %v766, %v1676
        %v1679 = vadd.f32 %v1673, %v1677
        %v1680 = vadd.f32 %v1674, %v1678
        %s1681 = sld [smem:[#allocation12 + $0x3]]
        %v1682 = vstv %s1681
        %v1683 = vadd.f32 %v1679, %v1682
        %v1684 = vadd.f32 %v1680, %v1682
        %s1685 = sld [smem:[#allocation14 + $0x3]]
        %v1686 = vstv %s1685
        %v1687 = vmul.f32 %v759, %v1686
        %v1688 = vmul.f32 %v760, %v1686
        %s1689 = sld [smem:[#allocation14 + $0x83]]
        %v1690 = vstv %s1689
        %v1691 = vmul.f32 %v761, %v1690
        %v1692 = vmul.f32 %v762, %v1690
        %v1693 = vadd.f32 %v1687, %v1691
        %v1694 = vadd.f32 %v1688, %v1692
        %s1695 = sld [smem:[#allocation14 + $0x103]]
        %v1696 = vstv %s1695
        %v1697 = vmul.f32 %v763, %v1696
        %v1698 = vmul.f32 %v764, %v1696
        %v1699 = vadd.f32 %v1693, %v1697
        %v1700 = vadd.f32 %v1694, %v1698
        %s1701 = sld [smem:[#allocation14 + $0x183]]
        %v1702 = vstv %s1701
        %v1703 = vmul.f32 %v765, %v1702
        %v1704 = vmul.f32 %v766, %v1702
        %v1705 = vadd.f32 %v1699, %v1703
        %v1706 = vadd.f32 %v1700, %v1704
        %s1707 = sld [smem:[#allocation15 + $0x3]]
        %v1708 = vstv %s1707
        %v1709 = vadd.f32 %v1705, %v1708
        %v1710 = vadd.f32 %v1706, %v1708
        %s1711 = sld [smem:[#allocation17 + $0x4]]
        %v1712 = vstv %s1711
        %v1713 = vmul.f32 %v759, %v1712
        %v1714 = vmul.f32 %v760, %v1712
        %s1715 = sld [smem:[#allocation17 + $0x84]]
        %v1716 = vstv %s1715
        %v1717 = vmul.f32 %v761, %v1716
        %v1718 = vmul.f32 %v762, %v1716
        %v1719 = vadd.f32 %v1713, %v1717
        %v1720 = vadd.f32 %v1714, %v1718
        %s1721 = sld [smem:[#allocation17 + $0x104]]
        %v1722 = vstv %s1721
        %v1723 = vmul.f32 %v763, %v1722
        %v1724 = vmul.f32 %v764, %v1722
        %v1725 = vadd.f32 %v1719, %v1723
        %v1726 = vadd.f32 %v1720, %v1724
        %s1727 = sld [smem:[#allocation17 + $0x184]]
        %v1728 = vstv %s1727
        %v1729 = vmul.f32 %v765, %v1728
        %v1730 = vmul.f32 %v766, %v1728
        %v1731 = vadd.f32 %v1725, %v1729
        %v1732 = vadd.f32 %v1726, %v1730
        %s1733 = sld [smem:[#allocation18 + $0x4]]
        %v1734 = vstv %s1733
        %v1735 = vadd.f32 %v1731, %v1734
        %v1736 = vadd.f32 %v1732, %v1734
        %s1737 = sld [smem:[#allocation11 + $0x4]]
        %v1738 = vstv %s1737
        %v1739 = vmul.f32 %v759, %v1738
        %v1740 = vmul.f32 %v760, %v1738
        %s1741 = sld [smem:[#allocation11 + $0x84]]
        %v1742 = vstv %s1741
        %v1743 = vmul.f32 %v761, %v1742
        %v1744 = vmul.f32 %v762, %v1742
        %v1745 = vadd.f32 %v1739, %v1743
        %v1746 = vadd.f32 %v1740, %v1744
        %s1747 = sld [smem:[#allocation11 + $0x104]]
        %v1748 = vstv %s1747
        %v1749 = vmul.f32 %v763, %v1748
        %v1750 = vmul.f32 %v764, %v1748
        %v1751 = vadd.f32 %v1745, %v1749
        %v1752 = vadd.f32 %v1746, %v1750
        %s1753 = sld [smem:[#allocation11 + $0x184]]
        %v1754 = vstv %s1753
        %v1755 = vmul.f32 %v765, %v1754
        %v1756 = vmul.f32 %v766, %v1754
        %v1757 = vadd.f32 %v1751, %v1755
        %v1758 = vadd.f32 %v1752, %v1756
        %s1759 = sld [smem:[#allocation12 + $0x4]]
        %v1760 = vstv %s1759
        %v1761 = vadd.f32 %v1757, %v1760
        %v1762 = vadd.f32 %v1758, %v1760
        %s1763 = sld [smem:[#allocation14 + $0x4]]
        %v1764 = vstv %s1763
        %v1765 = vmul.f32 %v759, %v1764
        %v1766 = vmul.f32 %v760, %v1764
        %s1767 = sld [smem:[#allocation14 + $0x84]]
        %v1768 = vstv %s1767
        %v1769 = vmul.f32 %v761, %v1768
        %v1770 = vmul.f32 %v762, %v1768
        %v1771 = vadd.f32 %v1765, %v1769
        %v1772 = vadd.f32 %v1766, %v1770
        %s1773 = sld [smem:[#allocation14 + $0x104]]
        %v1774 = vstv %s1773
        %v1775 = vmul.f32 %v763, %v1774
        %v1776 = vmul.f32 %v764, %v1774
        %v1777 = vadd.f32 %v1771, %v1775
        %v1778 = vadd.f32 %v1772, %v1776
        %s1779 = sld [smem:[#allocation14 + $0x184]]
        %v1780 = vstv %s1779
        %v1781 = vmul.f32 %v765, %v1780
        %v1782 = vmul.f32 %v766, %v1780
        %v1783 = vadd.f32 %v1777, %v1781
        %v1784 = vadd.f32 %v1778, %v1782
        %s1785 = sld [smem:[#allocation15 + $0x4]]
        %v1786 = vstv %s1785
        %v1787 = vadd.f32 %v1783, %v1786
        %v1788 = vadd.f32 %v1784, %v1786
        %s1789 = sld [smem:[#allocation17 + $0x5]]
        %v1790 = vstv %s1789
        %v1791 = vmul.f32 %v759, %v1790
        %v1792 = vmul.f32 %v760, %v1790
        %s1793 = sld [smem:[#allocation17 + $0x85]]
        %v1794 = vstv %s1793
        %v1795 = vmul.f32 %v761, %v1794
        %v1796 = vmul.f32 %v762, %v1794
        %v1797 = vadd.f32 %v1791, %v1795
        %v1798 = vadd.f32 %v1792, %v1796
        %s1799 = sld [smem:[#allocation17 + $0x105]]
        %v1800 = vstv %s1799
        %v1801 = vmul.f32 %v763, %v1800
        %v1802 = vmul.f32 %v764, %v1800
        %v1803 = vadd.f32 %v1797, %v1801
        %v1804 = vadd.f32 %v1798, %v1802
        %s1805 = sld [smem:[#allocation17 + $0x185]]
        %v1806 = vstv %s1805
        %v1807 = vmul.f32 %v765, %v1806
        %v1808 = vmul.f32 %v766, %v1806
        %v1809 = vadd.f32 %v1803, %v1807
        %v1810 = vadd.f32 %v1804, %v1808
        %s1811 = sld [smem:[#allocation18 + $0x5]]
        %v1812 = vstv %s1811
        %v1813 = vadd.f32 %v1809, %v1812
        %v1814 = vadd.f32 %v1810, %v1812
        %s1815 = sld [smem:[#allocation11 + $0x5]]
        %v1816 = vstv %s1815
        %v1817 = vmul.f32 %v759, %v1816
        %v1818 = vmul.f32 %v760, %v1816
        %s1819 = sld [smem:[#allocation11 + $0x85]]
        %v1820 = vstv %s1819
        %v1821 = vmul.f32 %v761, %v1820
        %v1822 = vmul.f32 %v762, %v1820
        %v1823 = vadd.f32 %v1817, %v1821
        %v1824 = vadd.f32 %v1818, %v1822
        %s1825 = sld [smem:[#allocation11 + $0x105]]
        %v1826 = vstv %s1825
        %v1827 = vmul.f32 %v763, %v1826
        %v1828 = vmul.f32 %v764, %v1826
        %v1829 = vadd.f32 %v1823, %v1827
        %v1830 = vadd.f32 %v1824, %v1828
        %s1831 = sld [smem:[#allocation11 + $0x185]]
        %v1832 = vstv %s1831
        %v1833 = vmul.f32 %v765, %v1832
        %v1834 = vmul.f32 %v766, %v1832
        %v1835 = vadd.f32 %v1829, %v1833
        %v1836 = vadd.f32 %v1830, %v1834
        %s1837 = sld [smem:[#allocation12 + $0x5]]
        %v1838 = vstv %s1837
        %v1839 = vadd.f32 %v1835, %v1838
        %v1840 = vadd.f32 %v1836, %v1838
        %s1841 = sld [smem:[#allocation14 + $0x5]]
        %v1842 = vstv %s1841
        %v1843 = vmul.f32 %v759, %v1842
        %v1844 = vmul.f32 %v760, %v1842
        %s1845 = sld [smem:[#allocation14 + $0x85]]
        %v1846 = vstv %s1845
        %v1847 = vmul.f32 %v761, %v1846
        %v1848 = vmul.f32 %v762, %v1846
        %v1849 = vadd.f32 %v1843, %v1847
        %v1850 = vadd.f32 %v1844, %v1848
        %s1851 = sld [smem:[#allocation14 + $0x105]]
        %v1852 = vstv %s1851
        %v1853 = vmul.f32 %v763, %v1852
        %v1854 = vmul.f32 %v764, %v1852
        %v1855 = vadd.f32 %v1849, %v1853
        %v1856 = vadd.f32 %v1850, %v1854
        %s1857 = sld [smem:[#allocation14 + $0x185]]
        %v1858 = vstv %s1857
        %v1859 = vmul.f32 %v765, %v1858
        %v1860 = vmul.f32 %v766, %v1858
        %v1861 = vadd.f32 %v1855, %v1859
        %v1862 = vadd.f32 %v1856, %v1860
        %s1863 = sld [smem:[#allocation15 + $0x5]]
        %v1864 = vstv %s1863
        %v1865 = vadd.f32 %v1861, %v1864
        %v1866 = vadd.f32 %v1862, %v1864
        %s1867 = sld [smem:[#allocation17 + $0x6]]
        %v1868 = vstv %s1867
        %v1869 = vmul.f32 %v759, %v1868
        %v1870 = vmul.f32 %v760, %v1868
        %s1871 = sld [smem:[#allocation17 + $0x86]]
        %v1872 = vstv %s1871
        %v1873 = vmul.f32 %v761, %v1872
        %v1874 = vmul.f32 %v762, %v1872
        %v1875 = vadd.f32 %v1869, %v1873
        %v1876 = vadd.f32 %v1870, %v1874
        %s1877 = sld [smem:[#allocation17 + $0x106]]
        %v1878 = vstv %s1877
        %v1879 = vmul.f32 %v763, %v1878
        %v1880 = vmul.f32 %v764, %v1878
        %v1881 = vadd.f32 %v1875, %v1879
        %v1882 = vadd.f32 %v1876, %v1880
        %s1883 = sld [smem:[#allocation17 + $0x186]]
        %v1884 = vstv %s1883
        %v1885 = vmul.f32 %v765, %v1884
        %v1886 = vmul.f32 %v766, %v1884
        %v1887 = vadd.f32 %v1881, %v1885
        %v1888 = vadd.f32 %v1882, %v1886
        %s1889 = sld [smem:[#allocation18 + $0x6]]
        %v1890 = vstv %s1889
        %v1891 = vadd.f32 %v1887, %v1890
        %v1892 = vadd.f32 %v1888, %v1890
        %s1893 = sld [smem:[#allocation11 + $0x6]]
        %v1894 = vstv %s1893
        %v1895 = vmul.f32 %v759, %v1894
        %v1896 = vmul.f32 %v760, %v1894
        %s1897 = sld [smem:[#allocation11 + $0x86]]
        %v1898 = vstv %s1897
        %v1899 = vmul.f32 %v761, %v1898
        %v1900 = vmul.f32 %v762, %v1898
        %v1901 = vadd.f32 %v1895, %v1899
        %v1902 = vadd.f32 %v1896, %v1900
        %s1903 = sld [smem:[#allocation11 + $0x106]]
        %v1904 = vstv %s1903
        %v1905 = vmul.f32 %v763, %v1904
        %v1906 = vmul.f32 %v764, %v1904
        %v1907 = vadd.f32 %v1901, %v1905
        %v1908 = vadd.f32 %v1902, %v1906
        %s1909 = sld [smem:[#allocation11 + $0x186]]
        %v1910 = vstv %s1909
        %v1911 = vmul.f32 %v765, %v1910
        %v1912 = vmul.f32 %v766, %v1910
        %v1913 = vadd.f32 %v1907, %v1911
        %v1914 = vadd.f32 %v1908, %v1912
        %s1915 = sld [smem:[#allocation12 + $0x6]]
        %v1916 = vstv %s1915
        %v1917 = vadd.f32 %v1913, %v1916
        %v1918 = vadd.f32 %v1914, %v1916
        %s1919 = sld [smem:[#allocation14 + $0x6]]
        %v1920 = vstv %s1919
        %v1921 = vmul.f32 %v759, %v1920
        %v1922 = vmul.f32 %v760, %v1920
        %s1923 = sld [smem:[#allocation14 + $0x86]]
        %v1924 = vstv %s1923
        %v1925 = vmul.f32 %v761, %v1924
        %v1926 = vmul.f32 %v762, %v1924
        %v1927 = vadd.f32 %v1921, %v1925
        %v1928 = vadd.f32 %v1922, %v1926
        %s1929 = sld [smem:[#allocation14 + $0x106]]
        %v1930 = vstv %s1929
        %v1931 = vmul.f32 %v763, %v1930
        %v1932 = vmul.f32 %v764, %v1930
        %v1933 = vadd.f32 %v1927, %v1931
        %v1934 = vadd.f32 %v1928, %v1932
        %s1935 = sld [smem:[#allocation14 + $0x186]]
        %v1936 = vstv %s1935
        %v1937 = vmul.f32 %v765, %v1936
        %v1938 = vmul.f32 %v766, %v1936
        %v1939 = vadd.f32 %v1933, %v1937
        %v1940 = vadd.f32 %v1934, %v1938
        %s1941 = sld [smem:[#allocation15 + $0x6]]
        %v1942 = vstv %s1941
        %v1943 = vadd.f32 %v1939, %v1942
        %v1944 = vadd.f32 %v1940, %v1942
        %s1945 = sld [smem:[#allocation17 + $0x7]]
        %v1946 = vstv %s1945
        %v1947 = vmul.f32 %v759, %v1946
        %v1948 = vmul.f32 %v760, %v1946
        %s1949 = sld [smem:[#allocation17 + $0x87]]
        %v1950 = vstv %s1949
        %v1951 = vmul.f32 %v761, %v1950
        %v1952 = vmul.f32 %v762, %v1950
        %v1953 = vadd.f32 %v1947, %v1951
        %v1954 = vadd.f32 %v1948, %v1952
        %s1955 = sld [smem:[#allocation17 + $0x107]]
        %v1956 = vstv %s1955
        %v1957 = vmul.f32 %v763, %v1956
        %v1958 = vmul.f32 %v764, %v1956
        %v1959 = vadd.f32 %v1953, %v1957
        %v1960 = vadd.f32 %v1954, %v1958
        %s1961 = sld [smem:[#allocation17 + $0x187]]
        %v1962 = vstv %s1961
        %v1963 = vmul.f32 %v765, %v1962
        %v1964 = vmul.f32 %v766, %v1962
        %v1965 = vadd.f32 %v1959, %v1963
        %v1966 = vadd.f32 %v1960, %v1964
        %s1967 = sld [smem:[#allocation18 + $0x7]]
        %v1968 = vstv %s1967
        %v1969 = vadd.f32 %v1965, %v1968
        %v1970 = vadd.f32 %v1966, %v1968
        %s1971 = sld [smem:[#allocation11 + $0x7]]
        %v1972 = vstv %s1971
        %v1973 = vmul.f32 %v759, %v1972
        %v1974 = vmul.f32 %v760, %v1972
        %s1975 = sld [smem:[#allocation11 + $0x87]]
        %v1976 = vstv %s1975
        %v1977 = vmul.f32 %v761, %v1976
        %v1978 = vmul.f32 %v762, %v1976
        %v1979 = vadd.f32 %v1973, %v1977
        %v1980 = vadd.f32 %v1974, %v1978
        %s1981 = sld [smem:[#allocation11 + $0x107]]
        %v1982 = vstv %s1981
        %v1983 = vmul.f32 %v763, %v1982
        %v1984 = vmul.f32 %v764, %v1982
        %v1985 = vadd.f32 %v1979, %v1983
        %v1986 = vadd.f32 %v1980, %v1984
        %s1987 = sld [smem:[#allocation11 + $0x187]]
        %v1988 = vstv %s1987
        %v1989 = vmul.f32 %v765, %v1988
        %v1990 = vmul.f32 %v766, %v1988
        %v1991 = vadd.f32 %v1985, %v1989
        %v1992 = vadd.f32 %v1986, %v1990
        %s1993 = sld [smem:[#allocation12 + $0x7]]
        %v1994 = vstv %s1993
        %v1995 = vadd.f32 %v1991, %v1994
        %v1996 = vadd.f32 %v1992, %v1994
        %s1997 = sld [smem:[#allocation14 + $0x7]]
        %v1998 = vstv %s1997
        %v1999 = vmul.f32 %v759, %v1998
        %v2000 = vmul.f32 %v760, %v1998
        %s2001 = sld [smem:[#allocation14 + $0x87]]
        %v2002 = vstv %s2001
        %v2003 = vmul.f32 %v761, %v2002
        %v2004 = vmul.f32 %v762, %v2002
        %v2005 = vadd.f32 %v1999, %v2003
        %v2006 = vadd.f32 %v2000, %v2004
        %s2007 = sld [smem:[#allocation14 + $0x107]]
        %v2008 = vstv %s2007
        %v2009 = vmul.f32 %v763, %v2008
        %v2010 = vmul.f32 %v764, %v2008
        %v2011 = vadd.f32 %v2005, %v2009
        %v2012 = vadd.f32 %v2006, %v2010
        %s2013 = sld [smem:[#allocation14 + $0x187]]
        %v2014 = vstv %s2013
        %v2015 = vmul.f32 %v765, %v2014
        %v2016 = vmul.f32 %v766, %v2014
        %v2017 = vadd.f32 %v2011, %v2015
        %v2018 = vadd.f32 %v2012, %v2016
        %s2019 = sld [smem:[#allocation15 + $0x7]]
        %v2020 = vstv %s2019
        %v2021 = vadd.f32 %v2017, %v2020
        %v2022 = vadd.f32 %v2018, %v2020
        %vm2023 = vcmask 130048
        %v2025 = vsel %vm2023, %v799, 0
        %v2028 = vsel %vm2023, %v800, 0
        %v2031 = vsel %vm2023, %v1449, 0
        %v2034 = vsel %vm2023, %v1450, 0
        %2036 = vmatprep.subr.mxu0 0.0
        %2037 = vmatpush1.xpose.msra.mxu0 %v2031
        %2038 = vmatprep.subr.mxu0 0.0
        %2039 = vmatpush1.xpose.msra.mxu0 %v2034
        %2040 = vmatprep.subr.mxu0 0.0
        %2041 = vmatpush1.xpose.msra.mxu0 0.0
        %2042 = vmatprep.subr.mxu0 0.0
        %2043 = vmatpush1.xpose.msra.mxu0 0.0
        %2044 = vmatprep.subr.mxu0 0.0
        %2045 = vmatpush1.xpose.msra.mxu0 0.0
        %2046 = vmatprep.subr.mxu0 0.0
        %2047 = vmatpush1.xpose.msra.mxu0 0.0
        %2048 = vmatprep.subr.mxu0 0.0
        %2049 = vmatpush1.xpose.msra.mxu0 0.0
        %2050 = vmatprep.subr.mxu0 0.0
        %2051 = vmatpush1.xpose.msra.mxu0 0.0
        %2052 = vmatprep.subr.mxu0 0.0
        %2053 = vmatpush1.xpose.msra.mxu0 0.0
        %2054 = vmatprep.subr.mxu0 0.0
        %2055 = vmatpush1.xpose.msra.mxu0 0.0
        %2056 = vmatprep.subr.mxu0 0.0
        %2057 = vmatpush1.xpose.msra.mxu0 0.0
        %2058 = vmatprep.subr.mxu0 0.0
        %2059 = vmatpush1.xpose.msra.mxu0 0.0
        %2060 = vmatprep.subr.mxu0 0.0
        %2061 = vmatpush1.xpose.msra.mxu0 0.0
        %2062 = vmatprep.subr.mxu0 0.0
        %2063 = vmatpush1.xpose.msra.mxu0 0.0
        %2064 = vmatprep.subr.mxu0 0.0
        %2065 = vmatpush1.xpose.msra.mxu0 0.0
        %2066 = vmatprep.subr.mxu0 0.0
        %2067 = vmatpush1.xpose.msra.mxu0 0.0
        %2068 = vmatprep.subr.mxu0 0.0
        %2069 = vmatpush1.xpose.msra.mxu0 0.0
        %2070 = vmatprep.subr.mxu0 0.0
        %2071 = vmatpush1.xpose.msra.mxu0 0.0
        %2072 = vmatprep.subr.mxu0 0.0
        %2073 = vmatpush1.xpose.msra.mxu0 0.0
        %2074 = vmatprep.subr.mxu0 0.0
        %2075 = vmatpush1.xpose.msra.mxu0 0.0
        %2076 = vmatprep.subr.mxu0 0.0
        %2077 = vmatpush1.xpose.msra.mxu0 0.0
        %2078 = vmatprep.subr.mxu0 0.0
        %2079 = vmatpush1.xpose.msra.mxu0 0.0
        %2080 = vmatprep.subr.mxu0 0.0
        %2081 = vmatpush1.xpose.msra.mxu0 0.0
        %2082 = vmatprep.subr.mxu0 0.0
        %2083 = vmatpush1.xpose.msra.mxu0 0.0
        %2084 = vmatprep.subr.mxu0 0.0
        %2085 = vmatpush1.xpose.msra.mxu0 0.0
        %2086 = vmatprep.subr.mxu0 0.0
        %2087 = vmatpush1.xpose.msra.mxu0 0.0
        %2088 = vmatprep.subr.mxu0 0.0
        %2089 = vmatpush1.xpose.msra.mxu0 0.0
        %2090 = vmatprep.subr.mxu0 0.0
        %2091 = vmatpush1.xpose.msra.mxu0 0.0
        %2092 = vmatprep.subr.mxu0 0.0
        %2093 = vmatpush1.xpose.msra.mxu0 0.0
        %2094 = vmatprep.subr.mxu0 0.0
        %2095 = vmatpush1.xpose.msra.mxu0 0.0
        %2096 = vmatprep.subr.mxu0 0.0
        %2097 = vmatpush1.xpose.msra.mxu0 0.0
        %2098 = vmatprep.subr.mxu0 0.0
        %2099 = vmatpush1.xpose.msra.mxu0 0.0
        %2100 = vmatprep.mubr.f32.mxu0 0.0
        %2101 = vmatmul.mubr.f32.gmra.mrb[0].mxu0 %v2025
        %v2102 = vpop.f32.mrb[0].mxu0
        %v2103 = vadd.f32 0.0, %v2102
        %v2104 = vpop.f32.mrb[0].mxu0
        %2105 = vmatprep.mubr.f32.mxu0 0.0
        %2106 = vmatmul.mubr.f32.gmra.mrb[0].mxu0 %v2028
        %v2107 = vpop.f32.mrb[0].mxu0
        %v2108 = vadd.f32 0.0, %v2107
        %v2109 = vpop.f32.mrb[0].mxu0
        %2110 = vdwg.mxu0
        %v2112 = vsel %vm2023, %v877, 0
        %v2115 = vsel %vm2023, %v878, 0
        %v2118 = vsel %vm2023, %v1527, 0
        %v2121 = vsel %vm2023, %v1528, 0
        %2123 = vmatprep.subr.mxu0 0.0
        %2124 = vmatpush1.xpose.msra.mxu0 %v2118
        %2125 = vmatprep.subr.mxu0 0.0
        %2126 = vmatpush1.xpose.msra.mxu0 %v2121
        %2127 = vmatprep.subr.mxu0 0.0
        %2128 = vmatpush1.xpose.msra.mxu0 0.0
        %2129 = vmatprep.subr.mxu0 0.0
        %2130 = vmatpush1.xpose.msra.mxu0 0.0
        %2131 = vmatprep.subr.mxu0 0.0
        %2132 = vmatpush1.xpose.msra.mxu0 0.0
        %2133 = vmatprep.subr.mxu0 0.0
        %2134 = vmatpush1.xpose.msra.mxu0 0.0
        %2135 = vmatprep.subr.mxu0 0.0
        %2136 = vmatpush1.xpose.msra.mxu0 0.0
        %2137 = vmatprep.subr.mxu0 0.0
        %2138 = vmatpush1.xpose.msra.mxu0 0.0
        %2139 = vmatprep.subr.mxu0 0.0
        %2140 = vmatpush1.xpose.msra.mxu0 0.0
        %2141 = vmatprep.subr.mxu0 0.0
        %2142 = vmatpush1.xpose.msra.mxu0 0.0
        %2143 = vmatprep.subr.mxu0 0.0
        %2144 = vmatpush1.xpose.msra.mxu0 0.0
        %2145 = vmatprep.subr.mxu0 0.0
        %2146 = vmatpush1.xpose.msra.mxu0 0.0
        %2147 = vmatprep.subr.mxu0 0.0
        %2148 = vmatpush1.xpose.msra.mxu0 0.0
        %2149 = vmatprep.subr.mxu0 0.0
        %2150 = vmatpush1.xpose.msra.mxu0 0.0
        %2151 = vmatprep.subr.mxu0 0.0
        %2152 = vmatpush1.xpose.msra.mxu0 0.0
        %2153 = vmatprep.subr.mxu0 0.0
        %2154 = vmatpush1.xpose.msra.mxu0 0.0
        %2155 = vmatprep.subr.mxu0 0.0
        %2156 = vmatpush1.xpose.msra.mxu0 0.0
        %2157 = vmatprep.subr.mxu0 0.0
        %2158 = vmatpush1.xpose.msra.mxu0 0.0
        %2159 = vmatprep.subr.mxu0 0.0
        %2160 = vmatpush1.xpose.msra.mxu0 0.0
        %2161 = vmatprep.subr.mxu0 0.0
        %2162 = vmatpush1.xpose.msra.mxu0 0.0
        %2163 = vmatprep.subr.mxu0 0.0
        %2164 = vmatpush1.xpose.msra.mxu0 0.0
        %2165 = vmatprep.subr.mxu0 0.0
        %2166 = vmatpush1.xpose.msra.mxu0 0.0
        %2167 = vmatprep.subr.mxu0 0.0
        %2168 = vmatpush1.xpose.msra.mxu0 0.0
        %2169 = vmatprep.subr.mxu0 0.0
        %2170 = vmatpush1.xpose.msra.mxu0 0.0
        %2171 = vmatprep.subr.mxu0 0.0
        %2172 = vmatpush1.xpose.msra.mxu0 0.0
        %2173 = vmatprep.subr.mxu0 0.0
        %2174 = vmatpush1.xpose.msra.mxu0 0.0
        %2175 = vmatprep.subr.mxu0 0.0
        %2176 = vmatpush1.xpose.msra.mxu0 0.0
        %2177 = vmatprep.subr.mxu0 0.0
        %2178 = vmatpush1.xpose.msra.mxu0 0.0
        %2179 = vmatprep.subr.mxu0 0.0
        %2180 = vmatpush1.xpose.msra.mxu0 0.0
        %2181 = vmatprep.subr.mxu0 0.0
        %2182 = vmatpush1.xpose.msra.mxu0 0.0
        %2183 = vmatprep.subr.mxu0 0.0
        %2184 = vmatpush1.xpose.msra.mxu0 0.0
        %2185 = vmatprep.subr.mxu0 0.0
        %2186 = vmatpush1.xpose.msra.mxu0 0.0
        %2187 = vmatprep.mubr.f32.mxu0 0.0
        %2188 = vmatmul.mubr.f32.gmra.mrb[0].mxu0 %v2112
        %v2189 = vpop.f32.mrb[0].mxu0
        %v2190 = vadd.f32 0.0, %v2189
        %v2191 = vpop.f32.mrb[0].mxu0
        %2192 = vmatprep.mubr.f32.mxu0 0.0
        %2193 = vmatmul.mubr.f32.gmra.mrb[0].mxu0 %v2115
        %v2194 = vpop.f32.mrb[0].mxu0
        %v2195 = vadd.f32 0.0, %v2194
        %v2196 = vpop.f32.mrb[0].mxu0
        %2197 = vdwg.mxu0
        %v2199 = vsel %vm2023, %v955, 0
        %v2202 = vsel %vm2023, %v956, 0
        %v2205 = vsel %vm2023, %v1605, 0
        %v2208 = vsel %vm2023, %v1606, 0
        %2210 = vmatprep.subr.mxu0 0.0
        %2211 = vmatpush1.xpose.msra.mxu0 %v2205
        %2212 = vmatprep.subr.mxu0 0.0
        %2213 = vmatpush1.xpose.msra.mxu0 %v2208
        %2214 = vmatprep.subr.mxu0 0.0
        %2215 = vmatpush1.xpose.msra.mxu0 0.0
        %2216 = vmatprep.subr.mxu0 0.0
        %2217 = vmatpush1.xpose.msra.mxu0 0.0
        %2218 = vmatprep.subr.mxu0 0.0
        %2219 = vmatpush1.xpose.msra.mxu0 0.0
        %2220 = vmatprep.subr.mxu0 0.0
        %2221 = vmatpush1.xpose.msra.mxu0 0.0
        %2222 = vmatprep.subr.mxu0 0.0
        %2223 = vmatpush1.xpose.msra.mxu0 0.0
        %2224 = vmatprep.subr.mxu0 0.0
        %2225 = vmatpush1.xpose.msra.mxu0 0.0
        %2226 = vmatprep.subr.mxu0 0.0
        %2227 = vmatpush1.xpose.msra.mxu0 0.0
        %2228 = vmatprep.subr.mxu0 0.0
        %2229 = vmatpush1.xpose.msra.mxu0 0.0
        %2230 = vmatprep.subr.mxu0 0.0
        %2231 = vmatpush1.xpose.msra.mxu0 0.0
        %2232 = vmatprep.subr.mxu0 0.0
        %2233 = vmatpush1.xpose.msra.mxu0 0.0
        %2234 = vmatprep.subr.mxu0 0.0
        %2235 = vmatpush1.xpose.msra.mxu0 0.0
        %2236 = vmatprep.subr.mxu0 0.0
        %2237 = vmatpush1.xpose.msra.mxu0 0.0
        %2238 = vmatprep.subr.mxu0 0.0
        %2239 = vmatpush1.xpose.msra.mxu0 0.0
        %2240 = vmatprep.subr.mxu0 0.0
        %2241 = vmatpush1.xpose.msra.mxu0 0.0
        %2242 = vmatprep.subr.mxu0 0.0
        %2243 = vmatpush1.xpose.msra.mxu0 0.0
        %2244 = vmatprep.subr.mxu0 0.0
        %2245 = vmatpush1.xpose.msra.mxu0 0.0
        %2246 = vmatprep.subr.mxu0 0.0
        %2247 = vmatpush1.xpose.msra.mxu0 0.0
        %2248 = vmatprep.subr.mxu0 0.0
        %2249 = vmatpush1.xpose.msra.mxu0 0.0
        %2250 = vmatprep.subr.mxu0 0.0
        %2251 = vmatpush1.xpose.msra.mxu0 0.0
        %2252 = vmatprep.subr.mxu0 0.0
        %2253 = vmatpush1.xpose.msra.mxu0 0.0
        %2254 = vmatprep.subr.mxu0 0.0
        %2255 = vmatpush1.xpose.msra.mxu0 0.0
        %2256 = vmatprep.subr.mxu0 0.0
        %2257 = vmatpush1.xpose.msra.mxu0 0.0
        %2258 = vmatprep.subr.mxu0 0.0
        %2259 = vmatpush1.xpose.msra.mxu0 0.0
        %2260 = vmatprep.subr.mxu0 0.0
        %2261 = vmatpush1.xpose.msra.mxu0 0.0
        %2262 = vmatprep.subr.mxu0 0.0
        %2263 = vmatpush1.xpose.msra.mxu0 0.0
        %2264 = vmatprep.subr.mxu0 0.0
        %2265 = vmatpush1.xpose.msra.mxu0 0.0
        %2266 = vmatprep.subr.mxu0 0.0
        %2267 = vmatpush1.xpose.msra.mxu0 0.0
        %2268 = vmatprep.subr.mxu0 0.0
        %2269 = vmatpush1.xpose.msra.mxu0 0.0
        %2270 = vmatprep.subr.mxu0 0.0
        %2271 = vmatpush1.xpose.msra.mxu0 0.0
        %2272 = vmatprep.subr.mxu0 0.0
        %2273 = vmatpush1.xpose.msra.mxu0 0.0
        %2274 = vmatprep.mubr.f32.mxu0 0.0
        %2275 = vmatmul.mubr.f32.gmra.mrb[0].mxu0 %v2199
        %v2276 = vpop.f32.mrb[0].mxu0
        %v2277 = vadd.f32 0.0, %v2276
        %v2278 = vpop.f32.mrb[0].mxu0
        %2279 = vmatprep.mubr.f32.mxu0 0.0
        %2280 = vmatmul.mubr.f32.gmra.mrb[0].mxu0 %v2202
        %v2281 = vpop.f32.mrb[0].mxu0
        %v2282 = vadd.f32 0.0, %v2281
        %v2283 = vpop.f32.mrb[0].mxu0
        %2284 = vdwg.mxu0
        %v2286 = vsel %vm2023, %v1033, 0
        %v2289 = vsel %vm2023, %v1034, 0
        %v2292 = vsel %vm2023, %v1683, 0
        %v2295 = vsel %vm2023, %v1684, 0
        %2297 = vmatprep.subr.mxu0 0.0
        %2298 = vmatpush1.xpose.msra.mxu0 %v2292
        %2299 = vmatprep.subr.mxu0 0.0
        %2300 = vmatpush1.xpose.msra.mxu0 %v2295
        %2301 = vmatprep.subr.mxu0 0.0
        %2302 = vmatpush1.xpose.msra.mxu0 0.0
        %2303 = vmatprep.subr.mxu0 0.0
        %2304 = vmatpush1.xpose.msra.mxu0 0.0
        %2305 = vmatprep.subr.mxu0 0.0
        %2306 = vmatpush1.xpose.msra.mxu0 0.0
        %2307 = vmatprep.subr.mxu0 0.0
        %2308 = vmatpush1.xpose.msra.mxu0 0.0
        %2309 = vmatprep.subr.mxu0 0.0
        %2310 = vmatpush1.xpose.msra.mxu0 0.0
        %2311 = vmatprep.subr.mxu0 0.0
        %2312 = vmatpush1.xpose.msra.mxu0 0.0
        %2313 = vmatprep.subr.mxu0 0.0
        %2314 = vmatpush1.xpose.msra.mxu0 0.0
        %2315 = vmatprep.subr.mxu0 0.0
        %2316 = vmatpush1.xpose.msra.mxu0 0.0
        %2317 = vmatprep.subr.mxu0 0.0
        %2318 = vmatpush1.xpose.msra.mxu0 0.0
        %2319 = vmatprep.subr.mxu0 0.0
        %2320 = vmatpush1.xpose.msra.mxu0 0.0
        %2321 = vmatprep.subr.mxu0 0.0
        %2322 = vmatpush1.xpose.msra.mxu0 0.0
        %2323 = vmatprep.subr.mxu0 0.0
        %2324 = vmatpush1.xpose.msra.mxu0 0.0
        %2325 = vmatprep.subr.mxu0 0.0
        %2326 = vmatpush1.xpose.msra.mxu0 0.0
        %2327 = vmatprep.subr.mxu0 0.0
        %2328 = vmatpush1.xpose.msra.mxu0 0.0
        %2329 = vmatprep.subr.mxu0 0.0
        %2330 = vmatpush1.xpose.msra.mxu0 0.0
        %2331 = vmatprep.subr.mxu0 0.0
        %2332 = vmatpush1.xpose.msra.mxu0 0.0
        %2333 = vmatprep.subr.mxu0 0.0
        %2334 = vmatpush1.xpose.msra.mxu0 0.0
        %2335 = vmatprep.subr.mxu0 0.0
        %2336 = vmatpush1.xpose.msra.mxu0 0.0
        %2337 = vmatprep.subr.mxu0 0.0
        %2338 = vmatpush1.xpose.msra.mxu0 0.0
        %2339 = vmatprep.subr.mxu0 0.0
        %2340 = vmatpush1.xpose.msra.mxu0 0.0
        %2341 = vmatprep.subr.mxu0 0.0
        %2342 = vmatpush1.xpose.msra.mxu0 0.0
        %2343 = vmatprep.subr.mxu0 0.0
        %2344 = vmatpush1.xpose.msra.mxu0 0.0
        %2345 = vmatprep.subr.mxu0 0.0
        %2346 = vmatpush1.xpose.msra.mxu0 0.0
        %2347 = vmatprep.subr.mxu0 0.0
        %2348 = vmatpush1.xpose.msra.mxu0 0.0
        %2349 = vmatprep.subr.mxu0 0.0
        %2350 = vmatpush1.xpose.msra.mxu0 0.0
        %2351 = vmatprep.subr.mxu0 0.0
        %2352 = vmatpush1.xpose.msra.mxu0 0.0
        %2353 = vmatprep.subr.mxu0 0.0
        %2354 = vmatpush1.xpose.msra.mxu0 0.0
        %2355 = vmatprep.subr.mxu0 0.0
        %2356 = vmatpush1.xpose.msra.mxu0 0.0
        %2357 = vmatprep.subr.mxu0 0.0
        %2358 = vmatpush1.xpose.msra.mxu0 0.0
        %2359 = vmatprep.subr.mxu0 0.0
        %2360 = vmatpush1.xpose.msra.mxu0 0.0
        %2361 = vmatprep.mubr.f32.mxu0 0.0
        %2362 = vmatmul.mubr.f32.gmra.mrb[0].mxu0 %v2286
        %v2363 = vpop.f32.mrb[0].mxu0
        %v2364 = vadd.f32 0.0, %v2363
        %v2365 = vpop.f32.mrb[0].mxu0
        %2366 = vmatprep.mubr.f32.mxu0 0.0
        %2367 = vmatmul.mubr.f32.gmra.mrb[0].mxu0 %v2289
        %v2368 = vpop.f32.mrb[0].mxu0
        %v2369 = vadd.f32 0.0, %v2368
        %v2370 = vpop.f32.mrb[0].mxu0
        %2371 = vdwg.mxu0
        %v2373 = vsel %vm2023, %v1111, 0
        %v2376 = vsel %vm2023, %v1112, 0
        %v2379 = vsel %vm2023, %v1761, 0
        %v2382 = vsel %vm2023, %v1762, 0
        %2384 = vmatprep.subr.mxu0 0.0
        %2385 = vmatpush1.xpose.msra.mxu0 %v2379
        %2386 = vmatprep.subr.mxu0 0.0
        %2387 = vmatpush1.xpose.msra.mxu0 %v2382
        %2388 = vmatprep.subr.mxu0 0.0
        %2389 = vmatpush1.xpose.msra.mxu0 0.0
        %2390 = vmatprep.subr.mxu0 0.0
        %2391 = vmatpush1.xpose.msra.mxu0 0.0
        %2392 = vmatprep.subr.mxu0 0.0
        %2393 = vmatpush1.xpose.msra.mxu0 0.0
        %2394 = vmatprep.subr.mxu0 0.0
        %2395 = vmatpush1.xpose.msra.mxu0 0.0
        %2396 = vmatprep.subr.mxu0 0.0
        %2397 = vmatpush1.xpose.msra.mxu0 0.0
        %2398 = vmatprep.subr.mxu0 0.0
        %2399 = vmatpush1.xpose.msra.mxu0 0.0
        %2400 = vmatprep.subr.mxu0 0.0
        %2401 = vmatpush1.xpose.msra.mxu0 0.0
        %2402 = vmatprep.subr.mxu0 0.0
        %2403 = vmatpush1.xpose.msra.mxu0 0.0
        %2404 = vmatprep.subr.mxu0 0.0
        %2405 = vmatpush1.xpose.msra.mxu0 0.0
        %2406 = vmatprep.subr.mxu0 0.0
        %2407 = vmatpush1.xpose.msra.mxu0 0.0
        %2408 = vmatprep.subr.mxu0 0.0
        %2409 = vmatpush1.xpose.msra.mxu0 0.0
        %2410 = vmatprep.subr.mxu0 0.0
        %2411 = vmatpush1.xpose.msra.mxu0 0.0
        %2412 = vmatprep.subr.mxu0 0.0
        %2413 = vmatpush1.xpose.msra.mxu0 0.0
        %2414 = vmatprep.subr.mxu0 0.0
        %2415 = vmatpush1.xpose.msra.mxu0 0.0
        %2416 = vmatprep.subr.mxu0 0.0
        %2417 = vmatpush1.xpose.msra.mxu0 0.0
        %2418 = vmatprep.subr.mxu0 0.0
        %2419 = vmatpush1.xpose.msra.mxu0 0.0
        %2420 = vmatprep.subr.mxu0 0.0
        %2421 = vmatpush1.xpose.msra.mxu0 0.0
        %2422 = vmatprep.subr.mxu0 0.0
        %2423 = vmatpush1.xpose.msra.mxu0 0.0
        %2424 = vmatprep.subr.mxu0 0.0
        %2425 = vmatpush1.xpose.msra.mxu0 0.0
        %2426 = vmatprep.subr.mxu0 0.0
        %2427 = vmatpush1.xpose.msra.mxu0 0.0
        %2428 = vmatprep.subr.mxu0 0.0
        %2429 = vmatpush1.xpose.msra.mxu0 0.0
        %2430 = vmatprep.subr.mxu0 0.0
        %2431 = vmatpush1.xpose.msra.mxu0 0.0
        %2432 = vmatprep.subr.mxu0 0.0
        %2433 = vmatpush1.xpose.msra.mxu0 0.0
        %2434 = vmatprep.subr.mxu0 0.0
        %2435 = vmatpush1.xpose.msra.mxu0 0.0
        %2436 = vmatprep.subr.mxu0 0.0
        %2437 = vmatpush1.xpose.msra.mxu0 0.0
        %2438 = vmatprep.subr.mxu0 0.0
        %2439 = vmatpush1.xpose.msra.mxu0 0.0
        %2440 = vmatprep.subr.mxu0 0.0
        %2441 = vmatpush1.xpose.msra.mxu0 0.0
        %2442 = vmatprep.subr.mxu0 0.0
        %2443 = vmatpush1.xpose.msra.mxu0 0.0
        %2444 = vmatprep.subr.mxu0 0.0
        %2445 = vmatpush1.xpose.msra.mxu0 0.0
        %2446 = vmatprep.subr.mxu0 0.0
        %2447 = vmatpush1.xpose.msra.mxu0 0.0
        %2448 = vmatprep.mubr.f32.mxu0 0.0
        %2449 = vmatmul.mubr.f32.gmra.mrb[0].mxu0 %v2373
        %v2450 = vpop.f32.mrb[0].mxu0
        %v2451 = vadd.f32 0.0, %v2450
        %v2452 = vpop.f32.mrb[0].mxu0
        %2453 = vmatprep.mubr.f32.mxu0 0.0
        %2454 = vmatmul.mubr.f32.gmra.mrb[0].mxu0 %v2376
        %v2455 = vpop.f32.mrb[0].mxu0
        %v2456 = vadd.f32 0.0, %v2455
        %v2457 = vpop.f32.mrb[0].mxu0
        %2458 = vdwg.mxu0
        %v2460 = vsel %vm2023, %v1189, 0
        %v2463 = vsel %vm2023, %v1190, 0
        %v2466 = vsel %vm2023, %v1839, 0
        %v2469 = vsel %vm2023, %v1840, 0
        %2471 = vmatprep.subr.mxu0 0.0
        %2472 = vmatpush1.xpose.msra.mxu0 %v2466
        %2473 = vmatprep.subr.mxu0 0.0
        %2474 = vmatpush1.xpose.msra.mxu0 %v2469
        %2475 = vmatprep.subr.mxu0 0.0
        %2476 = vmatpush1.xpose.msra.mxu0 0.0
        %2477 = vmatprep.subr.mxu0 0.0
        %2478 = vmatpush1.xpose.msra.mxu0 0.0
        %2479 = vmatprep.subr.mxu0 0.0
        %2480 = vmatpush1.xpose.msra.mxu0 0.0
        %2481 = vmatprep.subr.mxu0 0.0
        %2482 = vmatpush1.xpose.msra.mxu0 0.0
        %2483 = vmatprep.subr.mxu0 0.0
        %2484 = vmatpush1.xpose.msra.mxu0 0.0
        %2485 = vmatprep.subr.mxu0 0.0
        %2486 = vmatpush1.xpose.msra.mxu0 0.0
        %2487 = vmatprep.subr.mxu0 0.0
        %2488 = vmatpush1.xpose.msra.mxu0 0.0
        %2489 = vmatprep.subr.mxu0 0.0
        %2490 = vmatpush1.xpose.msra.mxu0 0.0
        %2491 = vmatprep.subr.mxu0 0.0
        %2492 = vmatpush1.xpose.msra.mxu0 0.0
        %2493 = vmatprep.subr.mxu0 0.0
        %2494 = vmatpush1.xpose.msra.mxu0 0.0
        %2495 = vmatprep.subr.mxu0 0.0
        %2496 = vmatpush1.xpose.msra.mxu0 0.0
        %2497 = vmatprep.subr.mxu0 0.0
        %2498 = vmatpush1.xpose.msra.mxu0 0.0
        %2499 = vmatprep.subr.mxu0 0.0
        %2500 = vmatpush1.xpose.msra.mxu0 0.0
        %2501 = vmatprep.subr.mxu0 0.0
        %2502 = vmatpush1.xpose.msra.mxu0 0.0
        %2503 = vmatprep.subr.mxu0 0.0
        %2504 = vmatpush1.xpose.msra.mxu0 0.0
        %2505 = vmatprep.subr.mxu0 0.0
        %2506 = vmatpush1.xpose.msra.mxu0 0.0
        %2507 = vmatprep.subr.mxu0 0.0
        %2508 = vmatpush1.xpose.msra.mxu0 0.0
        %2509 = vmatprep.subr.mxu0 0.0
        %2510 = vmatpush1.xpose.msra.mxu0 0.0
        %2511 = vmatprep.subr.mxu0 0.0
        %2512 = vmatpush1.xpose.msra.mxu0 0.0
        %2513 = vmatprep.subr.mxu0 0.0
        %2514 = vmatpush1.xpose.msra.mxu0 0.0
        %2515 = vmatprep.subr.mxu0 0.0
        %2516 = vmatpush1.xpose.msra.mxu0 0.0
        %2517 = vmatprep.subr.mxu0 0.0
        %2518 = vmatpush1.xpose.msra.mxu0 0.0
        %2519 = vmatprep.subr.mxu0 0.0
        %2520 = vmatpush1.xpose.msra.mxu0 0.0
        %2521 = vmatprep.subr.mxu0 0.0
        %2522 = vmatpush1.xpose.msra.mxu0 0.0
        %2523 = vmatprep.subr.mxu0 0.0
        %2524 = vmatpush1.xpose.msra.mxu0 0.0
        %2525 = vmatprep.subr.mxu0 0.0
        %2526 = vmatpush1.xpose.msra.mxu0 0.0
        %2527 = vmatprep.subr.mxu0 0.0
        %2528 = vmatpush1.xpose.msra.mxu0 0.0
        %2529 = vmatprep.subr.mxu0 0.0
        %2530 = vmatpush1.xpose.msra.mxu0 0.0
        %2531 = vmatprep.subr.mxu0 0.0
        %2532 = vmatpush1.xpose.msra.mxu0 0.0
        %2533 = vmatprep.subr.mxu0 0.0
        %2534 = vmatpush1.xpose.msra.mxu0 0.0
        %2535 = vmatprep.mubr.f32.mxu0 0.0
        %2536 = vmatmul.mubr.f32.gmra.mrb[0].mxu0 %v2460
        %v2537 = vpop.f32.mrb[0].mxu0
        %v2538 = vadd.f32 0.0, %v2537
        %v2539 = vpop.f32.mrb[0].mxu0
        %2540 = vmatprep.mubr.f32.mxu0 0.0
        %2541 = vmatmul.mubr.f32.gmra.mrb[0].mxu0 %v2463
        %v2542 = vpop.f32.mrb[0].mxu0
        %v2543 = vadd.f32 0.0, %v2542
        %v2544 = vpop.f32.mrb[0].mxu0
        %2545 = vdwg.mxu0
        %v2547 = vsel %vm2023, %v1267, 0
        %v2550 = vsel %vm2023, %v1268, 0
        %v2553 = vsel %vm2023, %v1917, 0
        %v2556 = vsel %vm2023, %v1918, 0
        %2558 = vmatprep.subr.mxu0 0.0
        %2559 = vmatpush1.xpose.msra.mxu0 %v2553
        %2560 = vmatprep.subr.mxu0 0.0
        %2561 = vmatpush1.xpose.msra.mxu0 %v2556
        %2562 = vmatprep.subr.mxu0 0.0
        %2563 = vmatpush1.xpose.msra.mxu0 0.0
        %2564 = vmatprep.subr.mxu0 0.0
        %2565 = vmatpush1.xpose.msra.mxu0 0.0
        %2566 = vmatprep.subr.mxu0 0.0
        %2567 = vmatpush1.xpose.msra.mxu0 0.0
        %2568 = vmatprep.subr.mxu0 0.0
        %2569 = vmatpush1.xpose.msra.mxu0 0.0
        %2570 = vmatprep.subr.mxu0 0.0
        %2571 = vmatpush1.xpose.msra.mxu0 0.0
        %2572 = vmatprep.subr.mxu0 0.0
        %2573 = vmatpush1.xpose.msra.mxu0 0.0
        %2574 = vmatprep.subr.mxu0 0.0
        %2575 = vmatpush1.xpose.msra.mxu0 0.0
        %2576 = vmatprep.subr.mxu0 0.0
        %2577 = vmatpush1.xpose.msra.mxu0 0.0
        %2578 = vmatprep.subr.mxu0 0.0
        %2579 = vmatpush1.xpose.msra.mxu0 0.0
        %2580 = vmatprep.subr.mxu0 0.0
        %2581 = vmatpush1.xpose.msra.mxu0 0.0
        %2582 = vmatprep.subr.mxu0 0.0
        %2583 = vmatpush1.xpose.msra.mxu0 0.0
        %2584 = vmatprep.subr.mxu0 0.0
        %2585 = vmatpush1.xpose.msra.mxu0 0.0
        %2586 = vmatprep.subr.mxu0 0.0
        %2587 = vmatpush1.xpose.msra.mxu0 0.0
        %2588 = vmatprep.subr.mxu0 0.0
        %2589 = vmatpush1.xpose.msra.mxu0 0.0
        %2590 = vmatprep.subr.mxu0 0.0
        %2591 = vmatpush1.xpose.msra.mxu0 0.0
        %2592 = vmatprep.subr.mxu0 0.0
        %2593 = vmatpush1.xpose.msra.mxu0 0.0
        %2594 = vmatprep.subr.mxu0 0.0
        %2595 = vmatpush1.xpose.msra.mxu0 0.0
        %2596 = vmatprep.subr.mxu0 0.0
        %2597 = vmatpush1.xpose.msra.mxu0 0.0
        %2598 = vmatprep.subr.mxu0 0.0
        %2599 = vmatpush1.xpose.msra.mxu0 0.0
        %2600 = vmatprep.subr.mxu0 0.0
        %2601 = vmatpush1.xpose.msra.mxu0 0.0
        %2602 = vmatprep.subr.mxu0 0.0
        %2603 = vmatpush1.xpose.msra.mxu0 0.0
        %2604 = vmatprep.subr.mxu0 0.0
        %2605 = vmatpush1.xpose.msra.mxu0 0.0
        %2606 = vmatprep.subr.mxu0 0.0
        %2607 = vmatpush1.xpose.msra.mxu0 0.0
        %2608 = vmatprep.subr.mxu0 0.0
        %2609 = vmatpush1.xpose.msra.mxu0 0.0
        %2610 = vmatprep.subr.mxu0 0.0
        %2611 = vmatpush1.xpose.msra.mxu0 0.0
        %2612 = vmatprep.subr.mxu0 0.0
        %2613 = vmatpush1.xpose.msra.mxu0 0.0
        %2614 = vmatprep.subr.mxu0 0.0
        %2615 = vmatpush1.xpose.msra.mxu0 0.0
        %2616 = vmatprep.subr.mxu0 0.0
        %2617 = vmatpush1.xpose.msra.mxu0 0.0
        %2618 = vmatprep.subr.mxu0 0.0
        %2619 = vmatpush1.xpose.msra.mxu0 0.0
        %2620 = vmatprep.subr.mxu0 0.0
        %2621 = vmatpush1.xpose.msra.mxu0 0.0
        %2622 = vmatprep.mubr.f32.mxu0 0.0
        %2623 = vmatmul.mubr.f32.gmra.mrb[0].mxu0 %v2547
        %v2624 = vpop.f32.mrb[0].mxu0
        %v2625 = vadd.f32 0.0, %v2624
        %v2626 = vpop.f32.mrb[0].mxu0
        %2627 = vmatprep.mubr.f32.mxu0 0.0
        %2628 = vmatmul.mubr.f32.gmra.mrb[0].mxu0 %v2550
        %v2629 = vpop.f32.mrb[0].mxu0
        %v2630 = vadd.f32 0.0, %v2629
        %v2631 = vpop.f32.mrb[0].mxu0
        %2632 = vdwg.mxu0
        %v2634 = vsel %vm2023, %v1345, 0
        %v2637 = vsel %vm2023, %v1346, 0
        %v2640 = vsel %vm2023, %v1995, 0
        %v2643 = vsel %vm2023, %v1996, 0
        %2645 = vmatprep.subr.mxu0 0.0
        %2646 = vmatpush1.xpose.msra.mxu0 %v2640
        %2647 = vmatprep.subr.mxu0 0.0
        %2648 = vmatpush1.xpose.msra.mxu0 %v2643
        %2649 = vmatprep.subr.mxu0 0.0
        %2650 = vmatpush1.xpose.msra.mxu0 0.0
        %2651 = vmatprep.subr.mxu0 0.0
        %2652 = vmatpush1.xpose.msra.mxu0 0.0
        %2653 = vmatprep.subr.mxu0 0.0
        %2654 = vmatpush1.xpose.msra.mxu0 0.0
        %2655 = vmatprep.subr.mxu0 0.0
        %2656 = vmatpush1.xpose.msra.mxu0 0.0
        %2657 = vmatprep.subr.mxu0 0.0
        %2658 = vmatpush1.xpose.msra.mxu0 0.0
        %2659 = vmatprep.subr.mxu0 0.0
        %2660 = vmatpush1.xpose.msra.mxu0 0.0
        %2661 = vmatprep.subr.mxu0 0.0
        %2662 = vmatpush1.xpose.msra.mxu0 0.0
        %2663 = vmatprep.subr.mxu0 0.0
        %2664 = vmatpush1.xpose.msra.mxu0 0.0
        %2665 = vmatprep.subr.mxu0 0.0
        %2666 = vmatpush1.xpose.msra.mxu0 0.0
        %2667 = vmatprep.subr.mxu0 0.0
        %2668 = vmatpush1.xpose.msra.mxu0 0.0
        %2669 = vmatprep.subr.mxu0 0.0
        %2670 = vmatpush1.xpose.msra.mxu0 0.0
        %2671 = vmatprep.subr.mxu0 0.0
        %2672 = vmatpush1.xpose.msra.mxu0 0.0
        %2673 = vmatprep.subr.mxu0 0.0
        %2674 = vmatpush1.xpose.msra.mxu0 0.0
        %2675 = vmatprep.subr.mxu0 0.0
        %2676 = vmatpush1.xpose.msra.mxu0 0.0
        %2677 = vmatprep.subr.mxu0 0.0
        %2678 = vmatpush1.xpose.msra.mxu0 0.0
        %2679 = vmatprep.subr.mxu0 0.0
        %2680 = vmatpush1.xpose.msra.mxu0 0.0
        %2681 = vmatprep.subr.mxu0 0.0
        %2682 = vmatpush1.xpose.msra.mxu0 0.0
        %2683 = vmatprep.subr.mxu0 0.0
        %2684 = vmatpush1.xpose.msra.mxu0 0.0
        %2685 = vmatprep.subr.mxu0 0.0
        %2686 = vmatpush1.xpose.msra.mxu0 0.0
        %2687 = vmatprep.subr.mxu0 0.0
        %2688 = vmatpush1.xpose.msra.mxu0 0.0
        %2689 = vmatprep.subr.mxu0 0.0
        %2690 = vmatpush1.xpose.msra.mxu0 0.0
        %2691 = vmatprep.subr.mxu0 0.0
        %2692 = vmatpush1.xpose.msra.mxu0 0.0
        %2693 = vmatprep.subr.mxu0 0.0
        %2694 = vmatpush1.xpose.msra.mxu0 0.0
        %2695 = vmatprep.subr.mxu0 0.0
        %2696 = vmatpush1.xpose.msra.mxu0 0.0
        %2697 = vmatprep.subr.mxu0 0.0
        %2698 = vmatpush1.xpose.msra.mxu0 0.0
        %2699 = vmatprep.subr.mxu0 0.0
        %2700 = vmatpush1.xpose.msra.mxu0 0.0
        %2701 = vmatprep.subr.mxu0 0.0
        %2702 = vmatpush1.xpose.msra.mxu0 0.0
        %2703 = vmatprep.subr.mxu0 0.0
        %2704 = vmatpush1.xpose.msra.mxu0 0.0
        %2705 = vmatprep.subr.mxu0 0.0
        %2706 = vmatpush1.xpose.msra.mxu0 0.0
        %2707 = vmatprep.subr.mxu0 0.0
        %2708 = vmatpush1.xpose.msra.mxu0 0.0
        %2709 = vmatprep.mubr.f32.mxu0 0.0
        %2710 = vmatmul.mubr.f32.gmra.mrb[0].mxu0 %v2634
        %v2711 = vpop.f32.mrb[0].mxu0
        %v2712 = vadd.f32 0.0, %v2711
        %v2713 = vpop.f32.mrb[0].mxu0
        %2714 = vmatprep.mubr.f32.mxu0 0.0
        %2715 = vmatmul.mubr.f32.gmra.mrb[0].mxu0 %v2637
        %v2716 = vpop.f32.mrb[0].mxu0
        %v2717 = vadd.f32 0.0, %v2716
        %v2718 = vpop.f32.mrb[0].mxu0
        %2719 = vdwg.mxu0
        %v2721 = vsel %vm2023, %v1423, 0
        %v2724 = vsel %vm2023, %v1424, 0
        %v2727 = vsel %vm2023, %v825, 0
        %v2730 = vsel %vm2023, %v826, 0
        %2732 = vmatprep.subr.mxu0 0.0
        %2733 = vmatpush1.xpose.msra.mxu0 %v2727
        %2734 = vmatprep.subr.mxu0 0.0
        %2735 = vmatpush1.xpose.msra.mxu0 %v2730
        %2736 = vmatprep.subr.mxu0 0.0
        %2737 = vmatpush1.xpose.msra.mxu0 0.0
        %2738 = vmatprep.subr.mxu0 0.0
        %2739 = vmatpush1.xpose.msra.mxu0 0.0
        %2740 = vmatprep.subr.mxu0 0.0
        %2741 = vmatpush1.xpose.msra.mxu0 0.0
        %2742 = vmatprep.subr.mxu0 0.0
        %2743 = vmatpush1.xpose.msra.mxu0 0.0
        %2744 = vmatprep.subr.mxu0 0.0
        %2745 = vmatpush1.xpose.msra.mxu0 0.0
        %2746 = vmatprep.subr.mxu0 0.0
        %2747 = vmatpush1.xpose.msra.mxu0 0.0
        %2748 = vmatprep.subr.mxu0 0.0
        %2749 = vmatpush1.xpose.msra.mxu0 0.0
        %2750 = vmatprep.subr.mxu0 0.0
        %2751 = vmatpush1.xpose.msra.mxu0 0.0
        %2752 = vmatprep.subr.mxu0 0.0
        %2753 = vmatpush1.xpose.msra.mxu0 0.0
        %2754 = vmatprep.subr.mxu0 0.0
        %2755 = vmatpush1.xpose.msra.mxu0 0.0
        %2756 = vmatprep.subr.mxu0 0.0
        %2757 = vmatpush1.xpose.msra.mxu0 0.0
        %2758 = vmatprep.subr.mxu0 0.0
        %2759 = vmatpush1.xpose.msra.mxu0 0.0
        %2760 = vmatprep.subr.mxu0 0.0
        %2761 = vmatpush1.xpose.msra.mxu0 0.0
        %2762 = vmatprep.subr.mxu0 0.0
        %2763 = vmatpush1.xpose.msra.mxu0 0.0
        %2764 = vmatprep.subr.mxu0 0.0
        %2765 = vmatpush1.xpose.msra.mxu0 0.0
        %2766 = vmatprep.subr.mxu0 0.0
        %2767 = vmatpush1.xpose.msra.mxu0 0.0
        %2768 = vmatprep.subr.mxu0 0.0
        %2769 = vmatpush1.xpose.msra.mxu0 0.0
        %2770 = vmatprep.subr.mxu0 0.0
        %2771 = vmatpush1.xpose.msra.mxu0 0.0
        %2772 = vmatprep.subr.mxu0 0.0
        %2773 = vmatpush1.xpose.msra.mxu0 0.0
        %2774 = vmatprep.subr.mxu0 0.0
        %2775 = vmatpush1.xpose.msra.mxu0 0.0
        %2776 = vmatprep.subr.mxu0 0.0
        %2777 = vmatpush1.xpose.msra.mxu0 0.0
        %2778 = vmatprep.subr.mxu0 0.0
        %2779 = vmatpush1.xpose.msra.mxu0 0.0
        %2780 = vmatprep.subr.mxu0 0.0
        %2781 = vmatpush1.xpose.msra.mxu0 0.0
        %2782 = vmatprep.subr.mxu0 0.0
        %2783 = vmatpush1.xpose.msra.mxu0 0.0
        %2784 = vmatprep.subr.mxu0 0.0
        %2785 = vmatpush1.xpose.msra.mxu0 0.0
        %2786 = vmatprep.subr.mxu0 0.0
        %2787 = vmatpush1.xpose.msra.mxu0 0.0
        %2788 = vmatprep.subr.mxu0 0.0
        %2789 = vmatpush1.xpose.msra.mxu0 0.0
        %2790 = vmatprep.subr.mxu0 0.0
        %2791 = vmatpush1.xpose.msra.mxu0 0.0
        %2792 = vmatprep.subr.mxu0 0.0
        %2793 = vmatpush1.xpose.msra.mxu0 0.0
        %2794 = vmatprep.subr.mxu0 0.0
        %2795 = vmatpush1.xpose.msra.mxu0 0.0
        %2796 = vmatprep.mubr.f32.mxu0 0.0
        %2797 = vmatmul.mubr.f32.gmra.mrb[0].mxu0 %v2721
        %v2798 = vpop.f32.mrb[0].mxu0
        %v2799 = vadd.f32 0.0, %v2798
        %v2800 = vpop.f32.mrb[0].mxu0
        %2801 = vmatprep.mubr.f32.mxu0 0.0
        %2802 = vmatmul.mubr.f32.gmra.mrb[0].mxu0 %v2724
        %v2803 = vpop.f32.mrb[0].mxu0
        %v2804 = vadd.f32 0.0, %v2803
        %v2805 = vpop.f32.mrb[0].mxu0
        %2806 = vdwg.mxu0
        %v2808 = vsel %vm2023, %v1501, 0
        %v2811 = vsel %vm2023, %v1502, 0
        %v2814 = vsel %vm2023, %v903, 0
        %v2817 = vsel %vm2023, %v904, 0
        %2819 = vmatprep.subr.mxu0 0.0
        %2820 = vmatpush1.xpose.msra.mxu0 %v2814
        %2821 = vmatprep.subr.mxu0 0.0
        %2822 = vmatpush1.xpose.msra.mxu0 %v2817
        %2823 = vmatprep.subr.mxu0 0.0
        %2824 = vmatpush1.xpose.msra.mxu0 0.0
        %2825 = vmatprep.subr.mxu0 0.0
        %2826 = vmatpush1.xpose.msra.mxu0 0.0
        %2827 = vmatprep.subr.mxu0 0.0
        %2828 = vmatpush1.xpose.msra.mxu0 0.0
        %2829 = vmatprep.subr.mxu0 0.0
        %2830 = vmatpush1.xpose.msra.mxu0 0.0
        %2831 = vmatprep.subr.mxu0 0.0
        %2832 = vmatpush1.xpose.msra.mxu0 0.0
        %2833 = vmatprep.subr.mxu0 0.0
        %2834 = vmatpush1.xpose.msra.mxu0 0.0
        %2835 = vmatprep.subr.mxu0 0.0
        %2836 = vmatpush1.xpose.msra.mxu0 0.0
        %2837 = vmatprep.subr.mxu0 0.0
        %2838 = vmatpush1.xpose.msra.mxu0 0.0
        %2839 = vmatprep.subr.mxu0 0.0
        %2840 = vmatpush1.xpose.msra.mxu0 0.0
        %2841 = vmatprep.subr.mxu0 0.0
        %2842 = vmatpush1.xpose.msra.mxu0 0.0
        %2843 = vmatprep.subr.mxu0 0.0
        %2844 = vmatpush1.xpose.msra.mxu0 0.0
        %2845 = vmatprep.subr.mxu0 0.0
        %2846 = vmatpush1.xpose.msra.mxu0 0.0
        %2847 = vmatprep.subr.mxu0 0.0
        %2848 = vmatpush1.xpose.msra.mxu0 0.0
        %2849 = vmatprep.subr.mxu0 0.0
        %2850 = vmatpush1.xpose.msra.mxu0 0.0
        %2851 = vmatprep.subr.mxu0 0.0
        %2852 = vmatpush1.xpose.msra.mxu0 0.0
        %2853 = vmatprep.subr.mxu0 0.0
        %2854 = vmatpush1.xpose.msra.mxu0 0.0
        %2855 = vmatprep.subr.mxu0 0.0
        %2856 = vmatpush1.xpose.msra.mxu0 0.0
        %2857 = vmatprep.subr.mxu0 0.0
        %2858 = vmatpush1.xpose.msra.mxu0 0.0
        %2859 = vmatprep.subr.mxu0 0.0
        %2860 = vmatpush1.xpose.msra.mxu0 0.0
        %2861 = vmatprep.subr.mxu0 0.0
        %2862 = vmatpush1.xpose.msra.mxu0 0.0
        %2863 = vmatprep.subr.mxu0 0.0
        %2864 = vmatpush1.xpose.msra.mxu0 0.0
        %2865 = vmatprep.subr.mxu0 0.0
        %2866 = vmatpush1.xpose.msra.mxu0 0.0
        %2867 = vmatprep.subr.mxu0 0.0
        %2868 = vmatpush1.xpose.msra.mxu0 0.0
        %2869 = vmatprep.subr.mxu0 0.0
        %2870 = vmatpush1.xpose.msra.mxu0 0.0
        %2871 = vmatprep.subr.mxu0 0.0
        %2872 = vmatpush1.xpose.msra.mxu0 0.0
        %2873 = vmatprep.subr.mxu0 0.0
        %2874 = vmatpush1.xpose.msra.mxu0 0.0
        %2875 = vmatprep.subr.mxu0 0.0
        %2876 = vmatpush1.xpose.msra.mxu0 0.0
        %2877 = vmatprep.subr.mxu0 0.0
        %2878 = vmatpush1.xpose.msra.mxu0 0.0
        %2879 = vmatprep.subr.mxu0 0.0
        %2880 = vmatpush1.xpose.msra.mxu0 0.0
        %2881 = vmatprep.subr.mxu0 0.0
        %2882 = vmatpush1.xpose.msra.mxu0 0.0
        %2883 = vmatprep.mubr.f32.mxu0 0.0
        %2884 = vmatmul.mubr.f32.gmra.mrb[0].mxu0 %v2808
        %v2885 = vpop.f32.mrb[0].mxu0
        %v2886 = vadd.f32 0.0, %v2885
        %v2887 = vpop.f32.mrb[0].mxu0
        %2888 = vmatprep.mubr.f32.mxu0 0.0
        %2889 = vmatmul.mubr.f32.gmra.mrb[0].mxu0 %v2811
        %v2890 = vpop.f32.mrb[0].mxu0
        %v2891 = vadd.f32 0.0, %v2890
        %v2892 = vpop.f32.mrb[0].mxu0
        %2893 = vdwg.mxu0
        %v2895 = vsel %vm2023, %v1579, 0
        %v2898 = vsel %vm2023, %v1580, 0
        %v2901 = vsel %vm2023, %v981, 0
        %v2904 = vsel %vm2023, %v982, 0
        %2906 = vmatprep.subr.mxu0 0.0
        %2907 = vmatpush1.xpose.msra.mxu0 %v2901
        %2908 = vmatprep.subr.mxu0 0.0
        %2909 = vmatpush1.xpose.msra.mxu0 %v2904
        %2910 = vmatprep.subr.mxu0 0.0
        %2911 = vmatpush1.xpose.msra.mxu0 0.0
        %2912 = vmatprep.subr.mxu0 0.0
        %2913 = vmatpush1.xpose.msra.mxu0 0.0
        %2914 = vmatprep.subr.mxu0 0.0
        %2915 = vmatpush1.xpose.msra.mxu0 0.0
        %2916 = vmatprep.subr.mxu0 0.0
        %2917 = vmatpush1.xpose.msra.mxu0 0.0
        %2918 = vmatprep.subr.mxu0 0.0
        %2919 = vmatpush1.xpose.msra.mxu0 0.0
        %2920 = vmatprep.subr.mxu0 0.0
        %2921 = vmatpush1.xpose.msra.mxu0 0.0
        %2922 = vmatprep.subr.mxu0 0.0
        %2923 = vmatpush1.xpose.msra.mxu0 0.0
        %2924 = vmatprep.subr.mxu0 0.0
        %2925 = vmatpush1.xpose.msra.mxu0 0.0
        %2926 = vmatprep.subr.mxu0 0.0
        %2927 = vmatpush1.xpose.msra.mxu0 0.0
        %2928 = vmatprep.subr.mxu0 0.0
        %2929 = vmatpush1.xpose.msra.mxu0 0.0
        %2930 = vmatprep.subr.mxu0 0.0
        %2931 = vmatpush1.xpose.msra.mxu0 0.0
        %2932 = vmatprep.subr.mxu0 0.0
        %2933 = vmatpush1.xpose.msra.mxu0 0.0
        %2934 = vmatprep.subr.mxu0 0.0
        %2935 = vmatpush1.xpose.msra.mxu0 0.0
        %2936 = vmatprep.subr.mxu0 0.0
        %2937 = vmatpush1.xpose.msra.mxu0 0.0
        %2938 = vmatprep.subr.mxu0 0.0
        %2939 = vmatpush1.xpose.msra.mxu0 0.0
        %2940 = vmatprep.subr.mxu0 0.0
        %2941 = vmatpush1.xpose.msra.mxu0 0.0
        %2942 = vmatprep.subr.mxu0 0.0
        %2943 = vmatpush1.xpose.msra.mxu0 0.0
        %2944 = vmatprep.subr.mxu0 0.0
        %2945 = vmatpush1.xpose.msra.mxu0 0.0
        %2946 = vmatprep.subr.mxu0 0.0
        %2947 = vmatpush1.xpose.msra.mxu0 0.0
        %2948 = vmatprep.subr.mxu0 0.0
        %2949 = vmatpush1.xpose.msra.mxu0 0.0
        %2950 = vmatprep.subr.mxu0 0.0
        %2951 = vmatpush1.xpose.msra.mxu0 0.0
        %2952 = vmatprep.subr.mxu0 0.0
        %2953 = vmatpush1.xpose.msra.mxu0 0.0
        %2954 = vmatprep.subr.mxu0 0.0
        %2955 = vmatpush1.xpose.msra.mxu0 0.0
        %2956 = vmatprep.subr.mxu0 0.0
        %2957 = vmatpush1.xpose.msra.mxu0 0.0
        %2958 = vmatprep.subr.mxu0 0.0
        %2959 = vmatpush1.xpose.msra.mxu0 0.0
        %2960 = vmatprep.subr.mxu0 0.0
        %2961 = vmatpush1.xpose.msra.mxu0 0.0
        %2962 = vmatprep.subr.mxu0 0.0
        %2963 = vmatpush1.xpose.msra.mxu0 0.0
        %2964 = vmatprep.subr.mxu0 0.0
        %2965 = vmatpush1.xpose.msra.mxu0 0.0
        %2966 = vmatprep.subr.mxu0 0.0
        %2967 = vmatpush1.xpose.msra.mxu0 0.0
        %2968 = vmatprep.subr.mxu0 0.0
        %2969 = vmatpush1.xpose.msra.mxu0 0.0
        %2970 = vmatprep.mubr.f32.mxu0 0.0
        %2971 = vmatmul.mubr.f32.gmra.mrb[0].mxu0 %v2895
        %v2972 = vpop.f32.mrb[0].mxu0
        %v2973 = vadd.f32 0.0, %v2972
        %v2974 = vpop.f32.mrb[0].mxu0
        %2975 = vmatprep.mubr.f32.mxu0 0.0
        %2976 = vmatmul.mubr.f32.gmra.mrb[0].mxu0 %v2898
        %v2977 = vpop.f32.mrb[0].mxu0
        %v2978 = vadd.f32 0.0, %v2977
        %v2979 = vpop.f32.mrb[0].mxu0
        %2980 = vdwg.mxu0
        %v2982 = vsel %vm2023, %v1657, 0
        %v2985 = vsel %vm2023, %v1658, 0
        %v2988 = vsel %vm2023, %v1059, 0
        %v2991 = vsel %vm2023, %v1060, 0
        %2993 = vmatprep.subr.mxu0 0.0
        %2994 = vmatpush1.xpose.msra.mxu0 %v2988
        %2995 = vmatprep.subr.mxu0 0.0
        %2996 = vmatpush1.xpose.msra.mxu0 %v2991
        %2997 = vmatprep.subr.mxu0 0.0
        %2998 = vmatpush1.xpose.msra.mxu0 0.0
        %2999 = vmatprep.subr.mxu0 0.0
        %3000 = vmatpush1.xpose.msra.mxu0 0.0
        %3001 = vmatprep.subr.mxu0 0.0
        %3002 = vmatpush1.xpose.msra.mxu0 0.0
        %3003 = vmatprep.subr.mxu0 0.0
        %3004 = vmatpush1.xpose.msra.mxu0 0.0
        %3005 = vmatprep.subr.mxu0 0.0
        %3006 = vmatpush1.xpose.msra.mxu0 0.0
        %3007 = vmatprep.subr.mxu0 0.0
        %3008 = vmatpush1.xpose.msra.mxu0 0.0
        %3009 = vmatprep.subr.mxu0 0.0
        %3010 = vmatpush1.xpose.msra.mxu0 0.0
        %3011 = vmatprep.subr.mxu0 0.0
        %3012 = vmatpush1.xpose.msra.mxu0 0.0
        %3013 = vmatprep.subr.mxu0 0.0
        %3014 = vmatpush1.xpose.msra.mxu0 0.0
        %3015 = vmatprep.subr.mxu0 0.0
        %3016 = vmatpush1.xpose.msra.mxu0 0.0
        %3017 = vmatprep.subr.mxu0 0.0
        %3018 = vmatpush1.xpose.msra.mxu0 0.0
        %3019 = vmatprep.subr.mxu0 0.0
        %3020 = vmatpush1.xpose.msra.mxu0 0.0
        %3021 = vmatprep.subr.mxu0 0.0
        %3022 = vmatpush1.xpose.msra.mxu0 0.0
        %3023 = vmatprep.subr.mxu0 0.0
        %3024 = vmatpush1.xpose.msra.mxu0 0.0
        %3025 = vmatprep.subr.mxu0 0.0
        %3026 = vmatpush1.xpose.msra.mxu0 0.0
        %3027 = vmatprep.subr.mxu0 0.0
        %3028 = vmatpush1.xpose.msra.mxu0 0.0
        %3029 = vmatprep.subr.mxu0 0.0
        %3030 = vmatpush1.xpose.msra.mxu0 0.0
        %3031 = vmatprep.subr.mxu0 0.0
        %3032 = vmatpush1.xpose.msra.mxu0 0.0
        %3033 = vmatprep.subr.mxu0 0.0
        %3034 = vmatpush1.xpose.msra.mxu0 0.0
        %3035 = vmatprep.subr.mxu0 0.0
        %3036 = vmatpush1.xpose.msra.mxu0 0.0
        %3037 = vmatprep.subr.mxu0 0.0
        %3038 = vmatpush1.xpose.msra.mxu0 0.0
        %3039 = vmatprep.subr.mxu0 0.0
        %3040 = vmatpush1.xpose.msra.mxu0 0.0
        %3041 = vmatprep.subr.mxu0 0.0
        %3042 = vmatpush1.xpose.msra.mxu0 0.0
        %3043 = vmatprep.subr.mxu0 0.0
        %3044 = vmatpush1.xpose.msra.mxu0 0.0
        %3045 = vmatprep.subr.mxu0 0.0
        %3046 = vmatpush1.xpose.msra.mxu0 0.0
        %3047 = vmatprep.subr.mxu0 0.0
        %3048 = vmatpush1.xpose.msra.mxu0 0.0
        %3049 = vmatprep.subr.mxu0 0.0
        %3050 = vmatpush1.xpose.msra.mxu0 0.0
        %3051 = vmatprep.subr.mxu0 0.0
        %3052 = vmatpush1.xpose.msra.mxu0 0.0
        %3053 = vmatprep.subr.mxu0 0.0
        %3054 = vmatpush1.xpose.msra.mxu0 0.0
        %3055 = vmatprep.subr.mxu0 0.0
        %3056 = vmatpush1.xpose.msra.mxu0 0.0
        %3057 = vmatprep.mubr.f32.mxu0 0.0
        %3058 = vmatmul.mubr.f32.gmra.mrb[0].mxu0 %v2982
        %v3059 = vpop.f32.mrb[0].mxu0
        %v3060 = vadd.f32 0.0, %v3059
        %v3061 = vpop.f32.mrb[0].mxu0
        %3062 = vmatprep.mubr.f32.mxu0 0.0
        %3063 = vmatmul.mubr.f32.gmra.mrb[0].mxu0 %v2985
        %v3064 = vpop.f32.mrb[0].mxu0
        %v3065 = vadd.f32 0.0, %v3064
        %v3066 = vpop.f32.mrb[0].mxu0
        %3067 = vdwg.mxu0
        %v3069 = vsel %vm2023, %v1735, 0
        %v3072 = vsel %vm2023, %v1736, 0
        %v3075 = vsel %vm2023, %v1137, 0
        %v3078 = vsel %vm2023, %v1138, 0
        %3080 = vmatprep.subr.mxu0 0.0
        %3081 = vmatpush1.xpose.msra.mxu0 %v3075
        %3082 = vmatprep.subr.mxu0 0.0
        %3083 = vmatpush1.xpose.msra.mxu0 %v3078
        %3084 = vmatprep.subr.mxu0 0.0
        %3085 = vmatpush1.xpose.msra.mxu0 0.0
        %3086 = vmatprep.subr.mxu0 0.0
        %3087 = vmatpush1.xpose.msra.mxu0 0.0
        %3088 = vmatprep.subr.mxu0 0.0
        %3089 = vmatpush1.xpose.msra.mxu0 0.0
        %3090 = vmatprep.subr.mxu0 0.0
        %3091 = vmatpush1.xpose.msra.mxu0 0.0
        %3092 = vmatprep.subr.mxu0 0.0
        %3093 = vmatpush1.xpose.msra.mxu0 0.0
        %3094 = vmatprep.subr.mxu0 0.0
        %3095 = vmatpush1.xpose.msra.mxu0 0.0
        %3096 = vmatprep.subr.mxu0 0.0
        %3097 = vmatpush1.xpose.msra.mxu0 0.0
        %3098 = vmatprep.subr.mxu0 0.0
        %3099 = vmatpush1.xpose.msra.mxu0 0.0
        %3100 = vmatprep.subr.mxu0 0.0
        %3101 = vmatpush1.xpose.msra.mxu0 0.0
        %3102 = vmatprep.subr.mxu0 0.0
        %3103 = vmatpush1.xpose.msra.mxu0 0.0
        %3104 = vmatprep.subr.mxu0 0.0
        %3105 = vmatpush1.xpose.msra.mxu0 0.0
        %3106 = vmatprep.subr.mxu0 0.0
        %3107 = vmatpush1.xpose.msra.mxu0 0.0
        %3108 = vmatprep.subr.mxu0 0.0
        %3109 = vmatpush1.xpose.msra.mxu0 0.0
        %3110 = vmatprep.subr.mxu0 0.0
        %3111 = vmatpush1.xpose.msra.mxu0 0.0
        %3112 = vmatprep.subr.mxu0 0.0
        %3113 = vmatpush1.xpose.msra.mxu0 0.0
        %3114 = vmatprep.subr.mxu0 0.0
        %3115 = vmatpush1.xpose.msra.mxu0 0.0
        %3116 = vmatprep.subr.mxu0 0.0
        %3117 = vmatpush1.xpose.msra.mxu0 0.0
        %3118 = vmatprep.subr.mxu0 0.0
        %3119 = vmatpush1.xpose.msra.mxu0 0.0
        %3120 = vmatprep.subr.mxu0 0.0
        %3121 = vmatpush1.xpose.msra.mxu0 0.0
        %3122 = vmatprep.subr.mxu0 0.0
        %3123 = vmatpush1.xpose.msra.mxu0 0.0
        %3124 = vmatprep.subr.mxu0 0.0
        %3125 = vmatpush1.xpose.msra.mxu0 0.0
        %3126 = vmatprep.subr.mxu0 0.0
        %3127 = vmatpush1.xpose.msra.mxu0 0.0
        %3128 = vmatprep.subr.mxu0 0.0
        %3129 = vmatpush1.xpose.msra.mxu0 0.0
        %3130 = vmatprep.subr.mxu0 0.0
        %3131 = vmatpush1.xpose.msra.mxu0 0.0
        %3132 = vmatprep.subr.mxu0 0.0
        %3133 = vmatpush1.xpose.msra.mxu0 0.0
        %3134 = vmatprep.subr.mxu0 0.0
        %3135 = vmatpush1.xpose.msra.mxu0 0.0
        %3136 = vmatprep.subr.mxu0 0.0
        %3137 = vmatpush1.xpose.msra.mxu0 0.0
        %3138 = vmatprep.subr.mxu0 0.0
        %3139 = vmatpush1.xpose.msra.mxu0 0.0
        %3140 = vmatprep.subr.mxu0 0.0
        %3141 = vmatpush1.xpose.msra.mxu0 0.0
        %3142 = vmatprep.subr.mxu0 0.0
        %3143 = vmatpush1.xpose.msra.mxu0 0.0
        %3144 = vmatprep.mubr.f32.mxu0 0.0
        %3145 = vmatmul.mubr.f32.gmra.mrb[0].mxu0 %v3069
        %v3146 = vpop.f32.mrb[0].mxu0
        %v3147 = vadd.f32 0.0, %v3146
        %v3148 = vpop.f32.mrb[0].mxu0
        %3149 = vmatprep.mubr.f32.mxu0 0.0
        %3150 = vmatmul.mubr.f32.gmra.mrb[0].mxu0 %v3072
        %v3151 = vpop.f32.mrb[0].mxu0
        %v3152 = vadd.f32 0.0, %v3151
        %v3153 = vpop.f32.mrb[0].mxu0
        %3154 = vdwg.mxu0
        %v3156 = vsel %vm2023, %v1813, 0
        %v3159 = vsel %vm2023, %v1814, 0
        %v3162 = vsel %vm2023, %v1215, 0
        %v3165 = vsel %vm2023, %v1216, 0
        %3167 = vmatprep.subr.mxu0 0.0
        %3168 = vmatpush1.xpose.msra.mxu0 %v3162
        %3169 = vmatprep.subr.mxu0 0.0
        %3170 = vmatpush1.xpose.msra.mxu0 %v3165
        %3171 = vmatprep.subr.mxu0 0.0
        %3172 = vmatpush1.xpose.msra.mxu0 0.0
        %3173 = vmatprep.subr.mxu0 0.0
        %3174 = vmatpush1.xpose.msra.mxu0 0.0
        %3175 = vmatprep.subr.mxu0 0.0
        %3176 = vmatpush1.xpose.msra.mxu0 0.0
        %3177 = vmatprep.subr.mxu0 0.0
        %3178 = vmatpush1.xpose.msra.mxu0 0.0
        %3179 = vmatprep.subr.mxu0 0.0
        %3180 = vmatpush1.xpose.msra.mxu0 0.0
        %3181 = vmatprep.subr.mxu0 0.0
        %3182 = vmatpush1.xpose.msra.mxu0 0.0
        %3183 = vmatprep.subr.mxu0 0.0
        %3184 = vmatpush1.xpose.msra.mxu0 0.0
        %3185 = vmatprep.subr.mxu0 0.0
        %3186 = vmatpush1.xpose.msra.mxu0 0.0
        %3187 = vmatprep.subr.mxu0 0.0
        %3188 = vmatpush1.xpose.msra.mxu0 0.0
        %3189 = vmatprep.subr.mxu0 0.0
        %3190 = vmatpush1.xpose.msra.mxu0 0.0
        %3191 = vmatprep.subr.mxu0 0.0
        %3192 = vmatpush1.xpose.msra.mxu0 0.0
        %3193 = vmatprep.subr.mxu0 0.0
        %3194 = vmatpush1.xpose.msra.mxu0 0.0
        %3195 = vmatprep.subr.mxu0 0.0
        %3196 = vmatpush1.xpose.msra.mxu0 0.0
        %3197 = vmatprep.subr.mxu0 0.0
        %3198 = vmatpush1.xpose.msra.mxu0 0.0
        %3199 = vmatprep.subr.mxu0 0.0
        %3200 = vmatpush1.xpose.msra.mxu0 0.0
        %3201 = vmatprep.subr.mxu0 0.0
        %3202 = vmatpush1.xpose.msra.mxu0 0.0
        %3203 = vmatprep.subr.mxu0 0.0
        %3204 = vmatpush1.xpose.msra.mxu0 0.0
        %3205 = vmatprep.subr.mxu0 0.0
        %3206 = vmatpush1.xpose.msra.mxu0 0.0
        %3207 = vmatprep.subr.mxu0 0.0
        %3208 = vmatpush1.xpose.msra.mxu0 0.0
        %3209 = vmatprep.subr.mxu0 0.0
        %3210 = vmatpush1.xpose.msra.mxu0 0.0
        %3211 = vmatprep.subr.mxu0 0.0
        %3212 = vmatpush1.xpose.msra.mxu0 0.0
        %3213 = vmatprep.subr.mxu0 0.0
        %3214 = vmatpush1.xpose.msra.mxu0 0.0
        %3215 = vmatprep.subr.mxu0 0.0
        %3216 = vmatpush1.xpose.msra.mxu0 0.0
        %3217 = vmatprep.subr.mxu0 0.0
        %3218 = vmatpush1.xpose.msra.mxu0 0.0
        %3219 = vmatprep.subr.mxu0 0.0
        %3220 = vmatpush1.xpose.msra.mxu0 0.0
        %3221 = vmatprep.subr.mxu0 0.0
        %3222 = vmatpush1.xpose.msra.mxu0 0.0
        %3223 = vmatprep.subr.mxu0 0.0
        %3224 = vmatpush1.xpose.msra.mxu0 0.0
        %3225 = vmatprep.subr.mxu0 0.0
        %3226 = vmatpush1.xpose.msra.mxu0 0.0
        %3227 = vmatprep.subr.mxu0 0.0
        %3228 = vmatpush1.xpose.msra.mxu0 0.0
        %3229 = vmatprep.subr.mxu0 0.0
        %3230 = vmatpush1.xpose.msra.mxu0 0.0
        %3231 = vmatprep.mubr.f32.mxu0 0.0
        %3232 = vmatmul.mubr.f32.gmra.mrb[0].mxu0 %v3156
        %v3233 = vpop.f32.mrb[0].mxu0
        %v3234 = vadd.f32 0.0, %v3233
        %v3235 = vpop.f32.mrb[0].mxu0
        %3236 = vmatprep.mubr.f32.mxu0 0.0
        %3237 = vmatmul.mubr.f32.gmra.mrb[0].mxu0 %v3159
        %v3238 = vpop.f32.mrb[0].mxu0
        %v3239 = vadd.f32 0.0, %v3238
        %v3240 = vpop.f32.mrb[0].mxu0
        %3241 = vdwg.mxu0
        %v3243 = vsel %vm2023, %v1891, 0
        %v3246 = vsel %vm2023, %v1892, 0
        %v3249 = vsel %vm2023, %v1293, 0
        %v3252 = vsel %vm2023, %v1294, 0
        %3254 = vmatprep.subr.mxu0 0.0
        %3255 = vmatpush1.xpose.msra.mxu0 %v3249
        %3256 = vmatprep.subr.mxu0 0.0
        %3257 = vmatpush1.xpose.msra.mxu0 %v3252
        %3258 = vmatprep.subr.mxu0 0.0
        %3259 = vmatpush1.xpose.msra.mxu0 0.0
        %3260 = vmatprep.subr.mxu0 0.0
        %3261 = vmatpush1.xpose.msra.mxu0 0.0
        %3262 = vmatprep.subr.mxu0 0.0
        %3263 = vmatpush1.xpose.msra.mxu0 0.0
        %3264 = vmatprep.subr.mxu0 0.0
        %3265 = vmatpush1.xpose.msra.mxu0 0.0
        %3266 = vmatprep.subr.mxu0 0.0
        %3267 = vmatpush1.xpose.msra.mxu0 0.0
        %3268 = vmatprep.subr.mxu0 0.0
        %3269 = vmatpush1.xpose.msra.mxu0 0.0
        %3270 = vmatprep.subr.mxu0 0.0
        %3271 = vmatpush1.xpose.msra.mxu0 0.0
        %3272 = vmatprep.subr.mxu0 0.0
        %3273 = vmatpush1.xpose.msra.mxu0 0.0
        %3274 = vmatprep.subr.mxu0 0.0
        %3275 = vmatpush1.xpose.msra.mxu0 0.0
        %3276 = vmatprep.subr.mxu0 0.0
        %3277 = vmatpush1.xpose.msra.mxu0 0.0
        %3278 = vmatprep.subr.mxu0 0.0
        %3279 = vmatpush1.xpose.msra.mxu0 0.0
        %3280 = vmatprep.subr.mxu0 0.0
        %3281 = vmatpush1.xpose.msra.mxu0 0.0
        %3282 = vmatprep.subr.mxu0 0.0
        %3283 = vmatpush1.xpose.msra.mxu0 0.0
        %3284 = vmatprep.subr.mxu0 0.0
        %3285 = vmatpush1.xpose.msra.mxu0 0.0
        %3286 = vmatprep.subr.mxu0 0.0
        %3287 = vmatpush1.xpose.msra.mxu0 0.0
        %3288 = vmatprep.subr.mxu0 0.0
        %3289 = vmatpush1.xpose.msra.mxu0 0.0
        %3290 = vmatprep.subr.mxu0 0.0
        %3291 = vmatpush1.xpose.msra.mxu0 0.0
        %3292 = vmatprep.subr.mxu0 0.0
        %3293 = vmatpush1.xpose.msra.mxu0 0.0
        %3294 = vmatprep.subr.mxu0 0.0
        %3295 = vmatpush1.xpose.msra.mxu0 0.0
        %3296 = vmatprep.subr.mxu0 0.0
        %3297 = vmatpush1.xpose.msra.mxu0 0.0
        %3298 = vmatprep.subr.mxu0 0.0
        %3299 = vmatpush1.xpose.msra.mxu0 0.0
        %3300 = vmatprep.subr.mxu0 0.0
        %3301 = vmatpush1.xpose.msra.mxu0 0.0
        %3302 = vmatprep.subr.mxu0 0.0
        %3303 = vmatpush1.xpose.msra.mxu0 0.0
        %3304 = vmatprep.subr.mxu0 0.0
        %3305 = vmatpush1.xpose.msra.mxu0 0.0
        %3306 = vmatprep.subr.mxu0 0.0
        %3307 = vmatpush1.xpose.msra.mxu0 0.0
        %3308 = vmatprep.subr.mxu0 0.0
        %3309 = vmatpush1.xpose.msra.mxu0 0.0
        %3310 = vmatprep.subr.mxu0 0.0
        %3311 = vmatpush1.xpose.msra.mxu0 0.0
        %3312 = vmatprep.subr.mxu0 0.0
        %3313 = vmatpush1.xpose.msra.mxu0 0.0
        %3314 = vmatprep.subr.mxu0 0.0
        %3315 = vmatpush1.xpose.msra.mxu0 0.0
        %3316 = vmatprep.subr.mxu0 0.0
        %3317 = vmatpush1.xpose.msra.mxu0 0.0
        %3318 = vmatprep.mubr.f32.mxu0 0.0
        %3319 = vmatmul.mubr.f32.gmra.mrb[0].mxu0 %v3243
        %v3320 = vpop.f32.mrb[0].mxu0
        %v3321 = vadd.f32 0.0, %v3320
        %v3322 = vpop.f32.mrb[0].mxu0
        %3323 = vmatprep.mubr.f32.mxu0 0.0
        %3324 = vmatmul.mubr.f32.gmra.mrb[0].mxu0 %v3246
        %v3325 = vpop.f32.mrb[0].mxu0
        %v3326 = vadd.f32 0.0, %v3325
        %v3327 = vpop.f32.mrb[0].mxu0
        %3328 = vdwg.mxu0
        %v3330 = vsel %vm2023, %v1969, 0
        %v3333 = vsel %vm2023, %v1970, 0
        %v3336 = vsel %vm2023, %v1371, 0
        %v3339 = vsel %vm2023, %v1372, 0
        %3341 = vmatprep.subr.mxu0 0.0
        %3342 = vmatpush1.xpose.msra.mxu0 %v3336
        %3343 = vmatprep.subr.mxu0 0.0
        %3344 = vmatpush1.xpose.msra.mxu0 %v3339
        %3345 = vmatprep.subr.mxu0 0.0
        %3346 = vmatpush1.xpose.msra.mxu0 0.0
        %3347 = vmatprep.subr.mxu0 0.0
        %3348 = vmatpush1.xpose.msra.mxu0 0.0
        %3349 = vmatprep.subr.mxu0 0.0
        %3350 = vmatpush1.xpose.msra.mxu0 0.0
        %3351 = vmatprep.subr.mxu0 0.0
        %3352 = vmatpush1.xpose.msra.mxu0 0.0
        %3353 = vmatprep.subr.mxu0 0.0
        %3354 = vmatpush1.xpose.msra.mxu0 0.0
        %3355 = vmatprep.subr.mxu0 0.0
        %3356 = vmatpush1.xpose.msra.mxu0 0.0
        %3357 = vmatprep.subr.mxu0 0.0
        %3358 = vmatpush1.xpose.msra.mxu0 0.0
        %3359 = vmatprep.subr.mxu0 0.0
        %3360 = vmatpush1.xpose.msra.mxu0 0.0
        %3361 = vmatprep.subr.mxu0 0.0
        %3362 = vmatpush1.xpose.msra.mxu0 0.0
        %3363 = vmatprep.subr.mxu0 0.0
        %3364 = vmatpush1.xpose.msra.mxu0 0.0
        %3365 = vmatprep.subr.mxu0 0.0
        %3366 = vmatpush1.xpose.msra.mxu0 0.0
        %3367 = vmatprep.subr.mxu0 0.0
        %3368 = vmatpush1.xpose.msra.mxu0 0.0
        %3369 = vmatprep.subr.mxu0 0.0
        %3370 = vmatpush1.xpose.msra.mxu0 0.0
        %3371 = vmatprep.subr.mxu0 0.0
        %3372 = vmatpush1.xpose.msra.mxu0 0.0
        %3373 = vmatprep.subr.mxu0 0.0
        %3374 = vmatpush1.xpose.msra.mxu0 0.0
        %3375 = vmatprep.subr.mxu0 0.0
        %3376 = vmatpush1.xpose.msra.mxu0 0.0
        %3377 = vmatprep.subr.mxu0 0.0
        %3378 = vmatpush1.xpose.msra.mxu0 0.0
        %3379 = vmatprep.subr.mxu0 0.0
        %3380 = vmatpush1.xpose.msra.mxu0 0.0
        %3381 = vmatprep.subr.mxu0 0.0
        %3382 = vmatpush1.xpose.msra.mxu0 0.0
        %3383 = vmatprep.subr.mxu0 0.0
        %3384 = vmatpush1.xpose.msra.mxu0 0.0
        %3385 = vmatprep.subr.mxu0 0.0
        %3386 = vmatpush1.xpose.msra.mxu0 0.0
        %3387 = vmatprep.subr.mxu0 0.0
        %3388 = vmatpush1.xpose.msra.mxu0 0.0
        %3389 = vmatprep.subr.mxu0 0.0
        %3390 = vmatpush1.xpose.msra.mxu0 0.0
        %3391 = vmatprep.subr.mxu0 0.0
        %3392 = vmatpush1.xpose.msra.mxu0 0.0
        %3393 = vmatprep.subr.mxu0 0.0
        %3394 = vmatpush1.xpose.msra.mxu0 0.0
        %3395 = vmatprep.subr.mxu0 0.0
        %3396 = vmatpush1.xpose.msra.mxu0 0.0
        %3397 = vmatprep.subr.mxu0 0.0
        %3398 = vmatpush1.xpose.msra.mxu0 0.0
        %3399 = vmatprep.subr.mxu0 0.0
        %3400 = vmatpush1.xpose.msra.mxu0 0.0
        %3401 = vmatprep.subr.mxu0 0.0
        %3402 = vmatpush1.xpose.msra.mxu0 0.0
        %3403 = vmatprep.subr.mxu0 0.0
        %3404 = vmatpush1.xpose.msra.mxu0 0.0
        %3405 = vmatprep.mubr.f32.mxu0 0.0
        %3406 = vmatmul.mubr.f32.gmra.mrb[0].mxu0 %v3330
        %v3407 = vpop.f32.mrb[0].mxu0
        %v3408 = vadd.f32 0.0, %v3407
        %v3409 = vpop.f32.mrb[0].mxu0
        %3410 = vmatprep.mubr.f32.mxu0 0.0
        %3411 = vmatmul.mubr.f32.gmra.mrb[0].mxu0 %v3333
        %v3412 = vpop.f32.mrb[0].mxu0
        %v3413 = vadd.f32 0.0, %v3412
        %v3414 = vpop.f32.mrb[0].mxu0
        %3415 = vdwg.mxu0
        %v3416 = vmul.f32 %v2103, 0.25
        %v3417 = vmul.f32 %v2108, 0.25
        %v3418 = vmul.f32 %v2190, 0.25
        %v3419 = vmul.f32 %v2195, 0.25
        %v3420 = vmul.f32 %v2277, 0.25
        %v3421 = vmul.f32 %v2282, 0.25
        %v3422 = vmul.f32 %v2364, 0.25
        %v3423 = vmul.f32 %v2369, 0.25
        %v3424 = vmul.f32 %v2451, 0.25
        %v3425 = vmul.f32 %v2456, 0.25
        %v3426 = vmul.f32 %v2538, 0.25
        %v3427 = vmul.f32 %v2543, 0.25
        %v3428 = vmul.f32 %v2625, 0.25
        %v3429 = vmul.f32 %v2630, 0.25
        %v3430 = vmul.f32 %v2712, 0.25
        %v3431 = vmul.f32 %v2717, 0.25
        %v3432 = vmul.f32 %v2799, 0.25
        %v3433 = vmul.f32 %v2804, 0.25
        %v3434 = vmul.f32 %v2886, 0.25
        %v3435 = vmul.f32 %v2891, 0.25
        %v3436 = vmul.f32 %v2973, 0.25
        %v3437 = vmul.f32 %v2978, 0.25
        %v3438 = vmul.f32 %v3060, 0.25
        %v3439 = vmul.f32 %v3065, 0.25
        %v3440 = vmul.f32 %v3147, 0.25
        %v3441 = vmul.f32 %v3152, 0.25
        %v3442 = vmul.f32 %v3234, 0.25
        %v3443 = vmul.f32 %v3239, 0.25
        %v3444 = vmul.f32 %v3321, 0.25
        %v3445 = vmul.f32 %v3326, 0.25
        %v3446 = vmul.f32 %v3408, 0.25
        %v3447 = vmul.f32 %v3413, 0.25
        %v3448 = vsel %vm2023, %v3416, -inf
        %3449 = vmax.xlane.f32.xlu0 %v3448
        %v3450 = vpop.xlane.xlu0 %3449
        %v3451 = vsel %vm2023, %v3417, -inf
        %3452 = vmax.xlane.f32.xlu0 %v3451
        %v3453 = vpop.xlane.xlu0 %3452
        %v3454 = vsel %vm2023, %v3418, -inf
        %3455 = vmax.xlane.f32.xlu0 %v3454
        %v3456 = vpop.xlane.xlu0 %3455
        %v3457 = vsel %vm2023, %v3419, -inf
        %3458 = vmax.xlane.f32.xlu0 %v3457
        %v3459 = vpop.xlane.xlu0 %3458
        %v3460 = vsel %vm2023, %v3420, -inf
        %3461 = vmax.xlane.f32.xlu0 %v3460
        %v3462 = vpop.xlane.xlu0 %3461
        %v3463 = vsel %vm2023, %v3421, -inf
        %3464 = vmax.xlane.f32.xlu0 %v3463
        %v3465 = vpop.xlane.xlu0 %3464
        %v3466 = vsel %vm2023, %v3422, -inf
        %3467 = vmax.xlane.f32.xlu0 %v3466
        %v3468 = vpop.xlane.xlu0 %3467
        %v3469 = vsel %vm2023, %v3423, -inf
        %3470 = vmax.xlane.f32.xlu0 %v3469
        %v3471 = vpop.xlane.xlu0 %3470
        %v3472 = vsel %vm2023, %v3424, -inf
        %3473 = vmax.xlane.f32.xlu0 %v3472
        %v3474 = vpop.xlane.xlu0 %3473
        %v3475 = vsel %vm2023, %v3425, -inf
        %3476 = vmax.xlane.f32.xlu0 %v3475
        %v3477 = vpop.xlane.xlu0 %3476
        %v3478 = vsel %vm2023, %v3426, -inf
        %3479 = vmax.xlane.f32.xlu0 %v3478
        %v3480 = vpop.xlane.xlu0 %3479
        %v3481 = vsel %vm2023, %v3427, -inf
        %3482 = vmax.xlane.f32.xlu0 %v3481
        %v3483 = vpop.xlane.xlu0 %3482
        %v3484 = vsel %vm2023, %v3428, -inf
        %3485 = vmax.xlane.f32.xlu0 %v3484
        %v3486 = vpop.xlane.xlu0 %3485
        %v3487 = vsel %vm2023, %v3429, -inf
        %3488 = vmax.xlane.f32.xlu0 %v3487
        %v3489 = vpop.xlane.xlu0 %3488
        %v3490 = vsel %vm2023, %v3430, -inf
        %3491 = vmax.xlane.f32.xlu0 %v3490
        %v3492 = vpop.xlane.xlu0 %3491
        %v3493 = vsel %vm2023, %v3431, -inf
        %3494 = vmax.xlane.f32.xlu0 %v3493
        %v3495 = vpop.xlane.xlu0 %3494
        %v3496 = vsel %vm2023, %v3432, -inf
        %3497 = vmax.xlane.f32.xlu0 %v3496
        %v3498 = vpop.xlane.xlu0 %3497
        %v3499 = vsel %vm2023, %v3433, -inf
        %3500 = vmax.xlane.f32.xlu0 %v3499
        %v3501 = vpop.xlane.xlu0 %3500
        %v3502 = vsel %vm2023, %v3434, -inf
        %3503 = vmax.xlane.f32.xlu0 %v3502
        %v3504 = vpop.xlane.xlu0 %3503
        %v3505 = vsel %vm2023, %v3435, -inf
        %3506 = vmax.xlane.f32.xlu0 %v3505
        %v3507 = vpop.xlane.xlu0 %3506
        %v3508 = vsel %vm2023, %v3436, -inf
        %3509 = vmax.xlane.f32.xlu0 %v3508
        %v3510 = vpop.xlane.xlu0 %3509
        %v3511 = vsel %vm2023, %v3437, -inf
        %3512 = vmax.xlane.f32.xlu0 %v3511
        %v3513 = vpop.xlane.xlu0 %3512
        %v3514 = vsel %vm2023, %v3438, -inf
        %3515 = vmax.xlane.f32.xlu0 %v3514
        %v3516 = vpop.xlane.xlu0 %3515
        %v3517 = vsel %vm2023, %v3439, -inf
        %3518 = vmax.xlane.f32.xlu0 %v3517
        %v3519 = vpop.xlane.xlu0 %3518
        %v3520 = vsel %vm2023, %v3440, -inf
        %3521 = vmax.xlane.f32.xlu0 %v3520
        %v3522 = vpop.xlane.xlu0 %3521
        %v3523 = vsel %vm2023, %v3441, -inf
        %3524 = vmax.xlane.f32.xlu0 %v3523
        %v3525 = vpop.xlane.xlu0 %3524
        %v3526 = vsel %vm2023, %v3442, -inf
        %3527 = vmax.xlane.f32.xlu0 %v3526
        %v3528 = vpop.xlane.xlu0 %3527
        %v3529 = vsel %vm2023, %v3443, -inf
        %3530 = vmax.xlane.f32.xlu0 %v3529
        %v3531 = vpop.xlane.xlu0 %3530
        %v3532 = vsel %vm2023, %v3444, -inf
        %3533 = vmax.xlane.f32.xlu0 %v3532
        %v3534 = vpop.xlane.xlu0 %3533
        %v3535 = vsel %vm2023, %v3445, -inf
        %3536 = vmax.xlane.f32.xlu0 %v3535
        %v3537 = vpop.xlane.xlu0 %3536
        %v3538 = vsel %vm2023, %v3446, -inf
        %3539 = vmax.xlane.f32.xlu0 %v3538
        %v3540 = vpop.xlane.xlu0 %3539
        %v3541 = vsel %vm2023, %v3447, -inf
        %3542 = vmax.xlane.f32.xlu0 %v3541
        %v3543 = vpop.xlane.xlu0 %3542
        %v3544 = vsub.f32 %v3416, %v3450
        %v3545 = vsub.f32 %v3417, %v3453
        %v3546 = vsub.f32 %v3418, %v3456
        %v3547 = vsub.f32 %v3419, %v3459
        %v3548 = vsub.f32 %v3420, %v3462
        %v3549 = vsub.f32 %v3421, %v3465
        %v3550 = vsub.f32 %v3422, %v3468
        %v3551 = vsub.f32 %v3423, %v3471
        %v3552 = vsub.f32 %v3424, %v3474
        %v3553 = vsub.f32 %v3425, %v3477
        %v3554 = vsub.f32 %v3426, %v3480
        %v3555 = vsub.f32 %v3427, %v3483
        %v3556 = vsub.f32 %v3428, %v3486
        %v3557 = vsub.f32 %v3429, %v3489
        %v3558 = vsub.f32 %v3430, %v3492
        %v3559 = vsub.f32 %v3431, %v3495
        %v3560 = vsub.f32 %v3432, %v3498
        %v3561 = vsub.f32 %v3433, %v3501
        %v3562 = vsub.f32 %v3434, %v3504
        %v3563 = vsub.f32 %v3435, %v3507
        %v3564 = vsub.f32 %v3436, %v3510
        %v3565 = vsub.f32 %v3437, %v3513
        %v3566 = vsub.f32 %v3438, %v3516
        %v3567 = vsub.f32 %v3439, %v3519
        %v3568 = vsub.f32 %v3440, %v3522
        %v3569 = vsub.f32 %v3441, %v3525
        %v3570 = vsub.f32 %v3442, %v3528
        %v3571 = vsub.f32 %v3443, %v3531
        %v3572 = vsub.f32 %v3444, %v3534
        %v3573 = vsub.f32 %v3445, %v3537
        %v3574 = vsub.f32 %v3446, %v3540
        %v3575 = vsub.f32 %v3447, %v3543
        %v3576 = vmul.f32 %v3544, 1.442695
        %v3577 = vpow.pop %v3576
        %v3578 = vmul.f32 %v3545, 1.442695
        %v3579 = vpow.pop %v3578
        %v3580 = vmul.f32 %v3546, 1.442695
        %v3581 = vpow.pop %v3580
        %v3582 = vmul.f32 %v3547, 1.442695
        %v3583 = vpow.pop %v3582
        %v3584 = vmul.f32 %v3548, 1.442695
        %v3585 = vpow.pop %v3584
        %v3586 = vmul.f32 %v3549, 1.442695
        %v3587 = vpow.pop %v3586
        %v3588 = vmul.f32 %v3550, 1.442695
        %v3589 = vpow.pop %v3588
        %v3590 = vmul.f32 %v3551, 1.442695
        %v3591 = vpow.pop %v3590
        %v3592 = vmul.f32 %v3552, 1.442695
        %v3593 = vpow.pop %v3592
        %v3594 = vmul.f32 %v3553, 1.442695
        %v3595 = vpow.pop %v3594
        %v3596 = vmul.f32 %v3554, 1.442695
        %v3597 = vpow.pop %v3596
        %v3598 = vmul.f32 %v3555, 1.442695
        %v3599 = vpow.pop %v3598
        %v3600 = vmul.f32 %v3556, 1.442695
        %v3601 = vpow.pop %v3600
        %v3602 = vmul.f32 %v3557, 1.442695
        %v3603 = vpow.pop %v3602
        %v3604 = vmul.f32 %v3558, 1.442695
        %v3605 = vpow.pop %v3604
        %v3606 = vmul.f32 %v3559, 1.442695
        %v3607 = vpow.pop %v3606
        %v3608 = vmul.f32 %v3560, 1.442695
        %v3609 = vpow.pop %v3608
        %v3610 = vmul.f32 %v3561, 1.442695
        %v3611 = vpow.pop %v3610
        %v3612 = vmul.f32 %v3562, 1.442695
        %v3613 = vpow.pop %v3612
        %v3614 = vmul.f32 %v3563, 1.442695
        %v3615 = vpow.pop %v3614
        %v3616 = vmul.f32 %v3564, 1.442695
        %v3617 = vpow.pop %v3616
        %v3618 = vmul.f32 %v3565, 1.442695
        %v3619 = vpow.pop %v3618
        %v3620 = vmul.f32 %v3566, 1.442695
        %v3621 = vpow.pop %v3620
        %v3622 = vmul.f32 %v3567, 1.442695
        %v3623 = vpow.pop %v3622
        %v3624 = vmul.f32 %v3568, 1.442695
        %v3625 = vpow.pop %v3624
        %v3626 = vmul.f32 %v3569, 1.442695
        %v3627 = vpow.pop %v3626
        %v3628 = vmul.f32 %v3570, 1.442695
        %v3629 = vpow.pop %v3628
        %v3630 = vmul.f32 %v3571, 1.442695
        %v3631 = vpow.pop %v3630
        %v3632 = vmul.f32 %v3572, 1.442695
        %v3633 = vpow.pop %v3632
        %v3634 = vmul.f32 %v3573, 1.442695
        %v3635 = vpow.pop %v3634
        %v3636 = vmul.f32 %v3574, 1.442695
        %v3637 = vpow.pop %v3636
        %v3638 = vmul.f32 %v3575, 1.442695
        %v3639 = vpow.pop %v3638
        %v3640 = vsel %vm2023, %v3577, 0.0
        %3641 = vadd.xlane.f32.xlu0 %v3640
        %v3642 = vpop.xlane.xlu0 %3641
        %v3643 = vsel %vm2023, %v3579, 0.0
        %3644 = vadd.xlane.f32.xlu0 %v3643
        %v3645 = vpop.xlane.xlu0 %3644
        %v3646 = vsel %vm2023, %v3581, 0.0
        %3647 = vadd.xlane.f32.xlu0 %v3646
        %v3648 = vpop.xlane.xlu0 %3647
        %v3649 = vsel %vm2023, %v3583, 0.0
        %3650 = vadd.xlane.f32.xlu0 %v3649
        %v3651 = vpop.xlane.xlu0 %3650
        %v3652 = vsel %vm2023, %v3585, 0.0
        %3653 = vadd.xlane.f32.xlu0 %v3652
        %v3654 = vpop.xlane.xlu0 %3653
        %v3655 = vsel %vm2023, %v3587, 0.0
        %3656 = vadd.xlane.f32.xlu0 %v3655
        %v3657 = vpop.xlane.xlu0 %3656
        %v3658 = vsel %vm2023, %v3589, 0.0
        %3659 = vadd.xlane.f32.xlu0 %v3658
        %v3660 = vpop.xlane.xlu0 %3659
        %v3661 = vsel %vm2023, %v3591, 0.0
        %3662 = vadd.xlane.f32.xlu0 %v3661
        %v3663 = vpop.xlane.xlu0 %3662
        %v3664 = vsel %vm2023, %v3593, 0.0
        %3665 = vadd.xlane.f32.xlu0 %v3664
        %v3666 = vpop.xlane.xlu0 %3665
        %v3667 = vsel %vm2023, %v3595, 0.0
        %3668 = vadd.xlane.f32.xlu0 %v3667
        %v3669 = vpop.xlane.xlu0 %3668
        %v3670 = vsel %vm2023, %v3597, 0.0
        %3671 = vadd.xlane.f32.xlu0 %v3670
        %v3672 = vpop.xlane.xlu0 %3671
        %v3673 = vsel %vm2023, %v3599, 0.0
        %3674 = vadd.xlane.f32.xlu0 %v3673
        %v3675 = vpop.xlane.xlu0 %3674
        %v3676 = vsel %vm2023, %v3601, 0.0
        %3677 = vadd.xlane.f32.xlu0 %v3676
        %v3678 = vpop.xlane.xlu0 %3677
        %v3679 = vsel %vm2023, %v3603, 0.0
        %3680 = vadd.xlane.f32.xlu0 %v3679
        %v3681 = vpop.xlane.xlu0 %3680
        %v3682 = vsel %vm2023, %v3605, 0.0
        %3683 = vadd.xlane.f32.xlu0 %v3682
        %v3684 = vpop.xlane.xlu0 %3683
        %v3685 = vsel %vm2023, %v3607, 0.0
        %3686 = vadd.xlane.f32.xlu0 %v3685
        %v3687 = vpop.xlane.xlu0 %3686
        %v3688 = vsel %vm2023, %v3609, 0.0
        %3689 = vadd.xlane.f32.xlu0 %v3688
        %v3690 = vpop.xlane.xlu0 %3689
        %v3691 = vsel %vm2023, %v3611, 0.0
        %3692 = vadd.xlane.f32.xlu0 %v3691
        %v3693 = vpop.xlane.xlu0 %3692
        %v3694 = vsel %vm2023, %v3613, 0.0
        %3695 = vadd.xlane.f32.xlu0 %v3694
        %v3696 = vpop.xlane.xlu0 %3695
        %v3697 = vsel %vm2023, %v3615, 0.0
        %3698 = vadd.xlane.f32.xlu0 %v3697
        %v3699 = vpop.xlane.xlu0 %3698
        %v3700 = vsel %vm2023, %v3617, 0.0
        %3701 = vadd.xlane.f32.xlu0 %v3700
        %v3702 = vpop.xlane.xlu0 %3701
        %v3703 = vsel %vm2023, %v3619, 0.0
        %3704 = vadd.xlane.f32.xlu0 %v3703
        %v3705 = vpop.xlane.xlu0 %3704
        %v3706 = vsel %vm2023, %v3621, 0.0
        %3707 = vadd.xlane.f32.xlu0 %v3706
        %v3708 = vpop.xlane.xlu0 %3707
        %v3709 = vsel %vm2023, %v3623, 0.0
        %3710 = vadd.xlane.f32.xlu0 %v3709
        %v3711 = vpop.xlane.xlu0 %3710
        %v3712 = vsel %vm2023, %v3625, 0.0
        %3713 = vadd.xlane.f32.xlu0 %v3712
        %v3714 = vpop.xlane.xlu0 %3713
        %v3715 = vsel %vm2023, %v3627, 0.0
        %3716 = vadd.xlane.f32.xlu0 %v3715
        %v3717 = vpop.xlane.xlu0 %3716
        %v3718 = vsel %vm2023, %v3629, 0.0
        %3719 = vadd.xlane.f32.xlu0 %v3718
        %v3720 = vpop.xlane.xlu0 %3719
        %v3721 = vsel %vm2023, %v3631, 0.0
        %3722 = vadd.xlane.f32.xlu0 %v3721
        %v3723 = vpop.xlane.xlu0 %3722
        %v3724 = vsel %vm2023, %v3633, 0.0
        %3725 = vadd.xlane.f32.xlu0 %v3724
        %v3726 = vpop.xlane.xlu0 %3725
        %v3727 = vsel %vm2023, %v3635, 0.0
        %3728 = vadd.xlane.f32.xlu0 %v3727
        %v3729 = vpop.xlane.xlu0 %3728
        %v3730 = vsel %vm2023, %v3637, 0.0
        %3731 = vadd.xlane.f32.xlu0 %v3730
        %v3732 = vpop.xlane.xlu0 %3731
        %v3733 = vsel %vm2023, %v3639, 0.0
        %3734 = vadd.xlane.f32.xlu0 %v3733
        %v3735 = vpop.xlane.xlu0 %3734
        %v3736 = vrcp.pop %v3642
        %v3737 = vmul.f32 %v3577, %v3736
        %v3738 = vrcp.pop %v3645
        %v3739 = vmul.f32 %v3579, %v3738
        %v3740 = vrcp.pop %v3648
        %v3741 = vmul.f32 %v3581, %v3740
        %v3742 = vrcp.pop %v3651
        %v3743 = vmul.f32 %v3583, %v3742
        %v3744 = vrcp.pop %v3654
        %v3745 = vmul.f32 %v3585, %v3744
        %v3746 = vrcp.pop %v3657
        %v3747 = vmul.f32 %v3587, %v3746
        %v3748 = vrcp.pop %v3660
        %v3749 = vmul.f32 %v3589, %v3748
        %v3750 = vrcp.pop %v3663
        %v3751 = vmul.f32 %v3591, %v3750
        %v3752 = vrcp.pop %v3666
        %v3753 = vmul.f32 %v3593, %v3752
        %v3754 = vrcp.pop %v3669
        %v3755 = vmul.f32 %v3595, %v3754
        %v3756 = vrcp.pop %v3672
        %v3757 = vmul.f32 %v3597, %v3756
        %v3758 = vrcp.pop %v3675
        %v3759 = vmul.f32 %v3599, %v3758
        %v3760 = vrcp.pop %v3678
        %v3761 = vmul.f32 %v3601, %v3760
        %v3762 = vrcp.pop %v3681
        %v3763 = vmul.f32 %v3603, %v3762
        %v3764 = vrcp.pop %v3684
        %v3765 = vmul.f32 %v3605, %v3764
        %v3766 = vrcp.pop %v3687
        %v3767 = vmul.f32 %v3607, %v3766
        %v3768 = vrcp.pop %v3690
        %v3769 = vmul.f32 %v3609, %v3768
        %v3770 = vrcp.pop %v3693
        %v3771 = vmul.f32 %v3611, %v3770
        %v3772 = vrcp.pop %v3696
        %v3773 = vmul.f32 %v3613, %v3772
        %v3774 = vrcp.pop %v3699
        %v3775 = vmul.f32 %v3615, %v3774
        %v3776 = vrcp.pop %v3702
        %v3777 = vmul.f32 %v3617, %v3776
        %v3778 = vrcp.pop %v3705
        %v3779 = vmul.f32 %v3619, %v3778
        %v3780 = vrcp.pop %v3708
        %v3781 = vmul.f32 %v3621, %v3780
        %v3782 = vrcp.pop %v3711
        %v3783 = vmul.f32 %v3623, %v3782
        %v3784 = vrcp.pop %v3714
        %v3785 = vmul.f32 %v3625, %v3784
        %v3786 = vrcp.pop %v3717
        %v3787 = vmul.f32 %v3627, %v3786
        %v3788 = vrcp.pop %v3720
        %v3789 = vmul.f32 %v3629, %v3788
        %v3790 = vrcp.pop %v3723
        %v3791 = vmul.f32 %v3631, %v3790
        %v3792 = vrcp.pop %v3726
        %v3793 = vmul.f32 %v3633, %v3792
        %v3794 = vrcp.pop %v3729
        %v3795 = vmul.f32 %v3635, %v3794
        %v3796 = vrcp.pop %v3732
        %v3797 = vmul.f32 %v3637, %v3796
        %v3798 = vrcp.pop %v3735
        %v3799 = vmul.f32 %v3639, %v3798
        %v3801 = vsel %vm2023, %v3737, 0
        %v3804 = vsel %vm2023, %v3739, 0
        %3806 = vmatprep.subr.mxu0 0.0
        %3807 = vmatpush1.msra.mxu0 %v1475
        %3808 = vmatprep.subr.mxu0 0.0
        %3809 = vmatpush1.msra.mxu0 %v1476
        %3810 = vmatprep.subr.mxu0 0.0
        %3811 = vmatpush1.msra.mxu0 0.0
        %3812 = vmatprep.subr.mxu0 0.0
        %3813 = vmatpush1.msra.mxu0 0.0
        %3814 = vmatprep.subr.mxu0 0.0
        %3815 = vmatpush1.msra.mxu0 0.0
        %3816 = vmatprep.subr.mxu0 0.0
        %3817 = vmatpush1.msra.mxu0 0.0
        %3818 = vmatprep.subr.mxu0 0.0
        %3819 = vmatpush1.msra.mxu0 0.0
        %3820 = vmatprep.subr.mxu0 0.0
        %3821 = vmatpush1.msra.mxu0 0.0
        %3822 = vmatprep.subr.mxu0 0.0
        %3823 = vmatpush1.msra.mxu0 0.0
        %3824 = vmatprep.subr.mxu0 0.0
        %3825 = vmatpush1.msra.mxu0 0.0
        %3826 = vmatprep.subr.mxu0 0.0
        %3827 = vmatpush1.msra.mxu0 0.0
        %3828 = vmatprep.subr.mxu0 0.0
        %3829 = vmatpush1.msra.mxu0 0.0
        %3830 = vmatprep.subr.mxu0 0.0
        %3831 = vmatpush1.msra.mxu0 0.0
        %3832 = vmatprep.subr.mxu0 0.0
        %3833 = vmatpush1.msra.mxu0 0.0
        %3834 = vmatprep.subr.mxu0 0.0
        %3835 = vmatpush1.msra.mxu0 0.0
        %3836 = vmatprep.subr.mxu0 0.0
        %3837 = vmatpush1.msra.mxu0 0.0
        %3838 = vmatprep.subr.mxu0 0.0
        %3839 = vmatpush1.msra.mxu0 0.0
        %3840 = vmatprep.subr.mxu0 0.0
        %3841 = vmatpush1.msra.mxu0 0.0
        %3842 = vmatprep.subr.mxu0 0.0
        %3843 = vmatpush1.msra.mxu0 0.0
        %3844 = vmatprep.subr.mxu0 0.0
        %3845 = vmatpush1.msra.mxu0 0.0
        %3846 = vmatprep.subr.mxu0 0.0
        %3847 = vmatpush1.msra.mxu0 0.0
        %3848 = vmatprep.subr.mxu0 0.0
        %3849 = vmatpush1.msra.mxu0 0.0
        %3850 = vmatprep.subr.mxu0 0.0
        %3851 = vmatpush1.msra.mxu0 0.0
        %3852 = vmatprep.subr.mxu0 0.0
        %3853 = vmatpush1.msra.mxu0 0.0
        %3854 = vmatprep.subr.mxu0 0.0
        %3855 = vmatpush1.msra.mxu0 0.0
        %3856 = vmatprep.subr.mxu0 0.0
        %3857 = vmatpush1.msra.mxu0 0.0
        %3858 = vmatprep.subr.mxu0 0.0
        %3859 = vmatpush1.msra.mxu0 0.0
        %3860 = vmatprep.subr.mxu0 0.0
        %3861 = vmatpush1.msra.mxu0 0.0
        %3862 = vmatprep.subr.mxu0 0.0
        %3863 = vmatpush1.msra.mxu0 0.0
        %3864 = vmatprep.subr.mxu0 0.0
        %3865 = vmatpush1.msra.mxu0 0.0
        %3866 = vmatprep.subr.mxu0 0.0
        %3867 = vmatpush1.msra.mxu0 0.0
        %3868 = vmatprep.subr.mxu0 0.0
        %3869 = vmatpush1.msra.mxu0 0.0
        %3870 = vmatprep.mubr.f32.mxu0 0.0
        %3871 = vmatmul.mubr.f32.gmra.mrb[0].mxu0 %v3801
        %v3872 = vpop.f32.mrb[0].mxu0
        %v3873 = vadd.f32 0.0, %v3872
        %v3874 = vpop.f32.mrb[0].mxu0
        %3875 = vmatprep.mubr.f32.mxu0 0.0
        %3876 = vmatmul.mubr.f32.gmra.mrb[0].mxu0 %v3804
        %v3877 = vpop.f32.mrb[0].mxu0
        %v3878 = vadd.f32 0.0, %v3877
        %v3879 = vpop.f32.mrb[0].mxu0
        %3880 = vdwg.mxu0
        %v3882 = vsel %vm2023, %v3741, 0
        %v3885 = vsel %vm2023, %v3743, 0
        %3887 = vmatprep.subr.mxu0 0.0
        %3888 = vmatpush1.msra.mxu0 %v1553
        %3889 = vmatprep.subr.mxu0 0.0
        %3890 = vmatpush1.msra.mxu0 %v1554
        %3891 = vmatprep.subr.mxu0 0.0
        %3892 = vmatpush1.msra.mxu0 0.0
        %3893 = vmatprep.subr.mxu0 0.0
        %3894 = vmatpush1.msra.mxu0 0.0
        %3895 = vmatprep.subr.mxu0 0.0
        %3896 = vmatpush1.msra.mxu0 0.0
        %3897 = vmatprep.subr.mxu0 0.0
        %3898 = vmatpush1.msra.mxu0 0.0
        %3899 = vmatprep.subr.mxu0 0.0
        %3900 = vmatpush1.msra.mxu0 0.0
        %3901 = vmatprep.subr.mxu0 0.0
        %3902 = vmatpush1.msra.mxu0 0.0
        %3903 = vmatprep.subr.mxu0 0.0
        %3904 = vmatpush1.msra.mxu0 0.0
        %3905 = vmatprep.subr.mxu0 0.0
        %3906 = vmatpush1.msra.mxu0 0.0
        %3907 = vmatprep.subr.mxu0 0.0
        %3908 = vmatpush1.msra.mxu0 0.0
        %3909 = vmatprep.subr.mxu0 0.0
        %3910 = vmatpush1.msra.mxu0 0.0
        %3911 = vmatprep.subr.mxu0 0.0
        %3912 = vmatpush1.msra.mxu0 0.0
        %3913 = vmatprep.subr.mxu0 0.0
        %3914 = vmatpush1.msra.mxu0 0.0
        %3915 = vmatprep.subr.mxu0 0.0
        %3916 = vmatpush1.msra.mxu0 0.0
        %3917 = vmatprep.subr.mxu0 0.0
        %3918 = vmatpush1.msra.mxu0 0.0
        %3919 = vmatprep.subr.mxu0 0.0
        %3920 = vmatpush1.msra.mxu0 0.0
        %3921 = vmatprep.subr.mxu0 0.0
        %3922 = vmatpush1.msra.mxu0 0.0
        %3923 = vmatprep.subr.mxu0 0.0
        %3924 = vmatpush1.msra.mxu0 0.0
        %3925 = vmatprep.subr.mxu0 0.0
        %3926 = vmatpush1.msra.mxu0 0.0
        %3927 = vmatprep.subr.mxu0 0.0
        %3928 = vmatpush1.msra.mxu0 0.0
        %3929 = vmatprep.subr.mxu0 0.0
        %3930 = vmatpush1.msra.mxu0 0.0
        %3931 = vmatprep.subr.mxu0 0.0
        %3932 = vmatpush1.msra.mxu0 0.0
        %3933 = vmatprep.subr.mxu0 0.0
        %3934 = vmatpush1.msra.mxu0 0.0
        %3935 = vmatprep.subr.mxu0 0.0
        %3936 = vmatpush1.msra.mxu0 0.0
        %3937 = vmatprep.subr.mxu0 0.0
        %3938 = vmatpush1.msra.mxu0 0.0
        %3939 = vmatprep.subr.mxu0 0.0
        %3940 = vmatpush1.msra.mxu0 0.0
        %3941 = vmatprep.subr.mxu0 0.0
        %3942 = vmatpush1.msra.mxu0 0.0
        %3943 = vmatprep.subr.mxu0 0.0
        %3944 = vmatpush1.msra.mxu0 0.0
        %3945 = vmatprep.subr.mxu0 0.0
        %3946 = vmatpush1.msra.mxu0 0.0
        %3947 = vmatprep.subr.mxu0 0.0
        %3948 = vmatpush1.msra.mxu0 0.0
        %3949 = vmatprep.subr.mxu0 0.0
        %3950 = vmatpush1.msra.mxu0 0.0
        %3951 = vmatprep.mubr.f32.mxu0 0.0
        %3952 = vmatmul.mubr.f32.gmra.mrb[0].mxu0 %v3882
        %v3953 = vpop.f32.mrb[0].mxu0
        %v3954 = vadd.f32 0.0, %v3953
        %v3955 = vpop.f32.mrb[0].mxu0
        %3956 = vmatprep.mubr.f32.mxu0 0.0
        %3957 = vmatmul.mubr.f32.gmra.mrb[0].mxu0 %v3885
        %v3958 = vpop.f32.mrb[0].mxu0
        %v3959 = vadd.f32 0.0, %v3958
        %v3960 = vpop.f32.mrb[0].mxu0
        %3961 = vdwg.mxu0
        %v3963 = vsel %vm2023, %v3745, 0
        %v3966 = vsel %vm2023, %v3747, 0
        %3968 = vmatprep.subr.mxu0 0.0
        %3969 = vmatpush1.msra.mxu0 %v1631
        %3970 = vmatprep.subr.mxu0 0.0
        %3971 = vmatpush1.msra.mxu0 %v1632
        %3972 = vmatprep.subr.mxu0 0.0
        %3973 = vmatpush1.msra.mxu0 0.0
        %3974 = vmatprep.subr.mxu0 0.0
        %3975 = vmatpush1.msra.mxu0 0.0
        %3976 = vmatprep.subr.mxu0 0.0
        %3977 = vmatpush1.msra.mxu0 0.0
        %3978 = vmatprep.subr.mxu0 0.0
        %3979 = vmatpush1.msra.mxu0 0.0
        %3980 = vmatprep.subr.mxu0 0.0
        %3981 = vmatpush1.msra.mxu0 0.0
        %3982 = vmatprep.subr.mxu0 0.0
        %3983 = vmatpush1.msra.mxu0 0.0
        %3984 = vmatprep.subr.mxu0 0.0
        %3985 = vmatpush1.msra.mxu0 0.0
        %3986 = vmatprep.subr.mxu0 0.0
        %3987 = vmatpush1.msra.mxu0 0.0
        %3988 = vmatprep.subr.mxu0 0.0
        %3989 = vmatpush1.msra.mxu0 0.0
        %3990 = vmatprep.subr.mxu0 0.0
        %3991 = vmatpush1.msra.mxu0 0.0
        %3992 = vmatprep.subr.mxu0 0.0
        %3993 = vmatpush1.msra.mxu0 0.0
        %3994 = vmatprep.subr.mxu0 0.0
        %3995 = vmatpush1.msra.mxu0 0.0
        %3996 = vmatprep.subr.mxu0 0.0
        %3997 = vmatpush1.msra.mxu0 0.0
        %3998 = vmatprep.subr.mxu0 0.0
        %3999 = vmatpush1.msra.mxu0 0.0
        %4000 = vmatprep.subr.mxu0 0.0
        %4001 = vmatpush1.msra.mxu0 0.0
        %4002 = vmatprep.subr.mxu0 0.0
        %4003 = vmatpush1.msra.mxu0 0.0
        %4004 = vmatprep.subr.mxu0 0.0
        %4005 = vmatpush1.msra.mxu0 0.0
        %4006 = vmatprep.subr.mxu0 0.0
        %4007 = vmatpush1.msra.mxu0 0.0
        %4008 = vmatprep.subr.mxu0 0.0
        %4009 = vmatpush1.msra.mxu0 0.0
        %4010 = vmatprep.subr.mxu0 0.0
        %4011 = vmatpush1.msra.mxu0 0.0
        %4012 = vmatprep.subr.mxu0 0.0
        %4013 = vmatpush1.msra.mxu0 0.0
        %4014 = vmatprep.subr.mxu0 0.0
        %4015 = vmatpush1.msra.mxu0 0.0
        %4016 = vmatprep.subr.mxu0 0.0
        %4017 = vmatpush1.msra.mxu0 0.0
        %4018 = vmatprep.subr.mxu0 0.0
        %4019 = vmatpush1.msra.mxu0 0.0
        %4020 = vmatprep.subr.mxu0 0.0
        %4021 = vmatpush1.msra.mxu0 0.0
        %4022 = vmatprep.subr.mxu0 0.0
        %4023 = vmatpush1.msra.mxu0 0.0
        %4024 = vmatprep.subr.mxu0 0.0
        %4025 = vmatpush1.msra.mxu0 0.0
        %4026 = vmatprep.subr.mxu0 0.0
        %4027 = vmatpush1.msra.mxu0 0.0
        %4028 = vmatprep.subr.mxu0 0.0
        %4029 = vmatpush1.msra.mxu0 0.0
        %4030 = vmatprep.subr.mxu0 0.0
        %4031 = vmatpush1.msra.mxu0 0.0
        %4032 = vmatprep.mubr.f32.mxu0 0.0
        %4033 = vmatmul.mubr.f32.gmra.mrb[0].mxu0 %v3963
        %v4034 = vpop.f32.mrb[0].mxu0
        %v4035 = vadd.f32 0.0, %v4034
        %v4036 = vpop.f32.mrb[0].mxu0
        %4037 = vmatprep.mubr.f32.mxu0 0.0
        %4038 = vmatmul.mubr.f32.gmra.mrb[0].mxu0 %v3966
        %v4039 = vpop.f32.mrb[0].mxu0
        %v4040 = vadd.f32 0.0, %v4039
        %v4041 = vpop.f32.mrb[0].mxu0
        %4042 = vdwg.mxu0
        %v4044 = vsel %vm2023, %v3749, 0
        %v4047 = vsel %vm2023, %v3751, 0
        %4049 = vmatprep.subr.mxu0 0.0
        %4050 = vmatpush1.msra.mxu0 %v1709
        %4051 = vmatprep.subr.mxu0 0.0
        %4052 = vmatpush1.msra.mxu0 %v1710
        %4053 = vmatprep.subr.mxu0 0.0
        %4054 = vmatpush1.msra.mxu0 0.0
        %4055 = vmatprep.subr.mxu0 0.0
        %4056 = vmatpush1.msra.mxu0 0.0
        %4057 = vmatprep.subr.mxu0 0.0
        %4058 = vmatpush1.msra.mxu0 0.0
        %4059 = vmatprep.subr.mxu0 0.0
        %4060 = vmatpush1.msra.mxu0 0.0
        %4061 = vmatprep.subr.mxu0 0.0
        %4062 = vmatpush1.msra.mxu0 0.0
        %4063 = vmatprep.subr.mxu0 0.0
        %4064 = vmatpush1.msra.mxu0 0.0
        %4065 = vmatprep.subr.mxu0 0.0
        %4066 = vmatpush1.msra.mxu0 0.0
        %4067 = vmatprep.subr.mxu0 0.0
        %4068 = vmatpush1.msra.mxu0 0.0
        %4069 = vmatprep.subr.mxu0 0.0
        %4070 = vmatpush1.msra.mxu0 0.0
        %4071 = vmatprep.subr.mxu0 0.0
        %4072 = vmatpush1.msra.mxu0 0.0
        %4073 = vmatprep.subr.mxu0 0.0
        %4074 = vmatpush1.msra.mxu0 0.0
        %4075 = vmatprep.subr.mxu0 0.0
        %4076 = vmatpush1.msra.mxu0 0.0
        %4077 = vmatprep.subr.mxu0 0.0
        %4078 = vmatpush1.msra.mxu0 0.0
        %4079 = vmatprep.subr.mxu0 0.0
        %4080 = vmatpush1.msra.mxu0 0.0
        %4081 = vmatprep.subr.mxu0 0.0
        %4082 = vmatpush1.msra.mxu0 0.0
        %4083 = vmatprep.subr.mxu0 0.0
        %4084 = vmatpush1.msra.mxu0 0.0
        %4085 = vmatprep.subr.mxu0 0.0
        %4086 = vmatpush1.msra.mxu0 0.0
        %4087 = vmatprep.subr.mxu0 0.0
        %4088 = vmatpush1.msra.mxu0 0.0
        %4089 = vmatprep.subr.mxu0 0.0
        %4090 = vmatpush1.msra.mxu0 0.0
        %4091 = vmatprep.subr.mxu0 0.0
        %4092 = vmatpush1.msra.mxu0 0.0
        %4093 = vmatprep.subr.mxu0 0.0
        %4094 = vmatpush1.msra.mxu0 0.0
        %4095 = vmatprep.subr.mxu0 0.0
        %4096 = vmatpush1.msra.mxu0 0.0
        %4097 = vmatprep.subr.mxu0 0.0
        %4098 = vmatpush1.msra.mxu0 0.0
        %4099 = vmatprep.subr.mxu0 0.0
        %4100 = vmatpush1.msra.mxu0 0.0
        %4101 = vmatprep.subr.mxu0 0.0
        %4102 = vmatpush1.msra.mxu0 0.0
        %4103 = vmatprep.subr.mxu0 0.0
        %4104 = vmatpush1.msra.mxu0 0.0
        %4105 = vmatprep.subr.mxu0 0.0
        %4106 = vmatpush1.msra.mxu0 0.0
        %4107 = vmatprep.subr.mxu0 0.0
        %4108 = vmatpush1.msra.mxu0 0.0
        %4109 = vmatprep.subr.mxu0 0.0
        %4110 = vmatpush1.msra.mxu0 0.0
        %4111 = vmatprep.subr.mxu0 0.0
        %4112 = vmatpush1.msra.mxu0 0.0
        %4113 = vmatprep.mubr.f32.mxu0 0.0
        %4114 = vmatmul.mubr.f32.gmra.mrb[0].mxu0 %v4044
        %v4115 = vpop.f32.mrb[0].mxu0
        %v4116 = vadd.f32 0.0, %v4115
        %v4117 = vpop.f32.mrb[0].mxu0
        %4118 = vmatprep.mubr.f32.mxu0 0.0
        %4119 = vmatmul.mubr.f32.gmra.mrb[0].mxu0 %v4047
        %v4120 = vpop.f32.mrb[0].mxu0
        %v4121 = vadd.f32 0.0, %v4120
        %v4122 = vpop.f32.mrb[0].mxu0
        %4123 = vdwg.mxu0
        %v4125 = vsel %vm2023, %v3753, 0
        %v4128 = vsel %vm2023, %v3755, 0
        %4130 = vmatprep.subr.mxu0 0.0
        %4131 = vmatpush1.msra.mxu0 %v1787
        %4132 = vmatprep.subr.mxu0 0.0
        %4133 = vmatpush1.msra.mxu0 %v1788
        %4134 = vmatprep.subr.mxu0 0.0
        %4135 = vmatpush1.msra.mxu0 0.0
        %4136 = vmatprep.subr.mxu0 0.0
        %4137 = vmatpush1.msra.mxu0 0.0
        %4138 = vmatprep.subr.mxu0 0.0
        %4139 = vmatpush1.msra.mxu0 0.0
        %4140 = vmatprep.subr.mxu0 0.0
        %4141 = vmatpush1.msra.mxu0 0.0
        %4142 = vmatprep.subr.mxu0 0.0
        %4143 = vmatpush1.msra.mxu0 0.0
        %4144 = vmatprep.subr.mxu0 0.0
        %4145 = vmatpush1.msra.mxu0 0.0
        %4146 = vmatprep.subr.mxu0 0.0
        %4147 = vmatpush1.msra.mxu0 0.0
        %4148 = vmatprep.subr.mxu0 0.0
        %4149 = vmatpush1.msra.mxu0 0.0
        %4150 = vmatprep.subr.mxu0 0.0
        %4151 = vmatpush1.msra.mxu0 0.0
        %4152 = vmatprep.subr.mxu0 0.0
        %4153 = vmatpush1.msra.mxu0 0.0
        %4154 = vmatprep.subr.mxu0 0.0
        %4155 = vmatpush1.msra.mxu0 0.0
        %4156 = vmatprep.subr.mxu0 0.0
        %4157 = vmatpush1.msra.mxu0 0.0
        %4158 = vmatprep.subr.mxu0 0.0
        %4159 = vmatpush1.msra.mxu0 0.0
        %4160 = vmatprep.subr.mxu0 0.0
        %4161 = vmatpush1.msra.mxu0 0.0
        %4162 = vmatprep.subr.mxu0 0.0
        %4163 = vmatpush1.msra.mxu0 0.0
        %4164 = vmatprep.subr.mxu0 0.0
        %4165 = vmatpush1.msra.mxu0 0.0
        %4166 = vmatprep.subr.mxu0 0.0
        %4167 = vmatpush1.msra.mxu0 0.0
        %4168 = vmatprep.subr.mxu0 0.0
        %4169 = vmatpush1.msra.mxu0 0.0
        %4170 = vmatprep.subr.mxu0 0.0
        %4171 = vmatpush1.msra.mxu0 0.0
        %4172 = vmatprep.subr.mxu0 0.0
        %4173 = vmatpush1.msra.mxu0 0.0
        %4174 = vmatprep.subr.mxu0 0.0
        %4175 = vmatpush1.msra.mxu0 0.0
        %4176 = vmatprep.subr.mxu0 0.0
        %4177 = vmatpush1.msra.mxu0 0.0
        %4178 = vmatprep.subr.mxu0 0.0
        %4179 = vmatpush1.msra.mxu0 0.0
        %4180 = vmatprep.subr.mxu0 0.0
        %4181 = vmatpush1.msra.mxu0 0.0
        %4182 = vmatprep.subr.mxu0 0.0
        %4183 = vmatpush1.msra.mxu0 0.0
        %4184 = vmatprep.subr.mxu0 0.0
        %4185 = vmatpush1.msra.mxu0 0.0
        %4186 = vmatprep.subr.mxu0 0.0
        %4187 = vmatpush1.msra.mxu0 0.0
        %4188 = vmatprep.subr.mxu0 0.0
        %4189 = vmatpush1.msra.mxu0 0.0
        %4190 = vmatprep.subr.mxu0 0.0
        %4191 = vmatpush1.msra.mxu0 0.0
        %4192 = vmatprep.subr.mxu0 0.0
        %4193 = vmatpush1.msra.mxu0 0.0
        %4194 = vmatprep.mubr.f32.mxu0 0.0
        %4195 = vmatmul.mubr.f32.gmra.mrb[0].mxu0 %v4125
        %v4196 = vpop.f32.mrb[0].mxu0
        %v4197 = vadd.f32 0.0, %v4196
        %v4198 = vpop.f32.mrb[0].mxu0
        %4199 = vmatprep.mubr.f32.mxu0 0.0
        %4200 = vmatmul.mubr.f32.gmra.mrb[0].mxu0 %v4128
        %v4201 = vpop.f32.mrb[0].mxu0
        %v4202 = vadd.f32 0.0, %v4201
        %v4203 = vpop.f32.mrb[0].mxu0
        %4204 = vdwg.mxu0
        %v4206 = vsel %vm2023, %v3757, 0
        %v4209 = vsel %vm2023, %v3759, 0
        %4211 = vmatprep.subr.mxu0 0.0
        %4212 = vmatpush1.msra.mxu0 %v1865
        %4213 = vmatprep.subr.mxu0 0.0
        %4214 = vmatpush1.msra.mxu0 %v1866
        %4215 = vmatprep.subr.mxu0 0.0
        %4216 = vmatpush1.msra.mxu0 0.0
        %4217 = vmatprep.subr.mxu0 0.0
        %4218 = vmatpush1.msra.mxu0 0.0
        %4219 = vmatprep.subr.mxu0 0.0
        %4220 = vmatpush1.msra.mxu0 0.0
        %4221 = vmatprep.subr.mxu0 0.0
        %4222 = vmatpush1.msra.mxu0 0.0
        %4223 = vmatprep.subr.mxu0 0.0
        %4224 = vmatpush1.msra.mxu0 0.0
        %4225 = vmatprep.subr.mxu0 0.0
        %4226 = vmatpush1.msra.mxu0 0.0
        %4227 = vmatprep.subr.mxu0 0.0
        %4228 = vmatpush1.msra.mxu0 0.0
        %4229 = vmatprep.subr.mxu0 0.0
        %4230 = vmatpush1.msra.mxu0 0.0
        %4231 = vmatprep.subr.mxu0 0.0
        %4232 = vmatpush1.msra.mxu0 0.0
        %4233 = vmatprep.subr.mxu0 0.0
        %4234 = vmatpush1.msra.mxu0 0.0
        %4235 = vmatprep.subr.mxu0 0.0
        %4236 = vmatpush1.msra.mxu0 0.0
        %4237 = vmatprep.subr.mxu0 0.0
        %4238 = vmatpush1.msra.mxu0 0.0
        %4239 = vmatprep.subr.mxu0 0.0
        %4240 = vmatpush1.msra.mxu0 0.0
        %4241 = vmatprep.subr.mxu0 0.0
        %4242 = vmatpush1.msra.mxu0 0.0
        %4243 = vmatprep.subr.mxu0 0.0
        %4244 = vmatpush1.msra.mxu0 0.0
        %4245 = vmatprep.subr.mxu0 0.0
        %4246 = vmatpush1.msra.mxu0 0.0
        %4247 = vmatprep.subr.mxu0 0.0
        %4248 = vmatpush1.msra.mxu0 0.0
        %4249 = vmatprep.subr.mxu0 0.0
        %4250 = vmatpush1.msra.mxu0 0.0
        %4251 = vmatprep.subr.mxu0 0.0
        %4252 = vmatpush1.msra.mxu0 0.0
        %4253 = vmatprep.subr.mxu0 0.0
        %4254 = vmatpush1.msra.mxu0 0.0
        %4255 = vmatprep.subr.mxu0 0.0
        %4256 = vmatpush1.msra.mxu0 0.0
        %4257 = vmatprep.subr.mxu0 0.0
        %4258 = vmatpush1.msra.mxu0 0.0
        %4259 = vmatprep.subr.mxu0 0.0
        %4260 = vmatpush1.msra.mxu0 0.0
        %4261 = vmatprep.subr.mxu0 0.0
        %4262 = vmatpush1.msra.mxu0 0.0
        %4263 = vmatprep.subr.mxu0 0.0
        %4264 = vmatpush1.msra.mxu0 0.0
        %4265 = vmatprep.subr.mxu0 0.0
        %4266 = vmatpush1.msra.mxu0 0.0
        %4267 = vmatprep.subr.mxu0 0.0
        %4268 = vmatpush1.msra.mxu0 0.0
        %4269 = vmatprep.subr.mxu0 0.0
        %4270 = vmatpush1.msra.mxu0 0.0
        %4271 = vmatprep.subr.mxu0 0.0
        %4272 = vmatpush1.msra.mxu0 0.0
        %4273 = vmatprep.subr.mxu0 0.0
        %4274 = vmatpush1.msra.mxu0 0.0
        %4275 = vmatprep.mubr.f32.mxu0 0.0
        %4276 = vmatmul.mubr.f32.gmra.mrb[0].mxu0 %v4206
        %v4277 = vpop.f32.mrb[0].mxu0
        %v4278 = vadd.f32 0.0, %v4277
        %v4279 = vpop.f32.mrb[0].mxu0
        %4280 = vmatprep.mubr.f32.mxu0 0.0
        %4281 = vmatmul.mubr.f32.gmra.mrb[0].mxu0 %v4209
        %v4282 = vpop.f32.mrb[0].mxu0
        %v4283 = vadd.f32 0.0, %v4282
        %v4284 = vpop.f32.mrb[0].mxu0
        %4285 = vdwg.mxu0
        %v4287 = vsel %vm2023, %v3761, 0
        %v4290 = vsel %vm2023, %v3763, 0
        %4292 = vmatprep.subr.mxu0 0.0
        %4293 = vmatpush1.msra.mxu0 %v1943
        %4294 = vmatprep.subr.mxu0 0.0
        %4295 = vmatpush1.msra.mxu0 %v1944
        %4296 = vmatprep.subr.mxu0 0.0
        %4297 = vmatpush1.msra.mxu0 0.0
        %4298 = vmatprep.subr.mxu0 0.0
        %4299 = vmatpush1.msra.mxu0 0.0
        %4300 = vmatprep.subr.mxu0 0.0
        %4301 = vmatpush1.msra.mxu0 0.0
        %4302 = vmatprep.subr.mxu0 0.0
        %4303 = vmatpush1.msra.mxu0 0.0
        %4304 = vmatprep.subr.mxu0 0.0
        %4305 = vmatpush1.msra.mxu0 0.0
        %4306 = vmatprep.subr.mxu0 0.0
        %4307 = vmatpush1.msra.mxu0 0.0
        %4308 = vmatprep.subr.mxu0 0.0
        %4309 = vmatpush1.msra.mxu0 0.0
        %4310 = vmatprep.subr.mxu0 0.0
        %4311 = vmatpush1.msra.mxu0 0.0
        %4312 = vmatprep.subr.mxu0 0.0
        %4313 = vmatpush1.msra.mxu0 0.0
        %4314 = vmatprep.subr.mxu0 0.0
        %4315 = vmatpush1.msra.mxu0 0.0
        %4316 = vmatprep.subr.mxu0 0.0
        %4317 = vmatpush1.msra.mxu0 0.0
        %4318 = vmatprep.subr.mxu0 0.0
        %4319 = vmatpush1.msra.mxu0 0.0
        %4320 = vmatprep.subr.mxu0 0.0
        %4321 = vmatpush1.msra.mxu0 0.0
        %4322 = vmatprep.subr.mxu0 0.0
        %4323 = vmatpush1.msra.mxu0 0.0
        %4324 = vmatprep.subr.mxu0 0.0
        %4325 = vmatpush1.msra.mxu0 0.0
        %4326 = vmatprep.subr.mxu0 0.0
        %4327 = vmatpush1.msra.mxu0 0.0
        %4328 = vmatprep.subr.mxu0 0.0
        %4329 = vmatpush1.msra.mxu0 0.0
        %4330 = vmatprep.subr.mxu0 0.0
        %4331 = vmatpush1.msra.mxu0 0.0
        %4332 = vmatprep.subr.mxu0 0.0
        %4333 = vmatpush1.msra.mxu0 0.0
        %4334 = vmatprep.subr.mxu0 0.0
        %4335 = vmatpush1.msra.mxu0 0.0
        %4336 = vmatprep.subr.mxu0 0.0
        %4337 = vmatpush1.msra.mxu0 0.0
        %4338 = vmatprep.subr.mxu0 0.0
        %4339 = vmatpush1.msra.mxu0 0.0
        %4340 = vmatprep.subr.mxu0 0.0
        %4341 = vmatpush1.msra.mxu0 0.0
        %4342 = vmatprep.subr.mxu0 0.0
        %4343 = vmatpush1.msra.mxu0 0.0
        %4344 = vmatprep.subr.mxu0 0.0
        %4345 = vmatpush1.msra.mxu0 0.0
        %4346 = vmatprep.subr.mxu0 0.0
        %4347 = vmatpush1.msra.mxu0 0.0
        %4348 = vmatprep.subr.mxu0 0.0
        %4349 = vmatpush1.msra.mxu0 0.0
        %4350 = vmatprep.subr.mxu0 0.0
        %4351 = vmatpush1.msra.mxu0 0.0
        %4352 = vmatprep.subr.mxu0 0.0
        %4353 = vmatpush1.msra.mxu0 0.0
        %4354 = vmatprep.subr.mxu0 0.0
        %4355 = vmatpush1.msra.mxu0 0.0
        %4356 = vmatprep.mubr.f32.mxu0 0.0
        %4357 = vmatmul.mubr.f32.gmra.mrb[0].mxu0 %v4287
        %v4358 = vpop.f32.mrb[0].mxu0
        %v4359 = vadd.f32 0.0, %v4358
        %v4360 = vpop.f32.mrb[0].mxu0
        %4361 = vmatprep.mubr.f32.mxu0 0.0
        %4362 = vmatmul.mubr.f32.gmra.mrb[0].mxu0 %v4290
        %v4363 = vpop.f32.mrb[0].mxu0
        %v4364 = vadd.f32 0.0, %v4363
        %v4365 = vpop.f32.mrb[0].mxu0
        %4366 = vdwg.mxu0
        %v4368 = vsel %vm2023, %v3765, 0
        %v4371 = vsel %vm2023, %v3767, 0
        %4373 = vmatprep.subr.mxu0 0.0
        %4374 = vmatpush1.msra.mxu0 %v2021
        %4375 = vmatprep.subr.mxu0 0.0
        %4376 = vmatpush1.msra.mxu0 %v2022
        %4377 = vmatprep.subr.mxu0 0.0
        %4378 = vmatpush1.msra.mxu0 0.0
        %4379 = vmatprep.subr.mxu0 0.0
        %4380 = vmatpush1.msra.mxu0 0.0
        %4381 = vmatprep.subr.mxu0 0.0
        %4382 = vmatpush1.msra.mxu0 0.0
        %4383 = vmatprep.subr.mxu0 0.0
        %4384 = vmatpush1.msra.mxu0 0.0
        %4385 = vmatprep.subr.mxu0 0.0
        %4386 = vmatpush1.msra.mxu0 0.0
        %4387 = vmatprep.subr.mxu0 0.0
        %4388 = vmatpush1.msra.mxu0 0.0
        %4389 = vmatprep.subr.mxu0 0.0
        %4390 = vmatpush1.msra.mxu0 0.0
        %4391 = vmatprep.subr.mxu0 0.0
        %4392 = vmatpush1.msra.mxu0 0.0
        %4393 = vmatprep.subr.mxu0 0.0
        %4394 = vmatpush1.msra.mxu0 0.0
        %4395 = vmatprep.subr.mxu0 0.0
        %4396 = vmatpush1.msra.mxu0 0.0
        %4397 = vmatprep.subr.mxu0 0.0
        %4398 = vmatpush1.msra.mxu0 0.0
        %4399 = vmatprep.subr.mxu0 0.0
        %4400 = vmatpush1.msra.mxu0 0.0
        %4401 = vmatprep.subr.mxu0 0.0
        %4402 = vmatpush1.msra.mxu0 0.0
        %4403 = vmatprep.subr.mxu0 0.0
        %4404 = vmatpush1.msra.mxu0 0.0
        %4405 = vmatprep.subr.mxu0 0.0
        %4406 = vmatpush1.msra.mxu0 0.0
        %4407 = vmatprep.subr.mxu0 0.0
        %4408 = vmatpush1.msra.mxu0 0.0
        %4409 = vmatprep.subr.mxu0 0.0
        %4410 = vmatpush1.msra.mxu0 0.0
        %4411 = vmatprep.subr.mxu0 0.0
        %4412 = vmatpush1.msra.mxu0 0.0
        %4413 = vmatprep.subr.mxu0 0.0
        %4414 = vmatpush1.msra.mxu0 0.0
        %4415 = vmatprep.subr.mxu0 0.0
        %4416 = vmatpush1.msra.mxu0 0.0
        %4417 = vmatprep.subr.mxu0 0.0
        %4418 = vmatpush1.msra.mxu0 0.0
        %4419 = vmatprep.subr.mxu0 0.0
        %4420 = vmatpush1.msra.mxu0 0.0
        %4421 = vmatprep.subr.mxu0 0.0
        %4422 = vmatpush1.msra.mxu0 0.0
        %4423 = vmatprep.subr.mxu0 0.0
        %4424 = vmatpush1.msra.mxu0 0.0
        %4425 = vmatprep.subr.mxu0 0.0
        %4426 = vmatpush1.msra.mxu0 0.0
        %4427 = vmatprep.subr.mxu0 0.0
        %4428 = vmatpush1.msra.mxu0 0.0
        %4429 = vmatprep.subr.mxu0 0.0
        %4430 = vmatpush1.msra.mxu0 0.0
        %4431 = vmatprep.subr.mxu0 0.0
        %4432 = vmatpush1.msra.mxu0 0.0
        %4433 = vmatprep.subr.mxu0 0.0
        %4434 = vmatpush1.msra.mxu0 0.0
        %4435 = vmatprep.subr.mxu0 0.0
        %4436 = vmatpush1.msra.mxu0 0.0
        %4437 = vmatprep.mubr.f32.mxu0 0.0
        %4438 = vmatmul.mubr.f32.gmra.mrb[0].mxu0 %v4368
        %v4439 = vpop.f32.mrb[0].mxu0
        %v4440 = vadd.f32 0.0, %v4439
        %v4441 = vpop.f32.mrb[0].mxu0
        %4442 = vmatprep.mubr.f32.mxu0 0.0
        %4443 = vmatmul.mubr.f32.gmra.mrb[0].mxu0 %v4371
        %v4444 = vpop.f32.mrb[0].mxu0
        %v4445 = vadd.f32 0.0, %v4444
        %v4446 = vpop.f32.mrb[0].mxu0
        %4447 = vdwg.mxu0
        %v4449 = vsel %vm2023, %v3769, 0
        %v4452 = vsel %vm2023, %v3771, 0
        %4454 = vmatprep.subr.mxu0 0.0
        %4455 = vmatpush1.msra.mxu0 %v851
        %4456 = vmatprep.subr.mxu0 0.0
        %4457 = vmatpush1.msra.mxu0 %v852
        %4458 = vmatprep.subr.mxu0 0.0
        %4459 = vmatpush1.msra.mxu0 0.0
        %4460 = vmatprep.subr.mxu0 0.0
        %4461 = vmatpush1.msra.mxu0 0.0
        %4462 = vmatprep.subr.mxu0 0.0
        %4463 = vmatpush1.msra.mxu0 0.0
        %4464 = vmatprep.subr.mxu0 0.0
        %4465 = vmatpush1.msra.mxu0 0.0
        %4466 = vmatprep.subr.mxu0 0.0
        %4467 = vmatpush1.msra.mxu0 0.0
        %4468 = vmatprep.subr.mxu0 0.0
        %4469 = vmatpush1.msra.mxu0 0.0
        %4470 = vmatprep.subr.mxu0 0.0
        %4471 = vmatpush1.msra.mxu0 0.0
        %4472 = vmatprep.subr.mxu0 0.0
        %4473 = vmatpush1.msra.mxu0 0.0
        %4474 = vmatprep.subr.mxu0 0.0
        %4475 = vmatpush1.msra.mxu0 0.0
        %4476 = vmatprep.subr.mxu0 0.0
        %4477 = vmatpush1.msra.mxu0 0.0
        %4478 = vmatprep.subr.mxu0 0.0
        %4479 = vmatpush1.msra.mxu0 0.0
        %4480 = vmatprep.subr.mxu0 0.0
        %4481 = vmatpush1.msra.mxu0 0.0
        %4482 = vmatprep.subr.mxu0 0.0
        %4483 = vmatpush1.msra.mxu0 0.0
        %4484 = vmatprep.subr.mxu0 0.0
        %4485 = vmatpush1.msra.mxu0 0.0
        %4486 = vmatprep.subr.mxu0 0.0
        %4487 = vmatpush1.msra.mxu0 0.0
        %4488 = vmatprep.subr.mxu0 0.0
        %4489 = vmatpush1.msra.mxu0 0.0
        %4490 = vmatprep.subr.mxu0 0.0
        %4491 = vmatpush1.msra.mxu0 0.0
        %4492 = vmatprep.subr.mxu0 0.0
        %4493 = vmatpush1.msra.mxu0 0.0
        %4494 = vmatprep.subr.mxu0 0.0
        %4495 = vmatpush1.msra.mxu0 0.0
        %4496 = vmatprep.subr.mxu0 0.0
        %4497 = vmatpush1.msra.mxu0 0.0
        %4498 = vmatprep.subr.mxu0 0.0
        %4499 = vmatpush1.msra.mxu0 0.0
        %4500 = vmatprep.subr.mxu0 0.0
        %4501 = vmatpush1.msra.mxu0 0.0
        %4502 = vmatprep.subr.mxu0 0.0
        %4503 = vmatpush1.msra.mxu0 0.0
        %4504 = vmatprep.subr.mxu0 0.0
        %4505 = vmatpush1.msra.mxu0 0.0
        %4506 = vmatprep.subr.mxu0 0.0
        %4507 = vmatpush1.msra.mxu0 0.0
        %4508 = vmatprep.subr.mxu0 0.0
        %4509 = vmatpush1.msra.mxu0 0.0
        %4510 = vmatprep.subr.mxu0 0.0
        %4511 = vmatpush1.msra.mxu0 0.0
        %4512 = vmatprep.subr.mxu0 0.0
        %4513 = vmatpush1.msra.mxu0 0.0
        %4514 = vmatprep.subr.mxu0 0.0
        %4515 = vmatpush1.msra.mxu0 0.0
        %4516 = vmatprep.subr.mxu0 0.0
        %4517 = vmatpush1.msra.mxu0 0.0
        %4518 = vmatprep.mubr.f32.mxu0 0.0
        %4519 = vmatmul.mubr.f32.gmra.mrb[0].mxu0 %v4449
        %v4520 = vpop.f32.mrb[0].mxu0
        %v4521 = vadd.f32 0.0, %v4520
        %v4522 = vpop.f32.mrb[0].mxu0
        %4523 = vmatprep.mubr.f32.mxu0 0.0
        %4524 = vmatmul.mubr.f32.gmra.mrb[0].mxu0 %v4452
        %v4525 = vpop.f32.mrb[0].mxu0
        %v4526 = vadd.f32 0.0, %v4525
        %v4527 = vpop.f32.mrb[0].mxu0
        %4528 = vdwg.mxu0
        %v4530 = vsel %vm2023, %v3773, 0
        %v4533 = vsel %vm2023, %v3775, 0
        %4535 = vmatprep.subr.mxu0 0.0
        %4536 = vmatpush1.msra.mxu0 %v929
        %4537 = vmatprep.subr.mxu0 0.0
        %4538 = vmatpush1.msra.mxu0 %v930
        %4539 = vmatprep.subr.mxu0 0.0
        %4540 = vmatpush1.msra.mxu0 0.0
        %4541 = vmatprep.subr.mxu0 0.0
        %4542 = vmatpush1.msra.mxu0 0.0
        %4543 = vmatprep.subr.mxu0 0.0
        %4544 = vmatpush1.msra.mxu0 0.0
        %4545 = vmatprep.subr.mxu0 0.0
        %4546 = vmatpush1.msra.mxu0 0.0
        %4547 = vmatprep.subr.mxu0 0.0
        %4548 = vmatpush1.msra.mxu0 0.0
        %4549 = vmatprep.subr.mxu0 0.0
        %4550 = vmatpush1.msra.mxu0 0.0
        %4551 = vmatprep.subr.mxu0 0.0
        %4552 = vmatpush1.msra.mxu0 0.0
        %4553 = vmatprep.subr.mxu0 0.0
        %4554 = vmatpush1.msra.mxu0 0.0
        %4555 = vmatprep.subr.mxu0 0.0
        %4556 = vmatpush1.msra.mxu0 0.0
        %4557 = vmatprep.subr.mxu0 0.0
        %4558 = vmatpush1.msra.mxu0 0.0
        %4559 = vmatprep.subr.mxu0 0.0
        %4560 = vmatpush1.msra.mxu0 0.0
        %4561 = vmatprep.subr.mxu0 0.0
        %4562 = vmatpush1.msra.mxu0 0.0
        %4563 = vmatprep.subr.mxu0 0.0
        %4564 = vmatpush1.msra.mxu0 0.0
        %4565 = vmatprep.subr.mxu0 0.0
        %4566 = vmatpush1.msra.mxu0 0.0
        %4567 = vmatprep.subr.mxu0 0.0
        %4568 = vmatpush1.msra.mxu0 0.0
        %4569 = vmatprep.subr.mxu0 0.0
        %4570 = vmatpush1.msra.mxu0 0.0
        %4571 = vmatprep.subr.mxu0 0.0
        %4572 = vmatpush1.msra.mxu0 0.0
        %4573 = vmatprep.subr.mxu0 0.0
        %4574 = vmatpush1.msra.mxu0 0.0
        %4575 = vmatprep.subr.mxu0 0.0
        %4576 = vmatpush1.msra.mxu0 0.0
        %4577 = vmatprep.subr.mxu0 0.0
        %4578 = vmatpush1.msra.mxu0 0.0
        %4579 = vmatprep.subr.mxu0 0.0
        %4580 = vmatpush1.msra.mxu0 0.0
        %4581 = vmatprep.subr.mxu0 0.0
        %4582 = vmatpush1.msra.mxu0 0.0
        %4583 = vmatprep.subr.mxu0 0.0
        %4584 = vmatpush1.msra.mxu0 0.0
        %4585 = vmatprep.subr.mxu0 0.0
        %4586 = vmatpush1.msra.mxu0 0.0
        %4587 = vmatprep.subr.mxu0 0.0
        %4588 = vmatpush1.msra.mxu0 0.0
        %4589 = vmatprep.subr.mxu0 0.0
        %4590 = vmatpush1.msra.mxu0 0.0
        %4591 = vmatprep.subr.mxu0 0.0
        %4592 = vmatpush1.msra.mxu0 0.0
        %4593 = vmatprep.subr.mxu0 0.0
        %4594 = vmatpush1.msra.mxu0 0.0
        %4595 = vmatprep.subr.mxu0 0.0
        %4596 = vmatpush1.msra.mxu0 0.0
        %4597 = vmatprep.subr.mxu0 0.0
        %4598 = vmatpush1.msra.mxu0 0.0
        %4599 = vmatprep.mubr.f32.mxu0 0.0
        %4600 = vmatmul.mubr.f32.gmra.mrb[0].mxu0 %v4530
        %v4601 = vpop.f32.mrb[0].mxu0
        %v4602 = vadd.f32 0.0, %v4601
        %v4603 = vpop.f32.mrb[0].mxu0
        %4604 = vmatprep.mubr.f32.mxu0 0.0
        %4605 = vmatmul.mubr.f32.gmra.mrb[0].mxu0 %v4533
        %v4606 = vpop.f32.mrb[0].mxu0
        %v4607 = vadd.f32 0.0, %v4606
        %v4608 = vpop.f32.mrb[0].mxu0
        %4609 = vdwg.mxu0
        %v4611 = vsel %vm2023, %v3777, 0
        %v4614 = vsel %vm2023, %v3779, 0
        %4616 = vmatprep.subr.mxu0 0.0
        %4617 = vmatpush1.msra.mxu0 %v1007
        %4618 = vmatprep.subr.mxu0 0.0
        %4619 = vmatpush1.msra.mxu0 %v1008
        %4620 = vmatprep.subr.mxu0 0.0
        %4621 = vmatpush1.msra.mxu0 0.0
        %4622 = vmatprep.subr.mxu0 0.0
        %4623 = vmatpush1.msra.mxu0 0.0
        %4624 = vmatprep.subr.mxu0 0.0
        %4625 = vmatpush1.msra.mxu0 0.0
        %4626 = vmatprep.subr.mxu0 0.0
        %4627 = vmatpush1.msra.mxu0 0.0
        %4628 = vmatprep.subr.mxu0 0.0
        %4629 = vmatpush1.msra.mxu0 0.0
        %4630 = vmatprep.subr.mxu0 0.0
        %4631 = vmatpush1.msra.mxu0 0.0
        %4632 = vmatprep.subr.mxu0 0.0
        %4633 = vmatpush1.msra.mxu0 0.0
        %4634 = vmatprep.subr.mxu0 0.0
        %4635 = vmatpush1.msra.mxu0 0.0
        %4636 = vmatprep.subr.mxu0 0.0
        %4637 = vmatpush1.msra.mxu0 0.0
        %4638 = vmatprep.subr.mxu0 0.0
        %4639 = vmatpush1.msra.mxu0 0.0
        %4640 = vmatprep.subr.mxu0 0.0
        %4641 = vmatpush1.msra.mxu0 0.0
        %4642 = vmatprep.subr.mxu0 0.0
        %4643 = vmatpush1.msra.mxu0 0.0
        %4644 = vmatprep.subr.mxu0 0.0
        %4645 = vmatpush1.msra.mxu0 0.0
        %4646 = vmatprep.subr.mxu0 0.0
        %4647 = vmatpush1.msra.mxu0 0.0
        %4648 = vmatprep.subr.mxu0 0.0
        %4649 = vmatpush1.msra.mxu0 0.0
        %4650 = vmatprep.subr.mxu0 0.0
        %4651 = vmatpush1.msra.mxu0 0.0
        %4652 = vmatprep.subr.mxu0 0.0
        %4653 = vmatpush1.msra.mxu0 0.0
        %4654 = vmatprep.subr.mxu0 0.0
        %4655 = vmatpush1.msra.mxu0 0.0
        %4656 = vmatprep.subr.mxu0 0.0
        %4657 = vmatpush1.msra.mxu0 0.0
        %4658 = vmatprep.subr.mxu0 0.0
        %4659 = vmatpush1.msra.mxu0 0.0
        %4660 = vmatprep.subr.mxu0 0.0
        %4661 = vmatpush1.msra.mxu0 0.0
        %4662 = vmatprep.subr.mxu0 0.0
        %4663 = vmatpush1.msra.mxu0 0.0
        %4664 = vmatprep.subr.mxu0 0.0
        %4665 = vmatpush1.msra.mxu0 0.0
        %4666 = vmatprep.subr.mxu0 0.0
        %4667 = vmatpush1.msra.mxu0 0.0
        %4668 = vmatprep.subr.mxu0 0.0
        %4669 = vmatpush1.msra.mxu0 0.0
        %4670 = vmatprep.subr.mxu0 0.0
        %4671 = vmatpush1.msra.mxu0 0.0
        %4672 = vmatprep.subr.mxu0 0.0
        %4673 = vmatpush1.msra.mxu0 0.0
        %4674 = vmatprep.subr.mxu0 0.0
        %4675 = vmatpush1.msra.mxu0 0.0
        %4676 = vmatprep.subr.mxu0 0.0
        %4677 = vmatpush1.msra.mxu0 0.0
        %4678 = vmatprep.subr.mxu0 0.0
        %4679 = vmatpush1.msra.mxu0 0.0
        %4680 = vmatprep.mubr.f32.mxu0 0.0
        %4681 = vmatmul.mubr.f32.gmra.mrb[0].mxu0 %v4611
        %v4682 = vpop.f32.mrb[0].mxu0
        %v4683 = vadd.f32 0.0, %v4682
        %v4684 = vpop.f32.mrb[0].mxu0
        %4685 = vmatprep.mubr.f32.mxu0 0.0
        %4686 = vmatmul.mubr.f32.gmra.mrb[0].mxu0 %v4614
        %v4687 = vpop.f32.mrb[0].mxu0
        %v4688 = vadd.f32 0.0, %v4687
        %v4689 = vpop.f32.mrb[0].mxu0
        %4690 = vdwg.mxu0
        %v4692 = vsel %vm2023, %v3781, 0
        %v4695 = vsel %vm2023, %v3783, 0
        %4697 = vmatprep.subr.mxu0 0.0
        %4698 = vmatpush1.msra.mxu0 %v1085
        %4699 = vmatprep.subr.mxu0 0.0
        %4700 = vmatpush1.msra.mxu0 %v1086
        %4701 = vmatprep.subr.mxu0 0.0
        %4702 = vmatpush1.msra.mxu0 0.0
        %4703 = vmatprep.subr.mxu0 0.0
        %4704 = vmatpush1.msra.mxu0 0.0
        %4705 = vmatprep.subr.mxu0 0.0
        %4706 = vmatpush1.msra.mxu0 0.0
        %4707 = vmatprep.subr.mxu0 0.0
        %4708 = vmatpush1.msra.mxu0 0.0
        %4709 = vmatprep.subr.mxu0 0.0
        %4710 = vmatpush1.msra.mxu0 0.0
        %4711 = vmatprep.subr.mxu0 0.0
        %4712 = vmatpush1.msra.mxu0 0.0
        %4713 = vmatprep.subr.mxu0 0.0
        %4714 = vmatpush1.msra.mxu0 0.0
        %4715 = vmatprep.subr.mxu0 0.0
        %4716 = vmatpush1.msra.mxu0 0.0
        %4717 = vmatprep.subr.mxu0 0.0
        %4718 = vmatpush1.msra.mxu0 0.0
        %4719 = vmatprep.subr.mxu0 0.0
        %4720 = vmatpush1.msra.mxu0 0.0
        %4721 = vmatprep.subr.mxu0 0.0
        %4722 = vmatpush1.msra.mxu0 0.0
        %4723 = vmatprep.subr.mxu0 0.0
        %4724 = vmatpush1.msra.mxu0 0.0
        %4725 = vmatprep.subr.mxu0 0.0
        %4726 = vmatpush1.msra.mxu0 0.0
        %4727 = vmatprep.subr.mxu0 0.0
        %4728 = vmatpush1.msra.mxu0 0.0
        %4729 = vmatprep.subr.mxu0 0.0
        %4730 = vmatpush1.msra.mxu0 0.0
        %4731 = vmatprep.subr.mxu0 0.0
        %4732 = vmatpush1.msra.mxu0 0.0
        %4733 = vmatprep.subr.mxu0 0.0
        %4734 = vmatpush1.msra.mxu0 0.0
        %4735 = vmatprep.subr.mxu0 0.0
        %4736 = vmatpush1.msra.mxu0 0.0
        %4737 = vmatprep.subr.mxu0 0.0
        %4738 = vmatpush1.msra.mxu0 0.0
        %4739 = vmatprep.subr.mxu0 0.0
        %4740 = vmatpush1.msra.mxu0 0.0
        %4741 = vmatprep.subr.mxu0 0.0
        %4742 = vmatpush1.msra.mxu0 0.0
        %4743 = vmatprep.subr.mxu0 0.0
        %4744 = vmatpush1.msra.mxu0 0.0
        %4745 = vmatprep.subr.mxu0 0.0
        %4746 = vmatpush1.msra.mxu0 0.0
        %4747 = vmatprep.subr.mxu0 0.0
        %4748 = vmatpush1.msra.mxu0 0.0
        %4749 = vmatprep.subr.mxu0 0.0
        %4750 = vmatpush1.msra.mxu0 0.0
        %4751 = vmatprep.subr.mxu0 0.0
        %4752 = vmatpush1.msra.mxu0 0.0
        %4753 = vmatprep.subr.mxu0 0.0
        %4754 = vmatpush1.msra.mxu0 0.0
        %4755 = vmatprep.subr.mxu0 0.0
        %4756 = vmatpush1.msra.mxu0 0.0
        %4757 = vmatprep.subr.mxu0 0.0
        %4758 = vmatpush1.msra.mxu0 0.0
        %4759 = vmatprep.subr.mxu0 0.0
        %4760 = vmatpush1.msra.mxu0 0.0
        %4761 = vmatprep.mubr.f32.mxu0 0.0
        %4762 = vmatmul.mubr.f32.gmra.mrb[0].mxu0 %v4692
        %v4763 = vpop.f32.mrb[0].mxu0
        %v4764 = vadd.f32 0.0, %v4763
        %v4765 = vpop.f32.mrb[0].mxu0
        %4766 = vmatprep.mubr.f32.mxu0 0.0
        %4767 = vmatmul.mubr.f32.gmra.mrb[0].mxu0 %v4695
        %v4768 = vpop.f32.mrb[0].mxu0
        %v4769 = vadd.f32 0.0, %v4768
        %v4770 = vpop.f32.mrb[0].mxu0
        %4771 = vdwg.mxu0
        %v4773 = vsel %vm2023, %v3785, 0
        %v4776 = vsel %vm2023, %v3787, 0
        %4778 = vmatprep.subr.mxu0 0.0
        %4779 = vmatpush1.msra.mxu0 %v1163
        %4780 = vmatprep.subr.mxu0 0.0
        %4781 = vmatpush1.msra.mxu0 %v1164
        %4782 = vmatprep.subr.mxu0 0.0
        %4783 = vmatpush1.msra.mxu0 0.0
        %4784 = vmatprep.subr.mxu0 0.0
        %4785 = vmatpush1.msra.mxu0 0.0
        %4786 = vmatprep.subr.mxu0 0.0
        %4787 = vmatpush1.msra.mxu0 0.0
        %4788 = vmatprep.subr.mxu0 0.0
        %4789 = vmatpush1.msra.mxu0 0.0
        %4790 = vmatprep.subr.mxu0 0.0
        %4791 = vmatpush1.msra.mxu0 0.0
        %4792 = vmatprep.subr.mxu0 0.0
        %4793 = vmatpush1.msra.mxu0 0.0
        %4794 = vmatprep.subr.mxu0 0.0
        %4795 = vmatpush1.msra.mxu0 0.0
        %4796 = vmatprep.subr.mxu0 0.0
        %4797 = vmatpush1.msra.mxu0 0.0
        %4798 = vmatprep.subr.mxu0 0.0
        %4799 = vmatpush1.msra.mxu0 0.0
        %4800 = vmatprep.subr.mxu0 0.0
        %4801 = vmatpush1.msra.mxu0 0.0
        %4802 = vmatprep.subr.mxu0 0.0
        %4803 = vmatpush1.msra.mxu0 0.0
        %4804 = vmatprep.subr.mxu0 0.0
        %4805 = vmatpush1.msra.mxu0 0.0
        %4806 = vmatprep.subr.mxu0 0.0
        %4807 = vmatpush1.msra.mxu0 0.0
        %4808 = vmatprep.subr.mxu0 0.0
        %4809 = vmatpush1.msra.mxu0 0.0
        %4810 = vmatprep.subr.mxu0 0.0
        %4811 = vmatpush1.msra.mxu0 0.0
        %4812 = vmatprep.subr.mxu0 0.0
        %4813 = vmatpush1.msra.mxu0 0.0
        %4814 = vmatprep.subr.mxu0 0.0
        %4815 = vmatpush1.msra.mxu0 0.0
        %4816 = vmatprep.subr.mxu0 0.0
        %4817 = vmatpush1.msra.mxu0 0.0
        %4818 = vmatprep.subr.mxu0 0.0
        %4819 = vmatpush1.msra.mxu0 0.0
        %4820 = vmatprep.subr.mxu0 0.0
        %4821 = vmatpush1.msra.mxu0 0.0
        %4822 = vmatprep.subr.mxu0 0.0
        %4823 = vmatpush1.msra.mxu0 0.0
        %4824 = vmatprep.subr.mxu0 0.0
        %4825 = vmatpush1.msra.mxu0 0.0
        %4826 = vmatprep.subr.mxu0 0.0
        %4827 = vmatpush1.msra.mxu0 0.0
        %4828 = vmatprep.subr.mxu0 0.0
        %4829 = vmatpush1.msra.mxu0 0.0
        %4830 = vmatprep.subr.mxu0 0.0
        %4831 = vmatpush1.msra.mxu0 0.0
        %4832 = vmatprep.subr.mxu0 0.0
        %4833 = vmatpush1.msra.mxu0 0.0
        %4834 = vmatprep.subr.mxu0 0.0
        %4835 = vmatpush1.msra.mxu0 0.0
        %4836 = vmatprep.subr.mxu0 0.0
        %4837 = vmatpush1.msra.mxu0 0.0
        %4838 = vmatprep.subr.mxu0 0.0
        %4839 = vmatpush1.msra.mxu0 0.0
        %4840 = vmatprep.subr.mxu0 0.0
        %4841 = vmatpush1.msra.mxu0 0.0
        %4842 = vmatprep.mubr.f32.mxu0 0.0
        %4843 = vmatmul.mubr.f32.gmra.mrb[0].mxu0 %v4773
        %v4844 = vpop.f32.mrb[0].mxu0
        %v4845 = vadd.f32 0.0, %v4844
        %v4846 = vpop.f32.mrb[0].mxu0
        %4847 = vmatprep.mubr.f32.mxu0 0.0
        %4848 = vmatmul.mubr.f32.gmra.mrb[0].mxu0 %v4776
        %v4849 = vpop.f32.mrb[0].mxu0
        %v4850 = vadd.f32 0.0, %v4849
        %v4851 = vpop.f32.mrb[0].mxu0
        %4852 = vdwg.mxu0
        %v4854 = vsel %vm2023, %v3789, 0
        %v4857 = vsel %vm2023, %v3791, 0
        %4859 = vmatprep.subr.mxu0 0.0
        %4860 = vmatpush1.msra.mxu0 %v1241
        %4861 = vmatprep.subr.mxu0 0.0
        %4862 = vmatpush1.msra.mxu0 %v1242
        %4863 = vmatprep.subr.mxu0 0.0
        %4864 = vmatpush1.msra.mxu0 0.0
        %4865 = vmatprep.subr.mxu0 0.0
        %4866 = vmatpush1.msra.mxu0 0.0
        %4867 = vmatprep.subr.mxu0 0.0
        %4868 = vmatpush1.msra.mxu0 0.0
        %4869 = vmatprep.subr.mxu0 0.0
        %4870 = vmatpush1.msra.mxu0 0.0
        %4871 = vmatprep.subr.mxu0 0.0
        %4872 = vmatpush1.msra.mxu0 0.0
        %4873 = vmatprep.subr.mxu0 0.0
        %4874 = vmatpush1.msra.mxu0 0.0
        %4875 = vmatprep.subr.mxu0 0.0
        %4876 = vmatpush1.msra.mxu0 0.0
        %4877 = vmatprep.subr.mxu0 0.0
        %4878 = vmatpush1.msra.mxu0 0.0
        %4879 = vmatprep.subr.mxu0 0.0
        %4880 = vmatpush1.msra.mxu0 0.0
        %4881 = vmatprep.subr.mxu0 0.0
        %4882 = vmatpush1.msra.mxu0 0.0
        %4883 = vmatprep.subr.mxu0 0.0
        %4884 = vmatpush1.msra.mxu0 0.0
        %4885 = vmatprep.subr.mxu0 0.0
        %4886 = vmatpush1.msra.mxu0 0.0
        %4887 = vmatprep.subr.mxu0 0.0
        %4888 = vmatpush1.msra.mxu0 0.0
        %4889 = vmatprep.subr.mxu0 0.0
        %4890 = vmatpush1.msra.mxu0 0.0
        %4891 = vmatprep.subr.mxu0 0.0
        %4892 = vmatpush1.msra.mxu0 0.0
        %4893 = vmatprep.subr.mxu0 0.0
        %4894 = vmatpush1.msra.mxu0 0.0
        %4895 = vmatprep.subr.mxu0 0.0
        %4896 = vmatpush1.msra.mxu0 0.0
        %4897 = vmatprep.subr.mxu0 0.0
        %4898 = vmatpush1.msra.mxu0 0.0
        %4899 = vmatprep.subr.mxu0 0.0
        %4900 = vmatpush1.msra.mxu0 0.0
        %4901 = vmatprep.subr.mxu0 0.0
        %4902 = vmatpush1.msra.mxu0 0.0
        %4903 = vmatprep.subr.mxu0 0.0
        %4904 = vmatpush1.msra.mxu0 0.0
        %4905 = vmatprep.subr.mxu0 0.0
        %4906 = vmatpush1.msra.mxu0 0.0
        %4907 = vmatprep.subr.mxu0 0.0
        %4908 = vmatpush1.msra.mxu0 0.0
        %4909 = vmatprep.subr.mxu0 0.0
        %4910 = vmatpush1.msra.mxu0 0.0
        %4911 = vmatprep.subr.mxu0 0.0
        %4912 = vmatpush1.msra.mxu0 0.0
        %4913 = vmatprep.subr.mxu0 0.0
        %4914 = vmatpush1.msra.mxu0 0.0
        %4915 = vmatprep.subr.mxu0 0.0
        %4916 = vmatpush1.msra.mxu0 0.0
        %4917 = vmatprep.subr.mxu0 0.0
        %4918 = vmatpush1.msra.mxu0 0.0
        %4919 = vmatprep.subr.mxu0 0.0
        %4920 = vmatpush1.msra.mxu0 0.0
        %4921 = vmatprep.subr.mxu0 0.0
        %4922 = vmatpush1.msra.mxu0 0.0
        %4923 = vmatprep.mubr.f32.mxu0 0.0
        %4924 = vmatmul.mubr.f32.gmra.mrb[0].mxu0 %v4854
        %v4925 = vpop.f32.mrb[0].mxu0
        %v4926 = vadd.f32 0.0, %v4925
        %v4927 = vpop.f32.mrb[0].mxu0
        %4928 = vmatprep.mubr.f32.mxu0 0.0
        %4929 = vmatmul.mubr.f32.gmra.mrb[0].mxu0 %v4857
        %v4930 = vpop.f32.mrb[0].mxu0
        %v4931 = vadd.f32 0.0, %v4930
        %v4932 = vpop.f32.mrb[0].mxu0
        %4933 = vdwg.mxu0
        %v4935 = vsel %vm2023, %v3793, 0
        %v4938 = vsel %vm2023, %v3795, 0
        %4940 = vmatprep.subr.mxu0 0.0
        %4941 = vmatpush1.msra.mxu0 %v1319
        %4942 = vmatprep.subr.mxu0 0.0
        %4943 = vmatpush1.msra.mxu0 %v1320
        %4944 = vmatprep.subr.mxu0 0.0
        %4945 = vmatpush1.msra.mxu0 0.0
        %4946 = vmatprep.subr.mxu0 0.0
        %4947 = vmatpush1.msra.mxu0 0.0
        %4948 = vmatprep.subr.mxu0 0.0
        %4949 = vmatpush1.msra.mxu0 0.0
        %4950 = vmatprep.subr.mxu0 0.0
        %4951 = vmatpush1.msra.mxu0 0.0
        %4952 = vmatprep.subr.mxu0 0.0
        %4953 = vmatpush1.msra.mxu0 0.0
        %4954 = vmatprep.subr.mxu0 0.0
        %4955 = vmatpush1.msra.mxu0 0.0
        %4956 = vmatprep.subr.mxu0 0.0
        %4957 = vmatpush1.msra.mxu0 0.0
        %4958 = vmatprep.subr.mxu0 0.0
        %4959 = vmatpush1.msra.mxu0 0.0
        %4960 = vmatprep.subr.mxu0 0.0
        %4961 = vmatpush1.msra.mxu0 0.0
        %4962 = vmatprep.subr.mxu0 0.0
        %4963 = vmatpush1.msra.mxu0 0.0
        %4964 = vmatprep.subr.mxu0 0.0
        %4965 = vmatpush1.msra.mxu0 0.0
        %4966 = vmatprep.subr.mxu0 0.0
        %4967 = vmatpush1.msra.mxu0 0.0
        %4968 = vmatprep.subr.mxu0 0.0
        %4969 = vmatpush1.msra.mxu0 0.0
        %4970 = vmatprep.subr.mxu0 0.0
        %4971 = vmatpush1.msra.mxu0 0.0
        %4972 = vmatprep.subr.mxu0 0.0
        %4973 = vmatpush1.msra.mxu0 0.0
        %4974 = vmatprep.subr.mxu0 0.0
        %4975 = vmatpush1.msra.mxu0 0.0
        %4976 = vmatprep.subr.mxu0 0.0
        %4977 = vmatpush1.msra.mxu0 0.0
        %4978 = vmatprep.subr.mxu0 0.0
        %4979 = vmatpush1.msra.mxu0 0.0
        %4980 = vmatprep.subr.mxu0 0.0
        %4981 = vmatpush1.msra.mxu0 0.0
        %4982 = vmatprep.subr.mxu0 0.0
        %4983 = vmatpush1.msra.mxu0 0.0
        %4984 = vmatprep.subr.mxu0 0.0
        %4985 = vmatpush1.msra.mxu0 0.0
        %4986 = vmatprep.subr.mxu0 0.0
        %4987 = vmatpush1.msra.mxu0 0.0
        %4988 = vmatprep.subr.mxu0 0.0
        %4989 = vmatpush1.msra.mxu0 0.0
        %4990 = vmatprep.subr.mxu0 0.0
        %4991 = vmatpush1.msra.mxu0 0.0
        %4992 = vmatprep.subr.mxu0 0.0
        %4993 = vmatpush1.msra.mxu0 0.0
        %4994 = vmatprep.subr.mxu0 0.0
        %4995 = vmatpush1.msra.mxu0 0.0
        %4996 = vmatprep.subr.mxu0 0.0
        %4997 = vmatpush1.msra.mxu0 0.0
        %4998 = vmatprep.subr.mxu0 0.0
        %4999 = vmatpush1.msra.mxu0 0.0
        %5000 = vmatprep.subr.mxu0 0.0
        %5001 = vmatpush1.msra.mxu0 0.0
        %5002 = vmatprep.subr.mxu0 0.0
        %5003 = vmatpush1.msra.mxu0 0.0
        %5004 = vmatprep.mubr.f32.mxu0 0.0
        %5005 = vmatmul.mubr.f32.gmra.mrb[0].mxu0 %v4935
        %v5006 = vpop.f32.mrb[0].mxu0
        %v5007 = vadd.f32 0.0, %v5006
        %v5008 = vpop.f32.mrb[0].mxu0
        %5009 = vmatprep.mubr.f32.mxu0 0.0
        %5010 = vmatmul.mubr.f32.gmra.mrb[0].mxu0 %v4938
        %v5011 = vpop.f32.mrb[0].mxu0
        %v5012 = vadd.f32 0.0, %v5011
        %v5013 = vpop.f32.mrb[0].mxu0
        %5014 = vdwg.mxu0
        %v5016 = vsel %vm2023, %v3797, 0
        %v5019 = vsel %vm2023, %v3799, 0
        %5021 = vmatprep.subr.mxu0 0.0
        %5022 = vmatpush1.msra.mxu0 %v1397
        %5023 = vmatprep.subr.mxu0 0.0
        %5024 = vmatpush1.msra.mxu0 %v1398
        %5025 = vmatprep.subr.mxu0 0.0
        %5026 = vmatpush1.msra.mxu0 0.0
        %5027 = vmatprep.subr.mxu0 0.0
        %5028 = vmatpush1.msra.mxu0 0.0
        %5029 = vmatprep.subr.mxu0 0.0
        %5030 = vmatpush1.msra.mxu0 0.0
        %5031 = vmatprep.subr.mxu0 0.0
        %5032 = vmatpush1.msra.mxu0 0.0
        %5033 = vmatprep.subr.mxu0 0.0
        %5034 = vmatpush1.msra.mxu0 0.0
        %5035 = vmatprep.subr.mxu0 0.0
        %5036 = vmatpush1.msra.mxu0 0.0
        %5037 = vmatprep.subr.mxu0 0.0
        %5038 = vmatpush1.msra.mxu0 0.0
        %5039 = vmatprep.subr.mxu0 0.0
        %5040 = vmatpush1.msra.mxu0 0.0
        %5041 = vmatprep.subr.mxu0 0.0
        %5042 = vmatpush1.msra.mxu0 0.0
        %5043 = vmatprep.subr.mxu0 0.0
        %5044 = vmatpush1.msra.mxu0 0.0
        %5045 = vmatprep.subr.mxu0 0.0
        %5046 = vmatpush1.msra.mxu0 0.0
        %5047 = vmatprep.subr.mxu0 0.0
        %5048 = vmatpush1.msra.mxu0 0.0
        %5049 = vmatprep.subr.mxu0 0.0
        %5050 = vmatpush1.msra.mxu0 0.0
        %5051 = vmatprep.subr.mxu0 0.0
        %5052 = vmatpush1.msra.mxu0 0.0
        %5053 = vmatprep.subr.mxu0 0.0
        %5054 = vmatpush1.msra.mxu0 0.0
        %5055 = vmatprep.subr.mxu0 0.0
        %5056 = vmatpush1.msra.mxu0 0.0
        %5057 = vmatprep.subr.mxu0 0.0
        %5058 = vmatpush1.msra.mxu0 0.0
        %5059 = vmatprep.subr.mxu0 0.0
        %5060 = vmatpush1.msra.mxu0 0.0
        %5061 = vmatprep.subr.mxu0 0.0
        %5062 = vmatpush1.msra.mxu0 0.0
        %5063 = vmatprep.subr.mxu0 0.0
        %5064 = vmatpush1.msra.mxu0 0.0
        %5065 = vmatprep.subr.mxu0 0.0
        %5066 = vmatpush1.msra.mxu0 0.0
        %5067 = vmatprep.subr.mxu0 0.0
        %5068 = vmatpush1.msra.mxu0 0.0
        %5069 = vmatprep.subr.mxu0 0.0
        %5070 = vmatpush1.msra.mxu0 0.0
        %5071 = vmatprep.subr.mxu0 0.0
        %5072 = vmatpush1.msra.mxu0 0.0
        %5073 = vmatprep.subr.mxu0 0.0
        %5074 = vmatpush1.msra.mxu0 0.0
        %5075 = vmatprep.subr.mxu0 0.0
        %5076 = vmatpush1.msra.mxu0 0.0
        %5077 = vmatprep.subr.mxu0 0.0
        %5078 = vmatpush1.msra.mxu0 0.0
        %5079 = vmatprep.subr.mxu0 0.0
        %5080 = vmatpush1.msra.mxu0 0.0
        %5081 = vmatprep.subr.mxu0 0.0
        %5082 = vmatpush1.msra.mxu0 0.0
        %5083 = vmatprep.subr.mxu0 0.0
        %5084 = vmatpush1.msra.mxu0 0.0
        %5085 = vmatprep.mubr.f32.mxu0 0.0
        %5086 = vmatmul.mubr.f32.gmra.mrb[0].mxu0 %v5016
        %v5087 = vpop.f32.mrb[0].mxu0
        %v5088 = vadd.f32 0.0, %v5087
        %v5089 = vpop.f32.mrb[0].mxu0
        %5090 = vmatprep.mubr.f32.mxu0 0.0
        %5091 = vmatmul.mubr.f32.gmra.mrb[0].mxu0 %v5019
        %v5092 = vpop.f32.mrb[0].mxu0
        %v5093 = vadd.f32 0.0, %v5092
        %v5094 = vpop.f32.mrb[0].mxu0
        %5095 = vdwg.mxu0
        %s5096 = sld [smem:[#allocation26]]
        %v5097 = vstv %s5096
        %v5098 = vmul.f32 %v3873, %v5097
        %v5099 = vmul.f32 %v3878, %v5097
        %s5100 = sld [smem:[#allocation26 + $0x80]]
        %v5101 = vstv %s5100
        %v5102 = vmul.f32 %v3954, %v5101
        %v5103 = vmul.f32 %v3959, %v5101
        %v5104 = vadd.f32 %v5098, %v5102
        %v5105 = vadd.f32 %v5099, %v5103
        %s5106 = sld [smem:[#allocation26 + $0x100]]
        %v5107 = vstv %s5106
        %v5108 = vmul.f32 %v4035, %v5107
        %v5109 = vmul.f32 %v4040, %v5107
        %v5110 = vadd.f32 %v5104, %v5108
        %v5111 = vadd.f32 %v5105, %v5109
        %s5112 = sld [smem:[#allocation26 + $0x180]]
        %v5113 = vstv %s5112
        %v5114 = vmul.f32 %v4116, %v5113
        %v5115 = vmul.f32 %v4121, %v5113
        %v5116 = vadd.f32 %v5110, %v5114
        %v5117 = vadd.f32 %v5111, %v5115
        %s5118 = sld [smem:[#allocation26 + $0x200]]
        %v5119 = vstv %s5118
        %v5120 = vmul.f32 %v4197, %v5119
        %v5121 = vmul.f32 %v4202, %v5119
        %v5122 = vadd.f32 %v5116, %v5120
        %v5123 = vadd.f32 %v5117, %v5121
        %s5124 = sld [smem:[#allocation26 + $0x280]]
        %v5125 = vstv %s5124
        %v5126 = vmul.f32 %v4278, %v5125
        %v5127 = vmul.f32 %v4283, %v5125
        %v5128 = vadd.f32 %v5122, %v5126
        %v5129 = vadd.f32 %v5123, %v5127
        %s5130 = sld [smem:[#allocation26 + $0x300]]
        %v5131 = vstv %s5130
        %v5132 = vmul.f32 %v4359, %v5131
        %v5133 = vmul.f32 %v4364, %v5131
        %v5134 = vadd.f32 %v5128, %v5132
        %v5135 = vadd.f32 %v5129, %v5133
        %s5136 = sld [smem:[#allocation26 + $0x380]]
        %v5137 = vstv %s5136
        %v5138 = vmul.f32 %v4440, %v5137
        %v5139 = vmul.f32 %v4445, %v5137
        %v5140 = vadd.f32 %v5134, %v5138
        %v5141 = vadd.f32 %v5135, %v5139
        %s5142 = sld [smem:[#allocation26 + $0x400]]
        %v5143 = vstv %s5142
        %v5144 = vmul.f32 %v4521, %v5143
        %v5145 = vmul.f32 %v4526, %v5143
        %v5146 = vadd.f32 %v5140, %v5144
        %v5147 = vadd.f32 %v5141, %v5145
        %s5148 = sld [smem:[#allocation26 + $0x480]]
        %v5149 = vstv %s5148
        %v5150 = vmul.f32 %v4602, %v5149
        %v5151 = vmul.f32 %v4607, %v5149
        %v5152 = vadd.f32 %v5146, %v5150
        %v5153 = vadd.f32 %v5147, %v5151
        %s5154 = sld [smem:[#allocation26 + $0x500]]
        %v5155 = vstv %s5154
        %v5156 = vmul.f32 %v4683, %v5155
        %v5157 = vmul.f32 %v4688, %v5155
        %v5158 = vadd.f32 %v5152, %v5156
        %v5159 = vadd.f32 %v5153, %v5157
        %s5160 = sld [smem:[#allocation26 + $0x580]]
        %v5161 = vstv %s5160
        %v5162 = vmul.f32 %v4764, %v5161
        %v5163 = vmul.f32 %v4769, %v5161
        %v5164 = vadd.f32 %v5158, %v5162
        %v5165 = vadd.f32 %v5159, %v5163
        %s5166 = sld [smem:[#allocation26 + $0x600]]
        %v5167 = vstv %s5166
        %v5168 = vmul.f32 %v4845, %v5167
        %v5169 = vmul.f32 %v4850, %v5167
        %v5170 = vadd.f32 %v5164, %v5168
        %v5171 = vadd.f32 %v5165, %v5169
        %s5172 = sld [smem:[#allocation26 + $0x680]]
        %v5173 = vstv %s5172
        %v5174 = vmul.f32 %v4926, %v5173
        %v5175 = vmul.f32 %v4931, %v5173
        %v5176 = vadd.f32 %v5170, %v5174
        %v5177 = vadd.f32 %v5171, %v5175
        %s5178 = sld [smem:[#allocation26 + $0x700]]
        %v5179 = vstv %s5178
        %v5180 = vmul.f32 %v5007, %v5179
        %v5181 = vmul.f32 %v5012, %v5179
        %v5182 = vadd.f32 %v5176, %v5180
        %v5183 = vadd.f32 %v5177, %v5181
        %s5184 = sld [smem:[#allocation26 + $0x780]]
        %v5185 = vstv %s5184
        %v5186 = vmul.f32 %v5088, %v5185
        %v5187 = vmul.f32 %v5093, %v5185
        %v5188 = vadd.f32 %v5182, %v5186
        %v5189 = vadd.f32 %v5183, %v5187
        %s5190 = sld [smem:[#allocation27]]
        %v5191 = vstv %s5190
        %v5192 = vadd.f32 %v5188, %v5191
        %v5193 = vadd.f32 %v5189, %v5191
        %s5194 = sld [smem:[#allocation26 + $0x1]]
        %v5195 = vstv %s5194
        %v5196 = vmul.f32 %v3873, %v5195
        %v5197 = vmul.f32 %v3878, %v5195
        %s5198 = sld [smem:[#allocation26 + $0x81]]
        %v5199 = vstv %s5198
        %v5200 = vmul.f32 %v3954, %v5199
        %v5201 = vmul.f32 %v3959, %v5199
        %v5202 = vadd.f32 %v5196, %v5200
        %v5203 = vadd.f32 %v5197, %v5201
        %s5204 = sld [smem:[#allocation26 + $0x101]]
        %v5205 = vstv %s5204
        %v5206 = vmul.f32 %v4035, %v5205
        %v5207 = vmul.f32 %v4040, %v5205
        %v5208 = vadd.f32 %v5202, %v5206
        %v5209 = vadd.f32 %v5203, %v5207
        %s5210 = sld [smem:[#allocation26 + $0x181]]
        %v5211 = vstv %s5210
        %v5212 = vmul.f32 %v4116, %v5211
        %v5213 = vmul.f32 %v4121, %v5211
        %v5214 = vadd.f32 %v5208, %v5212
        %v5215 = vadd.f32 %v5209, %v5213
        %s5216 = sld [smem:[#allocation26 + $0x201]]
        %v5217 = vstv %s5216
        %v5218 = vmul.f32 %v4197, %v5217
        %v5219 = vmul.f32 %v4202, %v5217
        %v5220 = vadd.f32 %v5214, %v5218
        %v5221 = vadd.f32 %v5215, %v5219
        %s5222 = sld [smem:[#allocation26 + $0x281]]
        %v5223 = vstv %s5222
        %v5224 = vmul.f32 %v4278, %v5223
        %v5225 = vmul.f32 %v4283, %v5223
        %v5226 = vadd.f32 %v5220, %v5224
        %v5227 = vadd.f32 %v5221, %v5225
        %s5228 = sld [smem:[#allocation26 + $0x301]]
        %v5229 = vstv %s5228
        %v5230 = vmul.f32 %v4359, %v5229
        %v5231 = vmul.f32 %v4364, %v5229
        %v5232 = vadd.f32 %v5226, %v5230
        %v5233 = vadd.f32 %v5227, %v5231
        %s5234 = sld [smem:[#allocation26 + $0x381]]
        %v5235 = vstv %s5234
        %v5236 = vmul.f32 %v4440, %v5235
        %v5237 = vmul.f32 %v4445, %v5235
        %v5238 = vadd.f32 %v5232, %v5236
        %v5239 = vadd.f32 %v5233, %v5237
        %s5240 = sld [smem:[#allocation26 + $0x401]]
        %v5241 = vstv %s5240
        %v5242 = vmul.f32 %v4521, %v5241
        %v5243 = vmul.f32 %v4526, %v5241
        %v5244 = vadd.f32 %v5238, %v5242
        %v5245 = vadd.f32 %v5239, %v5243
        %s5246 = sld [smem:[#allocation26 + $0x481]]
        %v5247 = vstv %s5246
        %v5248 = vmul.f32 %v4602, %v5247
        %v5249 = vmul.f32 %v4607, %v5247
        %v5250 = vadd.f32 %v5244, %v5248
        %v5251 = vadd.f32 %v5245, %v5249
        %s5252 = sld [smem:[#allocation26 + $0x501]]
        %v5253 = vstv %s5252
        %v5254 = vmul.f32 %v4683, %v5253
        %v5255 = vmul.f32 %v4688, %v5253
        %v5256 = vadd.f32 %v5250, %v5254
        %v5257 = vadd.f32 %v5251, %v5255
        %s5258 = sld [smem:[#allocation26 + $0x581]]
        %v5259 = vstv %s5258
        %v5260 = vmul.f32 %v4764, %v5259
        %v5261 = vmul.f32 %v4769, %v5259
        %v5262 = vadd.f32 %v5256, %v5260
        %v5263 = vadd.f32 %v5257, %v5261
        %s5264 = sld [smem:[#allocation26 + $0x601]]
        %v5265 = vstv %s5264
        %v5266 = vmul.f32 %v4845, %v5265
        %v5267 = vmul.f32 %v4850, %v5265
        %v5268 = vadd.f32 %v5262, %v5266
        %v5269 = vadd.f32 %v5263, %v5267
        %s5270 = sld [smem:[#allocation26 + $0x681]]
        %v5271 = vstv %s5270
        %v5272 = vmul.f32 %v4926, %v5271
        %v5273 = vmul.f32 %v4931, %v5271
        %v5274 = vadd.f32 %v5268, %v5272
        %v5275 = vadd.f32 %v5269, %v5273
        %s5276 = sld [smem:[#allocation26 + $0x701]]
        %v5277 = vstv %s5276
        %v5278 = vmul.f32 %v5007, %v5277
        %v5279 = vmul.f32 %v5012, %v5277
        %v5280 = vadd.f32 %v5274, %v5278
        %v5281 = vadd.f32 %v5275, %v5279
        %s5282 = sld [smem:[#allocation26 + $0x781]]
        %v5283 = vstv %s5282
        %v5284 = vmul.f32 %v5088, %v5283
        %v5285 = vmul.f32 %v5093, %v5283
        %v5286 = vadd.f32 %v5280, %v5284
        %v5287 = vadd.f32 %v5281, %v5285
        %s5288 = sld [smem:[#allocation27 + $0x1]]
        %v5289 = vstv %s5288
        %v5290 = vadd.f32 %v5286, %v5289
        %v5291 = vadd.f32 %v5287, %v5289
        %s5292 = sld [smem:[#allocation26 + $0x2]]
        %v5293 = vstv %s5292
        %v5294 = vmul.f32 %v3873, %v5293
        %v5295 = vmul.f32 %v3878, %v5293
        %s5296 = sld [smem:[#allocation26 + $0x82]]
        %v5297 = vstv %s5296
        %v5298 = vmul.f32 %v3954, %v5297
        %v5299 = vmul.f32 %v3959, %v5297
        %v5300 = vadd.f32 %v5294, %v5298
        %v5301 = vadd.f32 %v5295, %v5299
        %s5302 = sld [smem:[#allocation26 + $0x102]]
        %v5303 = vstv %s5302
        %v5304 = vmul.f32 %v4035, %v5303
        %v5305 = vmul.f32 %v4040, %v5303
        %v5306 = vadd.f32 %v5300, %v5304
        %v5307 = vadd.f32 %v5301, %v5305
        %s5308 = sld [smem:[#allocation26 + $0x182]]
        %v5309 = vstv %s5308
        %v5310 = vmul.f32 %v4116, %v5309
        %v5311 = vmul.f32 %v4121, %v5309
        %v5312 = vadd.f32 %v5306, %v5310
        %v5313 = vadd.f32 %v5307, %v5311
        %s5314 = sld [smem:[#allocation26 + $0x202]]
        %v5315 = vstv %s5314
        %v5316 = vmul.f32 %v4197, %v5315
        %v5317 = vmul.f32 %v4202, %v5315
        %v5318 = vadd.f32 %v5312, %v5316
        %v5319 = vadd.f32 %v5313, %v5317
        %s5320 = sld [smem:[#allocation26 + $0x282]]
        %v5321 = vstv %s5320
        %v5322 = vmul.f32 %v4278, %v5321
        %v5323 = vmul.f32 %v4283, %v5321
        %v5324 = vadd.f32 %v5318, %v5322
        %v5325 = vadd.f32 %v5319, %v5323
        %s5326 = sld [smem:[#allocation26 + $0x302]]
        %v5327 = vstv %s5326
        %v5328 = vmul.f32 %v4359, %v5327
        %v5329 = vmul.f32 %v4364, %v5327
        %v5330 = vadd.f32 %v5324, %v5328
        %v5331 = vadd.f32 %v5325, %v5329
        %s5332 = sld [smem:[#allocation26 + $0x382]]
        %v5333 = vstv %s5332
        %v5334 = vmul.f32 %v4440, %v5333
        %v5335 = vmul.f32 %v4445, %v5333
        %v5336 = vadd.f32 %v5330, %v5334
        %v5337 = vadd.f32 %v5331, %v5335
        %s5338 = sld [smem:[#allocation26 + $0x402]]
        %v5339 = vstv %s5338
        %v5340 = vmul.f32 %v4521, %v5339
        %v5341 = vmul.f32 %v4526, %v5339
        %v5342 = vadd.f32 %v5336, %v5340
        %v5343 = vadd.f32 %v5337, %v5341
        %s5344 = sld [smem:[#allocation26 + $0x482]]
        %v5345 = vstv %s5344
        %v5346 = vmul.f32 %v4602, %v5345
        %v5347 = vmul.f32 %v4607, %v5345
        %v5348 = vadd.f32 %v5342, %v5346
        %v5349 = vadd.f32 %v5343, %v5347
        %s5350 = sld [smem:[#allocation26 + $0x502]]
        %v5351 = vstv %s5350
        %v5352 = vmul.f32 %v4683, %v5351
        %v5353 = vmul.f32 %v4688, %v5351
        %v5354 = vadd.f32 %v5348, %v5352
        %v5355 = vadd.f32 %v5349, %v5353
        %s5356 = sld [smem:[#allocation26 + $0x582]]
        %v5357 = vstv %s5356
        %v5358 = vmul.f32 %v4764, %v5357
        %v5359 = vmul.f32 %v4769, %v5357
        %v5360 = vadd.f32 %v5354, %v5358
        %v5361 = vadd.f32 %v5355, %v5359
        %s5362 = sld [smem:[#allocation26 + $0x602]]
        %v5363 = vstv %s5362
        %v5364 = vmul.f32 %v4845, %v5363
        %v5365 = vmul.f32 %v4850, %v5363
        %v5366 = vadd.f32 %v5360, %v5364
        %v5367 = vadd.f32 %v5361, %v5365
        %s5368 = sld [smem:[#allocation26 + $0x682]]
        %v5369 = vstv %s5368
        %v5370 = vmul.f32 %v4926, %v5369
        %v5371 = vmul.f32 %v4931, %v5369
        %v5372 = vadd.f32 %v5366, %v5370
        %v5373 = vadd.f32 %v5367, %v5371
        %s5374 = sld [smem:[#allocation26 + $0x702]]
        %v5375 = vstv %s5374
        %v5376 = vmul.f32 %v5007, %v5375
        %v5377 = vmul.f32 %v5012, %v5375
        %v5378 = vadd.f32 %v5372, %v5376
        %v5379 = vadd.f32 %v5373, %v5377
        %s5380 = sld [smem:[#allocation26 + $0x782]]
        %v5381 = vstv %s5380
        %v5382 = vmul.f32 %v5088, %v5381
        %v5383 = vmul.f32 %v5093, %v5381
        %v5384 = vadd.f32 %v5378, %v5382
        %v5385 = vadd.f32 %v5379, %v5383
        %s5386 = sld [smem:[#allocation27 + $0x2]]
        %v5387 = vstv %s5386
        %v5388 = vadd.f32 %v5384, %v5387
        %v5389 = vadd.f32 %v5385, %v5387
        %s5390 = sld [smem:[#allocation26 + $0x3]]
        %v5391 = vstv %s5390
        %v5392 = vmul.f32 %v3873, %v5391
        %v5393 = vmul.f32 %v3878, %v5391
        %s5394 = sld [smem:[#allocation26 + $0x83]]
        %v5395 = vstv %s5394
        %v5396 = vmul.f32 %v3954, %v5395
        %v5397 = vmul.f32 %v3959, %v5395
        %v5398 = vadd.f32 %v5392, %v5396
        %v5399 = vadd.f32 %v5393, %v5397
        %s5400 = sld [smem:[#allocation26 + $0x103]]
        %v5401 = vstv %s5400
        %v5402 = vmul.f32 %v4035, %v5401
        %v5403 = vmul.f32 %v4040, %v5401
        %v5404 = vadd.f32 %v5398, %v5402
        %v5405 = vadd.f32 %v5399, %v5403
        %s5406 = sld [smem:[#allocation26 + $0x183]]
        %v5407 = vstv %s5406
        %v5408 = vmul.f32 %v4116, %v5407
        %v5409 = vmul.f32 %v4121, %v5407
        %v5410 = vadd.f32 %v5404, %v5408
        %v5411 = vadd.f32 %v5405, %v5409
        %s5412 = sld [smem:[#allocation26 + $0x203]]
        %v5413 = vstv %s5412
        %v5414 = vmul.f32 %v4197, %v5413
        %v5415 = vmul.f32 %v4202, %v5413
        %v5416 = vadd.f32 %v5410, %v5414
        %v5417 = vadd.f32 %v5411, %v5415
        %s5418 = sld [smem:[#allocation26 + $0x283]]
        %v5419 = vstv %s5418
        %v5420 = vmul.f32 %v4278, %v5419
        %v5421 = vmul.f32 %v4283, %v5419
        %v5422 = vadd.f32 %v5416, %v5420
        %v5423 = vadd.f32 %v5417, %v5421
        %s5424 = sld [smem:[#allocation26 + $0x303]]
        %v5425 = vstv %s5424
        %v5426 = vmul.f32 %v4359, %v5425
        %v5427 = vmul.f32 %v4364, %v5425
        %v5428 = vadd.f32 %v5422, %v5426
        %v5429 = vadd.f32 %v5423, %v5427
        %s5430 = sld [smem:[#allocation26 + $0x383]]
        %v5431 = vstv %s5430
        %v5432 = vmul.f32 %v4440, %v5431
        %v5433 = vmul.f32 %v4445, %v5431
        %v5434 = vadd.f32 %v5428, %v5432
        %v5435 = vadd.f32 %v5429, %v5433
        %s5436 = sld [smem:[#allocation26 + $0x403]]
        %v5437 = vstv %s5436
        %v5438 = vmul.f32 %v4521, %v5437
        %v5439 = vmul.f32 %v4526, %v5437
        %v5440 = vadd.f32 %v5434, %v5438
        %v5441 = vadd.f32 %v5435, %v5439
        %s5442 = sld [smem:[#allocation26 + $0x483]]
        %v5443 = vstv %s5442
        %v5444 = vmul.f32 %v4602, %v5443
        %v5445 = vmul.f32 %v4607, %v5443
        %v5446 = vadd.f32 %v5440, %v5444
        %v5447 = vadd.f32 %v5441, %v5445
        %s5448 = sld [smem:[#allocation26 + $0x503]]
        %v5449 = vstv %s5448
        %v5450 = vmul.f32 %v4683, %v5449
        %v5451 = vmul.f32 %v4688, %v5449
        %v5452 = vadd.f32 %v5446, %v5450
        %v5453 = vadd.f32 %v5447, %v5451
        %s5454 = sld [smem:[#allocation26 + $0x583]]
        %v5455 = vstv %s5454
        %v5456 = vmul.f32 %v4764, %v5455
        %v5457 = vmul.f32 %v4769, %v5455
        %v5458 = vadd.f32 %v5452, %v5456
        %v5459 = vadd.f32 %v5453, %v5457
        %s5460 = sld [smem:[#allocation26 + $0x603]]
        %v5461 = vstv %s5460
        %v5462 = vmul.f32 %v4845, %v5461
        %v5463 = vmul.f32 %v4850, %v5461
        %v5464 = vadd.f32 %v5458, %v5462
        %v5465 = vadd.f32 %v5459, %v5463
        %s5466 = sld [smem:[#allocation26 + $0x683]]
        %v5467 = vstv %s5466
        %v5468 = vmul.f32 %v4926, %v5467
        %v5469 = vmul.f32 %v4931, %v5467
        %v5470 = vadd.f32 %v5464, %v5468
        %v5471 = vadd.f32 %v5465, %v5469
        %s5472 = sld [smem:[#allocation26 + $0x703]]
        %v5473 = vstv %s5472
        %v5474 = vmul.f32 %v5007, %v5473
        %v5475 = vmul.f32 %v5012, %v5473
        %v5476 = vadd.f32 %v5470, %v5474
        %v5477 = vadd.f32 %v5471, %v5475
        %s5478 = sld [smem:[#allocation26 + $0x783]]
        %v5479 = vstv %s5478
        %v5480 = vmul.f32 %v5088, %v5479
        %v5481 = vmul.f32 %v5093, %v5479
        %v5482 = vadd.f32 %v5476, %v5480
        %v5483 = vadd.f32 %v5477, %v5481
        %s5484 = sld [smem:[#allocation27 + $0x3]]
        %v5485 = vstv %s5484
        %v5486 = vadd.f32 %v5482, %v5485
        %v5487 = vadd.f32 %v5483, %v5485
        %s5488 = sld [smem:[#allocation26 + $0x4]]
        %v5489 = vstv %s5488
        %v5490 = vmul.f32 %v3873, %v5489
        %v5491 = vmul.f32 %v3878, %v5489
        %s5492 = sld [smem:[#allocation26 + $0x84]]
        %v5493 = vstv %s5492
        %v5494 = vmul.f32 %v3954, %v5493
        %v5495 = vmul.f32 %v3959, %v5493
        %v5496 = vadd.f32 %v5490, %v5494
        %v5497 = vadd.f32 %v5491, %v5495
        %s5498 = sld [smem:[#allocation26 + $0x104]]
        %v5499 = vstv %s5498
        %v5500 = vmul.f32 %v4035, %v5499
        %v5501 = vmul.f32 %v4040, %v5499
        %v5502 = vadd.f32 %v5496, %v5500
        %v5503 = vadd.f32 %v5497, %v5501
        %s5504 = sld [smem:[#allocation26 + $0x184]]
        %v5505 = vstv %s5504
        %v5506 = vmul.f32 %v4116, %v5505
        %v5507 = vmul.f32 %v4121, %v5505
        %v5508 = vadd.f32 %v5502, %v5506
        %v5509 = vadd.f32 %v5503, %v5507
        %s5510 = sld [smem:[#allocation26 + $0x204]]
        %v5511 = vstv %s5510
        %v5512 = vmul.f32 %v4197, %v5511
        %v5513 = vmul.f32 %v4202, %v5511
        %v5514 = vadd.f32 %v5508, %v5512
        %v5515 = vadd.f32 %v5509, %v5513
        %s5516 = sld [smem:[#allocation26 + $0x284]]
        %v5517 = vstv %s5516
        %v5518 = vmul.f32 %v4278, %v5517
        %v5519 = vmul.f32 %v4283, %v5517
        %v5520 = vadd.f32 %v5514, %v5518
        %v5521 = vadd.f32 %v5515, %v5519
        %s5522 = sld [smem:[#allocation26 + $0x304]]
        %v5523 = vstv %s5522
        %v5524 = vmul.f32 %v4359, %v5523
        %v5525 = vmul.f32 %v4364, %v5523
        %v5526 = vadd.f32 %v5520, %v5524
        %v5527 = vadd.f32 %v5521, %v5525
        %s5528 = sld [smem:[#allocation26 + $0x384]]
        %v5529 = vstv %s5528
        %v5530 = vmul.f32 %v4440, %v5529
        %v5531 = vmul.f32 %v4445, %v5529
        %v5532 = vadd.f32 %v5526, %v5530
        %v5533 = vadd.f32 %v5527, %v5531
        %s5534 = sld [smem:[#allocation26 + $0x404]]
        %v5535 = vstv %s5534
        %v5536 = vmul.f32 %v4521, %v5535
        %v5537 = vmul.f32 %v4526, %v5535
        %v5538 = vadd.f32 %v5532, %v5536
        %v5539 = vadd.f32 %v5533, %v5537
        %s5540 = sld [smem:[#allocation26 + $0x484]]
        %v5541 = vstv %s5540
        %v5542 = vmul.f32 %v4602, %v5541
        %v5543 = vmul.f32 %v4607, %v5541
        %v5544 = vadd.f32 %v5538, %v5542
        %v5545 = vadd.f32 %v5539, %v5543
        %s5546 = sld [smem:[#allocation26 + $0x504]]
        %v5547 = vstv %s5546
        %v5548 = vmul.f32 %v4683, %v5547
        %v5549 = vmul.f32 %v4688, %v5547
        %v5550 = vadd.f32 %v5544, %v5548
        %v5551 = vadd.f32 %v5545, %v5549
        %s5552 = sld [smem:[#allocation26 + $0x584]]
        %v5553 = vstv %s5552
        %v5554 = vmul.f32 %v4764, %v5553
        %v5555 = vmul.f32 %v4769, %v5553
        %v5556 = vadd.f32 %v5550, %v5554
        %v5557 = vadd.f32 %v5551, %v5555
        %s5558 = sld [smem:[#allocation26 + $0x604]]
        %v5559 = vstv %s5558
        %v5560 = vmul.f32 %v4845, %v5559
        %v5561 = vmul.f32 %v4850, %v5559
        %v5562 = vadd.f32 %v5556, %v5560
        %v5563 = vadd.f32 %v5557, %v5561
        %s5564 = sld [smem:[#allocation26 + $0x684]]
        %v5565 = vstv %s5564
        %v5566 = vmul.f32 %v4926, %v5565
        %v5567 = vmul.f32 %v4931, %v5565
        %v5568 = vadd.f32 %v5562, %v5566
        %v5569 = vadd.f32 %v5563, %v5567
        %s5570 = sld [smem:[#allocation26 + $0x704]]
        %v5571 = vstv %s5570
        %v5572 = vmul.f32 %v5007, %v5571
        %v5573 = vmul.f32 %v5012, %v5571
        %v5574 = vadd.f32 %v5568, %v5572
        %v5575 = vadd.f32 %v5569, %v5573
        %s5576 = sld [smem:[#allocation26 + $0x784]]
        %v5577 = vstv %s5576
        %v5578 = vmul.f32 %v5088, %v5577
        %v5579 = vmul.f32 %v5093, %v5577
        %v5580 = vadd.f32 %v5574, %v5578
        %v5581 = vadd.f32 %v5575, %v5579
        %s5582 = sld [smem:[#allocation27 + $0x4]]
        %v5583 = vstv %s5582
        %v5584 = vadd.f32 %v5580, %v5583
        %v5585 = vadd.f32 %v5581, %v5583
        %s5586 = sld [smem:[#allocation26 + $0x5]]
        %v5587 = vstv %s5586
        %v5588 = vmul.f32 %v3873, %v5587
        %v5589 = vmul.f32 %v3878, %v5587
        %s5590 = sld [smem:[#allocation26 + $0x85]]
        %v5591 = vstv %s5590
        %v5592 = vmul.f32 %v3954, %v5591
        %v5593 = vmul.f32 %v3959, %v5591
        %v5594 = vadd.f32 %v5588, %v5592
        %v5595 = vadd.f32 %v5589, %v5593
        %s5596 = sld [smem:[#allocation26 + $0x105]]
        %v5597 = vstv %s5596
        %v5598 = vmul.f32 %v4035, %v5597
        %v5599 = vmul.f32 %v4040, %v5597
        %v5600 = vadd.f32 %v5594, %v5598
        %v5601 = vadd.f32 %v5595, %v5599
        %s5602 = sld [smem:[#allocation26 + $0x185]]
        %v5603 = vstv %s5602
        %v5604 = vmul.f32 %v4116, %v5603
        %v5605 = vmul.f32 %v4121, %v5603
        %v5606 = vadd.f32 %v5600, %v5604
        %v5607 = vadd.f32 %v5601, %v5605
        %s5608 = sld [smem:[#allocation26 + $0x205]]
        %v5609 = vstv %s5608
        %v5610 = vmul.f32 %v4197, %v5609
        %v5611 = vmul.f32 %v4202, %v5609
        %v5612 = vadd.f32 %v5606, %v5610
        %v5613 = vadd.f32 %v5607, %v5611
        %s5614 = sld [smem:[#allocation26 + $0x285]]
        %v5615 = vstv %s5614
        %v5616 = vmul.f32 %v4278, %v5615
        %v5617 = vmul.f32 %v4283, %v5615
        %v5618 = vadd.f32 %v5612, %v5616
        %v5619 = vadd.f32 %v5613, %v5617
        %s5620 = sld [smem:[#allocation26 + $0x305]]
        %v5621 = vstv %s5620
        %v5622 = vmul.f32 %v4359, %v5621
        %v5623 = vmul.f32 %v4364, %v5621
        %v5624 = vadd.f32 %v5618, %v5622
        %v5625 = vadd.f32 %v5619, %v5623
        %s5626 = sld [smem:[#allocation26 + $0x385]]
        %v5627 = vstv %s5626
        %v5628 = vmul.f32 %v4440, %v5627
        %v5629 = vmul.f32 %v4445, %v5627
        %v5630 = vadd.f32 %v5624, %v5628
        %v5631 = vadd.f32 %v5625, %v5629
        %s5632 = sld [smem:[#allocation26 + $0x405]]
        %v5633 = vstv %s5632
        %v5634 = vmul.f32 %v4521, %v5633
        %v5635 = vmul.f32 %v4526, %v5633
        %v5636 = vadd.f32 %v5630, %v5634
        %v5637 = vadd.f32 %v5631, %v5635
        %s5638 = sld [smem:[#allocation26 + $0x485]]
        %v5639 = vstv %s5638
        %v5640 = vmul.f32 %v4602, %v5639
        %v5641 = vmul.f32 %v4607, %v5639
        %v5642 = vadd.f32 %v5636, %v5640
        %v5643 = vadd.f32 %v5637, %v5641
        %s5644 = sld [smem:[#allocation26 + $0x505]]
        %v5645 = vstv %s5644
        %v5646 = vmul.f32 %v4683, %v5645
        %v5647 = vmul.f32 %v4688, %v5645
        %v5648 = vadd.f32 %v5642, %v5646
        %v5649 = vadd.f32 %v5643, %v5647
        %s5650 = sld [smem:[#allocation26 + $0x585]]
        %v5651 = vstv %s5650
        %v5652 = vmul.f32 %v4764, %v5651
        %v5653 = vmul.f32 %v4769, %v5651
        %v5654 = vadd.f32 %v5648, %v5652
        %v5655 = vadd.f32 %v5649, %v5653
        %s5656 = sld [smem:[#allocation26 + $0x605]]
        %v5657 = vstv %s5656
        %v5658 = vmul.f32 %v4845, %v5657
        %v5659 = vmul.f32 %v4850, %v5657
        %v5660 = vadd.f32 %v5654, %v5658
        %v5661 = vadd.f32 %v5655, %v5659
        %s5662 = sld [smem:[#allocation26 + $0x685]]
        %v5663 = vstv %s5662
        %v5664 = vmul.f32 %v4926, %v5663
        %v5665 = vmul.f32 %v4931, %v5663
        %v5666 = vadd.f32 %v5660, %v5664
        %v5667 = vadd.f32 %v5661, %v5665
        %s5668 = sld [smem:[#allocation26 + $0x705]]
        %v5669 = vstv %s5668
        %v5670 = vmul.f32 %v5007, %v5669
        %v5671 = vmul.f32 %v5012, %v5669
        %v5672 = vadd.f32 %v5666, %v5670
        %v5673 = vadd.f32 %v5667, %v5671
        %s5674 = sld [smem:[#allocation26 + $0x785]]
        %v5675 = vstv %s5674
        %v5676 = vmul.f32 %v5088, %v5675
        %v5677 = vmul.f32 %v5093, %v5675
        %v5678 = vadd.f32 %v5672, %v5676
        %v5679 = vadd.f32 %v5673, %v5677
        %s5680 = sld [smem:[#allocation27 + $0x5]]
        %v5681 = vstv %s5680
        %v5682 = vadd.f32 %v5678, %v5681
        %v5683 = vadd.f32 %v5679, %v5681
        %s5684 = sld [smem:[#allocation26 + $0x6]]
        %v5685 = vstv %s5684
        %v5686 = vmul.f32 %v3873, %v5685
        %v5687 = vmul.f32 %v3878, %v5685
        %s5688 = sld [smem:[#allocation26 + $0x86]]
        %v5689 = vstv %s5688
        %v5690 = vmul.f32 %v3954, %v5689
        %v5691 = vmul.f32 %v3959, %v5689
        %v5692 = vadd.f32 %v5686, %v5690
        %v5693 = vadd.f32 %v5687, %v5691
        %s5694 = sld [smem:[#allocation26 + $0x106]]
        %v5695 = vstv %s5694
        %v5696 = vmul.f32 %v4035, %v5695
        %v5697 = vmul.f32 %v4040, %v5695
        %v5698 = vadd.f32 %v5692, %v5696
        %v5699 = vadd.f32 %v5693, %v5697
        %s5700 = sld [smem:[#allocation26 + $0x186]]
        %v5701 = vstv %s5700
        %v5702 = vmul.f32 %v4116, %v5701
        %v5703 = vmul.f32 %v4121, %v5701
        %v5704 = vadd.f32 %v5698, %v5702
        %v5705 = vadd.f32 %v5699, %v5703
        %s5706 = sld [smem:[#allocation26 + $0x206]]
        %v5707 = vstv %s5706
        %v5708 = vmul.f32 %v4197, %v5707
        %v5709 = vmul.f32 %v4202, %v5707
        %v5710 = vadd.f32 %v5704, %v5708
        %v5711 = vadd.f32 %v5705, %v5709
        %s5712 = sld [smem:[#allocation26 + $0x286]]
        %v5713 = vstv %s5712
        %v5714 = vmul.f32 %v4278, %v5713
        %v5715 = vmul.f32 %v4283, %v5713
        %v5716 = vadd.f32 %v5710, %v5714
        %v5717 = vadd.f32 %v5711, %v5715
        %s5718 = sld [smem:[#allocation26 + $0x306]]
        %v5719 = vstv %s5718
        %v5720 = vmul.f32 %v4359, %v5719
        %v5721 = vmul.f32 %v4364, %v5719
        %v5722 = vadd.f32 %v5716, %v5720
        %v5723 = vadd.f32 %v5717, %v5721
        %s5724 = sld [smem:[#allocation26 + $0x386]]
        %v5725 = vstv %s5724
        %v5726 = vmul.f32 %v4440, %v5725
        %v5727 = vmul.f32 %v4445, %v5725
        %v5728 = vadd.f32 %v5722, %v5726
        %v5729 = vadd.f32 %v5723, %v5727
        %s5730 = sld [smem:[#allocation26 + $0x406]]
        %v5731 = vstv %s5730
        %v5732 = vmul.f32 %v4521, %v5731
        %v5733 = vmul.f32 %v4526, %v5731
        %v5734 = vadd.f32 %v5728, %v5732
        %v5735 = vadd.f32 %v5729, %v5733
        %s5736 = sld [smem:[#allocation26 + $0x486]]
        %v5737 = vstv %s5736
        %v5738 = vmul.f32 %v4602, %v5737
        %v5739 = vmul.f32 %v4607, %v5737
        %v5740 = vadd.f32 %v5734, %v5738
        %v5741 = vadd.f32 %v5735, %v5739
        %s5742 = sld [smem:[#allocation26 + $0x506]]
        %v5743 = vstv %s5742
        %v5744 = vmul.f32 %v4683, %v5743
        %v5745 = vmul.f32 %v4688, %v5743
        %v5746 = vadd.f32 %v5740, %v5744
        %v5747 = vadd.f32 %v5741, %v5745
        %s5748 = sld [smem:[#allocation26 + $0x586]]
        %v5749 = vstv %s5748
        %v5750 = vmul.f32 %v4764, %v5749
        %v5751 = vmul.f32 %v4769, %v5749
        %v5752 = vadd.f32 %v5746, %v5750
        %v5753 = vadd.f32 %v5747, %v5751
        %s5754 = sld [smem:[#allocation26 + $0x606]]
        %v5755 = vstv %s5754
        %v5756 = vmul.f32 %v4845, %v5755
        %v5757 = vmul.f32 %v4850, %v5755
        %v5758 = vadd.f32 %v5752, %v5756
        %v5759 = vadd.f32 %v5753, %v5757
        %s5760 = sld [smem:[#allocation26 + $0x686]]
        %v5761 = vstv %s5760
        %v5762 = vmul.f32 %v4926, %v5761
        %v5763 = vmul.f32 %v4931, %v5761
        %v5764 = vadd.f32 %v5758, %v5762
        %v5765 = vadd.f32 %v5759, %v5763
        %s5766 = sld [smem:[#allocation26 + $0x706]]
        %v5767 = vstv %s5766
        %v5768 = vmul.f32 %v5007, %v5767
        %v5769 = vmul.f32 %v5012, %v5767
        %v5770 = vadd.f32 %v5764, %v5768
        %v5771 = vadd.f32 %v5765, %v5769
        %s5772 = sld [smem:[#allocation26 + $0x786]]
        %v5773 = vstv %s5772
        %v5774 = vmul.f32 %v5088, %v5773
        %v5775 = vmul.f32 %v5093, %v5773
        %v5776 = vadd.f32 %v5770, %v5774
        %v5777 = vadd.f32 %v5771, %v5775
        %s5778 = sld [smem:[#allocation27 + $0x6]]
        %v5779 = vstv %s5778
        %v5780 = vadd.f32 %v5776, %v5779
        %v5781 = vadd.f32 %v5777, %v5779
        %s5782 = sld [smem:[#allocation26 + $0x7]]
        %v5783 = vstv %s5782
        %v5784 = vmul.f32 %v3873, %v5783
        %v5785 = vmul.f32 %v3878, %v5783
        %s5786 = sld [smem:[#allocation26 + $0x87]]
        %v5787 = vstv %s5786
        %v5788 = vmul.f32 %v3954, %v5787
        %v5789 = vmul.f32 %v3959, %v5787
        %v5790 = vadd.f32 %v5784, %v5788
        %v5791 = vadd.f32 %v5785, %v5789
        %s5792 = sld [smem:[#allocation26 + $0x107]]
        %v5793 = vstv %s5792
        %v5794 = vmul.f32 %v4035, %v5793
        %v5795 = vmul.f32 %v4040, %v5793
        %v5796 = vadd.f32 %v5790, %v5794
        %v5797 = vadd.f32 %v5791, %v5795
        %s5798 = sld [smem:[#allocation26 + $0x187]]
        %v5799 = vstv %s5798
        %v5800 = vmul.f32 %v4116, %v5799
        %v5801 = vmul.f32 %v4121, %v5799
        %v5802 = vadd.f32 %v5796, %v5800
        %v5803 = vadd.f32 %v5797, %v5801
        %s5804 = sld [smem:[#allocation26 + $0x207]]
        %v5805 = vstv %s5804
        %v5806 = vmul.f32 %v4197, %v5805
        %v5807 = vmul.f32 %v4202, %v5805
        %v5808 = vadd.f32 %v5802, %v5806
        %v5809 = vadd.f32 %v5803, %v5807
        %s5810 = sld [smem:[#allocation26 + $0x287]]
        %v5811 = vstv %s5810
        %v5812 = vmul.f32 %v4278, %v5811
        %v5813 = vmul.f32 %v4283, %v5811
        %v5814 = vadd.f32 %v5808, %v5812
        %v5815 = vadd.f32 %v5809, %v5813
        %s5816 = sld [smem:[#allocation26 + $0x307]]
        %v5817 = vstv %s5816
        %v5818 = vmul.f32 %v4359, %v5817
        %v5819 = vmul.f32 %v4364, %v5817
        %v5820 = vadd.f32 %v5814, %v5818
        %v5821 = vadd.f32 %v5815, %v5819
        %s5822 = sld [smem:[#allocation26 + $0x387]]
        %v5823 = vstv %s5822
        %v5824 = vmul.f32 %v4440, %v5823
        %v5825 = vmul.f32 %v4445, %v5823
        %v5826 = vadd.f32 %v5820, %v5824
        %v5827 = vadd.f32 %v5821, %v5825
        %s5828 = sld [smem:[#allocation26 + $0x407]]
        %v5829 = vstv %s5828
        %v5830 = vmul.f32 %v4521, %v5829
        %v5831 = vmul.f32 %v4526, %v5829
        %v5832 = vadd.f32 %v5826, %v5830
        %v5833 = vadd.f32 %v5827, %v5831
        %s5834 = sld [smem:[#allocation26 + $0x487]]
        %v5835 = vstv %s5834
        %v5836 = vmul.f32 %v4602, %v5835
        %v5837 = vmul.f32 %v4607, %v5835
        %v5838 = vadd.f32 %v5832, %v5836
        %v5839 = vadd.f32 %v5833, %v5837
        %s5840 = sld [smem:[#allocation26 + $0x507]]
        %v5841 = vstv %s5840
        %v5842 = vmul.f32 %v4683, %v5841
        %v5843 = vmul.f32 %v4688, %v5841
        %v5844 = vadd.f32 %v5838, %v5842
        %v5845 = vadd.f32 %v5839, %v5843
        %s5846 = sld [smem:[#allocation26 + $0x587]]
        %v5847 = vstv %s5846
        %v5848 = vmul.f32 %v4764, %v5847
        %v5849 = vmul.f32 %v4769, %v5847
        %v5850 = vadd.f32 %v5844, %v5848
        %v5851 = vadd.f32 %v5845, %v5849
        %s5852 = sld [smem:[#allocation26 + $0x607]]
        %v5853 = vstv %s5852
        %v5854 = vmul.f32 %v4845, %v5853
        %v5855 = vmul.f32 %v4850, %v5853
        %v5856 = vadd.f32 %v5850, %v5854
        %v5857 = vadd.f32 %v5851, %v5855
        %s5858 = sld [smem:[#allocation26 + $0x687]]
        %v5859 = vstv %s5858
        %v5860 = vmul.f32 %v4926, %v5859
        %v5861 = vmul.f32 %v4931, %v5859
        %v5862 = vadd.f32 %v5856, %v5860
        %v5863 = vadd.f32 %v5857, %v5861
        %s5864 = sld [smem:[#allocation26 + $0x707]]
        %v5865 = vstv %s5864
        %v5866 = vmul.f32 %v5007, %v5865
        %v5867 = vmul.f32 %v5012, %v5865
        %v5868 = vadd.f32 %v5862, %v5866
        %v5869 = vadd.f32 %v5863, %v5867
        %s5870 = sld [smem:[#allocation26 + $0x787]]
        %v5871 = vstv %s5870
        %v5872 = vmul.f32 %v5088, %v5871
        %v5873 = vmul.f32 %v5093, %v5871
        %v5874 = vadd.f32 %v5868, %v5872
        %v5875 = vadd.f32 %v5869, %v5873
        %s5876 = sld [smem:[#allocation27 + $0x7]]
        %v5877 = vstv %s5876
        %v5878 = vadd.f32 %v5874, %v5877
        %v5879 = vadd.f32 %v5875, %v5877
        %5880 = vst.msk [vmem:[%s758] sm:$0xff] %vm2023, %v5192
        %5881 = vst.msk [vmem:[%s758 + $0x8] sm:$0xff] %vm2023, %v5193
        %5882 = vst.msk [vmem:[%s758 + $0x10] sm:$0xff] %vm2023, %v5290
        %5883 = vst.msk [vmem:[%s758 + $0x18] sm:$0xff] %vm2023, %v5291
        %5884 = vst.msk [vmem:[%s758 + $0x20] sm:$0xff] %vm2023, %v5388
        %5885 = vst.msk [vmem:[%s758 + $0x28] sm:$0xff] %vm2023, %v5389
        %5886 = vst.msk [vmem:[%s758 + $0x30] sm:$0xff] %vm2023, %v5486
        %5887 = vst.msk [vmem:[%s758 + $0x38] sm:$0xff] %vm2023, %v5487
        %5888 = vst.msk [vmem:[%s758 + $0x40] sm:$0xff] %vm2023, %v5584
        %5889 = vst.msk [vmem:[%s758 + $0x48] sm:$0xff] %vm2023, %v5585
        %5890 = vst.msk [vmem:[%s758 + $0x50] sm:$0xff] %vm2023, %v5682
        %5891 = vst.msk [vmem:[%s758 + $0x58] sm:$0xff] %vm2023, %v5683
        %5892 = vst.msk [vmem:[%s758 + $0x60] sm:$0xff] %vm2023, %v5780
        %5893 = vst.msk [vmem:[%s758 + $0x68] sm:$0xff] %vm2023, %v5781
        %5894 = vst.msk [vmem:[%s758 + $0x70] sm:$0xff] %vm2023, %v5878
        %5895 = vst.msk [vmem:[%s758 + $0x78] sm:$0xff] %vm2023, %v5879
        %s5896 = sand.u32 %s398, 1
        %s5897 = scalar_lea.sflag [#allocation4], %s5896
        %s5898 = sand.u32 %s398, 1
        %s5899 = smul.addr %s5898, 128
        %s5900 = scalar_lea.vmem [#allocation29], %s5899
        // Predicated region
        $region149: #{tpu_custom_call.1} parent=83 // pred_check
          %p5901 = pneg %p408
        $region150: #{tpu_custom_call.1} parent=83 // pred_check_branch
          %5903 = sbr.rel (%p5901) target = $region152
        $region151: #{tpu_custom_call.1} parent=83 // pred_region
          %s5905 = ssub.s32 2048, 2048
          %5906 = vsyncadd %s5897, %s5905
          %s5907 = smul.addr %s44, 16
          %s5908 = smul.addr %s5907, 128
          %s5909 = scalar_lea.hbm %s16, %s5908
          %s5910 = sshll.u32 %s5900, 4
          %s5911 = int_to_ptr.vmem [resolvable:$true] %s5910
          %5916 = dma.vmem_to_hbm [thread:$0]  %s5911, 2048, %s5909, %s5897, 128, 128, 8
        $region152: #{tpu_custom_call.1} parent=83 // pred_fallthru
          _
      $region84: #{tpu_custom_call.1} parent=5 // pred_fallthru
        _
      %p5917 = scmp.le.s32.totalorder 2, %s39
      // Predicated region
      $region153: #{tpu_custom_call.1} parent=5 // pred_check
        %p5918 = pneg %p5917
      $region154: #{tpu_custom_call.1} parent=5 // pred_check_branch
        %5920 = sbr.rel (%p5918) target = $region156
      $region155: #{tpu_custom_call.1} parent=5 // pred_region
        %s5921 = ssub.s32 %s39, 2
        // Predicated region
        $region157: #{tpu_custom_call.1} parent=155 // pred_check
          %p5922 = pneg %p414
        $region158: #{tpu_custom_call.1} parent=155 // pred_check_branch
          %5924 = sbr.rel (%p5922) target = $region160
        $region159: #{tpu_custom_call.1} parent=155 // pred_region
          %s5925 = sand.u32 %s399, 1
          %s5926 = scalar_lea.sflag [#allocation4], %s5925
          %s5927 = sand.u32 %s399, 1
          %s5928 = smul.addr %s5927, 128
          %s5929 = scalar_lea.vmem [#allocation29], %s5928
          %5930 = dma.done %s5926, 2048
        $region160: #{tpu_custom_call.1} parent=155 // pred_fallthru
          _
      $region156: #{tpu_custom_call.1} parent=5 // pred_fallthru
        _
    $region6: #{tpu_custom_call.1} parent=1 // loop_footer
      %s43 = sadd.s32 1, %s39
    $region7: #{tpu_custom_call.1} parent=1 // loop_footer_branch
      %38 = sbr.rel target = $region3
    $region8: #{tpu_custom_call.1} parent=1 // loop_exit
      _
    %5931 = vsyncpa [#allocation3], 1
    %s5932 = scalar_lea.sflag [#allocation3], 1
    %5933 = vsyncpa %s5932, 1
    %5934 = vsyncpa [#allocation7], 1
    %s5935 = scalar_lea.sflag [#allocation7], 1
    %5936 = vsyncpa %s5935, 1
    %5937 = vsyncpa [#allocation4], 1
    %s5938 = scalar_lea.sflag [#allocation4], 1
    %5939 = vsyncpa %s5938, 1
    %5940 = vsyncpa [#allocation5], 1
    %s5941 = scalar_lea.sflag [#allocation5], 1
    %5942 = vsyncpa %s5941, 1
    %5943 = vsyncpa [#allocation10], 1
    %5944 = vsyncpa [#allocation13], 1
    %5945 = vsyncpa [#allocation16], 1
    %5946 = vsyncpa [#allocation19], 1
    %5947 = vsyncpa [#allocation22], 1
    %5948 = vsyncpa [#allocation25], 1
    %5949 = vsyncpa [#allocation28], 1

</llo_original>
